<compile_context>
chip_gen: v6e
topology: v6e:2x2x1
jax: 0.10.0
libtpu: 0.0.40
codegen_flags: <defaults>
</compile_context>

<pallas_src>
import functools

import jax
import jax.numpy as jnp
from jax import lax
from jax.experimental import pallas as pl
from jax.experimental.pallas import tpu as pltpu


_PARAM_ORDER = (
    "pre_w", "pre_b",
    "in_w_t", "in_w_s", "in_b_t", "in_b_s",
    "rs_res_w", "rs_res_b", "rs_skip_w", "rs_skip_b",
    "post_w_m", "post_b_m", "post_w_l", "post_b_l",
)


def _default_vmem_limit_bytes():
    """~3/4 of physical VMEM, capped at 96 MiB (v5e/v6e -> 96 MiB, v7x -> 48 MiB)."""
    try:
        phys = int(pltpu.get_tpu_info().vmem_capacity_bytes)
        return min(96 * 1024 * 1024, (phys * 3) // 4)
    except Exception:
        return 64 * 1024 * 1024


def _coupling_kernel(x0_ref, mask_ref, x1_ref,
                     pre_w_ref, pre_b_ref,
                     in_w_t_ref, in_w_s_ref, in_b_t_ref, in_b_s_ref,
                     rs_res_w_ref, rs_res_b_ref, rs_skip_w_ref, rs_skip_b_ref,
                     post_w_m_ref, post_b_m_ref, post_w_l_ref, post_b_l_ref,
                     y1_ref, *logdet_refs,
                     hidden, half_p, kernel_size, dilation_rate, n_layers,
                     t_tile, halo, reverse):
    t = pl.program_id(1)
    win = t_tile + 2 * halo                     # haloed window length
    start = pl.multiple_of(t * t_tile, 8)

    # x0 / mask hold this batch element's whole zero-padded haloed sequence;
    # slice out the (sublane-aligned) window belonging to this time tile.
    x0w = x0_ref[0, pl.ds(start, win), :].astype(jnp.bfloat16)     # (win, half)
    maskw = mask_ref[0, pl.ds(start, win), :]                      # (win, 1) f32
    mask_h = jnp.broadcast_to(maskw, (win, hidden))                # hoisted bcast

    # pre: 1x1 conv -> hidden, then mask.
    h = (jnp.dot(x0w, pre_w_ref[...], preferred_element_type=jnp.float32)
         + pre_b_ref[...]) * mask_h                                # (win, hidden) f32

    # WN encoder, python-unrolled over layers and conv taps.  Dilated-conv
    # taps are XLU rotations of the haloed window.  The rotation wrap-around
    # is deliberately left UNMASKED:
    #   * h is exactly 0 at masked rows (sequence padding) at every layer
    #     (the `* mask_h` multiplies), so taps past the true sequence edge
    #     reproduce the conv zero padding exactly;
    #   * wrap-around garbage contaminates at most rf = sum_i (k//2)*d_i <=
    #     halo rows inward over the whole stack, never reaching the central
    #     t_tile rows that are kept.
    output = None
    for i in range(n_layers):
        d = dilation_rate ** i
        xt = None
        xs = None
        for j in range(kernel_size):
            off = (j - kernel_size // 2) * d
            hs = h if off == 0 else pltpu.roll(h, (-off) % win, 0)
            # roll stays in f32 (packed-bf16 sublane rotates are not assumed
            # supported); the per-tap cast is ~1/5 of the removed masking
            # cost and hides under the MXU.
            hs = hs.astype(jnp.bfloat16)
            pt = jnp.dot(hs, in_w_t_ref[i, j], preferred_element_type=jnp.float32)
            ps = jnp.dot(hs, in_w_s_ref[i, j], preferred_element_type=jnp.float32)
            xt = pt if xt is None else xt + pt
            xs = ps if xs is None else xs + ps
        # TODO(synk): on v7x the per-tap f32 adds could accumulate in the MXU
        # result buffer (pltpu.matmul_acc_lhs) instead of the VPU.
        acts = (jnp.tanh(xt + in_b_t_ref[i])
                * jax.nn.sigmoid(xs + in_b_s_ref[i])).astype(jnp.bfloat16)
        skip = (jnp.dot(acts, rs_skip_w_ref[i], preferred_element_type=jnp.float32)
                + rs_skip_b_ref[i])
        output = skip if output is None else output + skip
        if i < n_layers - 1:                    # last WN layer: skip path only
            res = (jnp.dot(acts, rs_res_w_ref[i], preferred_element_type=jnp.float32)
                   + rs_res_b_ref[i])
            h = (h + res) * mask_h

    # Keep only the central (exactly computed) t_tile rows from here on.
    c = slice(halo, halo + t_tile)
    out_c = (output[c, :] * mask_h[c, :]).astype(jnp.bfloat16)     # (t_tile, hidden)
    mask_c = jnp.broadcast_to(maskw[c, :], (t_tile, half_p))

    # post: 1x1 conv split into m / logs halves (lane-dense half_p), masked.
    m = (jnp.dot(out_c, post_w_m_ref[...], preferred_element_type=jnp.float32)
         + post_b_m_ref[...]) * mask_c
    logs = (jnp.dot(out_c, post_w_l_ref[...], preferred_element_type=jnp.float32)
            + post_b_l_ref[...]) * mask_c

    x1 = x1_ref[0]                                                 # (t_tile, half_p)

    if not reverse:
        y1_ref[0] = m + x1 * jnp.exp(logs) * mask_c
        # Per-tile logdet partial, broadcast into one lane-dense (8,128) slab;
        # reduced over tiles in the wrapper (keeps the time axis "parallel").
        logdet_refs[0][...] = jnp.zeros_like(logdet_refs[0]) + jnp.sum(logs)
    else:
        y1_ref[0] = (x1 - m) * jnp.exp(-logs) * mask_c


def make_params(key, channels, hidden, kernel_size, n_layers, post_scale=0.5):
    """Synthetic weights in the split layout the kernel expects.

    weight_norm is a re-parametrization, so effective weights are drawn
    directly.  Matmul weights are bf16; biases stay f32.  The real module
    zero-initializes `post`; here small random values are used so the
    self-test exercises the whole stack (post_scale=0.0 matches the PyTorch
    init).  NOTE layout contract: the last WN layer's res_skip conv is only
    `hidden` wide and must be placed in the *skip* slot; its res slot is
    unused (zeroed here).
    """
    half = channels // 2
    ks = jax.random.split(key, 12)
    s = 0.1
    f32, bf16 = jnp.float32, jnp.bfloat16
    nrm = jax.random.normal

    pre_w = (s * nrm(ks[0], (half, hidden), f32)).astype(bf16)
    pre_b = s * nrm(ks[1], (1, hidden), f32)
    in_w_t = (s * nrm(ks[2], (n_layers, kernel_size, hidden, hidden), f32)).astype(bf16)
    in_w_s = (s * nrm(ks[3], (n_layers, kernel_size, hidden, hidden), f32)).astype(bf16)
    in_b_t = s * nrm(ks[4], (n_layers, 1, hidden), f32)
    in_b_s = s * nrm(ks[5], (n_layers, 1, hidden), f32)
    rs_res_w = (s * nrm(ks[6], (n_layers, hidden, hidden), f32)).astype(bf16)
    rs_res_b = s * nrm(ks[7], (n_layers, 1, hidden), f32)
    rs_skip_w = (s * nrm(ks[8], (n_layers, hidden, hidden), f32)).astype(bf16)
    rs_skip_b = s * nrm(ks[9], (n_layers, 1, hidden), f32)
    rs_res_w = rs_res_w.at[n_layers - 1].set(0)
    rs_res_b = rs_res_b.at[n_layers - 1].set(0)
    post_w_m = (post_scale * nrm(ks[10], (hidden, half), f32)).astype(bf16)
    post_w_l = (post_scale * nrm(ks[11], (hidden, half), f32)).astype(bf16)
    post_b_m = jnp.zeros((1, half), f32)
    post_b_l = jnp.zeros((1, half), f32)
    return dict(pre_w=pre_w, pre_b=pre_b,
                in_w_t=in_w_t, in_w_s=in_w_s, in_b_t=in_b_t, in_b_s=in_b_s,
                rs_res_w=rs_res_w, rs_res_b=rs_res_b,
                rs_skip_w=rs_skip_w, rs_skip_b=rs_skip_b,
                post_w_m=post_w_m, post_b_m=post_b_m,
                post_w_l=post_w_l, post_b_l=post_b_l)


def residual_coupling_forward(x_nct, mask_n1t, params, *, kernel_size,
                              dilation_rate, n_layers, reverse=False,
                              t_tile=512, single_buffer_weights=True,
                              vmem_limit_bytes=None):
    B, C, T = x_nct.shape
    half = C // 2
    hidden = params["pre_b"].shape[1]
    assert params["pre_w"].shape == (half, hidden)

    # Receptive-field radius of the dilated WN stack, rounded up to a sublane
    # multiple so window starts stay 8-aligned.  halo >= rf is what makes the
    # unmasked roll taps exact on the central tile (see kernel comment).
    rf = (kernel_size // 2) * sum(dilation_rate ** i for i in range(n_layers))
    halo = max(8, -(-rf // 8) * 8)

    t_tile = -(-min(t_tile, T) // 8) * 8          # multiple of 8
    n_t = pl.cdiv(T, t_tile)
    t_pad = n_t * t_tile
    t_ext = t_pad + 2 * halo

    # Lane-dense half for the x1/y1/post path (multiple of 128).  The pad is
    # inert: padded post weight/bias columns are zero -> padded m/logs are 0,
    # padded x1 is 0 -> padded y1 is 0 and logdet is unchanged.
    half_p = -(-half // 128) * 128

    f32 = jnp.float32
    # NCW -> NWC at the boundary (channels-last so 1x1 convs are MXU matmuls).
    # TODO(synk): keep the model channels-last end-to-end to drop these
    # boundary transposes (an extra HBM pass over x / y around the kernel).
    x0 = jnp.transpose(x_nct[:, :half, :].astype(f32), (0, 2, 1))   # (B, T, half)
    x1 = jnp.transpose(x_nct[:, half:, :].astype(f32), (0, 2, 1))
    mask = jnp.transpose(mask_n1t.astype(f32), (0, 2, 1))           # (B, T, 1)

    # Zero padding is inert: mask is zero there, matching conv zero padding.
    x0_pad = jnp.pad(x0, ((0, 0), (halo, t_ext - halo - T), (0, 0)))
    mask_pad = jnp.pad(mask, ((0, 0), (halo, t_ext - halo - T), (0, 0)))
    x1_pad = jnp.pad(x1, ((0, 0), (0, t_pad - T), (0, half_p - half)))

    wp = dict(params)
    if half_p != half:
        wp["post_w_m"] = jnp.pad(params["post_w_m"], ((0, 0), (0, half_p - half)))
        wp["post_w_l"] = jnp.pad(params["post_w_l"], ((0, 0), (0, half_p - half)))
        wp["post_b_m"] = jnp.pad(params["post_b_m"], ((0, 0), (0, half_p - half)))
        wp["post_b_l"] = jnp.pad(params["post_b_l"], ((0, 0), (0, half_p - half)))

    kernel = functools.partial(
        _coupling_kernel, hidden=hidden, half_p=half_p,
        kernel_size=kernel_size, dilation_rate=dilation_rate,
        n_layers=n_layers, t_tile=t_tile, halo=halo, reverse=reverse)

    def const_spec(shape):
        # Whole-array block, constant index_map -> never re-fetched.  Single-
        # buffer to halve the resident weight footprint (critical on v7x's
        # 64 MiB VMEM); fall back to the default double buffer on jax
        # versions without BlockSpec.pipeline_mode.
        idx = lambda b, t, n=len(shape): (0,) * n
        if single_buffer_weights:
            try:
                return pl.BlockSpec(shape, idx, pipeline_mode=pl.Buffered(1))
            except Exception:
                pass
        return pl.BlockSpec(shape, idx)

    in_specs = [
        # TODO(synk): for very long T on v7x (64 MiB VMEM), switch x0/mask from
        # whole-sequence residency to per-tile haloed windows via manual DMA.
        pl.BlockSpec((1, t_ext, half), lambda b, t: (b, 0, 0)),   # x0 (haloed, whole seq)
        pl.BlockSpec((1, t_ext, 1), lambda b, t: (b, 0, 0)),      # mask (haloed)
        pl.BlockSpec((1, t_tile, half_p), lambda b, t: (b, t, 0)),  # x1 tile (lane-dense)
    ] + [const_spec(wp[k].shape) for k in _PARAM_ORDER]

    y1_spec = pl.BlockSpec((1, t_tile, half_p), lambda b, t: (b, t, 0))
    y1_shape = jax.ShapeDtypeStruct((B, t_pad, half_p), f32)
    if reverse:
        out_specs = [y1_spec]
        out_shape = (y1_shape,)
    else:
        out_specs = [y1_spec,
                     pl.BlockSpec((1, 1, 8, 128), lambda b, t: (b, t, 0, 0))]
        out_shape = (y1_shape,
                     jax.ShapeDtypeStruct((B, n_t, 8, 128), f32))  # logdet partials

    if vmem_limit_bytes is None:
        vmem_limit_bytes = _default_vmem_limit_bytes()

    outs = pl.pallas_call(
        kernel,
        out_shape=out_shape,
        grid_spec=pltpu.PrefetchScalarGridSpec(
            num_scalar_prefetch=0, grid=(B, n_t),
            in_specs=in_specs, out_specs=out_specs),
        compiler_params=pltpu.CompilerParams(
            dimension_semantics=("parallel", "parallel"),
            vmem_limit_bytes=vmem_limit_bytes),
    )(x0_pad, mask_pad, x1_pad, *[wp[k] for k in _PARAM_ORDER])

    y1 = outs[0]
    y1_nct = jnp.transpose(y1[:, :T, :half], (0, 2, 1))
    y_nct = jnp.concatenate([x_nct[:, :half, :].astype(f32), y1_nct], axis=1)
    if reverse:
        return y_nct
    logdet = jnp.sum(outs[1][:, :, 0, 0], axis=1)
    return y_nct, logdet


def reference_forward(x_nct, mask_n1t, params, *, kernel_size, dilation_rate,
                      n_layers):
    """Pure-JAX (f32, lax.conv) reference matching the PyTorch module."""
    B, C, T = x_nct.shape
    half = C // 2
    hidden = params["pre_b"].shape[1]
    f32 = jnp.float32
    mask = mask_n1t.astype(f32)
    x = x_nct.astype(f32)
    x0, x1 = x[:, :half], x[:, half:]

    def w32(name):
        return params[name].astype(f32)

    h = (jnp.einsum("io,bit->bot", w32("pre_w"), x0)
         + params["pre_b"].reshape(1, hidden, 1)) * mask
    out = jnp.zeros_like(h)
    for i in range(n_layers):
        d = dilation_rate ** i
        pad = d * (kernel_size - 1) // 2
        wt = jnp.transpose(w32("in_w_t")[i], (2, 1, 0))   # (O, I, K)
        ws = jnp.transpose(w32("in_w_s")[i], (2, 1, 0))
        xt = lax.conv_general_dilated(h, wt, (1,), [(pad, pad)], rhs_dilation=(d,),
                                      dimension_numbers=("NCH", "OIH", "NCH"))
        xs = lax.conv_general_dilated(h, ws, (1,), [(pad, pad)], rhs_dilation=(d,),
                                      dimension_numbers=("NCH", "OIH", "NCH"))
        xt = xt + params["in_b_t"][i].reshape(1, hidden, 1)
        xs = xs + params["in_b_s"][i].reshape(1, hidden, 1)
        acts = jnp.tanh(xt) * jax.nn.sigmoid(xs)
        out = out + (jnp.einsum("io,bit->bot", w32("rs_skip_w")[i], acts)
                     + params["rs_skip_b"][i].reshape(1, hidden, 1))
        if i < n_layers - 1:
            res = (jnp.einsum("io,bit->bot", w32("rs_res_w")[i], acts)
                   + params["rs_res_b"][i].reshape(1, hidden, 1))
            h = (h + res) * mask
    out = out * mask

    m = (jnp.einsum("io,bit->bot", w32("post_w_m"), out)
         + params["post_b_m"].reshape(1, half, 1)) * mask
    logs = (jnp.einsum("io,bit->bot", w32("post_w_l"), out)
            + params["post_b_l"].reshape(1, half, 1)) * mask
    x1n = m + x1 * jnp.exp(logs) * mask
    y = jnp.concatenate([x0, x1n], axis=1)
    logdet = jnp.sum(logs, axis=(1, 2))
    return y, logdet


if __name__ == "__main__":
    B, C, T = 2, 4, 16            # batch, channels (even), sequence length
    hidden, ksz, dil_rate, n_layers = 16, 3, 2, 3

    key = jax.random.PRNGKey(0)
    kx, kp = jax.random.split(key)
    x = jax.random.normal(kx, (B, C, T), jnp.float32)          # PyTorch NCW
    lengths = jnp.array([T, T - 3])
    x_mask = (jnp.arange(T)[None, None, :] < lengths[:, None, None]
              ).astype(jnp.float32)                            # (B, 1, T)

    params = make_params(kp, C, hidden, ksz, n_layers)

    # t_tile=8 -> two time tiles, exercising the halo / per-tile logdet path.
    kw = dict(kernel_size=ksz, dilation_rate=dil_rate, n_layers=n_layers,
              t_tile=8)
    sbw = True
    try:
        y, logdet = residual_coupling_forward(
            x, x_mask, params, reverse=False, single_buffer_weights=sbw, **kw)
        jax.block_until_ready((y, logdet))
    except Exception:
        # Compatibility fallback: retry with default double-buffered weights
        # if this jax build rejects pipeline_mode=pl.Buffered(1).
        sbw = False
        y, logdet = residual_coupling_forward(
            x, x_mask, params, reverse=False, single_buffer_weights=sbw, **kw)
        jax.block_until_ready((y, logdet))

    y_ref, logdet_ref = reference_forward(
        x, x_mask, params, kernel_size=ksz, dilation_rate=dil_rate,
        n_layers=n_layers)

    assert y.shape == (B, C, T) and logdet.shape == (B,)
    assert jnp.allclose(y, y_ref, atol=2e-2, rtol=2e-2), "output mismatch"
    assert jnp.allclose(logdet, logdet_ref, atol=2e-2, rtol=2e-2), "logdet mismatch"

    # Inverse path (reverse=True, no logdet output) must recover x1 * mask
    # (x0 passes through unchanged).
    x_rec = residual_coupling_forward(
        y, x_mask, params, reverse=True, single_buffer_weights=sbw, **kw)
    jax.block_until_ready(x_rec)
    half = C // 2
    x_expected = jnp.concatenate([x[:, :half, :], x[:, half:, :] * x_mask], axis=1)
    assert jnp.allclose(x_rec, x_expected, atol=2e-2, rtol=2e-2), "inverse mismatch"

    print("KERNEL_OK")
</pallas_src>

<mosaic_0001>
module attributes {stable_mosaic.version = 11 : i64} {
  func.func @_coupling_kernel(%arg0: i32, %arg1: i32, %arg2: memref<1x32x2xf32, #tpu.memory_space<vmem>>, %arg3: memref<1x32x1xf32, #tpu.memory_space<vmem>>, %arg4: memref<1x8x128xf32, #tpu.memory_space<vmem>>, %arg5: memref<2x16xbf16, #tpu.memory_space<vmem>>, %arg6: memref<1x16xf32, #tpu.memory_space<vmem>>, %arg7: memref<3x3x16x16xbf16, #tpu.memory_space<vmem>>, %arg8: memref<3x3x16x16xbf16, #tpu.memory_space<vmem>>, %arg9: memref<3x1x16xf32, #tpu.memory_space<vmem>>, %arg10: memref<3x1x16xf32, #tpu.memory_space<vmem>>, %arg11: memref<3x16x16xbf16, #tpu.memory_space<vmem>>, %arg12: memref<3x1x16xf32, #tpu.memory_space<vmem>>, %arg13: memref<3x16x16xbf16, #tpu.memory_space<vmem>>, %arg14: memref<3x1x16xf32, #tpu.memory_space<vmem>>, %arg15: memref<16x128xbf16, #tpu.memory_space<vmem>>, %arg16: memref<1x128xf32, #tpu.memory_space<vmem>>, %arg17: memref<16x128xbf16, #tpu.memory_space<vmem>>, %arg18: memref<1x128xf32, #tpu.memory_space<vmem>>, %arg19: memref<1x8x128xf32, #tpu.memory_space<vmem>>, %arg20: memref<1x1x8x128xf32, #tpu.memory_space<vmem>>) attributes {dimension_semantics = [#tpu.dimension_semantics<parallel>, #tpu.dimension_semantics<parallel>], iteration_bounds = array<i64: 2, 2>, scalar_prefetch = 0 : i64, scratch_operands = 0 : i64, tpu.core_type = #tpu.core_type<tc>, window_params = [{transform_indices = @transform_0, window_bounds = array<i64: 1, 32, 2>}, {transform_indices = @transform_1, window_bounds = array<i64: 1, 32, 1>}, {transform_indices = @transform_2, window_bounds = array<i64: 1, 8, 128>}, {pipeline_mode = #tpu.pipeline_mode<synchronous>, transform_indices = @transform_3, window_bounds = array<i64: 2, 16>}, {pipeline_mode = #tpu.pipeline_mode<synchronous>, transform_indices = @transform_4, window_bounds = array<i64: 1, 16>}, {pipeline_mode = #tpu.pipeline_mode<synchronous>, transform_indices = @transform_5, window_bounds = array<i64: 3, 3, 16, 16>}, {pipeline_mode = #tpu.pipeline_mode<synchronous>, transform_indices = @transform_6, window_bounds = array<i64: 3, 3, 16, 16>}, {pipeline_mode = #tpu.pipeline_mode<synchronous>, transform_indices = @transform_7, window_bounds = array<i64: 3, 1, 16>}, {pipeline_mode = #tpu.pipeline_mode<synchronous>, transform_indices = @transform_8, window_bounds = array<i64: 3, 1, 16>}, {pipeline_mode = #tpu.pipeline_mode<synchronous>, transform_indices = @transform_9, window_bounds = array<i64: 3, 16, 16>}, {pipeline_mode = #tpu.pipeline_mode<synchronous>, transform_indices = @transform_10, window_bounds = array<i64: 3, 1, 16>}, {pipeline_mode = #tpu.pipeline_mode<synchronous>, transform_indices = @transform_11, window_bounds = array<i64: 3, 16, 16>}, {pipeline_mode = #tpu.pipeline_mode<synchronous>, transform_indices = @transform_12, window_bounds = array<i64: 3, 1, 16>}, {pipeline_mode = #tpu.pipeline_mode<synchronous>, transform_indices = @transform_13, window_bounds = array<i64: 16, 128>}, {pipeline_mode = #tpu.pipeline_mode<synchronous>, transform_indices = @transform_14, window_bounds = array<i64: 1, 128>}, {pipeline_mode = #tpu.pipeline_mode<synchronous>, transform_indices = @transform_15, window_bounds = array<i64: 16, 128>}, {pipeline_mode = #tpu.pipeline_mode<synchronous>, transform_indices = @transform_16, window_bounds = array<i64: 1, 128>}, {transform_indices = @transform_17, window_bounds = array<i64: 1, 8, 128>}, {transform_indices = @transform_18, window_bounds = array<i64: 1, 1, 8, 128>}]} {
    %c8_i32 = arith.constant 8 : i32
    %0 = arith.muli %arg1, %c8_i32 : i32
    %1 = tpu.assume_multiple %0, 8 : i32
    %c0 = arith.constant 0 : index
    %2 = arith.index_cast %1 : i32 to index
    %c0_0 = arith.constant 0 : index
    %3 = vector.load %arg2[%c0, %2, %c0_0] : memref<1x32x2xf32, #tpu.memory_space<vmem>>, vector<1x24x2xf32>
    %4 = vector.shape_cast %3 : vector<1x24x2xf32> to vector<24x2xf32>
    %5 = arith.truncf %4 : vector<24x2xf32> to vector<24x2xbf16>
    %c0_1 = arith.constant 0 : index
    %6 = arith.index_cast %1 : i32 to index
    %c0_2 = arith.constant 0 : index
    %7 = vector.load %arg3[%c0_1, %6, %c0_2] : memref<1x32x1xf32, #tpu.memory_space<vmem>>, vector<1x24x1xf32>
    %8 = vector.shape_cast %7 : vector<1x24x1xf32> to vector<24x1xf32>
    %9 = vector.shape_cast %8 : vector<24x1xf32> to vector<24x1xf32>
    %10 = vector.broadcast %9 : vector<24x1xf32> to vector<24x16xf32>
    %c0_3 = arith.constant 0 : index
    %c0_4 = arith.constant 0 : index
    %11 = vector.load %arg5[%c0_3, %c0_4] : memref<2x16xbf16, #tpu.memory_space<vmem>>, vector<2x16xbf16>
    %cst = arith.constant dense<0.000000e+00> : vector<24x16xf32>
    %12 = tpu.matmul %5, %11, %cst {dimension_numbers = #tpu.dot_dimension_numbers<[1], [0], [0], [1], [0, 0, 1, 1], [], []>} : vector<24x2xbf16>, vector<2x16xbf16>, vector<24x16xf32> -> vector<24x16xf32>
    %c0_5 = arith.constant 0 : index
    %c0_6 = arith.constant 0 : index
    %13 = vector.load %arg6[%c0_5, %c0_6] : memref<1x16xf32, #tpu.memory_space<vmem>>, vector<1x16xf32>
    %14 = vector.broadcast %13 : vector<1x16xf32> to vector<24x16xf32>
    %15 = arith.addf %12, %14 : vector<24x16xf32>
    %16 = arith.mulf %15, %10 : vector<24x16xf32>
    %c1_i32 = arith.constant 1 : i32
    %17 = tpu.dynamic_rotate %16 by %c1_i32 dim 0 : vector<24x16xf32>, i32 -> vector<24x16xf32>
    %18 = arith.truncf %17 : vector<24x16xf32> to vector<24x16xbf16>
    %c0_7 = arith.constant 0 : index
    %c0_8 = arith.constant 0 : index
    %c0_9 = arith.constant 0 : index
    %c0_10 = arith.constant 0 : index
    %19 = vector.load %arg7[%c0_7, %c0_8, %c0_9, %c0_10] : memref<3x3x16x16xbf16, #tpu.memory_space<vmem>>, vector<1x1x16x16xbf16>
    %20 = vector.shape_cast %19 : vector<1x1x16x16xbf16> to vector<16x16xbf16>
    %cst_11 = arith.constant dense<0.000000e+00> : vector<24x16xf32>
    %21 = tpu.matmul %18, %20, %cst_11 {dimension_numbers = #tpu.dot_dimension_numbers<[1], [0], [0], [1], [0, 0, 1, 1], [], []>} : vector<24x16xbf16>, vector<16x16xbf16>, vector<24x16xf32> -> vector<24x16xf32>
    %c0_12 = arith.constant 0 : index
    %c0_13 = arith.constant 0 : index
    %c0_14 = arith.constant 0 : index
    %c0_15 = arith.constant 0 : index
    %22 = vector.load %arg8[%c0_12, %c0_13, %c0_14, %c0_15] : memref<3x3x16x16xbf16, #tpu.memory_space<vmem>>, vector<1x1x16x16xbf16>
    %23 = vector.shape_cast %22 : vector<1x1x16x16xbf16> to vector<16x16xbf16>
    %cst_16 = arith.constant dense<0.000000e+00> : vector<24x16xf32>
    %24 = tpu.matmul %18, %23, %cst_16 {dimension_numbers = #tpu.dot_dimension_numbers<[1], [0], [0], [1], [0, 0, 1, 1], [], []>} : vector<24x16xbf16>, vector<16x16xbf16>, vector<24x16xf32> -> vector<24x16xf32>
    %25 = arith.truncf %16 : vector<24x16xf32> to vector<24x16xbf16>
    %c0_17 = arith.constant 0 : index
    %c1 = arith.constant 1 : index
    %c0_18 = arith.constant 0 : index
    %c0_19 = arith.constant 0 : index
    %26 = vector.load %arg7[%c0_17, %c1, %c0_18, %c0_19] : memref<3x3x16x16xbf16, #tpu.memory_space<vmem>>, vector<1x1x16x16xbf16>
    %27 = vector.shape_cast %26 : vector<1x1x16x16xbf16> to vector<16x16xbf16>
    %cst_20 = arith.constant dense<0.000000e+00> : vector<24x16xf32>
    %28 = tpu.matmul %25, %27, %cst_20 {dimension_numbers = #tpu.dot_dimension_numbers<[1], [0], [0], [1], [0, 0, 1, 1], [], []>} : vector<24x16xbf16>, vector<16x16xbf16>, vector<24x16xf32> -> vector<24x16xf32>
    %c0_21 = arith.constant 0 : index
    %c1_22 = arith.constant 1 : index
    %c0_23 = arith.constant 0 : index
    %c0_24 = arith.constant 0 : index
    %29 = vector.load %arg8[%c0_21, %c1_22, %c0_23, %c0_24] : memref<3x3x16x16xbf16, #tpu.memory_space<vmem>>, vector<1x1x16x16xbf16>
    %30 = vector.shape_cast %29 : vector<1x1x16x16xbf16> to vector<16x16xbf16>
    %cst_25 = arith.constant dense<0.000000e+00> : vector<24x16xf32>
    %31 = tpu.matmul %25, %30, %cst_25 {dimension_numbers = #tpu.dot_dimension_numbers<[1], [0], [0], [1], [0, 0, 1, 1], [], []>} : vector<24x16xbf16>, vector<16x16xbf16>, vector<24x16xf32> -> vector<24x16xf32>
    %32 = arith.addf %21, %28 : vector<24x16xf32>
    %33 = arith.addf %24, %31 : vector<24x16xf32>
    %c23_i32 = arith.constant 23 : i32
    %34 = tpu.dynamic_rotate %16 by %c23_i32 dim 0 : vector<24x16xf32>, i32 -> vector<24x16xf32>
    %35 = arith.truncf %34 : vector<24x16xf32> to vector<24x16xbf16>
    %c0_26 = arith.constant 0 : index
    %c2 = arith.constant 2 : index
    %c0_27 = arith.constant 0 : index
    %c0_28 = arith.constant 0 : index
    %36 = vector.load %arg7[%c0_26, %c2, %c0_27, %c0_28] : memref<3x3x16x16xbf16, #tpu.memory_space<vmem>>, vector<1x1x16x16xbf16>
    %37 = vector.shape_cast %36 : vector<1x1x16x16xbf16> to vector<16x16xbf16>
    %cst_29 = arith.constant dense<0.000000e+00> : vector<24x16xf32>
    %38 = tpu.matmul %35, %37, %cst_29 {dimension_numbers = #tpu.dot_dimension_numbers<[1], [0], [0], [1], [0, 0, 1, 1], [], []>} : vector<24x16xbf16>, vector<16x16xbf16>, vector<24x16xf32> -> vector<24x16xf32>
    %c0_30 = arith.constant 0 : index
    %c2_31 = arith.constant 2 : index
    %c0_32 = arith.constant 0 : index
    %c0_33 = arith.constant 0 : index
    %39 = vector.load %arg8[%c0_30, %c2_31, %c0_32, %c0_33] : memref<3x3x16x16xbf16, #tpu.memory_space<vmem>>, vector<1x1x16x16xbf16>
    %40 = vector.shape_cast %39 : vector<1x1x16x16xbf16> to vector<16x16xbf16>
    %cst_34 = arith.constant dense<0.000000e+00> : vector<24x16xf32>
    %41 = tpu.matmul %35, %40, %cst_34 {dimension_numbers = #tpu.dot_dimension_numbers<[1], [0], [0], [1], [0, 0, 1, 1], [], []>} : vector<24x16xbf16>, vector<16x16xbf16>, vector<24x16xf32> -> vector<24x16xf32>
    %42 = arith.addf %32, %38 : vector<24x16xf32>
    %43 = arith.addf %33, %41 : vector<24x16xf32>
    %c0_35 = arith.constant 0 : index
    %c0_36 = arith.constant 0 : index
    %c0_37 = arith.constant 0 : index
    %44 = vector.load %arg9[%c0_35, %c0_36, %c0_37] : memref<3x1x16xf32, #tpu.memory_space<vmem>>, vector<1x1x16xf32>
    %45 = vector.shape_cast %44 : vector<1x1x16xf32> to vector<1x16xf32>
    %46 = vector.broadcast %45 : vector<1x16xf32> to vector<24x16xf32>
    %47 = arith.addf %42, %46 : vector<24x16xf32>
    %48 = math.tanh %47 : vector<24x16xf32>
    %c0_38 = arith.constant 0 : index
    %c0_39 = arith.constant 0 : index
    %c0_40 = arith.constant 0 : index
    %49 = vector.load %arg10[%c0_38, %c0_39, %c0_40] : memref<3x1x16xf32, #tpu.memory_space<vmem>>, vector<1x1x16xf32>
    %50 = vector.shape_cast %49 : vector<1x1x16xf32> to vector<1x16xf32>
    %51 = vector.broadcast %50 : vector<1x16xf32> to vector<24x16xf32>
    %52 = arith.addf %43, %51 : vector<24x16xf32>
    %53 = arith.negf %52 : vector<24x16xf32>
    %54 = math.exp %53 : vector<24x16xf32>
    %cst_41 = arith.constant 1.000000e+00 : f32
    %55 = vector.broadcast %cst_41 : f32 to vector<24x16xf32>
    %56 = arith.addf %55, %54 : vector<24x16xf32>
    %57 = arith.divf %55, %56 : vector<24x16xf32>
    %58 = arith.mulf %48, %57 : vector<24x16xf32>
    %59 = arith.truncf %58 : vector<24x16xf32> to vector<24x16xbf16>
    %c0_42 = arith.constant 0 : index
    %c0_43 = arith.constant 0 : index
    %c0_44 = arith.constant 0 : index
    %60 = vector.load %arg13[%c0_42, %c0_43, %c0_44] : memref<3x16x16xbf16, #tpu.memory_space<vmem>>, vector<1x16x16xbf16>
    %61 = vector.shape_cast %60 : vector<1x16x16xbf16> to vector<16x16xbf16>
    %cst_45 = arith.constant dense<0.000000e+00> : vector<24x16xf32>
    %62 = tpu.matmul %59, %61, %cst_45 {dimension_numbers = #tpu.dot_dimension_numbers<[1], [0], [0], [1], [0, 0, 1, 1], [], []>} : vector<24x16xbf16>, vector<16x16xbf16>, vector<24x16xf32> -> vector<24x16xf32>
    %c0_46 = arith.constant 0 : index
    %c0_47 = arith.constant 0 : index
    %c0_48 = arith.constant 0 : index
    %63 = vector.load %arg14[%c0_46, %c0_47, %c0_48] : memref<3x1x16xf32, #tpu.memory_space<vmem>>, vector<1x1x16xf32>
    %64 = vector.shape_cast %63 : vector<1x1x16xf32> to vector<1x16xf32>
    %65 = vector.broadcast %64 : vector<1x16xf32> to vector<24x16xf32>
    %66 = arith.addf %62, %65 : vector<24x16xf32>
    %c0_49 = arith.constant 0 : index
    %c0_50 = arith.constant 0 : index
    %c0_51 = arith.constant 0 : index
    %67 = vector.load %arg11[%c0_49, %c0_50, %c0_51] : memref<3x16x16xbf16, #tpu.memory_space<vmem>>, vector<1x16x16xbf16>
    %68 = vector.shape_cast %67 : vector<1x16x16xbf16> to vector<16x16xbf16>
    %cst_52 = arith.constant dense<0.000000e+00> : vector<24x16xf32>
    %69 = tpu.matmul %59, %68, %cst_52 {dimension_numbers = #tpu.dot_dimension_numbers<[1], [0], [0], [1], [0, 0, 1, 1], [], []>} : vector<24x16xbf16>, vector<16x16xbf16>, vector<24x16xf32> -> vector<24x16xf32>
    %c0_53 = arith.constant 0 : index
    %c0_54 = arith.constant 0 : index
    %c0_55 = arith.constant 0 : index
    %70 = vector.load %arg12[%c0_53, %c0_54, %c0_55] : memref<3x1x16xf32, #tpu.memory_space<vmem>>, vector<1x1x16xf32>
    %71 = vector.shape_cast %70 : vector<1x1x16xf32> to vector<1x16xf32>
    %72 = vector.broadcast %71 : vector<1x16xf32> to vector<24x16xf32>
    %73 = arith.addf %69, %72 : vector<24x16xf32>
    %74 = arith.addf %16, %73 : vector<24x16xf32>
    %75 = arith.mulf %74, %10 : vector<24x16xf32>
    %c2_i32 = arith.constant 2 : i32
    %76 = tpu.dynamic_rotate %75 by %c2_i32 dim 0 : vector<24x16xf32>, i32 -> vector<24x16xf32>
    %77 = arith.truncf %76 : vector<24x16xf32> to vector<24x16xbf16>
    %c1_56 = arith.constant 1 : index
    %c0_57 = arith.constant 0 : index
    %c0_58 = arith.constant 0 : index
    %c0_59 = arith.constant 0 : index
    %78 = vector.load %arg7[%c1_56, %c0_57, %c0_58, %c0_59] : memref<3x3x16x16xbf16, #tpu.memory_space<vmem>>, vector<1x1x16x16xbf16>
    %79 = vector.shape_cast %78 : vector<1x1x16x16xbf16> to vector<16x16xbf16>
    %cst_60 = arith.constant dense<0.000000e+00> : vector<24x16xf32>
    %80 = tpu.matmul %77, %79, %cst_60 {dimension_numbers = #tpu.dot_dimension_numbers<[1], [0], [0], [1], [0, 0, 1, 1], [], []>} : vector<24x16xbf16>, vector<16x16xbf16>, vector<24x16xf32> -> vector<24x16xf32>
    %c1_61 = arith.constant 1 : index
    %c0_62 = arith.constant 0 : index
    %c0_63 = arith.constant 0 : index
    %c0_64 = arith.constant 0 : index
    %81 = vector.load %arg8[%c1_61, %c0_62, %c0_63, %c0_64] : memref<3x3x16x16xbf16, #tpu.memory_space<vmem>>, vector<1x1x16x16xbf16>
    %82 = vector.shape_cast %81 : vector<1x1x16x16xbf16> to vector<16x16xbf16>
    %cst_65 = arith.constant dense<0.000000e+00> : vector<24x16xf32>
    %83 = tpu.matmul %77, %82, %cst_65 {dimension_numbers = #tpu.dot_dimension_numbers<[1], [0], [0], [1], [0, 0, 1, 1], [], []>} : vector<24x16xbf16>, vector<16x16xbf16>, vector<24x16xf32> -> vector<24x16xf32>
    %84 = arith.truncf %75 : vector<24x16xf32> to vector<24x16xbf16>
    %c1_66 = arith.constant 1 : index
    %c1_67 = arith.constant 1 : index
    %c0_68 = arith.constant 0 : index
    %c0_69 = arith.constant 0 : index
    %85 = vector.load %arg7[%c1_66, %c1_67, %c0_68, %c0_69] : memref<3x3x16x16xbf16, #tpu.memory_space<vmem>>, vector<1x1x16x16xbf16>
    %86 = vector.shape_cast %85 : vector<1x1x16x16xbf16> to vector<16x16xbf16>
    %cst_70 = arith.constant dense<0.000000e+00> : vector<24x16xf32>
    %87 = tpu.matmul %84, %86, %cst_70 {dimension_numbers = #tpu.dot_dimension_numbers<[1], [0], [0], [1], [0, 0, 1, 1], [], []>} : vector<24x16xbf16>, vector<16x16xbf16>, vector<24x16xf32> -> vector<24x16xf32>
    %c1_71 = arith.constant 1 : index
    %c1_72 = arith.constant 1 : index
    %c0_73 = arith.constant 0 : index
    %c0_74 = arith.constant 0 : index
    %88 = vector.load %arg8[%c1_71, %c1_72, %c0_73, %c0_74] : memref<3x3x16x16xbf16, #tpu.memory_space<vmem>>, vector<1x1x16x16xbf16>
    %89 = vector.shape_cast %88 : vector<1x1x16x16xbf16> to vector<16x16xbf16>
    %cst_75 = arith.constant dense<0.000000e+00> : vector<24x16xf32>
    %90 = tpu.matmul %84, %89, %cst_75 {dimension_numbers = #tpu.dot_dimension_numbers<[1], [0], [0], [1], [0, 0, 1, 1], [], []>} : vector<24x16xbf16>, vector<16x16xbf16>, vector<24x16xf32> -> vector<24x16xf32>
    %91 = arith.addf %80, %87 : vector<24x16xf32>
    %92 = arith.addf %83, %90 : vector<24x16xf32>
    %c22_i32 = arith.constant 22 : i32
    %93 = tpu.dynamic_rotate %75 by %c22_i32 dim 0 : vector<24x16xf32>, i32 -> vector<24x16xf32>
    %94 = arith.truncf %93 : vector<24x16xf32> to vector<24x16xbf16>
    %c1_76 = arith.constant 1 : index
    %c2_77 = arith.constant 2 : index
    %c0_78 = arith.constant 0 : index
    %c0_79 = arith.constant 0 : index
    %95 = vector.load %arg7[%c1_76, %c2_77, %c0_78, %c0_79] : memref<3x3x16x16xbf16, #tpu.memory_space<vmem>>, vector<1x1x16x16xbf16>
    %96 = vector.shape_cast %95 : vector<1x1x16x16xbf16> to vector<16x16xbf16>
    %cst_80 = arith.constant dense<0.000000e+00> : vector<24x16xf32>
    %97 = tpu.matmul %94, %96, %cst_80 {dimension_numbers = #tpu.dot_dimension_numbers<[1], [0], [0], [1], [0, 0, 1, 1], [], []>} : vector<24x16xbf16>, vector<16x16xbf16>, vector<24x16xf32> -> vector<24x16xf32>
    %c1_81 = arith.constant 1 : index
    %c2_82 = arith.constant 2 : index
    %c0_83 = arith.constant 0 : index
    %c0_84 = arith.constant 0 : index
    %98 = vector.load %arg8[%c1_81, %c2_82, %c0_83, %c0_84] : memref<3x3x16x16xbf16, #tpu.memory_space<vmem>>, vector<1x1x16x16xbf16>
    %99 = vector.shape_cast %98 : vector<1x1x16x16xbf16> to vector<16x16xbf16>
    %cst_85 = arith.constant dense<0.000000e+00> : vector<24x16xf32>
    %100 = tpu.matmul %94, %99, %cst_85 {dimension_numbers = #tpu.dot_dimension_numbers<[1], [0], [0], [1], [0, 0, 1, 1], [], []>} : vector<24x16xbf16>, vector<16x16xbf16>, vector<24x16xf32> -> vector<24x16xf32>
    %101 = arith.addf %91, %97 : vector<24x16xf32>
    %102 = arith.addf %92, %100 : vector<24x16xf32>
    %c1_86 = arith.constant 1 : index
    %c0_87 = arith.constant 0 : index
    %c0_88 = arith.constant 0 : index
    %103 = vector.load %arg9[%c1_86, %c0_87, %c0_88] : memref<3x1x16xf32, #tpu.memory_space<vmem>>, vector<1x1x16xf32>
    %104 = vector.shape_cast %103 : vector<1x1x16xf32> to vector<1x16xf32>
    %105 = vector.broadcast %104 : vector<1x16xf32> to vector<24x16xf32>
    %106 = arith.addf %101, %105 : vector<24x16xf32>
    %107 = math.tanh %106 : vector<24x16xf32>
    %c1_89 = arith.constant 1 : index
    %c0_90 = arith.constant 0 : index
    %c0_91 = arith.constant 0 : index
    %108 = vector.load %arg10[%c1_89, %c0_90, %c0_91] : memref<3x1x16xf32, #tpu.memory_space<vmem>>, vector<1x1x16xf32>
    %109 = vector.shape_cast %108 : vector<1x1x16xf32> to vector<1x16xf32>
    %110 = vector.broadcast %109 : vector<1x16xf32> to vector<24x16xf32>
    %111 = arith.addf %102, %110 : vector<24x16xf32>
    %112 = arith.negf %111 : vector<24x16xf32>
    %113 = math.exp %112 : vector<24x16xf32>
    %cst_92 = arith.constant 1.000000e+00 : f32
    %114 = vector.broadcast %cst_92 : f32 to vector<24x16xf32>
    %115 = arith.addf %114, %113 : vector<24x16xf32>
    %116 = arith.divf %114, %115 : vector<24x16xf32>
    %117 = arith.mulf %107, %116 : vector<24x16xf32>
    %118 = arith.truncf %117 : vector<24x16xf32> to vector<24x16xbf16>
    %c1_93 = arith.constant 1 : index
    %c0_94 = arith.constant 0 : index
    %c0_95 = arith.constant 0 : index
    %119 = vector.load %arg13[%c1_93, %c0_94, %c0_95] : memref<3x16x16xbf16, #tpu.memory_space<vmem>>, vector<1x16x16xbf16>
    %120 = vector.shape_cast %119 : vector<1x16x16xbf16> to vector<16x16xbf16>
    %cst_96 = arith.constant dense<0.000000e+00> : vector<24x16xf32>
    %121 = tpu.matmul %118, %120, %cst_96 {dimension_numbers = #tpu.dot_dimension_numbers<[1], [0], [0], [1], [0, 0, 1, 1], [], []>} : vector<24x16xbf16>, vector<16x16xbf16>, vector<24x16xf32> -> vector<24x16xf32>
    %c1_97 = arith.constant 1 : index
    %c0_98 = arith.constant 0 : index
    %c0_99 = arith.constant 0 : index
    %122 = vector.load %arg14[%c1_97, %c0_98, %c0_99] : memref<3x1x16xf32, #tpu.memory_space<vmem>>, vector<1x1x16xf32>
    %123 = vector.shape_cast %122 : vector<1x1x16xf32> to vector<1x16xf32>
    %124 = vector.broadcast %123 : vector<1x16xf32> to vector<24x16xf32>
    %125 = arith.addf %121, %124 : vector<24x16xf32>
    %126 = arith.addf %66, %125 : vector<24x16xf32>
    %c1_100 = arith.constant 1 : index
    %c0_101 = arith.constant 0 : index
    %c0_102 = arith.constant 0 : index
    %127 = vector.load %arg11[%c1_100, %c0_101, %c0_102] : memref<3x16x16xbf16, #tpu.memory_space<vmem>>, vector<1x16x16xbf16>
    %128 = vector.shape_cast %127 : vector<1x16x16xbf16> to vector<16x16xbf16>
    %cst_103 = arith.constant dense<0.000000e+00> : vector<24x16xf32>
    %129 = tpu.matmul %118, %128, %cst_103 {dimension_numbers = #tpu.dot_dimension_numbers<[1], [0], [0], [1], [0, 0, 1, 1], [], []>} : vector<24x16xbf16>, vector<16x16xbf16>, vector<24x16xf32> -> vector<24x16xf32>
    %c1_104 = arith.constant 1 : index
    %c0_105 = arith.constant 0 : index
    %c0_106 = arith.constant 0 : index
    %130 = vector.load %arg12[%c1_104, %c0_105, %c0_106] : memref<3x1x16xf32, #tpu.memory_space<vmem>>, vector<1x1x16xf32>
    %131 = vector.shape_cast %130 : vector<1x1x16xf32> to vector<1x16xf32>
    %132 = vector.broadcast %131 : vector<1x16xf32> to vector<24x16xf32>
    %133 = arith.addf %129, %132 : vector<24x16xf32>
    %134 = arith.addf %75, %133 : vector<24x16xf32>
    %135 = arith.mulf %134, %10 : vector<24x16xf32>
    %c4_i32 = arith.constant 4 : i32
    %136 = tpu.dynamic_rotate %135 by %c4_i32 dim 0 : vector<24x16xf32>, i32 -> vector<24x16xf32>
    %137 = arith.truncf %136 : vector<24x16xf32> to vector<24x16xbf16>
    %c2_107 = arith.constant 2 : index
    %c0_108 = arith.constant 0 : index
    %c0_109 = arith.constant 0 : index
    %c0_110 = arith.constant 0 : index
    %138 = vector.load %arg7[%c2_107, %c0_108, %c0_109, %c0_110] : memref<3x3x16x16xbf16, #tpu.memory_space<vmem>>, vector<1x1x16x16xbf16>
    %139 = vector.shape_cast %138 : vector<1x1x16x16xbf16> to vector<16x16xbf16>
    %cst_111 = arith.constant dense<0.000000e+00> : vector<24x16xf32>
    %140 = tpu.matmul %137, %139, %cst_111 {dimension_numbers = #tpu.dot_dimension_numbers<[1], [0], [0], [1], [0, 0, 1, 1], [], []>} : vector<24x16xbf16>, vector<16x16xbf16>, vector<24x16xf32> -> vector<24x16xf32>
    %c2_112 = arith.constant 2 : index
    %c0_113 = arith.constant 0 : index
    %c0_114 = arith.constant 0 : index
    %c0_115 = arith.constant 0 : index
    %141 = vector.load %arg8[%c2_112, %c0_113, %c0_114, %c0_115] : memref<3x3x16x16xbf16, #tpu.memory_space<vmem>>, vector<1x1x16x16xbf16>
    %142 = vector.shape_cast %141 : vector<1x1x16x16xbf16> to vector<16x16xbf16>
    %cst_116 = arith.constant dense<0.000000e+00> : vector<24x16xf32>
    %143 = tpu.matmul %137, %142, %cst_116 {dimension_numbers = #tpu.dot_dimension_numbers<[1], [0], [0], [1], [0, 0, 1, 1], [], []>} : vector<24x16xbf16>, vector<16x16xbf16>, vector<24x16xf32> -> vector<24x16xf32>
    %144 = arith.truncf %135 : vector<24x16xf32> to vector<24x16xbf16>
    %c2_117 = arith.constant 2 : index
    %c1_118 = arith.constant 1 : index
    %c0_119 = arith.constant 0 : index
    %c0_120 = arith.constant 0 : index
    %145 = vector.load %arg7[%c2_117, %c1_118, %c0_119, %c0_120] : memref<3x3x16x16xbf16, #tpu.memory_space<vmem>>, vector<1x1x16x16xbf16>
    %146 = vector.shape_cast %145 : vector<1x1x16x16xbf16> to vector<16x16xbf16>
    %cst_121 = arith.constant dense<0.000000e+00> : vector<24x16xf32>
    %147 = tpu.matmul %144, %146, %cst_121 {dimension_numbers = #tpu.dot_dimension_numbers<[1], [0], [0], [1], [0, 0, 1, 1], [], []>} : vector<24x16xbf16>, vector<16x16xbf16>, vector<24x16xf32> -> vector<24x16xf32>
    %c2_122 = arith.constant 2 : index
    %c1_123 = arith.constant 1 : index
    %c0_124 = arith.constant 0 : index
    %c0_125 = arith.constant 0 : index
    %148 = vector.load %arg8[%c2_122, %c1_123, %c0_124, %c0_125] : memref<3x3x16x16xbf16, #tpu.memory_space<vmem>>, vector<1x1x16x16xbf16>
    %149 = vector.shape_cast %148 : vector<1x1x16x16xbf16> to vector<16x16xbf16>
    %cst_126 = arith.constant dense<0.000000e+00> : vector<24x16xf32>
    %150 = tpu.matmul %144, %149, %cst_126 {dimension_numbers = #tpu.dot_dimension_numbers<[1], [0], [0], [1], [0, 0, 1, 1], [], []>} : vector<24x16xbf16>, vector<16x16xbf16>, vector<24x16xf32> -> vector<24x16xf32>
    %151 = arith.addf %140, %147 : vector<24x16xf32>
    %152 = arith.addf %143, %150 : vector<24x16xf32>
    %c20_i32 = arith.constant 20 : i32
    %153 = tpu.dynamic_rotate %135 by %c20_i32 dim 0 : vector<24x16xf32>, i32 -> vector<24x16xf32>
    %154 = arith.truncf %153 : vector<24x16xf32> to vector<24x16xbf16>
    %c2_127 = arith.constant 2 : index
    %c2_128 = arith.constant 2 : index
    %c0_129 = arith.constant 0 : index
    %c0_130 = arith.constant 0 : index
    %155 = vector.load %arg7[%c2_127, %c2_128, %c0_129, %c0_130] : memref<3x3x16x16xbf16, #tpu.memory_space<vmem>>, vector<1x1x16x16xbf16>
    %156 = vector.shape_cast %155 : vector<1x1x16x16xbf16> to vector<16x16xbf16>
    %cst_131 = arith.constant dense<0.000000e+00> : vector<24x16xf32>
    %157 = tpu.matmul %154, %156, %cst_131 {dimension_numbers = #tpu.dot_dimension_numbers<[1], [0], [0], [1], [0, 0, 1, 1], [], []>} : vector<24x16xbf16>, vector<16x16xbf16>, vector<24x16xf32> -> vector<24x16xf32>
    %c2_132 = arith.constant 2 : index
    %c2_133 = arith.constant 2 : index
    %c0_134 = arith.constant 0 : index
    %c0_135 = arith.constant 0 : index
    %158 = vector.load %arg8[%c2_132, %c2_133, %c0_134, %c0_135] : memref<3x3x16x16xbf16, #tpu.memory_space<vmem>>, vector<1x1x16x16xbf16>
    %159 = vector.shape_cast %158 : vector<1x1x16x16xbf16> to vector<16x16xbf16>
    %cst_136 = arith.constant dense<0.000000e+00> : vector<24x16xf32>
    %160 = tpu.matmul %154, %159, %cst_136 {dimension_numbers = #tpu.dot_dimension_numbers<[1], [0], [0], [1], [0, 0, 1, 1], [], []>} : vector<24x16xbf16>, vector<16x16xbf16>, vector<24x16xf32> -> vector<24x16xf32>
    %161 = arith.addf %151, %157 : vector<24x16xf32>
    %162 = arith.addf %152, %160 : vector<24x16xf32>
    %c2_137 = arith.constant 2 : index
    %c0_138 = arith.constant 0 : index
    %c0_139 = arith.constant 0 : index
    %163 = vector.load %arg9[%c2_137, %c0_138, %c0_139] : memref<3x1x16xf32, #tpu.memory_space<vmem>>, vector<1x1x16xf32>
    %164 = vector.shape_cast %163 : vector<1x1x16xf32> to vector<1x16xf32>
    %165 = vector.broadcast %164 : vector<1x16xf32> to vector<24x16xf32>
    %166 = arith.addf %161, %165 : vector<24x16xf32>
    %167 = math.tanh %166 : vector<24x16xf32>
    %c2_140 = arith.constant 2 : index
    %c0_141 = arith.constant 0 : index
    %c0_142 = arith.constant 0 : index
    %168 = vector.load %arg10[%c2_140, %c0_141, %c0_142] : memref<3x1x16xf32, #tpu.memory_space<vmem>>, vector<1x1x16xf32>
    %169 = vector.shape_cast %168 : vector<1x1x16xf32> to vector<1x16xf32>
    %170 = vector.broadcast %169 : vector<1x16xf32> to vector<24x16xf32>
    %171 = arith.addf %162, %170 : vector<24x16xf32>
    %172 = arith.negf %171 : vector<24x16xf32>
    %173 = math.exp %172 : vector<24x16xf32>
    %cst_143 = arith.constant 1.000000e+00 : f32
    %174 = vector.broadcast %cst_143 : f32 to vector<24x16xf32>
    %175 = arith.addf %174, %173 : vector<24x16xf32>
    %176 = arith.divf %174, %175 : vector<24x16xf32>
    %177 = arith.mulf %167, %176 : vector<24x16xf32>
    %178 = arith.truncf %177 : vector<24x16xf32> to vector<24x16xbf16>
    %c2_144 = arith.constant 2 : index
    %c0_145 = arith.constant 0 : index
    %c0_146 = arith.constant 0 : index
    %179 = vector.load %arg13[%c2_144, %c0_145, %c0_146] : memref<3x16x16xbf16, #tpu.memory_space<vmem>>, vector<1x16x16xbf16>
    %180 = vector.shape_cast %179 : vector<1x16x16xbf16> to vector<16x16xbf16>
    %cst_147 = arith.constant dense<0.000000e+00> : vector<24x16xf32>
    %181 = tpu.matmul %178, %180, %cst_147 {dimension_numbers = #tpu.dot_dimension_numbers<[1], [0], [0], [1], [0, 0, 1, 1], [], []>} : vector<24x16xbf16>, vector<16x16xbf16>, vector<24x16xf32> -> vector<24x16xf32>
    %c2_148 = arith.constant 2 : index
    %c0_149 = arith.constant 0 : index
    %c0_150 = arith.constant 0 : index
    %182 = vector.load %arg14[%c2_148, %c0_149, %c0_150] : memref<3x1x16xf32, #tpu.memory_space<vmem>>, vector<1x1x16xf32>
    %183 = vector.shape_cast %182 : vector<1x1x16xf32> to vector<1x16xf32>
    %184 = vector.broadcast %183 : vector<1x16xf32> to vector<24x16xf32>
    %185 = arith.addf %181, %184 : vector<24x16xf32>
    %186 = arith.addf %126, %185 : vector<24x16xf32>
    %187 = vector.extract_strided_slice %186 {offsets = [8, 0], sizes = [8, 16], strides = [1, 1]} : vector<24x16xf32> to vector<8x16xf32>
    %188 = vector.extract_strided_slice %10 {offsets = [8, 0], sizes = [8, 16], strides = [1, 1]} : vector<24x16xf32> to vector<8x16xf32>
    %189 = arith.mulf %187, %188 : vector<8x16xf32>
    %190 = arith.truncf %189 : vector<8x16xf32> to vector<8x16xbf16>
    %191 = vector.extract_strided_slice %8 {offsets = [8, 0], sizes = [8, 1], strides = [1, 1]} : vector<24x1xf32> to vector<8x1xf32>
    %192 = vector.shape_cast %191 : vector<8x1xf32> to vector<8x1xf32>
    %193 = vector.broadcast %192 : vector<8x1xf32> to vector<8x128xf32>
    %c0_151 = arith.constant 0 : index
    %c0_152 = arith.constant 0 : index
    %194 = vector.load %arg15[%c0_151, %c0_152] : memref<16x128xbf16, #tpu.memory_space<vmem>>, vector<16x128xbf16>
    %cst_153 = arith.constant dense<0.000000e+00> : vector<8x128xf32>
    %195 = tpu.matmul %190, %194, %cst_153 {dimension_numbers = #tpu.dot_dimension_numbers<[1], [0], [0], [1], [0, 0, 1, 1], [], []>} : vector<8x16xbf16>, vector<16x128xbf16>, vector<8x128xf32> -> vector<8x128xf32>
    %c0_154 = arith.constant 0 : index
    %c0_155 = arith.constant 0 : index
    %196 = vector.load %arg16[%c0_154, %c0_155] : memref<1x128xf32, #tpu.memory_space<vmem>>, vector<1x128xf32>
    %197 = vector.broadcast %196 : vector<1x128xf32> to vector<8x128xf32>
    %198 = arith.addf %195, %197 : vector<8x128xf32>
    %199 = arith.mulf %198, %193 : vector<8x128xf32>
    %c0_156 = arith.constant 0 : index
    %c0_157 = arith.constant 0 : index
    %200 = vector.load %arg17[%c0_156, %c0_157] : memref<16x128xbf16, #tpu.memory_space<vmem>>, vector<16x128xbf16>
    %cst_158 = arith.constant dense<0.000000e+00> : vector<8x128xf32>
    %201 = tpu.matmul %190, %200, %cst_158 {dimension_numbers = #tpu.dot_dimension_numbers<[1], [0], [0], [1], [0, 0, 1, 1], [], []>} : vector<8x16xbf16>, vector<16x128xbf16>, vector<8x128xf32> -> vector<8x128xf32>
    %c0_159 = arith.constant 0 : index
    %c0_160 = arith.constant 0 : index
    %202 = vector.load %arg18[%c0_159, %c0_160] : memref<1x128xf32, #tpu.memory_space<vmem>>, vector<1x128xf32>
    %203 = vector.broadcast %202 : vector<1x128xf32> to vector<8x128xf32>
    %204 = arith.addf %201, %203 : vector<8x128xf32>
    %205 = arith.mulf %204, %193 : vector<8x128xf32>
    %c0_161 = arith.constant 0 : index
    %c0_162 = arith.constant 0 : index
    %c0_163 = arith.constant 0 : index
    %206 = vector.load %arg4[%c0_161, %c0_162, %c0_163] : memref<1x8x128xf32, #tpu.memory_space<vmem>>, vector<1x8x128xf32>
    %207 = vector.shape_cast %206 : vector<1x8x128xf32> to vector<8x128xf32>
    %208 = math.exp %205 : vector<8x128xf32>
    %209 = arith.mulf %207, %208 : vector<8x128xf32>
    %210 = arith.mulf %209, %193 : vector<8x128xf32>
    %211 = arith.addf %199, %210 : vector<8x128xf32>
    %c0_164 = arith.constant 0 : index
    %c0_165 = arith.constant 0 : index
    %c0_166 = arith.constant 0 : index
    %212 = vector.load %arg19[%c0_164, %c0_165, %c0_166] : memref<1x8x128xf32, #tpu.memory_space<vmem>>, vector<1x8x128xf32>
    %213 = vector.shape_cast %212 : vector<1x8x128xf32> to vector<8x128xf32>
    %214 = vector.shape_cast %211 : vector<8x128xf32> to vector<1x8x128xf32>
    tpu.vector_store %arg19[%c0_164, %c0_165, %c0_166], %214 {strides = array<i32>} : memref<1x8x128xf32, #tpu.memory_space<vmem>>, vector<1x8x128xf32>,
    %cst_167 = arith.constant 0.000000e+00 : f32
    %215 = vector.broadcast %cst_167 : f32 to vector<1x1x8x128xf32>
    %216 = vector.shape_cast %205 : vector<8x128xf32> to vector<1x8x128xf32>
    %cst_168 = arith.constant dense<0.000000e+00> : vector<1xf32>
    %217 = vector.multi_reduction <add>, %216, %cst_168 [1, 2] : vector<1x8x128xf32> to vector<1xf32>
    %218 = vector.shape_cast %217 : vector<1xf32> to vector<1x1x1xf32>
    %219 = vector.extract %218[0, 0, 0] : f32 from vector<1x1x1xf32>
    %220 = vector.broadcast %219 : f32 to vector<1x1x8x128xf32>
    %221 = arith.addf %215, %220 : vector<1x1x8x128xf32>
    %c0_169 = arith.constant 0 : index
    %c0_170 = arith.constant 0 : index
    %c0_171 = arith.constant 0 : index
    %c0_172 = arith.constant 0 : index
    %222 = vector.load %arg20[%c0_169, %c0_170, %c0_171, %c0_172] : memref<1x1x8x128xf32, #tpu.memory_space<vmem>>, vector<1x1x8x128xf32>
    tpu.vector_store %arg20[%c0_169, %c0_170, %c0_171, %c0_172], %221 {strides = array<i32>} : memref<1x1x8x128xf32, #tpu.memory_space<vmem>>, vector<1x1x8x128xf32>,
    return
  }
  func.func @transform_0(%arg0: i32, %arg1: i32) -> (i32, i32, i32) {
    %c0_i32 = arith.constant 0 : i32
    %c0_i32_0 = arith.constant 0 : i32
    %c0_i32_1 = arith.constant 0 : i32
    return %arg0, %c0_i32, %c0_i32_0 : i32, i32, i32
  }
  func.func @transform_1(%arg0: i32, %arg1: i32) -> (i32, i32, i32) {
    %c0_i32 = arith.constant 0 : i32
    %c0_i32_0 = arith.constant 0 : i32
    %c0_i32_1 = arith.constant 0 : i32
    return %arg0, %c0_i32, %c0_i32_0 : i32, i32, i32
  }
  func.func @transform_2(%arg0: i32, %arg1: i32) -> (i32, i32, i32) {
    %c0_i32 = arith.constant 0 : i32
    %c0_i32_0 = arith.constant 0 : i32
    return %arg0, %arg1, %c0_i32 : i32, i32, i32
  }
  func.func @transform_3(%arg0: i32, %arg1: i32) -> (i32, i32) {
    %c0_i32 = arith.constant 0 : i32
    %c0_i32_0 = arith.constant 0 : i32
    %c0_i32_1 = arith.constant 0 : i32
    return %c0_i32, %c0_i32_0 : i32, i32
  }
  func.func @transform_4(%arg0: i32, %arg1: i32) -> (i32, i32) {
    %c0_i32 = arith.constant 0 : i32
    %c0_i32_0 = arith.constant 0 : i32
    %c0_i32_1 = arith.constant 0 : i32
    return %c0_i32, %c0_i32_0 : i32, i32
  }
  func.func @transform_5(%arg0: i32, %arg1: i32) -> (i32, i32, i32, i32) {
    %c0_i32 = arith.constant 0 : i32
    %c0_i32_0 = arith.constant 0 : i32
    %c0_i32_1 = arith.constant 0 : i32
    %c0_i32_2 = arith.constant 0 : i32
    %c0_i32_3 = arith.constant 0 : i32
    return %c0_i32, %c0_i32_0, %c0_i32_1, %c0_i32_2 : i32, i32, i32, i32
  }
  func.func @transform_6(%arg0: i32, %arg1: i32) -> (i32, i32, i32, i32) {
    %c0_i32 = arith.constant 0 : i32
    %c0_i32_0 = arith.constant 0 : i32
    %c0_i32_1 = arith.constant 0 : i32
    %c0_i32_2 = arith.constant 0 : i32
    %c0_i32_3 = arith.constant 0 : i32
    return %c0_i32, %c0_i32_0, %c0_i32_1, %c0_i32_2 : i32, i32, i32, i32
  }
  func.func @transform_7(%arg0: i32, %arg1: i32) -> (i32, i32, i32) {
    %c0_i32 = arith.constant 0 : i32
    %c0_i32_0 = arith.constant 0 : i32
    %c0_i32_1 = arith.constant 0 : i32
    %c0_i32_2 = arith.constant 0 : i32
    return %c0_i32, %c0_i32_0, %c0_i32_1 : i32, i32, i32
  }
  func.func @transform_8(%arg0: i32, %arg1: i32) -> (i32, i32, i32) {
    %c0_i32 = arith.constant 0 : i32
    %c0_i32_0 = arith.constant 0 : i32
    %c0_i32_1 = arith.constant 0 : i32
    %c0_i32_2 = arith.constant 0 : i32
    return %c0_i32, %c0_i32_0, %c0_i32_1 : i32, i32, i32
  }
  func.func @transform_9(%arg0: i32, %arg1: i32) -> (i32, i32, i32) {
    %c0_i32 = arith.constant 0 : i32
    %c0_i32_0 = arith.constant 0 : i32
    %c0_i32_1 = arith.constant 0 : i32
    %c0_i32_2 = arith.constant 0 : i32
    return %c0_i32, %c0_i32_0, %c0_i32_1 : i32, i32, i32
  }
  func.func @transform_10(%arg0: i32, %arg1: i32) -> (i32, i32, i32) {
    %c0_i32 = arith.constant 0 : i32
    %c0_i32_0 = arith.constant 0 : i32
    %c0_i32_1 = arith.constant 0 : i32
    %c0_i32_2 = arith.constant 0 : i32
    return %c0_i32, %c0_i32_0, %c0_i32_1 : i32, i32, i32
  }
  func.func @transform_11(%arg0: i32, %arg1: i32) -> (i32, i32, i32) {
    %c0_i32 = arith.constant 0 : i32
    %c0_i32_0 = arith.constant 0 : i32
    %c0_i32_1 = arith.constant 0 : i32
    %c0_i32_2 = arith.constant 0 : i32
    return %c0_i32, %c0_i32_0, %c0_i32_1 : i32, i32, i32
  }
  func.func @transform_12(%arg0: i32, %arg1: i32) -> (i32, i32, i32) {
    %c0_i32 = arith.constant 0 : i32
    %c0_i32_0 = arith.constant 0 : i32
    %c0_i32_1 = arith.constant 0 : i32
    %c0_i32_2 = arith.constant 0 : i32
    return %c0_i32, %c0_i32_0, %c0_i32_1 : i32, i32, i32
  }
  func.func @transform_13(%arg0: i32, %arg1: i32) -> (i32, i32) {
    %c0_i32 = arith.constant 0 : i32
    %c0_i32_0 = arith.constant 0 : i32
    %c0_i32_1 = arith.constant 0 : i32
    return %c0_i32, %c0_i32_0 : i32, i32
  }
  func.func @transform_14(%arg0: i32, %arg1: i32) -> (i32, i32) {
    %c0_i32 = arith.constant 0 : i32
    %c0_i32_0 = arith.constant 0 : i32
    %c0_i32_1 = arith.constant 0 : i32
    return %c0_i32, %c0_i32_0 : i32, i32
  }
  func.func @transform_15(%arg0: i32, %arg1: i32) -> (i32, i32) {
    %c0_i32 = arith.constant 0 : i32
    %c0_i32_0 = arith.constant 0 : i32
    %c0_i32_1 = arith.constant 0 : i32
    return %c0_i32, %c0_i32_0 : i32, i32
  }
  func.func @transform_16(%arg0: i32, %arg1: i32) -> (i32, i32) {
    %c0_i32 = arith.constant 0 : i32
    %c0_i32_0 = arith.constant 0 : i32
    %c0_i32_1 = arith.constant 0 : i32
    return %c0_i32, %c0_i32_0 : i32, i32
  }
  func.func @transform_17(%arg0: i32, %arg1: i32) -> (i32, i32, i32) {
    %c0_i32 = arith.constant 0 : i32
    %c0_i32_0 = arith.constant 0 : i32
    return %arg0, %arg1, %c0_i32 : i32, i32, i32
  }
  func.func @transform_18(%arg0: i32, %arg1: i32) -> (i32, i32, i32, i32) {
    %c0_i32 = arith.constant 0 : i32
    %c0_i32_0 = arith.constant 0 : i32
    %c0_i32_1 = arith.constant 0 : i32
    return %arg0, %arg1, %c0_i32, %c0_i32_0 : i32, i32, i32, i32
  }
}

module attributes {stable_mosaic.version = 11 : i64} {
  func.func @_coupling_kernel(%arg0: i32, %arg1: i32, %arg2: memref<1x32x2xf32, #tpu.memory_space<vmem>>, %arg3: memref<1x32x1xf32, #tpu.memory_space<vmem>>, %arg4: memref<1x8x128xf32, #tpu.memory_space<vmem>>, %arg5: memref<2x16xbf16, #tpu.memory_space<vmem>>, %arg6: memref<1x16xf32, #tpu.memory_space<vmem>>, %arg7: memref<3x3x16x16xbf16, #tpu.memory_space<vmem>>, %arg8: memref<3x3x16x16xbf16, #tpu.memory_space<vmem>>, %arg9: memref<3x1x16xf32, #tpu.memory_space<vmem>>, %arg10: memref<3x1x16xf32, #tpu.memory_space<vmem>>, %arg11: memref<3x16x16xbf16, #tpu.memory_space<vmem>>, %arg12: memref<3x1x16xf32, #tpu.memory_space<vmem>>, %arg13: memref<3x16x16xbf16, #tpu.memory_space<vmem>>, %arg14: memref<3x1x16xf32, #tpu.memory_space<vmem>>, %arg15: memref<16x128xbf16, #tpu.memory_space<vmem>>, %arg16: memref<1x128xf32, #tpu.memory_space<vmem>>, %arg17: memref<16x128xbf16, #tpu.memory_space<vmem>>, %arg18: memref<1x128xf32, #tpu.memory_space<vmem>>, %arg19: memref<1x8x128xf32, #tpu.memory_space<vmem>>, %arg20: memref<1x1x8x128xf32, #tpu.memory_space<vmem>>) attributes {dimension_semantics = [#tpu.dimension_semantics<parallel>, #tpu.dimension_semantics<parallel>], iteration_bounds = array<i64: 2, 2>, scalar_prefetch = 0 : i64, scratch_operands = 0 : i64, tpu.core_type = #tpu.core_type<tc>, window_params = [{transform_indices = @transform_0, window_bounds = array<i64: 1, 32, 2>}, {transform_indices = @transform_1, window_bounds = array<i64: 1, 32, 1>}, {transform_indices = @transform_2, window_bounds = array<i64: 1, 8, 128>}, {pipeline_mode = #tpu.pipeline_mode<synchronous>, transform_indices = @transform_3, window_bounds = array<i64: 2, 16>}, {pipeline_mode = #tpu.pipeline_mode<synchronous>, transform_indices = @transform_4, window_bounds = array<i64: 1, 16>}, {pipeline_mode = #tpu.pipeline_mode<synchronous>, transform_indices = @transform_5, window_bounds = array<i64: 3, 3, 16, 16>}, {pipeline_mode = #tpu.pipeline_mode<synchronous>, transform_indices = @transform_6, window_bounds = array<i64: 3, 3, 16, 16>}, {pipeline_mode = #tpu.pipeline_mode<synchronous>, transform_indices = @transform_7, window_bounds = array<i64: 3, 1, 16>}, {pipeline_mode = #tpu.pipeline_mode<synchronous>, transform_indices = @transform_8, window_bounds = array<i64: 3, 1, 16>}, {pipeline_mode = #tpu.pipeline_mode<synchronous>, transform_indices = @transform_9, window_bounds = array<i64: 3, 16, 16>}, {pipeline_mode = #tpu.pipeline_mode<synchronous>, transform_indices = @transform_10, window_bounds = array<i64: 3, 1, 16>}, {pipeline_mode = #tpu.pipeline_mode<synchronous>, transform_indices = @transform_11, window_bounds = array<i64: 3, 16, 16>}, {pipeline_mode = #tpu.pipeline_mode<synchronous>, transform_indices = @transform_12, window_bounds = array<i64: 3, 1, 16>}, {pipeline_mode = #tpu.pipeline_mode<synchronous>, transform_indices = @transform_13, window_bounds = array<i64: 16, 128>}, {pipeline_mode = #tpu.pipeline_mode<synchronous>, transform_indices = @transform_14, window_bounds = array<i64: 1, 128>}, {pipeline_mode = #tpu.pipeline_mode<synchronous>, transform_indices = @transform_15, window_bounds = array<i64: 16, 128>}, {pipeline_mode = #tpu.pipeline_mode<synchronous>, transform_indices = @transform_16, window_bounds = array<i64: 1, 128>}, {transform_indices = @transform_17, window_bounds = array<i64: 1, 8, 128>}, {transform_indices = @transform_18, window_bounds = array<i64: 1, 1, 8, 128>}]} {
    %c8_i32 = arith.constant 8 : i32
    %0 = arith.muli %arg1, %c8_i32 : i32
    %1 = tpu.assume_multiple %0, 8 : i32
    %c0 = arith.constant 0 : index
    %2 = arith.index_cast %1 : i32 to index
    %c0_0 = arith.constant 0 : index
    %3 = vector.load %arg2[%c0, %2, %c0_0] : memref<1x32x2xf32, #tpu.memory_space<vmem>>, vector<1x24x2xf32>
    %4 = vector.shape_cast %3 : vector<1x24x2xf32> to vector<24x2xf32>
    %5 = arith.truncf %4 : vector<24x2xf32> to vector<24x2xbf16>
    %c0_1 = arith.constant 0 : index
    %6 = arith.index_cast %1 : i32 to index
    %c0_2 = arith.constant 0 : index
    %7 = vector.load %arg3[%c0_1, %6, %c0_2] : memref<1x32x1xf32, #tpu.memory_space<vmem>>, vector<1x24x1xf32>
    %8 = vector.shape_cast %7 : vector<1x24x1xf32> to vector<24x1xf32>
    %9 = vector.shape_cast %8 : vector<24x1xf32> to vector<24x1xf32>
    %10 = vector.broadcast %9 : vector<24x1xf32> to vector<24x16xf32>
    %c0_3 = arith.constant 0 : index
    %c0_4 = arith.constant 0 : index
    %11 = vector.load %arg5[%c0_3, %c0_4] : memref<2x16xbf16, #tpu.memory_space<vmem>>, vector<2x16xbf16>
    %cst = arith.constant dense<0.000000e+00> : vector<24x16xf32>
    %12 = tpu.matmul %5, %11, %cst {dimension_numbers = #tpu.dot_dimension_numbers<[1], [0], [0], [1], [0, 0, 1, 1], [], []>} : vector<24x2xbf16>, vector<2x16xbf16>, vector<24x16xf32> -> vector<24x16xf32>
    %c0_5 = arith.constant 0 : index
    %c0_6 = arith.constant 0 : index
    %13 = vector.load %arg6[%c0_5, %c0_6] : memref<1x16xf32, #tpu.memory_space<vmem>>, vector<1x16xf32>
    %14 = vector.broadcast %13 : vector<1x16xf32> to vector<24x16xf32>
    %15 = arith.addf %12, %14 : vector<24x16xf32>
    %16 = arith.mulf %15, %10 : vector<24x16xf32>
    %c1_i32 = arith.constant 1 : i32
    %17 = tpu.dynamic_rotate %16 by %c1_i32 dim 0 : vector<24x16xf32>, i32 -> vector<24x16xf32>
    %18 = arith.truncf %17 : vector<24x16xf32> to vector<24x16xbf16>
    %c0_7 = arith.constant 0 : index
    %c0_8 = arith.constant 0 : index
    %c0_9 = arith.constant 0 : index
    %c0_10 = arith.constant 0 : index
    %19 = vector.load %arg7[%c0_7, %c0_8, %c0_9, %c0_10] : memref<3x3x16x16xbf16, #tpu.memory_space<vmem>>, vector<1x1x16x16xbf16>
    %20 = vector.shape_cast %19 : vector<1x1x16x16xbf16> to vector<16x16xbf16>
    %cst_11 = arith.constant dense<0.000000e+00> : vector<24x16xf32>
    %21 = tpu.matmul %18, %20, %cst_11 {dimension_numbers = #tpu.dot_dimension_numbers<[1], [0], [0], [1], [0, 0, 1, 1], [], []>} : vector<24x16xbf16>, vector<16x16xbf16>, vector<24x16xf32> -> vector<24x16xf32>
    %c0_12 = arith.constant 0 : index
    %c0_13 = arith.constant 0 : index
    %c0_14 = arith.constant 0 : index
    %c0_15 = arith.constant 0 : index
    %22 = vector.load %arg8[%c0_12, %c0_13, %c0_14, %c0_15] : memref<3x3x16x16xbf16, #tpu.memory_space<vmem>>, vector<1x1x16x16xbf16>
    %23 = vector.shape_cast %22 : vector<1x1x16x16xbf16> to vector<16x16xbf16>
    %cst_16 = arith.constant dense<0.000000e+00> : vector<24x16xf32>
    %24 = tpu.matmul %18, %23, %cst_16 {dimension_numbers = #tpu.dot_dimension_numbers<[1], [0], [0], [1], [0, 0, 1, 1], [], []>} : vector<24x16xbf16>, vector<16x16xbf16>, vector<24x16xf32> -> vector<24x16xf32>
    %25 = arith.truncf %16 : vector<24x16xf32> to vector<24x16xbf16>
    %c0_17 = arith.constant 0 : index
    %c1 = arith.constant 1 : index
    %c0_18 = arith.constant 0 : index
    %c0_19 = arith.constant 0 : index
    %26 = vector.load %arg7[%c0_17, %c1, %c0_18, %c0_19] : memref<3x3x16x16xbf16, #tpu.memory_space<vmem>>, vector<1x1x16x16xbf16>
    %27 = vector.shape_cast %26 : vector<1x1x16x16xbf16> to vector<16x16xbf16>
    %cst_20 = arith.constant dense<0.000000e+00> : vector<24x16xf32>
    %28 = tpu.matmul %25, %27, %cst_20 {dimension_numbers = #tpu.dot_dimension_numbers<[1], [0], [0], [1], [0, 0, 1, 1], [], []>} : vector<24x16xbf16>, vector<16x16xbf16>, vector<24x16xf32> -> vector<24x16xf32>
    %c0_21 = arith.constant 0 : index
    %c1_22 = arith.constant 1 : index
    %c0_23 = arith.constant 0 : index
    %c0_24 = arith.constant 0 : index
    %29 = vector.load %arg8[%c0_21, %c1_22, %c0_23, %c0_24] : memref<3x3x16x16xbf16, #tpu.memory_space<vmem>>, vector<1x1x16x16xbf16>
    %30 = vector.shape_cast %29 : vector<1x1x16x16xbf16> to vector<16x16xbf16>
    %cst_25 = arith.constant dense<0.000000e+00> : vector<24x16xf32>
    %31 = tpu.matmul %25, %30, %cst_25 {dimension_numbers = #tpu.dot_dimension_numbers<[1], [0], [0], [1], [0, 0, 1, 1], [], []>} : vector<24x16xbf16>, vector<16x16xbf16>, vector<24x16xf32> -> vector<24x16xf32>
    %32 = arith.addf %21, %28 : vector<24x16xf32>
    %33 = arith.addf %24, %31 : vector<24x16xf32>
    %c23_i32 = arith.constant 23 : i32
    %34 = tpu.dynamic_rotate %16 by %c23_i32 dim 0 : vector<24x16xf32>, i32 -> vector<24x16xf32>
    %35 = arith.truncf %34 : vector<24x16xf32> to vector<24x16xbf16>
    %c0_26 = arith.constant 0 : index
    %c2 = arith.constant 2 : index
    %c0_27 = arith.constant 0 : index
    %c0_28 = arith.constant 0 : index
    %36 = vector.load %arg7[%c0_26, %c2, %c0_27, %c0_28] : memref<3x3x16x16xbf16, #tpu.memory_space<vmem>>, vector<1x1x16x16xbf16>
    %37 = vector.shape_cast %36 : vector<1x1x16x16xbf16> to vector<16x16xbf16>
    %cst_29 = arith.constant dense<0.000000e+00> : vector<24x16xf32>
    %38 = tpu.matmul %35, %37, %cst_29 {dimension_numbers = #tpu.dot_dimension_numbers<[1], [0], [0], [1], [0, 0, 1, 1], [], []>} : vector<24x16xbf16>, vector<16x16xbf16>, vector<24x16xf32> -> vector<24x16xf32>
    %c0_30 = arith.constant 0 : index
    %c2_31 = arith.constant 2 : index
    %c0_32 = arith.constant 0 : index
    %c0_33 = arith.constant 0 : index
    %39 = vector.load %arg8[%c0_30, %c2_31, %c0_32, %c0_33] : memref<3x3x16x16xbf16, #tpu.memory_space<vmem>>, vector<1x1x16x16xbf16>
    %40 = vector.shape_cast %39 : vector<1x1x16x16xbf16> to vector<16x16xbf16>
    %cst_34 = arith.constant dense<0.000000e+00> : vector<24x16xf32>
    %41 = tpu.matmul %35, %40, %cst_34 {dimension_numbers = #tpu.dot_dimension_numbers<[1], [0], [0], [1], [0, 0, 1, 1], [], []>} : vector<24x16xbf16>, vector<16x16xbf16>, vector<24x16xf32> -> vector<24x16xf32>
    %42 = arith.addf %32, %38 : vector<24x16xf32>
    %43 = arith.addf %33, %41 : vector<24x16xf32>
    %c0_35 = arith.constant 0 : index
    %c0_36 = arith.constant 0 : index
    %c0_37 = arith.constant 0 : index
    %44 = vector.load %arg9[%c0_35, %c0_36, %c0_37] : memref<3x1x16xf32, #tpu.memory_space<vmem>>, vector<1x1x16xf32>
    %45 = vector.shape_cast %44 : vector<1x1x16xf32> to vector<1x16xf32>
    %46 = vector.broadcast %45 : vector<1x16xf32> to vector<24x16xf32>
    %47 = arith.addf %42, %46 : vector<24x16xf32>
    %48 = math.tanh %47 : vector<24x16xf32>
    %c0_38 = arith.constant 0 : index
    %c0_39 = arith.constant 0 : index
    %c0_40 = arith.constant 0 : index
    %49 = vector.load %arg10[%c0_38, %c0_39, %c0_40] : memref<3x1x16xf32, #tpu.memory_space<vmem>>, vector<1x1x16xf32>
    %50 = vector.shape_cast %49 : vector<1x1x16xf32> to vector<1x16xf32>
    %51 = vector.broadcast %50 : vector<1x16xf32> to vector<24x16xf32>
    %52 = arith.addf %43, %51 : vector<24x16xf32>
    %53 = arith.negf %52 : vector<24x16xf32>
    %54 = math.exp %53 : vector<24x16xf32>
    %cst_41 = arith.constant 1.000000e+00 : f32
    %55 = vector.broadcast %cst_41 : f32 to vector<24x16xf32>
    %56 = arith.addf %55, %54 : vector<24x16xf32>
    %57 = arith.divf %55, %56 : vector<24x16xf32>
    %58 = arith.mulf %48, %57 : vector<24x16xf32>
    %59 = arith.truncf %58 : vector<24x16xf32> to vector<24x16xbf16>
    %c0_42 = arith.constant 0 : index
    %c0_43 = arith.constant 0 : index
    %c0_44 = arith.constant 0 : index
    %60 = vector.load %arg13[%c0_42, %c0_43, %c0_44] : memref<3x16x16xbf16, #tpu.memory_space<vmem>>, vector<1x16x16xbf16>
    %61 = vector.shape_cast %60 : vector<1x16x16xbf16> to vector<16x16xbf16>
    %cst_45 = arith.constant dense<0.000000e+00> : vector<24x16xf32>
    %62 = tpu.matmul %59, %61, %cst_45 {dimension_numbers = #tpu.dot_dimension_numbers<[1], [0], [0], [1], [0, 0, 1, 1], [], []>} : vector<24x16xbf16>, vector<16x16xbf16>, vector<24x16xf32> -> vector<24x16xf32>
    %c0_46 = arith.constant 0 : index
    %c0_47 = arith.constant 0 : index
    %c0_48 = arith.constant 0 : index
    %63 = vector.load %arg14[%c0_46, %c0_47, %c0_48] : memref<3x1x16xf32, #tpu.memory_space<vmem>>, vector<1x1x16xf32>
    %64 = vector.shape_cast %63 : vector<1x1x16xf32> to vector<1x16xf32>
    %65 = vector.broadcast %64 : vector<1x16xf32> to vector<24x16xf32>
    %66 = arith.addf %62, %65 : vector<24x16xf32>
    %c0_49 = arith.constant 0 : index
    %c0_50 = arith.constant 0 : index
    %c0_51 = arith.constant 0 : index
    %67 = vector.load %arg11[%c0_49, %c0_50, %c0_51] : memref<3x16x16xbf16, #tpu.memory_space<vmem>>, vector<1x16x16xbf16>
    %68 = vector.shape_cast %67 : vector<1x16x16xbf16> to vector<16x16xbf16>
    %cst_52 = arith.constant dense<0.000000e+00> : vector<24x16xf32>
    %69 = tpu.matmul %59, %68, %cst_52 {dimension_numbers = #tpu.dot_dimension_numbers<[1], [0], [0], [1], [0, 0, 1, 1], [], []>} : vector<24x16xbf16>, vector<16x16xbf16>, vector<24x16xf32> -> vector<24x16xf32>
    %c0_53 = arith.constant 0 : index
    %c0_54 = arith.constant 0 : index
    %c0_55 = arith.constant 0 : index
    %70 = vector.load %arg12[%c0_53, %c0_54, %c0_55] : memref<3x1x16xf32, #tpu.memory_space<vmem>>, vector<1x1x16xf32>
    %71 = vector.shape_cast %70 : vector<1x1x16xf32> to vector<1x16xf32>
    %72 = vector.broadcast %71 : vector<1x16xf32> to vector<24x16xf32>
    %73 = arith.addf %69, %72 : vector<24x16xf32>
    %74 = arith.addf %16, %73 : vector<24x16xf32>
    %75 = arith.mulf %74, %10 : vector<24x16xf32>
    %c2_i32 = arith.constant 2 : i32
    %76 = tpu.dynamic_rotate %75 by %c2_i32 dim 0 : vector<24x16xf32>, i32 -> vector<24x16xf32>
    %77 = arith.truncf %76 : vector<24x16xf32> to vector<24x16xbf16>
    %c1_56 = arith.constant 1 : index
    %c0_57 = arith.constant 0 : index
    %c0_58 = arith.constant 0 : index
    %c0_59 = arith.constant 0 : index
    %78 = vector.load %arg7[%c1_56, %c0_57, %c0_58, %c0_59] : memref<3x3x16x16xbf16, #tpu.memory_space<vmem>>, vector<1x1x16x16xbf16>
    %79 = vector.shape_cast %78 : vector<1x1x16x16xbf16> to vector<16x16xbf16>
    %cst_60 = arith.constant dense<0.000000e+00> : vector<24x16xf32>
    %80 = tpu.matmul %77, %79, %cst_60 {dimension_numbers = #tpu.dot_dimension_numbers<[1], [0], [0], [1], [0, 0, 1, 1], [], []>} : vector<24x16xbf16>, vector<16x16xbf16>, vector<24x16xf32> -> vector<24x16xf32>
    %c1_61 = arith.constant 1 : index
    %c0_62 = arith.constant 0 : index
    %c0_63 = arith.constant 0 : index
    %c0_64 = arith.constant 0 : index
    %81 = vector.load %arg8[%c1_61, %c0_62, %c0_63, %c0_64] : memref<3x3x16x16xbf16, #tpu.memory_space<vmem>>, vector<1x1x16x16xbf16>
    %82 = vector.shape_cast %81 : vector<1x1x16x16xbf16> to vector<16x16xbf16>
    %cst_65 = arith.constant dense<0.000000e+00> : vector<24x16xf32>
    %83 = tpu.matmul %77, %82, %cst_65 {dimension_numbers = #tpu.dot_dimension_numbers<[1], [0], [0], [1], [0, 0, 1, 1], [], []>} : vector<24x16xbf16>, vector<16x16xbf16>, vector<24x16xf32> -> vector<24x16xf32>
    %84 = arith.truncf %75 : vector<24x16xf32> to vector<24x16xbf16>
    %c1_66 = arith.constant 1 : index
    %c1_67 = arith.constant 1 : index
    %c0_68 = arith.constant 0 : index
    %c0_69 = arith.constant 0 : index
    %85 = vector.load %arg7[%c1_66, %c1_67, %c0_68, %c0_69] : memref<3x3x16x16xbf16, #tpu.memory_space<vmem>>, vector<1x1x16x16xbf16>
    %86 = vector.shape_cast %85 : vector<1x1x16x16xbf16> to vector<16x16xbf16>
    %cst_70 = arith.constant dense<0.000000e+00> : vector<24x16xf32>
    %87 = tpu.matmul %84, %86, %cst_70 {dimension_numbers = #tpu.dot_dimension_numbers<[1], [0], [0], [1], [0, 0, 1, 1], [], []>} : vector<24x16xbf16>, vector<16x16xbf16>, vector<24x16xf32> -> vector<24x16xf32>
    %c1_71 = arith.constant 1 : index
    %c1_72 = arith.constant 1 : index
    %c0_73 = arith.constant 0 : index
    %c0_74 = arith.constant 0 : index
    %88 = vector.load %arg8[%c1_71, %c1_72, %c0_73, %c0_74] : memref<3x3x16x16xbf16, #tpu.memory_space<vmem>>, vector<1x1x16x16xbf16>
    %89 = vector.shape_cast %88 : vector<1x1x16x16xbf16> to vector<16x16xbf16>
    %cst_75 = arith.constant dense<0.000000e+00> : vector<24x16xf32>
    %90 = tpu.matmul %84, %89, %cst_75 {dimension_numbers = #tpu.dot_dimension_numbers<[1], [0], [0], [1], [0, 0, 1, 1], [], []>} : vector<24x16xbf16>, vector<16x16xbf16>, vector<24x16xf32> -> vector<24x16xf32>
    %91 = arith.addf %80, %87 : vector<24x16xf32>
    %92 = arith.addf %83, %90 : vector<24x16xf32>
    %c22_i32 = arith.constant 22 : i32
    %93 = tpu.dynamic_rotate %75 by %c22_i32 dim 0 : vector<24x16xf32>, i32 -> vector<24x16xf32>
    %94 = arith.truncf %93 : vector<24x16xf32> to vector<24x16xbf16>
    %c1_76 = arith.constant 1 : index
    %c2_77 = arith.constant 2 : index
    %c0_78 = arith.constant 0 : index
    %c0_79 = arith.constant 0 : index
    %95 = vector.load %arg7[%c1_76, %c2_77, %c0_78, %c0_79] : memref<3x3x16x16xbf16, #tpu.memory_space<vmem>>, vector<1x1x16x16xbf16>
    %96 = vector.shape_cast %95 : vector<1x1x16x16xbf16> to vector<16x16xbf16>
    %cst_80 = arith.constant dense<0.000000e+00> : vector<24x16xf32>
    %97 = tpu.matmul %94, %96, %cst_80 {dimension_numbers = #tpu.dot_dimension_numbers<[1], [0], [0], [1], [0, 0, 1, 1], [], []>} : vector<24x16xbf16>, vector<16x16xbf16>, vector<24x16xf32> -> vector<24x16xf32>
    %c1_81 = arith.constant 1 : index
    %c2_82 = arith.constant 2 : index
    %c0_83 = arith.constant 0 : index
    %c0_84 = arith.constant 0 : index
    %98 = vector.load %arg8[%c1_81, %c2_82, %c0_83, %c0_84] : memref<3x3x16x16xbf16, #tpu.memory_space<vmem>>, vector<1x1x16x16xbf16>
    %99 = vector.shape_cast %98 : vector<1x1x16x16xbf16> to vector<16x16xbf16>
    %cst_85 = arith.constant dense<0.000000e+00> : vector<24x16xf32>
    %100 = tpu.matmul %94, %99, %cst_85 {dimension_numbers = #tpu.dot_dimension_numbers<[1], [0], [0], [1], [0, 0, 1, 1], [], []>} : vector<24x16xbf16>, vector<16x16xbf16>, vector<24x16xf32> -> vector<24x16xf32>
    %101 = arith.addf %91, %97 : vector<24x16xf32>
    %102 = arith.addf %92, %100 : vector<24x16xf32>
    %c1_86 = arith.constant 1 : index
    %c0_87 = arith.constant 0 : index
    %c0_88 = arith.constant 0 : index
    %103 = vector.load %arg9[%c1_86, %c0_87, %c0_88] : memref<3x1x16xf32, #tpu.memory_space<vmem>>, vector<1x1x16xf32>
    %104 = vector.shape_cast %103 : vector<1x1x16xf32> to vector<1x16xf32>
    %105 = vector.broadcast %104 : vector<1x16xf32> to vector<24x16xf32>
    %106 = arith.addf %101, %105 : vector<24x16xf32>
    %107 = math.tanh %106 : vector<24x16xf32>
    %c1_89 = arith.constant 1 : index
    %c0_90 = arith.constant 0 : index
    %c0_91 = arith.constant 0 : index
    %108 = vector.load %arg10[%c1_89, %c0_90, %c0_91] : memref<3x1x16xf32, #tpu.memory_space<vmem>>, vector<1x1x16xf32>
    %109 = vector.shape_cast %108 : vector<1x1x16xf32> to vector<1x16xf32>
    %110 = vector.broadcast %109 : vector<1x16xf32> to vector<24x16xf32>
    %111 = arith.addf %102, %110 : vector<24x16xf32>
    %112 = arith.negf %111 : vector<24x16xf32>
    %113 = math.exp %112 : vector<24x16xf32>
    %cst_92 = arith.constant 1.000000e+00 : f32
    %114 = vector.broadcast %cst_92 : f32 to vector<24x16xf32>
    %115 = arith.addf %114, %113 : vector<24x16xf32>
    %116 = arith.divf %114, %115 : vector<24x16xf32>
    %117 = arith.mulf %107, %116 : vector<24x16xf32>
    %118 = arith.truncf %117 : vector<24x16xf32> to vector<24x16xbf16>
    %c1_93 = arith.constant 1 : index
    %c0_94 = arith.constant 0 : index
    %c0_95 = arith.constant 0 : index
    %119 = vector.load %arg13[%c1_93, %c0_94, %c0_95] : memref<3x16x16xbf16, #tpu.memory_space<vmem>>, vector<1x16x16xbf16>
    %120 = vector.shape_cast %119 : vector<1x16x16xbf16> to vector<16x16xbf16>
    %cst_96 = arith.constant dense<0.000000e+00> : vector<24x16xf32>
    %121 = tpu.matmul %118, %120, %cst_96 {dimension_numbers = #tpu.dot_dimension_numbers<[1], [0], [0], [1], [0, 0, 1, 1], [], []>} : vector<24x16xbf16>, vector<16x16xbf16>, vector<24x16xf32> -> vector<24x16xf32>
    %c1_97 = arith.constant 1 : index
    %c0_98 = arith.constant 0 : index
    %c0_99 = arith.constant 0 : index
    %122 = vector.load %arg14[%c1_97, %c0_98, %c0_99] : memref<3x1x16xf32, #tpu.memory_space<vmem>>, vector<1x1x16xf32>
    %123 = vector.shape_cast %122 : vector<1x1x16xf32> to vector<1x16xf32>
    %124 = vector.broadcast %123 : vector<1x16xf32> to vector<24x16xf32>
    %125 = arith.addf %121, %124 : vector<24x16xf32>
    %126 = arith.addf %66, %125 : vector<24x16xf32>
    %c1_100 = arith.constant 1 : index
    %c0_101 = arith.constant 0 : index
    %c0_102 = arith.constant 0 : index
    %127 = vector.load %arg11[%c1_100, %c0_101, %c0_102] : memref<3x16x16xbf16, #tpu.memory_space<vmem>>, vector<1x16x16xbf16>
    %128 = vector.shape_cast %127 : vector<1x16x16xbf16> to vector<16x16xbf16>
    %cst_103 = arith.constant dense<0.000000e+00> : vector<24x16xf32>
    %129 = tpu.matmul %118, %128, %cst_103 {dimension_numbers = #tpu.dot_dimension_numbers<[1], [0], [0], [1], [0, 0, 1, 1], [], []>} : vector<24x16xbf16>, vector<16x16xbf16>, vector<24x16xf32> -> vector<24x16xf32>
    %c1_104 = arith.constant 1 : index
    %c0_105 = arith.constant 0 : index
    %c0_106 = arith.constant 0 : index
    %130 = vector.load %arg12[%c1_104, %c0_105, %c0_106] : memref<3x1x16xf32, #tpu.memory_space<vmem>>, vector<1x1x16xf32>
    %131 = vector.shape_cast %130 : vector<1x1x16xf32> to vector<1x16xf32>
    %132 = vector.broadcast %131 : vector<1x16xf32> to vector<24x16xf32>
    %133 = arith.addf %129, %132 : vector<24x16xf32>
    %134 = arith.addf %75, %133 : vector<24x16xf32>
    %135 = arith.mulf %134, %10 : vector<24x16xf32>
    %c4_i32 = arith.constant 4 : i32
    %136 = tpu.dynamic_rotate %135 by %c4_i32 dim 0 : vector<24x16xf32>, i32 -> vector<24x16xf32>
    %137 = arith.truncf %136 : vector<24x16xf32> to vector<24x16xbf16>
    %c2_107 = arith.constant 2 : index
    %c0_108 = arith.constant 0 : index
    %c0_109 = arith.constant 0 : index
    %c0_110 = arith.constant 0 : index
    %138 = vector.load %arg7[%c2_107, %c0_108, %c0_109, %c0_110] : memref<3x3x16x16xbf16, #tpu.memory_space<vmem>>, vector<1x1x16x16xbf16>
    %139 = vector.shape_cast %138 : vector<1x1x16x16xbf16> to vector<16x16xbf16>
    %cst_111 = arith.constant dense<0.000000e+00> : vector<24x16xf32>
    %140 = tpu.matmul %137, %139, %cst_111 {dimension_numbers = #tpu.dot_dimension_numbers<[1], [0], [0], [1], [0, 0, 1, 1], [], []>} : vector<24x16xbf16>, vector<16x16xbf16>, vector<24x16xf32> -> vector<24x16xf32>
    %c2_112 = arith.constant 2 : index
    %c0_113 = arith.constant 0 : index
    %c0_114 = arith.constant 0 : index
    %c0_115 = arith.constant 0 : index
    %141 = vector.load %arg8[%c2_112, %c0_113, %c0_114, %c0_115] : memref<3x3x16x16xbf16, #tpu.memory_space<vmem>>, vector<1x1x16x16xbf16>
    %142 = vector.shape_cast %141 : vector<1x1x16x16xbf16> to vector<16x16xbf16>
    %cst_116 = arith.constant dense<0.000000e+00> : vector<24x16xf32>
    %143 = tpu.matmul %137, %142, %cst_116 {dimension_numbers = #tpu.dot_dimension_numbers<[1], [0], [0], [1], [0, 0, 1, 1], [], []>} : vector<24x16xbf16>, vector<16x16xbf16>, vector<24x16xf32> -> vector<24x16xf32>
    %144 = arith.truncf %135 : vector<24x16xf32> to vector<24x16xbf16>
    %c2_117 = arith.constant 2 : index
    %c1_118 = arith.constant 1 : index
    %c0_119 = arith.constant 0 : index
    %c0_120 = arith.constant 0 : index
    %145 = vector.load %arg7[%c2_117, %c1_118, %c0_119, %c0_120] : memref<3x3x16x16xbf16, #tpu.memory_space<vmem>>, vector<1x1x16x16xbf16>
    %146 = vector.shape_cast %145 : vector<1x1x16x16xbf16> to vector<16x16xbf16>
    %cst_121 = arith.constant dense<0.000000e+00> : vector<24x16xf32>
    %147 = tpu.matmul %144, %146, %cst_121 {dimension_numbers = #tpu.dot_dimension_numbers<[1], [0], [0], [1], [0, 0, 1, 1], [], []>} : vector<24x16xbf16>, vector<16x16xbf16>, vector<24x16xf32> -> vector<24x16xf32>
    %c2_122 = arith.constant 2 : index
    %c1_123 = arith.constant 1 : index
    %c0_124 = arith.constant 0 : index
    %c0_125 = arith.constant 0 : index
    %148 = vector.load %arg8[%c2_122, %c1_123, %c0_124, %c0_125] : memref<3x3x16x16xbf16, #tpu.memory_space<vmem>>, vector<1x1x16x16xbf16>
    %149 = vector.shape_cast %148 : vector<1x1x16x16xbf16> to vector<16x16xbf16>
    %cst_126 = arith.constant dense<0.000000e+00> : vector<24x16xf32>
    %150 = tpu.matmul %144, %149, %cst_126 {dimension_numbers = #tpu.dot_dimension_numbers<[1], [0], [0], [1], [0, 0, 1, 1], [], []>} : vector<24x16xbf16>, vector<16x16xbf16>, vector<24x16xf32> -> vector<24x16xf32>
    %151 = arith.addf %140, %147 : vector<24x16xf32>
    %152 = arith.addf %143, %150 : vector<24x16xf32>
    %c20_i32 = arith.constant 20 : i32
    %153 = tpu.dynamic_rotate %135 by %c20_i32 dim 0 : vector<24x16xf32>, i32 -> vector<24x16xf32>
    %154 = arith.truncf %153 : vector<24x16xf32> to vector<24x16xbf16>
    %c2_127 = arith.constant 2 : index
    %c2_128 = arith.constant 2 : index
    %c0_129 = arith.constant 0 : index
    %c0_130 = arith.constant 0 : index
    %155 = vector.load %arg7[%c2_127, %c2_128, %c0_129, %c0_130] : memref<3x3x16x16xbf16, #tpu.memory_space<vmem>>, vector<1x1x16x16xbf16>
    %156 = vector.shape_cast %155 : vector<1x1x16x16xbf16> to vector<16x16xbf16>
    %cst_131 = arith.constant dense<0.000000e+00> : vector<24x16xf32>
    %157 = tpu.matmul %154, %156, %cst_131 {dimension_numbers = #tpu.dot_dimension_numbers<[1], [0], [0], [1], [0, 0, 1, 1], [], []>} : vector<24x16xbf16>, vector<16x16xbf16>, vector<24x16xf32> -> vector<24x16xf32>
    %c2_132 = arith.constant 2 : index
    %c2_133 = arith.constant 2 : index
    %c0_134 = arith.constant 0 : index
    %c0_135 = arith.constant 0 : index
    %158 = vector.load %arg8[%c2_132, %c2_133, %c0_134, %c0_135] : memref<3x3x16x16xbf16, #tpu.memory_space<vmem>>, vector<1x1x16x16xbf16>
    %159 = vector.shape_cast %158 : vector<1x1x16x16xbf16> to vector<16x16xbf16>
    %cst_136 = arith.constant dense<0.000000e+00> : vector<24x16xf32>
    %160 = tpu.matmul %154, %159, %cst_136 {dimension_numbers = #tpu.dot_dimension_numbers<[1], [0], [0], [1], [0, 0, 1, 1], [], []>} : vector<24x16xbf16>, vector<16x16xbf16>, vector<24x16xf32> -> vector<24x16xf32>
    %161 = arith.addf %151, %157 : vector<24x16xf32>
    %162 = arith.addf %152, %160 : vector<24x16xf32>
    %c2_137 = arith.constant 2 : index
    %c0_138 = arith.constant 0 : index
    %c0_139 = arith.constant 0 : index
    %163 = vector.load %arg9[%c2_137, %c0_138, %c0_139] : memref<3x1x16xf32, #tpu.memory_space<vmem>>, vector<1x1x16xf32>
    %164 = vector.shape_cast %163 : vector<1x1x16xf32> to vector<1x16xf32>
    %165 = vector.broadcast %164 : vector<1x16xf32> to vector<24x16xf32>
    %166 = arith.addf %161, %165 : vector<24x16xf32>
    %167 = math.tanh %166 : vector<24x16xf32>
    %c2_140 = arith.constant 2 : index
    %c0_141 = arith.constant 0 : index
    %c0_142 = arith.constant 0 : index
    %168 = vector.load %arg10[%c2_140, %c0_141, %c0_142] : memref<3x1x16xf32, #tpu.memory_space<vmem>>, vector<1x1x16xf32>
    %169 = vector.shape_cast %168 : vector<1x1x16xf32> to vector<1x16xf32>
    %170 = vector.broadcast %169 : vector<1x16xf32> to vector<24x16xf32>
    %171 = arith.addf %162, %170 : vector<24x16xf32>
    %172 = arith.negf %171 : vector<24x16xf32>
    %173 = math.exp %172 : vector<24x16xf32>
    %cst_143 = arith.constant 1.000000e+00 : f32
    %174 = vector.broadcast %cst_143 : f32 to vector<24x16xf32>
    %175 = arith.addf %174, %173 : vector<24x16xf32>
    %176 = arith.divf %174, %175 : vector<24x16xf32>
    %177 = arith.mulf %167, %176 : vector<24x16xf32>
    %178 = arith.truncf %177 : vector<24x16xf32> to vector<24x16xbf16>
    %c2_144 = arith.constant 2 : index
    %c0_145 = arith.constant 0 : index
    %c0_146 = arith.constant 0 : index
    %179 = vector.load %arg13[%c2_144, %c0_145, %c0_146] : memref<3x16x16xbf16, #tpu.memory_space<vmem>>, vector<1x16x16xbf16>
    %180 = vector.shape_cast %179 : vector<1x16x16xbf16> to vector<16x16xbf16>
    %cst_147 = arith.constant dense<0.000000e+00> : vector<24x16xf32>
    %181 = tpu.matmul %178, %180, %cst_147 {dimension_numbers = #tpu.dot_dimension_numbers<[1], [0], [0], [1], [0, 0, 1, 1], [], []>} : vector<24x16xbf16>, vector<16x16xbf16>, vector<24x16xf32> -> vector<24x16xf32>
    %c2_148 = arith.constant 2 : index
    %c0_149 = arith.constant 0 : index
    %c0_150 = arith.constant 0 : index
    %182 = vector.load %arg14[%c2_148, %c0_149, %c0_150] : memref<3x1x16xf32, #tpu.memory_space<vmem>>, vector<1x1x16xf32>
    %183 = vector.shape_cast %182 : vector<1x1x16xf32> to vector<1x16xf32>
    %184 = vector.broadcast %183 : vector<1x16xf32> to vector<24x16xf32>
    %185 = arith.addf %181, %184 : vector<24x16xf32>
    %186 = arith.addf %126, %185 : vector<24x16xf32>
    %187 = vector.extract_strided_slice %186 {offsets = [8, 0], sizes = [8, 16], strides = [1, 1]} : vector<24x16xf32> to vector<8x16xf32>
    %188 = vector.extract_strided_slice %10 {offsets = [8, 0], sizes = [8, 16], strides = [1, 1]} : vector<24x16xf32> to vector<8x16xf32>
    %189 = arith.mulf %187, %188 : vector<8x16xf32>
    %190 = arith.truncf %189 : vector<8x16xf32> to vector<8x16xbf16>
    %191 = vector.extract_strided_slice %8 {offsets = [8, 0], sizes = [8, 1], strides = [1, 1]} : vector<24x1xf32> to vector<8x1xf32>
    %192 = vector.shape_cast %191 : vector<8x1xf32> to vector<8x1xf32>
    %193 = vector.broadcast %192 : vector<8x1xf32> to vector<8x128xf32>
    %c0_151 = arith.constant 0 : index
    %c0_152 = arith.constant 0 : index
    %194 = vector.load %arg15[%c0_151, %c0_152] : memref<16x128xbf16, #tpu.memory_space<vmem>>, vector<16x128xbf16>
    %cst_153 = arith.constant dense<0.000000e+00> : vector<8x128xf32>
    %195 = tpu.matmul %190, %194, %cst_153 {dimension_numbers = #tpu.dot_dimension_numbers<[1], [0], [0], [1], [0, 0, 1, 1], [], []>} : vector<8x16xbf16>, vector<16x128xbf16>, vector<8x128xf32> -> vector<8x128xf32>
    %c0_154 = arith.constant 0 : index
    %c0_155 = arith.constant 0 : index
    %196 = vector.load %arg16[%c0_154, %c0_155] : memref<1x128xf32, #tpu.memory_space<vmem>>, vector<1x128xf32>
    %197 = vector.broadcast %196 : vector<1x128xf32> to vector<8x128xf32>
    %198 = arith.addf %195, %197 : vector<8x128xf32>
    %199 = arith.mulf %198, %193 : vector<8x128xf32>
    %c0_156 = arith.constant 0 : index
    %c0_157 = arith.constant 0 : index
    %200 = vector.load %arg17[%c0_156, %c0_157] : memref<16x128xbf16, #tpu.memory_space<vmem>>, vector<16x128xbf16>
    %cst_158 = arith.constant dense<0.000000e+00> : vector<8x128xf32>
    %201 = tpu.matmul %190, %200, %cst_158 {dimension_numbers = #tpu.dot_dimension_numbers<[1], [0], [0], [1], [0, 0, 1, 1], [], []>} : vector<8x16xbf16>, vector<16x128xbf16>, vector<8x128xf32> -> vector<8x128xf32>
    %c0_159 = arith.constant 0 : index
    %c0_160 = arith.constant 0 : index
    %202 = vector.load %arg18[%c0_159, %c0_160] : memref<1x128xf32, #tpu.memory_space<vmem>>, vector<1x128xf32>
    %203 = vector.broadcast %202 : vector<1x128xf32> to vector<8x128xf32>
    %204 = arith.addf %201, %203 : vector<8x128xf32>
    %205 = arith.mulf %204, %193 : vector<8x128xf32>
    %c0_161 = arith.constant 0 : index
    %c0_162 = arith.constant 0 : index
    %c0_163 = arith.constant 0 : index
    %206 = vector.load %arg4[%c0_161, %c0_162, %c0_163] : memref<1x8x128xf32, #tpu.memory_space<vmem>>, vector<1x8x128xf32>
    %207 = vector.shape_cast %206 : vector<1x8x128xf32> to vector<8x128xf32>
    %208 = math.exp %205 : vector<8x128xf32>
    %209 = arith.mulf %207, %208 : vector<8x128xf32>
    %210 = arith.mulf %209, %193 : vector<8x128xf32>
    %211 = arith.addf %199, %210 : vector<8x128xf32>
    %c0_164 = arith.constant 0 : index
    %c0_165 = arith.constant 0 : index
    %c0_166 = arith.constant 0 : index
    %212 = vector.load %arg19[%c0_164, %c0_165, %c0_166] : memref<1x8x128xf32, #tpu.memory_space<vmem>>, vector<1x8x128xf32>
    %213 = vector.shape_cast %212 : vector<1x8x128xf32> to vector<8x128xf32>
    %214 = vector.shape_cast %211 : vector<8x128xf32> to vector<1x8x128xf32>
    tpu.vector_store %arg19[%c0_164, %c0_165, %c0_166], %214 {strides = array<i32>} : memref<1x8x128xf32, #tpu.memory_space<vmem>>, vector<1x8x128xf32>,
    %cst_167 = arith.constant 0.000000e+00 : f32
    %215 = vector.broadcast %cst_167 : f32 to vector<1x1x8x128xf32>
    %216 = vector.shape_cast %205 : vector<8x128xf32> to vector<1x8x128xf32>
    %cst_168 = arith.constant dense<0.000000e+00> : vector<1xf32>
    %217 = vector.multi_reduction <add>, %216, %cst_168 [1, 2] : vector<1x8x128xf32> to vector<1xf32>
    %218 = vector.shape_cast %217 : vector<1xf32> to vector<1x1x1xf32>
    %219 = vector.extract %218[0, 0, 0] : f32 from vector<1x1x1xf32>
    %220 = vector.broadcast %219 : f32 to vector<1x1x8x128xf32>
    %221 = arith.addf %215, %220 : vector<1x1x8x128xf32>
    %c0_169 = arith.constant 0 : index
    %c0_170 = arith.constant 0 : index
    %c0_171 = arith.constant 0 : index
    %c0_172 = arith.constant 0 : index
    %222 = vector.load %arg20[%c0_169, %c0_170, %c0_171, %c0_172] : memref<1x1x8x128xf32, #tpu.memory_space<vmem>>, vector<1x1x8x128xf32>
    tpu.vector_store %arg20[%c0_169, %c0_170, %c0_171, %c0_172], %221 {strides = array<i32>} : memref<1x1x8x128xf32, #tpu.memory_space<vmem>>, vector<1x1x8x128xf32>,
    return
  }
  func.func @transform_0(%arg0: i32, %arg1: i32) -> (i32, i32, i32) {
    %c0_i32 = arith.constant 0 : i32
    %c0_i32_0 = arith.constant 0 : i32
    %c0_i32_1 = arith.constant 0 : i32
    return %arg0, %c0_i32, %c0_i32_0 : i32, i32, i32
  }
  func.func @transform_1(%arg0: i32, %arg1: i32) -> (i32, i32, i32) {
    %c0_i32 = arith.constant 0 : i32
    %c0_i32_0 = arith.constant 0 : i32
    %c0_i32_1 = arith.constant 0 : i32
    return %arg0, %c0_i32, %c0_i32_0 : i32, i32, i32
  }
  func.func @transform_2(%arg0: i32, %arg1: i32) -> (i32, i32, i32) {
    %c0_i32 = arith.constant 0 : i32
    %c0_i32_0 = arith.constant 0 : i32
    return %arg0, %arg1, %c0_i32 : i32, i32, i32
  }
  func.func @transform_3(%arg0: i32, %arg1: i32) -> (i32, i32) {
    %c0_i32 = arith.constant 0 : i32
    %c0_i32_0 = arith.constant 0 : i32
    %c0_i32_1 = arith.constant 0 : i32
    return %c0_i32, %c0_i32_0 : i32, i32
  }
  func.func @transform_4(%arg0: i32, %arg1: i32) -> (i32, i32) {
    %c0_i32 = arith.constant 0 : i32
    %c0_i32_0 = arith.constant 0 : i32
    %c0_i32_1 = arith.constant 0 : i32
    return %c0_i32, %c0_i32_0 : i32, i32
  }
  func.func @transform_5(%arg0: i32, %arg1: i32) -> (i32, i32, i32, i32) {
    %c0_i32 = arith.constant 0 : i32
    %c0_i32_0 = arith.constant 0 : i32
    %c0_i32_1 = arith.constant 0 : i32
    %c0_i32_2 = arith.constant 0 : i32
    %c0_i32_3 = arith.constant 0 : i32
    return %c0_i32, %c0_i32_0, %c0_i32_1, %c0_i32_2 : i32, i32, i32, i32
  }
  func.func @transform_6(%arg0: i32, %arg1: i32) -> (i32, i32, i32, i32) {
    %c0_i32 = arith.constant 0 : i32
    %c0_i32_0 = arith.constant 0 : i32
    %c0_i32_1 = arith.constant 0 : i32
    %c0_i32_2 = arith.constant 0 : i32
    %c0_i32_3 = arith.constant 0 : i32
    return %c0_i32, %c0_i32_0, %c0_i32_1, %c0_i32_2 : i32, i32, i32, i32
  }
  func.func @transform_7(%arg0: i32, %arg1: i32) -> (i32, i32, i32) {
    %c0_i32 = arith.constant 0 : i32
    %c0_i32_0 = arith.constant 0 : i32
    %c0_i32_1 = arith.constant 0 : i32
    %c0_i32_2 = arith.constant 0 : i32
    return %c0_i32, %c0_i32_0, %c0_i32_1 : i32, i32, i32
  }
  func.func @transform_8(%arg0: i32, %arg1: i32) -> (i32, i32, i32) {
    %c0_i32 = arith.constant 0 : i32
    %c0_i32_0 = arith.constant 0 : i32
    %c0_i32_1 = arith.constant 0 : i32
    %c0_i32_2 = arith.constant 0 : i32
    return %c0_i32, %c0_i32_0, %c0_i32_1 : i32, i32, i32
  }
  func.func @transform_9(%arg0: i32, %arg1: i32) -> (i32, i32, i32) {
    %c0_i32 = arith.constant 0 : i32
    %c0_i32_0 = arith.constant 0 : i32
    %c0_i32_1 = arith.constant 0 : i32
    %c0_i32_2 = arith.constant 0 : i32
    return %c0_i32, %c0_i32_0, %c0_i32_1 : i32, i32, i32
  }
  func.func @transform_10(%arg0: i32, %arg1: i32) -> (i32, i32, i32) {
    %c0_i32 = arith.constant 0 : i32
    %c0_i32_0 = arith.constant 0 : i32
    %c0_i32_1 = arith.constant 0 : i32
    %c0_i32_2 = arith.constant 0 : i32
    return %c0_i32, %c0_i32_0, %c0_i32_1 : i32, i32, i32
  }
  func.func @transform_11(%arg0: i32, %arg1: i32) -> (i32, i32, i32) {
    %c0_i32 = arith.constant 0 : i32
    %c0_i32_0 = arith.constant 0 : i32
    %c0_i32_1 = arith.constant 0 : i32
    %c0_i32_2 = arith.constant 0 : i32
    return %c0_i32, %c0_i32_0, %c0_i32_1 : i32, i32, i32
  }
  func.func @transform_12(%arg0: i32, %arg1: i32) -> (i32, i32, i32) {
    %c0_i32 = arith.constant 0 : i32
    %c0_i32_0 = arith.constant 0 : i32
    %c0_i32_1 = arith.constant 0 : i32
    %c0_i32_2 = arith.constant 0 : i32
    return %c0_i32, %c0_i32_0, %c0_i32_1 : i32, i32, i32
  }
  func.func @transform_13(%arg0: i32, %arg1: i32) -> (i32, i32) {
    %c0_i32 = arith.constant 0 : i32
    %c0_i32_0 = arith.constant 0 : i32
    %c0_i32_1 = arith.constant 0 : i32
    return %c0_i32, %c0_i32_0 : i32, i32
  }
  func.func @transform_14(%arg0: i32, %arg1: i32) -> (i32, i32) {
    %c0_i32 = arith.constant 0 : i32
    %c0_i32_0 = arith.constant 0 : i32
    %c0_i32_1 = arith.constant 0 : i32
    return %c0_i32, %c0_i32_0 : i32, i32
  }
  func.func @transform_15(%arg0: i32, %arg1: i32) -> (i32, i32) {
    %c0_i32 = arith.constant 0 : i32
    %c0_i32_0 = arith.constant 0 : i32
    %c0_i32_1 = arith.constant 0 : i32
    return %c0_i32, %c0_i32_0 : i32, i32
  }
  func.func @transform_16(%arg0: i32, %arg1: i32) -> (i32, i32) {
    %c0_i32 = arith.constant 0 : i32
    %c0_i32_0 = arith.constant 0 : i32
    %c0_i32_1 = arith.constant 0 : i32
    return %c0_i32, %c0_i32_0 : i32, i32
  }
  func.func @transform_17(%arg0: i32, %arg1: i32) -> (i32, i32, i32) {
    %c0_i32 = arith.constant 0 : i32
    %c0_i32_0 = arith.constant 0 : i32
    return %arg0, %arg1, %c0_i32 : i32, i32, i32
  }
  func.func @transform_18(%arg0: i32, %arg1: i32) -> (i32, i32, i32, i32) {
    %c0_i32 = arith.constant 0 : i32
    %c0_i32_0 = arith.constant 0 : i32
    %c0_i32_1 = arith.constant 0 : i32
    return %arg0, %arg1, %c0_i32, %c0_i32_0 : i32, i32, i32, i32
  }
}

</mosaic_0001>

<llo_original>
// kernel: tpu_custom_call.1
$region0: #{tpu_custom_call.1}
  #allocation0 [shape = 'u32[]', space=smem, size = 0x4, offset = 0x4, fixed_abs, tag = 'smem constant byte address 0x4 - core index']
  #allocation1 [shape = 'u32[144,128]{1,0:T(1,128)}', space=vmem, size = 0x12000, scoped, tag = 'internal scratch']
  %s0 = inlined_call_operand.vmem [shape: f32[2,32,2], index: 0, kind: input, shape index: {}]
  %s1 = inlined_call_operand.vmem [shape: f32[2,32,1], index: 1, kind: input, shape index: {}]
  %s2 = inlined_call_operand.hbm [shape: f32[2,16,128], index: 2, kind: input, shape index: {}]
  %s3 = inlined_call_operand.hbm [shape: bf16[2,16], index: 3, kind: input, shape index: {}]
  %s4 = inlined_call_operand.hbm [shape: f32[1,16], index: 4, kind: input, shape index: {}]
  %s5 = inlined_call_operand.vmem [shape: bf16[3,3,16,16], index: 5, kind: input, shape index: {}]
  %s6 = inlined_call_operand.vmem [shape: bf16[3,3,16,16], index: 6, kind: input, shape index: {}]
  %s7 = inlined_call_operand.hbm [shape: f32[3,1,16], index: 7, kind: input, shape index: {}]
  %s8 = inlined_call_operand.hbm [shape: f32[3,1,16], index: 8, kind: input, shape index: {}]
  %s9 = inlined_call_operand.hbm [shape: bf16[3,16,16], index: 9, kind: input, shape index: {}]
  %s10 = inlined_call_operand.hbm [shape: f32[3,1,16], index: 10, kind: input, shape index: {}]
  %s11 = inlined_call_operand.hbm [shape: bf16[3,16,16], index: 11, kind: input, shape index: {}]
  %s12 = inlined_call_operand.hbm [shape: f32[3,1,16], index: 12, kind: input, shape index: {}]
  %s13 = inlined_call_operand.vmem [shape: bf16[16,128], index: 13, kind: input, shape index: {}]
  %s14 = inlined_call_operand.vmem [shape: f32[1,128], index: 14, kind: input, shape index: {}]
  %s15 = inlined_call_operand.vmem [shape: bf16[16,128], index: 15, kind: input, shape index: {}]
  %s16 = inlined_call_operand.vmem [shape: f32[1,128], index: 16, kind: input, shape index: {}]
  %s17 = inlined_call_operand.hbm [shape: f32[2,16,128], index: 17, kind: output, shape index: {0}]
  %s18 = inlined_call_operand.hbm [shape: f32[2,2,8,128], index: 18, kind: output, shape index: {1}]
  %19 = xla_tuple %s17, %s18
  %s20 = sld [smem:[#allocation0]]
  $region145: #{tpu_custom_call.1} parent=0
    _
  %s22 = ssub.s32 1, %s20
  %s23 = scalar_select 0, %s22, %s20
  $region1: #{tpu_custom_call.1} parent=0
    #allocation2 [shape = 'u8[8192]{0}', space=vmem, size = 0x2000, scoped, tag = 'input window, operand 2']
    #allocation3 [shape = 's32[2]{0}', space=sflag, size = 0x8, scoped, tag = 'scoped memory for tpu_custom_call.1']
    #allocation4 [shape = 's32[2]{0}', space=sflag, size = 0x8, scoped, tag = 'scoped memory for tpu_custom_call.1']
    #allocation5 [shape = 'u8[512]{0}', space=vmem, size = 0x400, scoped, tag = 'input window, operand 3, single buffered']
    #allocation6 [shape = 's32[1]{0}', space=sflag, size = 0x4, scoped, tag = 'scoped memory for tpu_custom_call.1']
    #allocation7 [shape = 'u8[512]{0}', space=vmem, size = 0x400, scoped, tag = 'input window, operand 4, single buffered']
    #allocation8 [shape = 'u8[1536]{0}', space=vmem, size = 0x800, scoped, tag = 'input window, operand 7, single buffered']
    #allocation9 [shape = 's32[1]{0}', space=sflag, size = 0x4, scoped, tag = 'scoped memory for tpu_custom_call.1']
    #allocation10 [shape = 'u8[1536]{0}', space=vmem, size = 0x800, scoped, tag = 'input window, operand 8, single buffered']
    #allocation11 [shape = 'u8[12288]{0}', space=vmem, size = 0x3000, scoped, tag = 'input window, operand 9, single buffered']
    #allocation12 [shape = 's32[1]{0}', space=sflag, size = 0x4, scoped, tag = 'scoped memory for tpu_custom_call.1']
    #allocation13 [shape = 'u8[1536]{0}', space=vmem, size = 0x800, scoped, tag = 'input window, operand 10, single buffered']
    #allocation14 [shape = 'u8[12288]{0}', space=vmem, size = 0x3000, scoped, tag = 'input window, operand 11, single buffered']
    #allocation15 [shape = 's32[1]{0}', space=sflag, size = 0x4, scoped, tag = 'scoped memory for tpu_custom_call.1']
    #allocation16 [shape = 'u8[1536]{0}', space=vmem, size = 0x800, scoped, tag = 'input window, operand 12, single buffered']
    #allocation17 [shape = 'u8[8192]{0}', space=vmem, size = 0x2000, scoped, tag = 'output window, operand 0']
    #allocation18 [shape = 'u8[8192]{0}', space=vmem, size = 0x2000, scoped, tag = 'output window, operand 1']
    #allocation19 [shape = 's32[2]{0}', space=sflag, size = 0x8, scoped, tag = 'scoped memory for tpu_custom_call.1']
    %24 = vsyncpa [#allocation3], 0
    %s25 = scalar_lea.sflag [#allocation3], 1
    %26 = vsyncpa %s25, 0
    %27 = vsyncpa [#allocation6], 0
    %28 = vsyncpa [#allocation9], 0
    %29 = vsyncpa [#allocation12], 0
    %30 = vsyncpa [#allocation15], 0
    %31 = vsyncpa [#allocation4], 0
    %s32 = scalar_lea.sflag [#allocation4], 1
    %33 = vsyncpa %s32, 0
    %34 = vsyncpa [#allocation19], 0
    %s35 = scalar_lea.sflag [#allocation19], 1
    %36 = vsyncpa %s35, 0
    loop: start=0, step=1, limit=6
    $region2: #{tpu_custom_call.1} parent=1 // loop_pre_header
      _
    $region3: #{tpu_custom_call.1} parent=1 // loop_header
      %s38 = sphi 0, %s42
      %p39 = scmp.ge.s32.totalorder %s38, 6
      %s45 = sphi 0, %s57
      %s46 = sphi 0, %s53
      %s47 = sphi 0, %s45
      %s48 = sphi 0, %s46
      %s49 = sphi 0, %s47
      %s50 = sphi 0, %s48
      %s60 = sphi 0, %s62
      %s63 = sphi 0, %s60
      %s64 = sphi 0, %s63
      %s80 = sphi 0, %s64
      %s86 = sphi 0, %s88
      %s89 = sphi 0, %s86
      %s90 = sphi 0, %s89
      %s106 = sphi 0, %s90
      %s114 = sphi 0, %s116
      %s117 = sphi 0, %s114
      %s118 = sphi 0, %s117
      %s134 = sphi 0, %s118
      %s138 = sphi 0, %s138
      %s140 = sphi 0, %s138
      %s141 = sphi 0, %s140
      %s155 = sphi 0, %s141
      %s159 = sphi 0, %s159
      %s161 = sphi 0, %s159
      %s162 = sphi 0, %s161
      %s176 = sphi 0, %s162
      %s180 = sphi 0, %s180
      %s182 = sphi 0, %s180
      %s183 = sphi 0, %s182
      %s197 = sphi 0, %s183
      %s201 = sphi 0, %s201
      %s203 = sphi 0, %s201
      %s204 = sphi 0, %s203
      %s218 = sphi 0, %s204
      %s222 = sphi 0, %s222
      %s224 = sphi 0, %s222
      %s225 = sphi 0, %s224
      %s239 = sphi 0, %s225
      %s243 = sphi 0, %s243
      %s245 = sphi 0, %s243
      %s246 = sphi 0, %s245
      %s260 = sphi 0, %s246
      %s264 = sphi 0, %s264
      %s266 = sphi 0, %s264
      %s267 = sphi 0, %s266
      %s281 = sphi 0, %s267
      %s285 = sphi 0, %s285
      %s287 = sphi 0, %s285
      %s288 = sphi 0, %s287
      %s302 = sphi 0, %s288
      %s306 = sphi 0, %s306
      %s308 = sphi 0, %s306
      %s309 = sphi 0, %s308
      %s323 = sphi 0, %s309
      %s327 = sphi 0, %s327
      %s329 = sphi 0, %s327
      %s330 = sphi 0, %s329
      %s344 = sphi 0, %s330
      %s348 = sphi 0, %s348
      %s350 = sphi 0, %s348
      %s351 = sphi 0, %s350
      %s365 = sphi 0, %s351
      %s369 = sphi 0, %s369
      %s371 = sphi 0, %s369
      %s372 = sphi 0, %s371
      %s386 = sphi 0, %s372
      %s390 = sphi 0, %s390
      %s392 = sphi 0, %s390
      %s393 = sphi 0, %s392
      %s407 = sphi 0, %s393
      %s411 = sphi 0, %s411
      %s413 = sphi 0, %s411
      %s414 = sphi 0, %s413
      %s428 = sphi 0, %s414
      %s436 = sphi 0, %s438
      %s439 = sphi 0, %s436
      %s440 = sphi 0, %s439
      %s456 = sphi 0, %s440
      %s464 = sphi 0, %s466
      %s467 = sphi 0, %s464
      %s468 = sphi 0, %s467
      %s484 = sphi 0, %s468
    $region4: #{tpu_custom_call.1} parent=1 // loop_header_branch
      %41 = sbr.rel (%p39) target = $region8
    $region5: #{tpu_custom_call.1} parent=1 // loop_body
      %s43 = ssub.s32 %s38, 1
      %s44 = ssub.s32 %s38, 2
      %s51 = sadd.s32 1, %s46
      %p52 = scmp.ge.s32.totalorder %s51, 2
      %s53 = scalar_select %p52, 0, %s51
      %s54 = sadd.s32 1, %s45
      %s55 = scalar_select %p52, %s54, %s45
      %p56 = scmp.ge.s32.totalorder %s55, 2
      %s57 = scalar_select %p56, 0, %s55
      %s58 = ssub.s32 %s45, %s57
      %p59 = scmp.eq.s32.totalorder %s58, 0
      %s61 = sadd.s32 %s60, 1
      %s62 = scalar_select %p59, %s60, %s61
      %p65 = pneg %p59
      %p66 = scmp.eq.s32.totalorder %s38, 3
      %p67 = por %p65, %p66
      %p68 = scmp.ne.s32.totalorder %s60, %s63
      %p69 = scmp.eq.s32.totalorder %s38, 0
      %p70 = por %p68, %p69
      %p71 = scmp.ne.s32.totalorder %s60, %s63
      %p72 = scmp.eq.s32.totalorder %s43, 3
      %p73 = por %p71, %p72
      %p74 = scmp.ne.s32.totalorder %s63, %s64
      %p75 = scmp.eq.s32.totalorder %s43, 0
      %p76 = por %p74, %p75
      %p77 = scmp.ne.s32.totalorder %s63, %s64
      %p78 = scmp.eq.s32.totalorder %s44, 3
      %p79 = por %p77, %p78
      %p81 = scmp.ne.s32.totalorder %s64, %s80
      %p82 = scmp.eq.s32.totalorder %s44, 0
      %p83 = por %p81, %p82
      %s84 = ssub.s32 %s45, %s57
      %p85 = scmp.eq.s32.totalorder %s84, 0
      %s87 = sadd.s32 %s86, 1
      %s88 = scalar_select %p85, %s86, %s87
      %p91 = pneg %p85
      %p92 = scmp.eq.s32.totalorder %s38, 3
      %p93 = por %p91, %p92
      %p94 = scmp.ne.s32.totalorder %s86, %s89
      %p95 = scmp.eq.s32.totalorder %s38, 0
      %p96 = por %p94, %p95
      %p97 = scmp.ne.s32.totalorder %s86, %s89
      %p98 = scmp.eq.s32.totalorder %s43, 3
      %p99 = por %p97, %p98
      %p100 = scmp.ne.s32.totalorder %s89, %s90
      %p101 = scmp.eq.s32.totalorder %s43, 0
      %p102 = por %p100, %p101
      %p103 = scmp.ne.s32.totalorder %s89, %s90
      %p104 = scmp.eq.s32.totalorder %s44, 3
      %p105 = por %p103, %p104
      %p107 = scmp.ne.s32.totalorder %s90, %s106
      %p108 = scmp.eq.s32.totalorder %s44, 0
      %p109 = por %p107, %p108
      %s110 = ssub.s32 %s45, %s57
      %s111 = ssub.s32 %s46, %s53
      %s112 = sor.u32 %s110, %s111
      %p113 = scmp.eq.s32.totalorder %s112, 0
      %s115 = sadd.s32 %s114, 1
      %s116 = scalar_select %p113, %s114, %s115
      %p119 = pneg %p113
      %p120 = scmp.eq.s32.totalorder %s38, 3
      %p121 = por %p119, %p120
      %p122 = scmp.ne.s32.totalorder %s114, %s117
      %p123 = scmp.eq.s32.totalorder %s38, 0
      %p124 = por %p122, %p123
      %p125 = scmp.ne.s32.totalorder %s114, %s117
      %p126 = scmp.eq.s32.totalorder %s43, 3
      %p127 = por %p125, %p126
      %p128 = scmp.ne.s32.totalorder %s117, %s118
      %p129 = scmp.eq.s32.totalorder %s43, 0
      %p130 = por %p128, %p129
      %p131 = scmp.ne.s32.totalorder %s117, %s118
      %p132 = scmp.eq.s32.totalorder %s44, 3
      %p133 = por %p131, %p132
      %p135 = scmp.ne.s32.totalorder %s118, %s134
      %p136 = scmp.eq.s32.totalorder %s44, 0
      %p137 = por %p135, %p136
      %s139 = sadd.s32 %s138, 1
      %p142 = scmp.eq.s32.totalorder %s38, 3
      %p143 = scmp.ne.s32.totalorder %s138, %s140
      %p144 = scmp.eq.s32.totalorder %s38, 0
      %p145 = por %p143, %p144
      %p146 = scmp.ne.s32.totalorder %s138, %s140
      %p147 = scmp.eq.s32.totalorder %s43, 3
      %p148 = por %p146, %p147
      %p149 = scmp.ne.s32.totalorder %s140, %s141
      %p150 = scmp.eq.s32.totalorder %s43, 0
      %p151 = por %p149, %p150
      %p152 = scmp.ne.s32.totalorder %s140, %s141
      %p153 = scmp.eq.s32.totalorder %s44, 3
      %p154 = por %p152, %p153
      %p156 = scmp.ne.s32.totalorder %s141, %s155
      %p157 = scmp.eq.s32.totalorder %s44, 0
      %p158 = por %p156, %p157
      %s160 = sadd.s32 %s159, 1
      %p163 = scmp.eq.s32.totalorder %s38, 3
      %p164 = scmp.ne.s32.totalorder %s159, %s161
      %p165 = scmp.eq.s32.totalorder %s38, 0
      %p166 = por %p164, %p165
      %p167 = scmp.ne.s32.totalorder %s159, %s161
      %p168 = scmp.eq.s32.totalorder %s43, 3
      %p169 = por %p167, %p168
      %p170 = scmp.ne.s32.totalorder %s161, %s162
      %p171 = scmp.eq.s32.totalorder %s43, 0
      %p172 = por %p170, %p171
      %p173 = scmp.ne.s32.totalorder %s161, %s162
      %p174 = scmp.eq.s32.totalorder %s44, 3
      %p175 = por %p173, %p174
      %p177 = scmp.ne.s32.totalorder %s162, %s176
      %p178 = scmp.eq.s32.totalorder %s44, 0
      %p179 = por %p177, %p178
      %s181 = sadd.s32 %s180, 1
      %p184 = scmp.eq.s32.totalorder %s38, 3
      %p185 = scmp.ne.s32.totalorder %s180, %s182
      %p186 = scmp.eq.s32.totalorder %s38, 0
      %p187 = por %p185, %p186
      %p188 = scmp.ne.s32.totalorder %s180, %s182
      %p189 = scmp.eq.s32.totalorder %s43, 3
      %p190 = por %p188, %p189
      %p191 = scmp.ne.s32.totalorder %s182, %s183
      %p192 = scmp.eq.s32.totalorder %s43, 0
      %p193 = por %p191, %p192
      %p194 = scmp.ne.s32.totalorder %s182, %s183
      %p195 = scmp.eq.s32.totalorder %s44, 3
      %p196 = por %p194, %p195
      %p198 = scmp.ne.s32.totalorder %s183, %s197
      %p199 = scmp.eq.s32.totalorder %s44, 0
      %p200 = por %p198, %p199
      %s202 = sadd.s32 %s201, 1
      %p205 = scmp.eq.s32.totalorder %s38, 3
      %p206 = scmp.ne.s32.totalorder %s201, %s203
      %p207 = scmp.eq.s32.totalorder %s38, 0
      %p208 = por %p206, %p207
      %p209 = scmp.ne.s32.totalorder %s201, %s203
      %p210 = scmp.eq.s32.totalorder %s43, 3
      %p211 = por %p209, %p210
      %p212 = scmp.ne.s32.totalorder %s203, %s204
      %p213 = scmp.eq.s32.totalorder %s43, 0
      %p214 = por %p212, %p213
      %p215 = scmp.ne.s32.totalorder %s203, %s204
      %p216 = scmp.eq.s32.totalorder %s44, 3
      %p217 = por %p215, %p216
      %p219 = scmp.ne.s32.totalorder %s204, %s218
      %p220 = scmp.eq.s32.totalorder %s44, 0
      %p221 = por %p219, %p220
      %s223 = sadd.s32 %s222, 1
      %p226 = scmp.eq.s32.totalorder %s38, 3
      %p227 = scmp.ne.s32.totalorder %s222, %s224
      %p228 = scmp.eq.s32.totalorder %s38, 0
      %p229 = por %p227, %p228
      %p230 = scmp.ne.s32.totalorder %s222, %s224
      %p231 = scmp.eq.s32.totalorder %s43, 3
      %p232 = por %p230, %p231
      %p233 = scmp.ne.s32.totalorder %s224, %s225
      %p234 = scmp.eq.s32.totalorder %s43, 0
      %p235 = por %p233, %p234
      %p236 = scmp.ne.s32.totalorder %s224, %s225
      %p237 = scmp.eq.s32.totalorder %s44, 3
      %p238 = por %p236, %p237
      %p240 = scmp.ne.s32.totalorder %s225, %s239
      %p241 = scmp.eq.s32.totalorder %s44, 0
      %p242 = por %p240, %p241
      %s244 = sadd.s32 %s243, 1
      %p247 = scmp.eq.s32.totalorder %s38, 3
      %p248 = scmp.ne.s32.totalorder %s243, %s245
      %p249 = scmp.eq.s32.totalorder %s38, 0
      %p250 = por %p248, %p249
      %p251 = scmp.ne.s32.totalorder %s243, %s245
      %p252 = scmp.eq.s32.totalorder %s43, 3
      %p253 = por %p251, %p252
      %p254 = scmp.ne.s32.totalorder %s245, %s246
      %p255 = scmp.eq.s32.totalorder %s43, 0
      %p256 = por %p254, %p255
      %p257 = scmp.ne.s32.totalorder %s245, %s246
      %p258 = scmp.eq.s32.totalorder %s44, 3
      %p259 = por %p257, %p258
      %p261 = scmp.ne.s32.totalorder %s246, %s260
      %p262 = scmp.eq.s32.totalorder %s44, 0
      %p263 = por %p261, %p262
      %s265 = sadd.s32 %s264, 1
      %p268 = scmp.eq.s32.totalorder %s38, 3
      %p269 = scmp.ne.s32.totalorder %s264, %s266
      %p270 = scmp.eq.s32.totalorder %s38, 0
      %p271 = por %p269, %p270
      %p272 = scmp.ne.s32.totalorder %s264, %s266
      %p273 = scmp.eq.s32.totalorder %s43, 3
      %p274 = por %p272, %p273
      %p275 = scmp.ne.s32.totalorder %s266, %s267
      %p276 = scmp.eq.s32.totalorder %s43, 0
      %p277 = por %p275, %p276
      %p278 = scmp.ne.s32.totalorder %s266, %s267
      %p279 = scmp.eq.s32.totalorder %s44, 3
      %p280 = por %p278, %p279
      %p282 = scmp.ne.s32.totalorder %s267, %s281
      %p283 = scmp.eq.s32.totalorder %s44, 0
      %p284 = por %p282, %p283
      %s286 = sadd.s32 %s285, 1
      %p289 = scmp.eq.s32.totalorder %s38, 3
      %p290 = scmp.ne.s32.totalorder %s285, %s287
      %p291 = scmp.eq.s32.totalorder %s38, 0
      %p292 = por %p290, %p291
      %p293 = scmp.ne.s32.totalorder %s285, %s287
      %p294 = scmp.eq.s32.totalorder %s43, 3
      %p295 = por %p293, %p294
      %p296 = scmp.ne.s32.totalorder %s287, %s288
      %p297 = scmp.eq.s32.totalorder %s43, 0
      %p298 = por %p296, %p297
      %p299 = scmp.ne.s32.totalorder %s287, %s288
      %p300 = scmp.eq.s32.totalorder %s44, 3
      %p301 = por %p299, %p300
      %p303 = scmp.ne.s32.totalorder %s288, %s302
      %p304 = scmp.eq.s32.totalorder %s44, 0
      %p305 = por %p303, %p304
      %s307 = sadd.s32 %s306, 1
      %p310 = scmp.eq.s32.totalorder %s38, 3
      %p311 = scmp.ne.s32.totalorder %s306, %s308
      %p312 = scmp.eq.s32.totalorder %s38, 0
      %p313 = por %p311, %p312
      %p314 = scmp.ne.s32.totalorder %s306, %s308
      %p315 = scmp.eq.s32.totalorder %s43, 3
      %p316 = por %p314, %p315
      %p317 = scmp.ne.s32.totalorder %s308, %s309
      %p318 = scmp.eq.s32.totalorder %s43, 0
      %p319 = por %p317, %p318
      %p320 = scmp.ne.s32.totalorder %s308, %s309
      %p321 = scmp.eq.s32.totalorder %s44, 3
      %p322 = por %p320, %p321
      %p324 = scmp.ne.s32.totalorder %s309, %s323
      %p325 = scmp.eq.s32.totalorder %s44, 0
      %p326 = por %p324, %p325
      %s328 = sadd.s32 %s327, 1
      %p331 = scmp.eq.s32.totalorder %s38, 3
      %p332 = scmp.ne.s32.totalorder %s327, %s329
      %p333 = scmp.eq.s32.totalorder %s38, 0
      %p334 = por %p332, %p333
      %p335 = scmp.ne.s32.totalorder %s327, %s329
      %p336 = scmp.eq.s32.totalorder %s43, 3
      %p337 = por %p335, %p336
      %p338 = scmp.ne.s32.totalorder %s329, %s330
      %p339 = scmp.eq.s32.totalorder %s43, 0
      %p340 = por %p338, %p339
      %p341 = scmp.ne.s32.totalorder %s329, %s330
      %p342 = scmp.eq.s32.totalorder %s44, 3
      %p343 = por %p341, %p342
      %p345 = scmp.ne.s32.totalorder %s330, %s344
      %p346 = scmp.eq.s32.totalorder %s44, 0
      %p347 = por %p345, %p346
      %s349 = sadd.s32 %s348, 1
      %p352 = scmp.eq.s32.totalorder %s38, 3
      %p353 = scmp.ne.s32.totalorder %s348, %s350
      %p354 = scmp.eq.s32.totalorder %s38, 0
      %p355 = por %p353, %p354
      %p356 = scmp.ne.s32.totalorder %s348, %s350
      %p357 = scmp.eq.s32.totalorder %s43, 3
      %p358 = por %p356, %p357
      %p359 = scmp.ne.s32.totalorder %s350, %s351
      %p360 = scmp.eq.s32.totalorder %s43, 0
      %p361 = por %p359, %p360
      %p362 = scmp.ne.s32.totalorder %s350, %s351
      %p363 = scmp.eq.s32.totalorder %s44, 3
      %p364 = por %p362, %p363
      %p366 = scmp.ne.s32.totalorder %s351, %s365
      %p367 = scmp.eq.s32.totalorder %s44, 0
      %p368 = por %p366, %p367
      %s370 = sadd.s32 %s369, 1
      %p373 = scmp.eq.s32.totalorder %s38, 3
      %p374 = scmp.ne.s32.totalorder %s369, %s371
      %p375 = scmp.eq.s32.totalorder %s38, 0
      %p376 = por %p374, %p375
      %p377 = scmp.ne.s32.totalorder %s369, %s371
      %p378 = scmp.eq.s32.totalorder %s43, 3
      %p379 = por %p377, %p378
      %p380 = scmp.ne.s32.totalorder %s371, %s372
      %p381 = scmp.eq.s32.totalorder %s43, 0
      %p382 = por %p380, %p381
      %p383 = scmp.ne.s32.totalorder %s371, %s372
      %p384 = scmp.eq.s32.totalorder %s44, 3
      %p385 = por %p383, %p384
      %p387 = scmp.ne.s32.totalorder %s372, %s386
      %p388 = scmp.eq.s32.totalorder %s44, 0
      %p389 = por %p387, %p388
      %s391 = sadd.s32 %s390, 1
      %p394 = scmp.eq.s32.totalorder %s38, 3
      %p395 = scmp.ne.s32.totalorder %s390, %s392
      %p396 = scmp.eq.s32.totalorder %s38, 0
      %p397 = por %p395, %p396
      %p398 = scmp.ne.s32.totalorder %s390, %s392
      %p399 = scmp.eq.s32.totalorder %s43, 3
      %p400 = por %p398, %p399
      %p401 = scmp.ne.s32.totalorder %s392, %s393
      %p402 = scmp.eq.s32.totalorder %s43, 0
      %p403 = por %p401, %p402
      %p404 = scmp.ne.s32.totalorder %s392, %s393
      %p405 = scmp.eq.s32.totalorder %s44, 3
      %p406 = por %p404, %p405
      %p408 = scmp.ne.s32.totalorder %s393, %s407
      %p409 = scmp.eq.s32.totalorder %s44, 0
      %p410 = por %p408, %p409
      %s412 = sadd.s32 %s411, 1
      %p415 = scmp.eq.s32.totalorder %s38, 3
      %p416 = scmp.ne.s32.totalorder %s411, %s413
      %p417 = scmp.eq.s32.totalorder %s38, 0
      %p418 = por %p416, %p417
      %p419 = scmp.ne.s32.totalorder %s411, %s413
      %p420 = scmp.eq.s32.totalorder %s43, 3
      %p421 = por %p419, %p420
      %p422 = scmp.ne.s32.totalorder %s413, %s414
      %p423 = scmp.eq.s32.totalorder %s43, 0
      %p424 = por %p422, %p423
      %p425 = scmp.ne.s32.totalorder %s413, %s414
      %p426 = scmp.eq.s32.totalorder %s44, 3
      %p427 = por %p425, %p426
      %p429 = scmp.ne.s32.totalorder %s414, %s428
      %p430 = scmp.eq.s32.totalorder %s44, 0
      %p431 = por %p429, %p430
      %s432 = ssub.s32 %s45, %s57
      %s433 = ssub.s32 %s46, %s53
      %s434 = sor.u32 %s432, %s433
      %p435 = scmp.eq.s32.totalorder %s434, 0
      %s437 = sadd.s32 %s436, 1
      %s438 = scalar_select %p435, %s436, %s437
      %p441 = pneg %p435
      %p442 = scmp.eq.s32.totalorder %s38, 3
      %p443 = por %p441, %p442
      %p444 = scmp.ne.s32.totalorder %s436, %s439
      %p445 = scmp.eq.s32.totalorder %s38, 0
      %p446 = por %p444, %p445
      %p447 = scmp.ne.s32.totalorder %s436, %s439
      %p448 = scmp.eq.s32.totalorder %s43, 3
      %p449 = por %p447, %p448
      %p450 = scmp.ne.s32.totalorder %s439, %s440
      %p451 = scmp.eq.s32.totalorder %s43, 0
      %p452 = por %p450, %p451
      %p453 = scmp.ne.s32.totalorder %s439, %s440
      %p454 = scmp.eq.s32.totalorder %s44, 3
      %p455 = por %p453, %p454
      %p457 = scmp.ne.s32.totalorder %s440, %s456
      %p458 = scmp.eq.s32.totalorder %s44, 0
      %p459 = por %p457, %p458
      %s460 = ssub.s32 %s45, %s57
      %s461 = ssub.s32 %s46, %s53
      %s462 = sor.u32 %s460, %s461
      %p463 = scmp.eq.s32.totalorder %s462, 0
      %s465 = sadd.s32 %s464, 1
      %s466 = scalar_select %p463, %s464, %s465
      %p469 = pneg %p463
      %p470 = scmp.eq.s32.totalorder %s38, 3
      %p471 = por %p469, %p470
      %p472 = scmp.ne.s32.totalorder %s464, %s467
      %p473 = scmp.eq.s32.totalorder %s38, 0
      %p474 = por %p472, %p473
      %p475 = scmp.ne.s32.totalorder %s464, %s467
      %p476 = scmp.eq.s32.totalorder %s43, 3
      %p477 = por %p475, %p476
      %p478 = scmp.ne.s32.totalorder %s467, %s468
      %p479 = scmp.eq.s32.totalorder %s43, 0
      %p480 = por %p478, %p479
      %p481 = scmp.ne.s32.totalorder %s467, %s468
      %p482 = scmp.eq.s32.totalorder %s44, 3
      %p483 = por %p481, %p482
      %p485 = scmp.ne.s32.totalorder %s468, %s484
      %p486 = scmp.eq.s32.totalorder %s44, 0
      %p487 = por %p485, %p486
      %p488 = scmp.le.s32.totalorder 1, %s38
      %p489 = scmp.lt.s32.totalorder %s38, 5
      %p490 = pnand %p488, %p489
      %p491 = pneg %p490
      // Predicated region
      $region9: #{tpu_custom_call.1} parent=5 // pred_check
        _
      $region10: #{tpu_custom_call.1} parent=5 // pred_check_branch
        %493 = sbr.rel (%p490) target = $region12
      $region11: #{tpu_custom_call.1} parent=5 // pred_region
        %s494 = ssub.s32 %s38, 1
        // Predicated region
        $region13: #{tpu_custom_call.1} parent=11 // pred_check
          %p495 = pneg %p151
        $region14: #{tpu_custom_call.1} parent=11 // pred_check_branch
          %497 = sbr.rel (%p495) target = $region16
        $region15: #{tpu_custom_call.1} parent=11 // pred_region
          %s499 = ssub.s32 16, 16
          %500 = vsyncadd [#allocation6], %s499
          %s502 = sshll.u32 [#allocation5], 4
          %s503 = int_to_ptr.vmem [resolvable:$true] %s502
          %505 = dma.hbm_to_vmem [thread:$0]  %s3, 16, %s503, [#allocation6]
        $region16: #{tpu_custom_call.1} parent=11 // pred_fallthru
          _
        // Predicated region
        $region17: #{tpu_custom_call.1} parent=11 // pred_check
          %p506 = pneg %p172
        $region18: #{tpu_custom_call.1} parent=11 // pred_check_branch
          %508 = sbr.rel (%p506) target = $region20
        $region19: #{tpu_custom_call.1} parent=11 // pred_region
          %s510 = ssub.s32 16, 16
          %511 = vsyncadd [#allocation6], %s510
          %s513 = sshll.u32 [#allocation7], 4
          %s514 = int_to_ptr.vmem [resolvable:$true] %s513
          %516 = dma.hbm_to_vmem [thread:$0]  %s4, 16, %s514, [#allocation6]
        $region20: #{tpu_custom_call.1} parent=11 // pred_fallthru
          _
        // Predicated region
        $region21: #{tpu_custom_call.1} parent=11 // pred_check
          %p517 = pneg %p193
        $region22: #{tpu_custom_call.1} parent=11 // pred_check_branch
          %519 = sbr.rel (%p517) target = $region24
        $region23: #{tpu_custom_call.1} parent=11 // pred_region
          _
        $region24: #{tpu_custom_call.1} parent=11 // pred_fallthru
          _
        // Predicated region
        $region25: #{tpu_custom_call.1} parent=11 // pred_check
          %p520 = pneg %p214
        $region26: #{tpu_custom_call.1} parent=11 // pred_check_branch
          %522 = sbr.rel (%p520) target = $region28
        $region27: #{tpu_custom_call.1} parent=11 // pred_region
          _
        $region28: #{tpu_custom_call.1} parent=11 // pred_fallthru
          _
        // Predicated region
        $region29: #{tpu_custom_call.1} parent=11 // pred_check
          %p523 = pneg %p235
        $region30: #{tpu_custom_call.1} parent=11 // pred_check_branch
          %525 = sbr.rel (%p523) target = $region32
        $region31: #{tpu_custom_call.1} parent=11 // pred_region
          %s527 = ssub.s32 48, 48
          %528 = vsyncadd [#allocation9], %s527
          %s529 = sshll.u32 [#allocation8], 4
          %s530 = int_to_ptr.vmem [resolvable:$true] %s529
          %535 = dma.hbm_to_vmem [thread:$0]  %s7, 48, %s530, [#allocation9], 16, 16, 1
        $region32: #{tpu_custom_call.1} parent=11 // pred_fallthru
          _
        // Predicated region
        $region33: #{tpu_custom_call.1} parent=11 // pred_check
          %p536 = pneg %p256
        $region34: #{tpu_custom_call.1} parent=11 // pred_check_branch
          %538 = sbr.rel (%p536) target = $region36
        $region35: #{tpu_custom_call.1} parent=11 // pred_region
          %s540 = ssub.s32 48, 48
          %541 = vsyncadd [#allocation9], %s540
          %s542 = sshll.u32 [#allocation10], 4
          %s543 = int_to_ptr.vmem [resolvable:$true] %s542
          %548 = dma.hbm_to_vmem [thread:$0]  %s8, 48, %s543, [#allocation9], 16, 16, 1
        $region36: #{tpu_custom_call.1} parent=11 // pred_fallthru
          _
        // Predicated region
        $region37: #{tpu_custom_call.1} parent=11 // pred_check
          %p549 = pneg %p277
        $region38: #{tpu_custom_call.1} parent=11 // pred_check_branch
          %551 = sbr.rel (%p549) target = $region40
        $region39: #{tpu_custom_call.1} parent=11 // pred_region
          %s553 = ssub.s32 384, 384
          %554 = vsyncadd [#allocation12], %s553
          %s555 = sshll.u32 [#allocation11], 4
          %s556 = int_to_ptr.vmem [resolvable:$true] %s555
          %561 = dma.hbm_to_vmem [thread:$0]  %s9, 384, %s556, [#allocation12], 64, 64, 4
        $region40: #{tpu_custom_call.1} parent=11 // pred_fallthru
          _
        // Predicated region
        $region41: #{tpu_custom_call.1} parent=11 // pred_check
          %p562 = pneg %p298
        $region42: #{tpu_custom_call.1} parent=11 // pred_check_branch
          %564 = sbr.rel (%p562) target = $region44
        $region43: #{tpu_custom_call.1} parent=11 // pred_region
          %s566 = ssub.s32 48, 48
          %567 = vsyncadd [#allocation12], %s566
          %s568 = sshll.u32 [#allocation13], 4
          %s569 = int_to_ptr.vmem [resolvable:$true] %s568
          %574 = dma.hbm_to_vmem [thread:$0]  %s10, 48, %s569, [#allocation12], 16, 16, 1
        $region44: #{tpu_custom_call.1} parent=11 // pred_fallthru
          _
        // Predicated region
        $region45: #{tpu_custom_call.1} parent=11 // pred_check
          %p575 = pneg %p319
        $region46: #{tpu_custom_call.1} parent=11 // pred_check_branch
          %577 = sbr.rel (%p575) target = $region48
        $region47: #{tpu_custom_call.1} parent=11 // pred_region
          %s579 = ssub.s32 384, 384
          %580 = vsyncadd [#allocation15], %s579
          %s581 = sshll.u32 [#allocation14], 4
          %s582 = int_to_ptr.vmem [resolvable:$true] %s581
          %587 = dma.hbm_to_vmem [thread:$0]  %s11, 384, %s582, [#allocation15], 64, 64, 4
        $region48: #{tpu_custom_call.1} parent=11 // pred_fallthru
          _
        // Predicated region
        $region49: #{tpu_custom_call.1} parent=11 // pred_check
          %p588 = pneg %p340
        $region50: #{tpu_custom_call.1} parent=11 // pred_check_branch
          %590 = sbr.rel (%p588) target = $region52
        $region51: #{tpu_custom_call.1} parent=11 // pred_region
          %s592 = ssub.s32 48, 48
          %593 = vsyncadd [#allocation15], %s592
          %s594 = sshll.u32 [#allocation16], 4
          %s595 = int_to_ptr.vmem [resolvable:$true] %s594
          %600 = dma.hbm_to_vmem [thread:$0]  %s12, 48, %s595, [#allocation15], 16, 16, 1
        $region52: #{tpu_custom_call.1} parent=11 // pred_fallthru
          _
        // Predicated region
        $region53: #{tpu_custom_call.1} parent=11 // pred_check
          %p601 = pneg %p361
        $region54: #{tpu_custom_call.1} parent=11 // pred_check_branch
          %603 = sbr.rel (%p601) target = $region56
        $region55: #{tpu_custom_call.1} parent=11 // pred_region
          _
        $region56: #{tpu_custom_call.1} parent=11 // pred_fallthru
          _
        // Predicated region
        $region57: #{tpu_custom_call.1} parent=11 // pred_check
          %p604 = pneg %p382
        $region58: #{tpu_custom_call.1} parent=11 // pred_check_branch
          %606 = sbr.rel (%p604) target = $region60
        $region59: #{tpu_custom_call.1} parent=11 // pred_region
          _
        $region60: #{tpu_custom_call.1} parent=11 // pred_fallthru
          _
        // Predicated region
        $region61: #{tpu_custom_call.1} parent=11 // pred_check
          %p607 = pneg %p403
        $region62: #{tpu_custom_call.1} parent=11 // pred_check_branch
          %609 = sbr.rel (%p607) target = $region64
        $region63: #{tpu_custom_call.1} parent=11 // pred_region
          _
        $region64: #{tpu_custom_call.1} parent=11 // pred_fallthru
          _
        // Predicated region
        $region65: #{tpu_custom_call.1} parent=11 // pred_check
          %p610 = pneg %p424
        $region66: #{tpu_custom_call.1} parent=11 // pred_check_branch
          %612 = sbr.rel (%p610) target = $region68
        $region67: #{tpu_custom_call.1} parent=11 // pred_region
          _
        $region68: #{tpu_custom_call.1} parent=11 // pred_fallthru
          _
      $region12: #{tpu_custom_call.1} parent=5 // pred_fallthru
        _
      %p613 = scmp.lt.s32.totalorder %s38, 4
      // Predicated region
      $region69: #{tpu_custom_call.1} parent=5 // pred_check
        %p614 = pneg %p613
      $region70: #{tpu_custom_call.1} parent=5 // pred_check_branch
        %616 = sbr.rel (%p614) target = $region72
      $region71: #{tpu_custom_call.1} parent=5 // pred_region
        // Predicated region
        $region73: #{tpu_custom_call.1} parent=71 // pred_check
          %p617 = pneg %p70
        $region74: #{tpu_custom_call.1} parent=71 // pred_check_branch
          %619 = sbr.rel (%p617) target = $region76
        $region75: #{tpu_custom_call.1} parent=71 // pred_region
          %p620 = scmp.lt.s32.totalorder %s45, 1
          %s621 = scalar_select %p620, %s45, 1
          %s622 = smul.addr %s621, 4
          %s623 = smul.addr %s622, 8
          %s624 = scalar_lea.vmem %s0, %s623
        $region76: #{tpu_custom_call.1} parent=71 // pred_fallthru
          _
        // Predicated region
        $region77: #{tpu_custom_call.1} parent=71 // pred_check
          %p625 = pneg %p96
        $region78: #{tpu_custom_call.1} parent=71 // pred_check_branch
          %627 = sbr.rel (%p625) target = $region80
        $region79: #{tpu_custom_call.1} parent=71 // pred_region
          %p628 = scmp.lt.s32.totalorder %s45, 1
          %s629 = scalar_select %p628, %s45, 1
          %s630 = smul.addr %s629, 4
          %s631 = smul.addr %s630, 8
          %s632 = scalar_lea.vmem %s1, %s631
        $region80: #{tpu_custom_call.1} parent=71 // pred_fallthru
          _
        // Predicated region
        $region81: #{tpu_custom_call.1} parent=71 // pred_check
          %p633 = pneg %p124
        $region82: #{tpu_custom_call.1} parent=71 // pred_check_branch
          %635 = sbr.rel (%p633) target = $region84
        $region83: #{tpu_custom_call.1} parent=71 // pred_region
          %s636 = sand.u32 %s114, 1
          %s637 = scalar_lea.sflag [#allocation3], %s636
          %s638 = sand.u32 %s114, 1
          %s639 = smul.addr %s638, 8
          %s640 = scalar_lea.vmem [#allocation2], %s639
          %s642 = ssub.s32 128, 128
          %643 = vsyncadd %s637, %s642
          %s644 = smul.addr %s45, 2
          %s645 = sadd.s32 %s46, %s644
          %s646 = smul.addr %s645, 128
          %s647 = scalar_lea.hbm %s2, %s646
          %s649 = sshll.u32 %s640, 4
          %s650 = int_to_ptr.vmem [resolvable:$true] %s649
          %652 = dma.hbm_to_vmem [thread:$0]  %s647, 128, %s650, %s637
        $region84: #{tpu_custom_call.1} parent=71 // pred_fallthru
          _
      $region72: #{tpu_custom_call.1} parent=5 // pred_fallthru
        _
      %p653 = scmp.le.s32.totalorder 1, %s38
      %p654 = scmp.lt.s32.totalorder %s38, 5
      %p655 = pnand %p653, %p654
      %p656 = pneg %p655
      // Predicated region
      $region85: #{tpu_custom_call.1} parent=5 // pred_check
        _
      $region86: #{tpu_custom_call.1} parent=5 // pred_check_branch
        %658 = sbr.rel (%p655) target = $region88
      $region87: #{tpu_custom_call.1} parent=5 // pred_region
        %s659 = ssub.s32 %s38, 1
        %s660 = sand.u32 %s117, 1
        %s661 = scalar_lea.sflag [#allocation3], %s660
        %s662 = sand.u32 %s117, 1
        %s663 = smul.addr %s662, 8
        %s664 = scalar_lea.vmem [#allocation2], %s663
        // Predicated region
        $region89: #{tpu_custom_call.1} parent=87 // pred_check
          %p665 = pneg %p130
        $region90: #{tpu_custom_call.1} parent=87 // pred_check_branch
          %667 = sbr.rel (%p665) target = $region92
        $region91: #{tpu_custom_call.1} parent=87 // pred_region
          %668 = dma.done %s661, 128
        $region92: #{tpu_custom_call.1} parent=87 // pred_fallthru
          _
        // Predicated region
        $region93: #{tpu_custom_call.1} parent=87 // pred_check
          %p669 = pneg %p151
        $region94: #{tpu_custom_call.1} parent=87 // pred_check_branch
          %671 = sbr.rel (%p669) target = $region96
        $region95: #{tpu_custom_call.1} parent=87 // pred_region
          %672 = dma.done [#allocation6], 16
        $region96: #{tpu_custom_call.1} parent=87 // pred_fallthru
          _
        // Predicated region
        $region97: #{tpu_custom_call.1} parent=87 // pred_check
          %p673 = pneg %p172
        $region98: #{tpu_custom_call.1} parent=87 // pred_check_branch
          %675 = sbr.rel (%p673) target = $region100
        $region99: #{tpu_custom_call.1} parent=87 // pred_region
          %676 = dma.done [#allocation6], 16
        $region100: #{tpu_custom_call.1} parent=87 // pred_fallthru
          _
        // Predicated region
        $region101: #{tpu_custom_call.1} parent=87 // pred_check
          %p677 = pneg %p235
        $region102: #{tpu_custom_call.1} parent=87 // pred_check_branch
          %679 = sbr.rel (%p677) target = $region104
        $region103: #{tpu_custom_call.1} parent=87 // pred_region
          %680 = dma.done [#allocation9], 48
        $region104: #{tpu_custom_call.1} parent=87 // pred_fallthru
          _
        // Predicated region
        $region105: #{tpu_custom_call.1} parent=87 // pred_check
          %p681 = pneg %p256
        $region106: #{tpu_custom_call.1} parent=87 // pred_check_branch
          %683 = sbr.rel (%p681) target = $region108
        $region107: #{tpu_custom_call.1} parent=87 // pred_region
          %684 = dma.done [#allocation9], 48
        $region108: #{tpu_custom_call.1} parent=87 // pred_fallthru
          _
        // Predicated region
        $region109: #{tpu_custom_call.1} parent=87 // pred_check
          %p685 = pneg %p277
        $region110: #{tpu_custom_call.1} parent=87 // pred_check_branch
          %687 = sbr.rel (%p685) target = $region112
        $region111: #{tpu_custom_call.1} parent=87 // pred_region
          %688 = dma.done [#allocation12], 384
        $region112: #{tpu_custom_call.1} parent=87 // pred_fallthru
          _
        // Predicated region
        $region113: #{tpu_custom_call.1} parent=87 // pred_check
          %p689 = pneg %p298
        $region114: #{tpu_custom_call.1} parent=87 // pred_check_branch
          %691 = sbr.rel (%p689) target = $region116
        $region115: #{tpu_custom_call.1} parent=87 // pred_region
          %692 = dma.done [#allocation12], 48
        $region116: #{tpu_custom_call.1} parent=87 // pred_fallthru
          _
        // Predicated region
        $region117: #{tpu_custom_call.1} parent=87 // pred_check
          %p693 = pneg %p319
        $region118: #{tpu_custom_call.1} parent=87 // pred_check_branch
          %695 = sbr.rel (%p693) target = $region120
        $region119: #{tpu_custom_call.1} parent=87 // pred_region
          %696 = dma.done [#allocation15], 384
        $region120: #{tpu_custom_call.1} parent=87 // pred_fallthru
          _
        // Predicated region
        $region121: #{tpu_custom_call.1} parent=87 // pred_check
          %p697 = pneg %p340
        $region122: #{tpu_custom_call.1} parent=87 // pred_check_branch
          %699 = sbr.rel (%p697) target = $region124
        $region123: #{tpu_custom_call.1} parent=87 // pred_region
          %700 = dma.done [#allocation15], 48
        $region124: #{tpu_custom_call.1} parent=87 // pred_fallthru
          _
        %p701 = scmp.lt.s32.totalorder %s47, 1
        %s702 = scalar_select %p701, %s47, 1
        %s703 = smul.addr %s702, 4
        %s704 = smul.addr %s703, 8
        %s705 = scalar_lea.vmem %s0, %s704
        %p706 = pneg %p76
        %p707 = pneg %p73
        %p708 = scmp.lt.s32.totalorder %s47, 1
        %s709 = scalar_select %p708, %s47, 1
        %s710 = smul.addr %s709, 4
        %s711 = smul.addr %s710, 8
        %s712 = scalar_lea.vmem %s1, %s711
        %p713 = pneg %p102
        %p714 = pneg %p99
        %s715 = sand.u32 %s117, 1
        %s716 = scalar_lea.sflag [#allocation3], %s715
        %s717 = sand.u32 %s117, 1
        %s718 = smul.addr %s717, 8
        %s719 = scalar_lea.vmem [#allocation2], %s718
        %p720 = pneg %p130
        %p721 = pneg %p127
        %p722 = pneg %p151
        %p723 = pneg %p148
        %p724 = pneg %p172
        %p725 = pneg %p169
        %p726 = pneg %p193
        %p727 = pneg %p190
        %p728 = pneg %p214
        %p729 = pneg %p211
        %p730 = pneg %p235
        %p731 = pneg %p232
        %p732 = pneg %p256
        %p733 = pneg %p253
        %p734 = pneg %p277
        %p735 = pneg %p274
        %p736 = pneg %p298
        %p737 = pneg %p295
        %p738 = pneg %p319
        %p739 = pneg %p316
        %p740 = pneg %p340
        %p741 = pneg %p337
        %p742 = pneg %p361
        %p743 = pneg %p358
        %p744 = pneg %p382
        %p745 = pneg %p379
        %p746 = pneg %p403
        %p747 = pneg %p400
        %p748 = pneg %p424
        %p749 = pneg %p421
        %p750 = pneg %p452
        %p751 = pneg %p449
        %s752 = sand.u32 %s439, 1
        %s753 = scalar_lea.sflag [#allocation4], %s752
        %s754 = sand.u32 %s439, 1
        %s755 = smul.addr %s754, 8
        %s756 = scalar_lea.vmem [#allocation17], %s755
        %p757 = pneg %p480
        %p758 = pneg %p477
        %s759 = sand.u32 %s467, 1
        %s760 = scalar_lea.sflag [#allocation19], %s759
        %s761 = sand.u32 %s467, 1
        %s762 = smul.addr %s761, 8
        %s763 = scalar_lea.vmem [#allocation18], %s762
        %p764 = scmp.lt.s32.totalorder %s47, 1
        %s765 = scalar_select %p764, %s47, 1
        %s766 = smul.addr %s765, 4
        %s767 = smul.addr %s766, 8
        %s768 = scalar_lea.vmem %s0, %s767
        %p769 = scmp.lt.s32.totalorder %s47, 1
        %s770 = scalar_select %p769, %s47, 1
        %s771 = smul.addr %s770, 4
        %s772 = smul.addr %s771, 8
        %s773 = scalar_lea.vmem %s1, %s772
        %s775 = smul.u32 %s48, 8
        %s776 = scalar_lea.vmem %s768, %s775
        %v777 = vld [vmem:[%s776] sm:$0xff]
        %v778 = vld [vmem:[%s776 + $0x8] sm:$0xff]
        %v779 = vld [vmem:[%s776 + $0x10] sm:$0xff]
        %v780 = vpack.c.bf16 %v778, %v777
        %v781 = vpack.c.bf16 %v779, %v779
        %s782 = scalar_lea.vmem %s773, %s775
        %v783 = vld [vmem:[%s782] sm:$0xff]
        %v784 = vld [vmem:[%s782 + $0x8] sm:$0xff]
        %v785 = vld [vmem:[%s782 + $0x10] sm:$0xff]
        %787 = vset.pattern.permute.xlu0 0
        %788 = vperm.xlu0 %787, %v783
        %v789 = vpop.permute.xlu0 %788
        %792 = vset.pattern.permute.xlu0 0
        %793 = vperm.xlu0 %792, %v784
        %v794 = vpop.permute.xlu0 %793
        %797 = vset.pattern.permute.xlu0 0
        %798 = vperm.xlu0 %797, %v785
        %v799 = vpop.permute.xlu0 %798
        %v801 = vld [vmem:[#allocation5] sm:$0x1]
        %v802 = vld [vmem:[#allocation7] sm:$0x1]
        %v804 = vlaneseq
        %v805 = vshrl.u32 %v804, 7
        %v806 = vsub.s32 0, %v805
        %v807 = vrot.slane %v802, %v806
        %vm809 = vcmask 15360
        %v811 = vsel %vm809, %v780, 0
        %v814 = vsel %vm809, %v781, 0
        %vm816 = vcmask 1040384
        %v818 = vsel %vm816, %v801, 0
        %820 = vmatprep.subr.bf16.mxu0 0
        %821 = vmatpush1.bf16.msra.mxu0 0
        %822 = vmatprep.subr.bf16.mxu0 0
        %823 = vmatpush1.bf16.msra.mxu0 0
        %824 = vmatprep.subr.bf16.mxu0 0
        %825 = vmatpush1.bf16.msra.mxu0 0
        %826 = vmatprep.subr.bf16.mxu0 0
        %827 = vmatpush1.bf16.msra.mxu0 0
        %828 = vmatprep.subr.bf16.mxu0 0
        %829 = vmatpush1.bf16.msra.mxu0 0
        %830 = vmatprep.subr.bf16.mxu0 0
        %831 = vmatpush1.bf16.msra.mxu0 0
        %832 = vmatprep.subr.bf16.mxu0 0
        %833 = vmatpush1.bf16.msra.mxu0 0
        %834 = vmatprep.subr.bf16.mxu0 0
        %835 = vmatpush1.bf16.msra.mxu0 %v818
        %836 = vmatprep.subr.bf16.mxu0 0
        %837 = vmatpush2.bf16.msra.mxu0 0
        %838 = vmatprep.subr.bf16.mxu0 0
        %839 = vmatpush2.bf16.msra.mxu0 0
        %840 = vmatprep.subr.bf16.mxu0 0
        %841 = vmatpush2.bf16.msra.mxu0 0
        %842 = vmatprep.subr.bf16.mxu0 0
        %843 = vmatpush2.bf16.msra.mxu0 0
        %844 = vmatprep.subr.bf16.mxu0 0
        %845 = vmatpush2.bf16.msra.mxu0 0
        %846 = vmatprep.subr.bf16.mxu0 0
        %847 = vmatpush2.bf16.msra.mxu0 0
        %848 = vmatprep.subr.bf16.mxu0 0
        %849 = vmatpush2.bf16.msra.mxu0 0
        %850 = vmatprep.subr.bf16.mxu0 0
        %851 = vmatpush2.bf16.msra.mxu0 0
        %852 = vmatprep.mubr.bf16.mxu0 0
        %853 = vmatmul.mubr.bf16.gmra.mxu0 %v811
        %v854 = vpop.f32.mrf.mxu0
        %v855 = vadd.f32 %v807, %v854
        %v856 = vpop.f32.mrf.mxu0
        %v857 = vpop.f32.mrf.mxu0
        %v858 = vadd.f32 %v807, %v857
        %v859 = vpop.f32.mrf.mxu0
        %860 = vmatprep.mubr.bf16.mxu0 0
        %861 = vmatmul.mubr.bf16.gmra.mxu0 %v814
        %v862 = vpop.f32.mrf.mxu0
        %v863 = vadd.f32 %v807, %v862
        %v864 = vpop.f32.mrf.mxu0
        %v865 = vpop.f32.mrf.mxu0
        %v866 = vpop.f32.mrf.mxu0
        %867 = vdwg.mxu0
        %v868 = vmul.f32 %v855, %v789
        %v869 = vmul.f32 %v858, %v794
        %v870 = vmul.f32 %v863, %v799
        %v871 = vrot.slane %v868, 7
        %v872 = vrot.slane %v869, 7
        %v873 = vrot.slane %v870, 7
        %v874 = vlaneseq
        %v875 = vshrl.u32 %v874, 7
        %vm876 = vcmp.lt.s32.totalorder %v875, 1
        %v877 = vsel %vm876, %v872, %v873
        %v878 = vsel %vm876, %v871, %v872
        %v879 = vsel %vm876, %v873, %v871
        %v880 = vpack.c.bf16 %v878, %v879
        %v881 = vpack.c.bf16 %v877, %v877
        %v882 = vld [vmem:[%s5] sm:$0xf]
        %v883 = vld [vmem:[%s5 + $0x4] sm:$0xf]
        %v884 = vld [vmem:[%s6] sm:$0xf]
        %v885 = vld [vmem:[%s6 + $0x4] sm:$0xf]
        %v886 = vpack.c.bf16 %v869, %v868
        %v887 = vpack.c.bf16 %v870, %v870
        %s888 = scalar_lea.vmem %s5, 8
        %v889 = vld [vmem:[%s888] sm:$0xf]
        %v890 = vld [vmem:[%s888 + $0x4] sm:$0xf]
        %v893 = vunpack.c.l.b16 %v889
        %v894 = vunpack.c.l.b16 %v890
        %v895 = vpack.c.b16 %v894, %v893
        %vm897 = vcmask 130048
        %v899 = vsel %vm897, %v886, 0
        %v902 = vsel %vm897, %v887, 0
        %904 = vmatprep.subr.bf16.mxu0 0
        %905 = vmatpush1.bf16.msra.mxu0 0
        %906 = vmatprep.subr.bf16.mxu0 0
        %907 = vmatpush1.bf16.msra.mxu0 0
        %908 = vmatprep.subr.bf16.mxu0 0
        %909 = vmatpush1.bf16.msra.mxu0 0
        %910 = vmatprep.subr.bf16.mxu0 0
        %911 = vmatpush1.bf16.msra.mxu0 0
        %912 = vmatprep.subr.bf16.mxu0 0
        %913 = vmatpush1.bf16.msra.mxu0 0
        %914 = vmatprep.subr.bf16.mxu0 0
        %915 = vmatpush1.bf16.msra.mxu0 0
        %916 = vmatprep.subr.bf16.mxu0 0
        %917 = vmatpush1.bf16.msra.mxu0 0
        %918 = vmatprep.subr.bf16.mxu0 0
        %919 = vmatpush1.bf16.msra.mxu0 %v895
        %920 = vmatprep.subr.bf16.mxu0 0
        %921 = vmatpush2.bf16.msra.mxu0 0
        %922 = vmatprep.subr.bf16.mxu0 0
        %923 = vmatpush2.bf16.msra.mxu0 0
        %924 = vmatprep.subr.bf16.mxu0 0
        %925 = vmatpush2.bf16.msra.mxu0 0
        %926 = vmatprep.subr.bf16.mxu0 0
        %927 = vmatpush2.bf16.msra.mxu0 0
        %928 = vmatprep.subr.bf16.mxu0 0
        %929 = vmatpush2.bf16.msra.mxu0 0
        %930 = vmatprep.subr.bf16.mxu0 0
        %931 = vmatpush2.bf16.msra.mxu0 0
        %932 = vmatprep.subr.bf16.mxu0 0
        %933 = vmatpush2.bf16.msra.mxu0 0
        %934 = vmatprep.subr.bf16.mxu0 0
        %935 = vmatpush2.bf16.msra.mxu0 0
        %936 = vmatprep.mubr.bf16.mxu0 0
        %937 = vmatmul.mubr.bf16.gmra.mxu0 %v899
        %v938 = vpop.f32.mrf.mxu0
        %v939 = vadd.f32 0.0, %v938
        %v940 = vpop.f32.mrf.mxu0
        %v941 = vpop.f32.mrf.mxu0
        %v942 = vadd.f32 0.0, %v941
        %v943 = vpop.f32.mrf.mxu0
        %944 = vmatprep.mubr.bf16.mxu0 0
        %945 = vmatmul.mubr.bf16.gmra.mxu0 %v902
        %v946 = vpop.f32.mrf.mxu0
        %v947 = vadd.f32 0.0, %v946
        %v948 = vpop.f32.mrf.mxu0
        %v949 = vpop.f32.mrf.mxu0
        %v950 = vpop.f32.mrf.mxu0
        %951 = vdwg.mxu0
        %s952 = scalar_lea.vmem %s6, 8
        %v953 = vld [vmem:[%s952] sm:$0xf]
        %v954 = vld [vmem:[%s952 + $0x4] sm:$0xf]
        %v957 = vunpack.c.l.b16 %v953
        %v958 = vunpack.c.l.b16 %v954
        %v959 = vpack.c.b16 %v958, %v957
        %961 = vmatprep.subr.bf16.mxu0 0
        %962 = vmatpush1.bf16.msra.mxu0 0
        %963 = vmatprep.subr.bf16.mxu0 0
        %964 = vmatpush1.bf16.msra.mxu0 0
        %965 = vmatprep.subr.bf16.mxu0 0
        %966 = vmatpush1.bf16.msra.mxu0 0
        %967 = vmatprep.subr.bf16.mxu0 0
        %968 = vmatpush1.bf16.msra.mxu0 0
        %969 = vmatprep.subr.bf16.mxu0 0
        %970 = vmatpush1.bf16.msra.mxu0 0
        %971 = vmatprep.subr.bf16.mxu0 0
        %972 = vmatpush1.bf16.msra.mxu0 0
        %973 = vmatprep.subr.bf16.mxu0 0
        %974 = vmatpush1.bf16.msra.mxu0 0
        %975 = vmatprep.subr.bf16.mxu0 0
        %976 = vmatpush1.bf16.msra.mxu0 %v959
        %977 = vmatprep.subr.bf16.mxu0 0
        %978 = vmatpush2.bf16.msra.mxu0 0
        %979 = vmatprep.subr.bf16.mxu0 0
        %980 = vmatpush2.bf16.msra.mxu0 0
        %981 = vmatprep.subr.bf16.mxu0 0
        %982 = vmatpush2.bf16.msra.mxu0 0
        %983 = vmatprep.subr.bf16.mxu0 0
        %984 = vmatpush2.bf16.msra.mxu0 0
        %985 = vmatprep.subr.bf16.mxu0 0
        %986 = vmatpush2.bf16.msra.mxu0 0
        %987 = vmatprep.subr.bf16.mxu0 0
        %988 = vmatpush2.bf16.msra.mxu0 0
        %989 = vmatprep.subr.bf16.mxu0 0
        %990 = vmatpush2.bf16.msra.mxu0 0
        %991 = vmatprep.subr.bf16.mxu0 0
        %992 = vmatpush2.bf16.msra.mxu0 0
        %993 = vmatprep.mubr.bf16.mxu0 0
        %994 = vmatmul.mubr.bf16.gmra.mxu0 %v899
        %v995 = vpop.f32.mrf.mxu0
        %v996 = vadd.f32 0.0, %v995
        %v997 = vpop.f32.mrf.mxu0
        %v998 = vpop.f32.mrf.mxu0
        %v999 = vadd.f32 0.0, %v998
        %v1000 = vpop.f32.mrf.mxu0
        %1001 = vmatprep.mubr.bf16.mxu0 0
        %1002 = vmatmul.mubr.bf16.gmra.mxu0 %v902
        %v1003 = vpop.f32.mrf.mxu0
        %v1004 = vadd.f32 0.0, %v1003
        %v1005 = vpop.f32.mrf.mxu0
        %v1006 = vpop.f32.mrf.mxu0
        %v1007 = vpop.f32.mrf.mxu0
        %1008 = vdwg.mxu0
        %v1011 = vunpack.c.l.b16 %v882
        %v1012 = vunpack.c.l.b16 %v883
        %v1013 = vpack.c.b16 %v1012, %v1011
        %v1016 = vsel %vm897, %v880, 0
        %v1019 = vsel %vm897, %v881, 0
        %1021 = vmatprep.subr.bf16.mxu0 0
        %1022 = vmatpush1.bf16.msra.mxu0 0
        %1023 = vmatprep.subr.bf16.mxu0 0
        %1024 = vmatpush1.bf16.msra.mxu0 0
        %1025 = vmatprep.subr.bf16.mxu0 0
        %1026 = vmatpush1.bf16.msra.mxu0 0
        %1027 = vmatprep.subr.bf16.mxu0 0
        %1028 = vmatpush1.bf16.msra.mxu0 0
        %1029 = vmatprep.subr.bf16.mxu0 0
        %1030 = vmatpush1.bf16.msra.mxu0 0
        %1031 = vmatprep.subr.bf16.mxu0 0
        %1032 = vmatpush1.bf16.msra.mxu0 0
        %1033 = vmatprep.subr.bf16.mxu0 0
        %1034 = vmatpush1.bf16.msra.mxu0 0
        %1035 = vmatprep.subr.bf16.mxu0 0
        %1036 = vmatpush1.bf16.msra.mxu0 %v1013
        %1037 = vmatprep.subr.bf16.mxu0 0
        %1038 = vmatpush2.bf16.msra.mxu0 0
        %1039 = vmatprep.subr.bf16.mxu0 0
        %1040 = vmatpush2.bf16.msra.mxu0 0
        %1041 = vmatprep.subr.bf16.mxu0 0
        %1042 = vmatpush2.bf16.msra.mxu0 0
        %1043 = vmatprep.subr.bf16.mxu0 0
        %1044 = vmatpush2.bf16.msra.mxu0 0
        %1045 = vmatprep.subr.bf16.mxu0 0
        %1046 = vmatpush2.bf16.msra.mxu0 0
        %1047 = vmatprep.subr.bf16.mxu0 0
        %1048 = vmatpush2.bf16.msra.mxu0 0
        %1049 = vmatprep.subr.bf16.mxu0 0
        %1050 = vmatpush2.bf16.msra.mxu0 0
        %1051 = vmatprep.subr.bf16.mxu0 0
        %1052 = vmatpush2.bf16.msra.mxu0 0
        %1053 = vmatprep.mubr.bf16.mxu0 0
        %1054 = vmatmul.mubr.bf16.gmra.mxu0 %v1016
        %v1055 = vpop.f32.mrf.mxu0
        %v1056 = vadd.f32 %v939, %v1055
        %v1057 = vpop.f32.mrf.mxu0
        %v1058 = vpop.f32.mrf.mxu0
        %v1059 = vadd.f32 %v942, %v1058
        %v1060 = vpop.f32.mrf.mxu0
        %1061 = vmatprep.mubr.bf16.mxu0 0
        %1062 = vmatmul.mubr.bf16.gmra.mxu0 %v1019
        %v1063 = vpop.f32.mrf.mxu0
        %v1064 = vadd.f32 %v947, %v1063
        %v1065 = vpop.f32.mrf.mxu0
        %v1066 = vpop.f32.mrf.mxu0
        %v1067 = vpop.f32.mrf.mxu0
        %1068 = vdwg.mxu0
        %v1071 = vunpack.c.l.b16 %v884
        %v1072 = vunpack.c.l.b16 %v885
        %v1073 = vpack.c.b16 %v1072, %v1071
        %1075 = vmatprep.subr.bf16.mxu0 0
        %1076 = vmatpush1.bf16.msra.mxu0 0
        %1077 = vmatprep.subr.bf16.mxu0 0
        %1078 = vmatpush1.bf16.msra.mxu0 0
        %1079 = vmatprep.subr.bf16.mxu0 0
        %1080 = vmatpush1.bf16.msra.mxu0 0
        %1081 = vmatprep.subr.bf16.mxu0 0
        %1082 = vmatpush1.bf16.msra.mxu0 0
        %1083 = vmatprep.subr.bf16.mxu0 0
        %1084 = vmatpush1.bf16.msra.mxu0 0
        %1085 = vmatprep.subr.bf16.mxu0 0
        %1086 = vmatpush1.bf16.msra.mxu0 0
        %1087 = vmatprep.subr.bf16.mxu0 0
        %1088 = vmatpush1.bf16.msra.mxu0 0
        %1089 = vmatprep.subr.bf16.mxu0 0
        %1090 = vmatpush1.bf16.msra.mxu0 %v1073
        %1091 = vmatprep.subr.bf16.mxu0 0
        %1092 = vmatpush2.bf16.msra.mxu0 0
        %1093 = vmatprep.subr.bf16.mxu0 0
        %1094 = vmatpush2.bf16.msra.mxu0 0
        %1095 = vmatprep.subr.bf16.mxu0 0
        %1096 = vmatpush2.bf16.msra.mxu0 0
        %1097 = vmatprep.subr.bf16.mxu0 0
        %1098 = vmatpush2.bf16.msra.mxu0 0
        %1099 = vmatprep.subr.bf16.mxu0 0
        %1100 = vmatpush2.bf16.msra.mxu0 0
        %1101 = vmatprep.subr.bf16.mxu0 0
        %1102 = vmatpush2.bf16.msra.mxu0 0
        %1103 = vmatprep.subr.bf16.mxu0 0
        %1104 = vmatpush2.bf16.msra.mxu0 0
        %1105 = vmatprep.subr.bf16.mxu0 0
        %1106 = vmatpush2.bf16.msra.mxu0 0
        %1107 = vmatprep.mubr.bf16.mxu0 0
        %1108 = vmatmul.mubr.bf16.gmra.mxu0 %v1016
        %v1109 = vpop.f32.mrf.mxu0
        %v1110 = vadd.f32 %v996, %v1109
        %v1111 = vpop.f32.mrf.mxu0
        %v1112 = vpop.f32.mrf.mxu0
        %v1113 = vadd.f32 %v999, %v1112
        %v1114 = vpop.f32.mrf.mxu0
        %1115 = vmatprep.mubr.bf16.mxu0 0
        %1116 = vmatmul.mubr.bf16.gmra.mxu0 %v1019
        %v1117 = vpop.f32.mrf.mxu0
        %v1118 = vadd.f32 %v1004, %v1117
        %v1119 = vpop.f32.mrf.mxu0
        %v1120 = vpop.f32.mrf.mxu0
        %v1121 = vpop.f32.mrf.mxu0
        %1122 = vdwg.mxu0
        %v1123 = vrot.slane %v868, 1
        %v1124 = vrot.slane %v869, 1
        %v1125 = vrot.slane %v870, 1
        %vm1126 = vcmp.lt.s32.totalorder %v875, 7
        %v1127 = vsel %vm1126, %v1124, %v1125
        %v1128 = vsel %vm1126, %v1123, %v1124
        %v1129 = vsel %vm1126, %v1125, %v1123
        %v1130 = vpack.c.bf16 %v1127, %v1128
        %v1131 = vpack.c.bf16 %v1129, %v1129
        %s1132 = scalar_lea.vmem %s5, 16
        %v1133 = vld [vmem:[%s1132] sm:$0xf]
        %v1134 = vld [vmem:[%s1132 + $0x4] sm:$0xf]
        %v1137 = vunpack.c.l.b16 %v1133
        %v1138 = vunpack.c.l.b16 %v1134
        %v1139 = vpack.c.b16 %v1138, %v1137
        %v1142 = vsel %vm897, %v1130, 0
        %v1145 = vsel %vm897, %v1131, 0
        %1147 = vmatprep.subr.bf16.mxu0 0
        %1148 = vmatpush1.bf16.msra.mxu0 0
        %1149 = vmatprep.subr.bf16.mxu0 0
        %1150 = vmatpush1.bf16.msra.mxu0 0
        %1151 = vmatprep.subr.bf16.mxu0 0
        %1152 = vmatpush1.bf16.msra.mxu0 0
        %1153 = vmatprep.subr.bf16.mxu0 0
        %1154 = vmatpush1.bf16.msra.mxu0 0
        %1155 = vmatprep.subr.bf16.mxu0 0
        %1156 = vmatpush1.bf16.msra.mxu0 0
        %1157 = vmatprep.subr.bf16.mxu0 0
        %1158 = vmatpush1.bf16.msra.mxu0 0
        %1159 = vmatprep.subr.bf16.mxu0 0
        %1160 = vmatpush1.bf16.msra.mxu0 0
        %1161 = vmatprep.subr.bf16.mxu0 0
        %1162 = vmatpush1.bf16.msra.mxu0 %v1139
        %1163 = vmatprep.subr.bf16.mxu0 0
        %1164 = vmatpush2.bf16.msra.mxu0 0
        %1165 = vmatprep.subr.bf16.mxu0 0
        %1166 = vmatpush2.bf16.msra.mxu0 0
        %1167 = vmatprep.subr.bf16.mxu0 0
        %1168 = vmatpush2.bf16.msra.mxu0 0
        %1169 = vmatprep.subr.bf16.mxu0 0
        %1170 = vmatpush2.bf16.msra.mxu0 0
        %1171 = vmatprep.subr.bf16.mxu0 0
        %1172 = vmatpush2.bf16.msra.mxu0 0
        %1173 = vmatprep.subr.bf16.mxu0 0
        %1174 = vmatpush2.bf16.msra.mxu0 0
        %1175 = vmatprep.subr.bf16.mxu0 0
        %1176 = vmatpush2.bf16.msra.mxu0 0
        %1177 = vmatprep.subr.bf16.mxu0 0
        %1178 = vmatpush2.bf16.msra.mxu0 0
        %1179 = vmatprep.mubr.bf16.mxu0 0
        %1180 = vmatmul.mubr.bf16.gmra.mxu0 %v1142
        %v1181 = vpop.f32.mrf.mxu0
        %v1182 = vadd.f32 0.0, %v1181
        %v1183 = vpop.f32.mrf.mxu0
        %v1184 = vpop.f32.mrf.mxu0
        %v1185 = vadd.f32 0.0, %v1184
        %v1186 = vpop.f32.mrf.mxu0
        %1187 = vmatprep.mubr.bf16.mxu0 0
        %1188 = vmatmul.mubr.bf16.gmra.mxu0 %v1145
        %v1189 = vpop.f32.mrf.mxu0
        %v1190 = vadd.f32 0.0, %v1189
        %v1191 = vpop.f32.mrf.mxu0
        %v1192 = vpop.f32.mrf.mxu0
        %v1193 = vpop.f32.mrf.mxu0
        %1194 = vdwg.mxu0
        %s1195 = scalar_lea.vmem %s6, 16
        %v1196 = vld [vmem:[%s1195] sm:$0xf]
        %v1197 = vld [vmem:[%s1195 + $0x4] sm:$0xf]
        %v1200 = vunpack.c.l.b16 %v1196
        %v1201 = vunpack.c.l.b16 %v1197
        %v1202 = vpack.c.b16 %v1201, %v1200
        %1204 = vmatprep.subr.bf16.mxu0 0
        %1205 = vmatpush1.bf16.msra.mxu0 0
        %1206 = vmatprep.subr.bf16.mxu0 0
        %1207 = vmatpush1.bf16.msra.mxu0 0
        %1208 = vmatprep.subr.bf16.mxu0 0
        %1209 = vmatpush1.bf16.msra.mxu0 0
        %1210 = vmatprep.subr.bf16.mxu0 0
        %1211 = vmatpush1.bf16.msra.mxu0 0
        %1212 = vmatprep.subr.bf16.mxu0 0
        %1213 = vmatpush1.bf16.msra.mxu0 0
        %1214 = vmatprep.subr.bf16.mxu0 0
        %1215 = vmatpush1.bf16.msra.mxu0 0
        %1216 = vmatprep.subr.bf16.mxu0 0
        %1217 = vmatpush1.bf16.msra.mxu0 0
        %1218 = vmatprep.subr.bf16.mxu0 0
        %1219 = vmatpush1.bf16.msra.mxu0 %v1202
        %1220 = vmatprep.subr.bf16.mxu0 0
        %1221 = vmatpush2.bf16.msra.mxu0 0
        %1222 = vmatprep.subr.bf16.mxu0 0
        %1223 = vmatpush2.bf16.msra.mxu0 0
        %1224 = vmatprep.subr.bf16.mxu0 0
        %1225 = vmatpush2.bf16.msra.mxu0 0
        %1226 = vmatprep.subr.bf16.mxu0 0
        %1227 = vmatpush2.bf16.msra.mxu0 0
        %1228 = vmatprep.subr.bf16.mxu0 0
        %1229 = vmatpush2.bf16.msra.mxu0 0
        %1230 = vmatprep.subr.bf16.mxu0 0
        %1231 = vmatpush2.bf16.msra.mxu0 0
        %1232 = vmatprep.subr.bf16.mxu0 0
        %1233 = vmatpush2.bf16.msra.mxu0 0
        %1234 = vmatprep.subr.bf16.mxu0 0
        %1235 = vmatpush2.bf16.msra.mxu0 0
        %1236 = vmatprep.mubr.bf16.mxu0 0
        %1237 = vmatmul.mubr.bf16.gmra.mxu0 %v1142
        %v1238 = vpop.f32.mrf.mxu0
        %v1239 = vadd.f32 0.0, %v1238
        %v1240 = vpop.f32.mrf.mxu0
        %v1241 = vpop.f32.mrf.mxu0
        %v1242 = vadd.f32 0.0, %v1241
        %v1243 = vpop.f32.mrf.mxu0
        %1244 = vmatprep.mubr.bf16.mxu0 0
        %1245 = vmatmul.mubr.bf16.gmra.mxu0 %v1145
        %v1246 = vpop.f32.mrf.mxu0
        %v1247 = vadd.f32 0.0, %v1246
        %v1248 = vpop.f32.mrf.mxu0
        %v1249 = vpop.f32.mrf.mxu0
        %v1250 = vpop.f32.mrf.mxu0
        %1251 = vdwg.mxu0
        %v1252 = vadd.f32 %v1056, %v1182
        %v1253 = vadd.f32 %v1059, %v1185
        %v1254 = vadd.f32 %v1064, %v1190
        %v1255 = vadd.f32 %v1110, %v1239
        %v1256 = vadd.f32 %v1113, %v1242
        %v1257 = vadd.f32 %v1118, %v1247
        %v1258 = vld [vmem:[#allocation8] sm:$0x1]
        %v1260 = vlaneseq
        %v1261 = vshrl.u32 %v1260, 7
        %v1262 = vsub.s32 0, %v1261
        %v1263 = vrot.slane %v1258, %v1262
        %v1265 = vadd.f32 %v1252, %v1263
        %v1266 = vadd.f32 %v1253, %v1263
        %v1267 = vadd.f32 %v1254, %v1263
        %v1268 = vtanh.pop %v1265
        %v1269 = vtanh.pop %v1266
        %v1270 = vtanh.pop %v1267
        %v1271 = vld [vmem:[#allocation10] sm:$0x1]
        %v1273 = vlaneseq
        %v1274 = vshrl.u32 %v1273, 7
        %v1275 = vsub.s32 0, %v1274
        %v1276 = vrot.slane %v1271, %v1275
        %v1278 = vadd.f32 %v1255, %v1276
        %v1279 = vadd.f32 %v1256, %v1276
        %v1280 = vadd.f32 %v1257, %v1276
        %v1281 = vxor.u32 %v1278, 2147483648
        %v1282 = vxor.u32 %v1279, 2147483648
        %v1283 = vxor.u32 %v1280, 2147483648
        %v1284 = vmul.f32 %v1281, 1.442695
        %v1285 = vpow.pop %v1284
        %v1286 = vmul.f32 %v1282, 1.442695
        %v1287 = vpow.pop %v1286
        %v1288 = vmul.f32 %v1283, 1.442695
        %v1289 = vpow.pop %v1288
        %v1290 = vadd.f32 %v1285, 1.0
        %v1291 = vadd.f32 %v1287, 1.0
        %v1292 = vadd.f32 %v1289, 1.0
        %v1293 = vrcp.pop %v1290
        %v1294 = vmul.f32 1.0, %v1293
        %v1295 = vrcp.pop %v1291
        %v1296 = vmul.f32 1.0, %v1295
        %v1297 = vrcp.pop %v1292
        %v1298 = vmul.f32 1.0, %v1297
        %v1299 = vmul.f32 %v1268, %v1294
        %v1300 = vmul.f32 %v1269, %v1296
        %v1301 = vmul.f32 %v1270, %v1298
        %v1302 = vpack.c.bf16 %v1300, %v1299
        %v1303 = vpack.c.bf16 %v1301, %v1301
        %v1304 = vld [vmem:[#allocation14] sm:$0xf]
        %v1305 = vld [vmem:[#allocation14 + $0x4] sm:$0xf]
        %v1306 = vld [vmem:[#allocation16] sm:$0x1]
        %v1308 = vlaneseq
        %v1309 = vshrl.u32 %v1308, 7
        %v1310 = vsub.s32 0, %v1309
        %v1311 = vrot.slane %v1306, %v1310
        %v1315 = vunpack.c.l.b16 %v1304
        %v1316 = vunpack.c.l.b16 %v1305
        %v1317 = vpack.c.b16 %v1316, %v1315
        %v1320 = vsel %vm897, %v1302, 0
        %v1323 = vsel %vm897, %v1303, 0
        %1325 = vmatprep.subr.bf16.mxu0 0
        %1326 = vmatpush1.bf16.msra.mxu0 0
        %1327 = vmatprep.subr.bf16.mxu0 0
        %1328 = vmatpush1.bf16.msra.mxu0 0
        %1329 = vmatprep.subr.bf16.mxu0 0
        %1330 = vmatpush1.bf16.msra.mxu0 0
        %1331 = vmatprep.subr.bf16.mxu0 0
        %1332 = vmatpush1.bf16.msra.mxu0 0
        %1333 = vmatprep.subr.bf16.mxu0 0
        %1334 = vmatpush1.bf16.msra.mxu0 0
        %1335 = vmatprep.subr.bf16.mxu0 0
        %1336 = vmatpush1.bf16.msra.mxu0 0
        %1337 = vmatprep.subr.bf16.mxu0 0
        %1338 = vmatpush1.bf16.msra.mxu0 0
        %1339 = vmatprep.subr.bf16.mxu0 0
        %1340 = vmatpush1.bf16.msra.mxu0 %v1317
        %1341 = vmatprep.subr.bf16.mxu0 0
        %1342 = vmatpush2.bf16.msra.mxu0 0
        %1343 = vmatprep.subr.bf16.mxu0 0
        %1344 = vmatpush2.bf16.msra.mxu0 0
        %1345 = vmatprep.subr.bf16.mxu0 0
        %1346 = vmatpush2.bf16.msra.mxu0 0
        %1347 = vmatprep.subr.bf16.mxu0 0
        %1348 = vmatpush2.bf16.msra.mxu0 0
        %1349 = vmatprep.subr.bf16.mxu0 0
        %1350 = vmatpush2.bf16.msra.mxu0 0
        %1351 = vmatprep.subr.bf16.mxu0 0
        %1352 = vmatpush2.bf16.msra.mxu0 0
        %1353 = vmatprep.subr.bf16.mxu0 0
        %1354 = vmatpush2.bf16.msra.mxu0 0
        %1355 = vmatprep.subr.bf16.mxu0 0
        %1356 = vmatpush2.bf16.msra.mxu0 0
        %1357 = vmatprep.mubr.bf16.mxu0 0
        %1358 = vmatmul.mubr.bf16.gmra.mxu0 %v1320
        %v1359 = vpop.f32.mrf.mxu0
        %v1360 = vpop.f32.mrf.mxu0
        %v1361 = vpop.f32.mrf.mxu0
        %v1362 = vadd.f32 %v1311, %v1361
        %v1363 = vpop.f32.mrf.mxu0
        %1364 = vmatprep.mubr.bf16.mxu0 0
        %1365 = vmatmul.mubr.bf16.gmra.mxu0 %v1323
        %v1366 = vpop.f32.mrf.mxu0
        %v1367 = vpop.f32.mrf.mxu0
        %v1368 = vpop.f32.mrf.mxu0
        %v1369 = vpop.f32.mrf.mxu0
        %1370 = vdwg.mxu0
        %v1371 = vld [vmem:[#allocation11] sm:$0xf]
        %v1372 = vld [vmem:[#allocation11 + $0x4] sm:$0xf]
        %v1373 = vld [vmem:[#allocation13] sm:$0x1]
        %v1375 = vlaneseq
        %v1376 = vshrl.u32 %v1375, 7
        %v1377 = vsub.s32 0, %v1376
        %v1378 = vrot.slane %v1373, %v1377
        %v1382 = vunpack.c.l.b16 %v1371
        %v1383 = vunpack.c.l.b16 %v1372
        %v1384 = vpack.c.b16 %v1383, %v1382
        %1386 = vmatprep.subr.bf16.mxu0 0
        %1387 = vmatpush1.bf16.msra.mxu0 0
        %1388 = vmatprep.subr.bf16.mxu0 0
        %1389 = vmatpush1.bf16.msra.mxu0 0
        %1390 = vmatprep.subr.bf16.mxu0 0
        %1391 = vmatpush1.bf16.msra.mxu0 0
        %1392 = vmatprep.subr.bf16.mxu0 0
        %1393 = vmatpush1.bf16.msra.mxu0 0
        %1394 = vmatprep.subr.bf16.mxu0 0
        %1395 = vmatpush1.bf16.msra.mxu0 0
        %1396 = vmatprep.subr.bf16.mxu0 0
        %1397 = vmatpush1.bf16.msra.mxu0 0
        %1398 = vmatprep.subr.bf16.mxu0 0
        %1399 = vmatpush1.bf16.msra.mxu0 0
        %1400 = vmatprep.subr.bf16.mxu0 0
        %1401 = vmatpush1.bf16.msra.mxu0 %v1384
        %1402 = vmatprep.subr.bf16.mxu0 0
        %1403 = vmatpush2.bf16.msra.mxu0 0
        %1404 = vmatprep.subr.bf16.mxu0 0
        %1405 = vmatpush2.bf16.msra.mxu0 0
        %1406 = vmatprep.subr.bf16.mxu0 0
        %1407 = vmatpush2.bf16.msra.mxu0 0
        %1408 = vmatprep.subr.bf16.mxu0 0
        %1409 = vmatpush2.bf16.msra.mxu0 0
        %1410 = vmatprep.subr.bf16.mxu0 0
        %1411 = vmatpush2.bf16.msra.mxu0 0
        %1412 = vmatprep.subr.bf16.mxu0 0
        %1413 = vmatpush2.bf16.msra.mxu0 0
        %1414 = vmatprep.subr.bf16.mxu0 0
        %1415 = vmatpush2.bf16.msra.mxu0 0
        %1416 = vmatprep.subr.bf16.mxu0 0
        %1417 = vmatpush2.bf16.msra.mxu0 0
        %1418 = vmatprep.mubr.bf16.mxu0 0
        %1419 = vmatmul.mubr.bf16.gmra.mxu0 %v1320
        %v1420 = vpop.f32.mrf.mxu0
        %v1421 = vadd.f32 %v1378, %v1420
        %v1422 = vpop.f32.mrf.mxu0
        %v1423 = vpop.f32.mrf.mxu0
        %v1424 = vadd.f32 %v1378, %v1423
        %v1425 = vpop.f32.mrf.mxu0
        %1426 = vmatprep.mubr.bf16.mxu0 0
        %1427 = vmatmul.mubr.bf16.gmra.mxu0 %v1323
        %v1428 = vpop.f32.mrf.mxu0
        %v1429 = vadd.f32 %v1378, %v1428
        %v1430 = vpop.f32.mrf.mxu0
        %v1431 = vpop.f32.mrf.mxu0
        %v1432 = vpop.f32.mrf.mxu0
        %1433 = vdwg.mxu0
        %v1434 = vadd.f32 %v868, %v1421
        %v1435 = vadd.f32 %v869, %v1424
        %v1436 = vadd.f32 %v870, %v1429
        %v1437 = vmul.f32 %v1434, %v789
        %v1438 = vmul.f32 %v1435, %v794
        %v1439 = vmul.f32 %v1436, %v799
        %v1440 = vrot.slane %v1437, 6
        %v1441 = vrot.slane %v1438, 6
        %v1442 = vrot.slane %v1439, 6
        %vm1443 = vcmp.lt.s32.totalorder %v875, 2
        %v1444 = vsel %vm1443, %v1441, %v1442
        %v1445 = vsel %vm1443, %v1440, %v1441
        %v1446 = vsel %vm1443, %v1442, %v1440
        %v1447 = vpack.c.bf16 %v1445, %v1446
        %v1448 = vpack.c.bf16 %v1444, %v1444
        %s1449 = scalar_lea.vmem %s5, 24
        %v1450 = vld [vmem:[%s1449] sm:$0xf]
        %v1451 = vld [vmem:[%s1449 + $0x4] sm:$0xf]
        %s1452 = scalar_lea.vmem %s6, 24
        %v1453 = vld [vmem:[%s1452] sm:$0xf]
        %v1454 = vld [vmem:[%s1452 + $0x4] sm:$0xf]
        %v1455 = vpack.c.bf16 %v1438, %v1437
        %v1456 = vpack.c.bf16 %v1439, %v1439
        %s1457 = scalar_lea.vmem %s5, 32
        %v1458 = vld [vmem:[%s1457] sm:$0xf]
        %v1459 = vld [vmem:[%s1457 + $0x4] sm:$0xf]
        %v1462 = vunpack.c.l.b16 %v1458
        %v1463 = vunpack.c.l.b16 %v1459
        %v1464 = vpack.c.b16 %v1463, %v1462
        %v1467 = vsel %vm897, %v1455, 0
        %v1470 = vsel %vm897, %v1456, 0
        %1472 = vmatprep.subr.bf16.mxu0 0
        %1473 = vmatpush1.bf16.msra.mxu0 0
        %1474 = vmatprep.subr.bf16.mxu0 0
        %1475 = vmatpush1.bf16.msra.mxu0 0
        %1476 = vmatprep.subr.bf16.mxu0 0
        %1477 = vmatpush1.bf16.msra.mxu0 0
        %1478 = vmatprep.subr.bf16.mxu0 0
        %1479 = vmatpush1.bf16.msra.mxu0 0
        %1480 = vmatprep.subr.bf16.mxu0 0
        %1481 = vmatpush1.bf16.msra.mxu0 0
        %1482 = vmatprep.subr.bf16.mxu0 0
        %1483 = vmatpush1.bf16.msra.mxu0 0
        %1484 = vmatprep.subr.bf16.mxu0 0
        %1485 = vmatpush1.bf16.msra.mxu0 0
        %1486 = vmatprep.subr.bf16.mxu0 0
        %1487 = vmatpush1.bf16.msra.mxu0 %v1464
        %1488 = vmatprep.subr.bf16.mxu0 0
        %1489 = vmatpush2.bf16.msra.mxu0 0
        %1490 = vmatprep.subr.bf16.mxu0 0
        %1491 = vmatpush2.bf16.msra.mxu0 0
        %1492 = vmatprep.subr.bf16.mxu0 0
        %1493 = vmatpush2.bf16.msra.mxu0 0
        %1494 = vmatprep.subr.bf16.mxu0 0
        %1495 = vmatpush2.bf16.msra.mxu0 0
        %1496 = vmatprep.subr.bf16.mxu0 0
        %1497 = vmatpush2.bf16.msra.mxu0 0
        %1498 = vmatprep.subr.bf16.mxu0 0
        %1499 = vmatpush2.bf16.msra.mxu0 0
        %1500 = vmatprep.subr.bf16.mxu0 0
        %1501 = vmatpush2.bf16.msra.mxu0 0
        %1502 = vmatprep.subr.bf16.mxu0 0
        %1503 = vmatpush2.bf16.msra.mxu0 0
        %1504 = vmatprep.mubr.bf16.mxu0 0
        %1505 = vmatmul.mubr.bf16.gmra.mxu0 %v1467
        %v1506 = vpop.f32.mrf.mxu0
        %v1507 = vadd.f32 0.0, %v1506
        %v1508 = vpop.f32.mrf.mxu0
        %v1509 = vpop.f32.mrf.mxu0
        %v1510 = vadd.f32 0.0, %v1509
        %v1511 = vpop.f32.mrf.mxu0
        %1512 = vmatprep.mubr.bf16.mxu0 0
        %1513 = vmatmul.mubr.bf16.gmra.mxu0 %v1470
        %v1514 = vpop.f32.mrf.mxu0
        %v1515 = vadd.f32 0.0, %v1514
        %v1516 = vpop.f32.mrf.mxu0
        %v1517 = vpop.f32.mrf.mxu0
        %v1518 = vpop.f32.mrf.mxu0
        %1519 = vdwg.mxu0
        %s1520 = scalar_lea.vmem %s6, 32
        %v1521 = vld [vmem:[%s1520] sm:$0xf]
        %v1522 = vld [vmem:[%s1520 + $0x4] sm:$0xf]
        %v1525 = vunpack.c.l.b16 %v1521
        %v1526 = vunpack.c.l.b16 %v1522
        %v1527 = vpack.c.b16 %v1526, %v1525
        %1529 = vmatprep.subr.bf16.mxu0 0
        %1530 = vmatpush1.bf16.msra.mxu0 0
        %1531 = vmatprep.subr.bf16.mxu0 0
        %1532 = vmatpush1.bf16.msra.mxu0 0
        %1533 = vmatprep.subr.bf16.mxu0 0
        %1534 = vmatpush1.bf16.msra.mxu0 0
        %1535 = vmatprep.subr.bf16.mxu0 0
        %1536 = vmatpush1.bf16.msra.mxu0 0
        %1537 = vmatprep.subr.bf16.mxu0 0
        %1538 = vmatpush1.bf16.msra.mxu0 0
        %1539 = vmatprep.subr.bf16.mxu0 0
        %1540 = vmatpush1.bf16.msra.mxu0 0
        %1541 = vmatprep.subr.bf16.mxu0 0
        %1542 = vmatpush1.bf16.msra.mxu0 0
        %1543 = vmatprep.subr.bf16.mxu0 0
        %1544 = vmatpush1.bf16.msra.mxu0 %v1527
        %1545 = vmatprep.subr.bf16.mxu0 0
        %1546 = vmatpush2.bf16.msra.mxu0 0
        %1547 = vmatprep.subr.bf16.mxu0 0
        %1548 = vmatpush2.bf16.msra.mxu0 0
        %1549 = vmatprep.subr.bf16.mxu0 0
        %1550 = vmatpush2.bf16.msra.mxu0 0
        %1551 = vmatprep.subr.bf16.mxu0 0
        %1552 = vmatpush2.bf16.msra.mxu0 0
        %1553 = vmatprep.subr.bf16.mxu0 0
        %1554 = vmatpush2.bf16.msra.mxu0 0
        %1555 = vmatprep.subr.bf16.mxu0 0
        %1556 = vmatpush2.bf16.msra.mxu0 0
        %1557 = vmatprep.subr.bf16.mxu0 0
        %1558 = vmatpush2.bf16.msra.mxu0 0
        %1559 = vmatprep.subr.bf16.mxu0 0
        %1560 = vmatpush2.bf16.msra.mxu0 0
        %1561 = vmatprep.mubr.bf16.mxu0 0
        %1562 = vmatmul.mubr.bf16.gmra.mxu0 %v1467
        %v1563 = vpop.f32.mrf.mxu0
        %v1564 = vadd.f32 0.0, %v1563
        %v1565 = vpop.f32.mrf.mxu0
        %v1566 = vpop.f32.mrf.mxu0
        %v1567 = vadd.f32 0.0, %v1566
        %v1568 = vpop.f32.mrf.mxu0
        %1569 = vmatprep.mubr.bf16.mxu0 0
        %1570 = vmatmul.mubr.bf16.gmra.mxu0 %v1470
        %v1571 = vpop.f32.mrf.mxu0
        %v1572 = vadd.f32 0.0, %v1571
        %v1573 = vpop.f32.mrf.mxu0
        %v1574 = vpop.f32.mrf.mxu0
        %v1575 = vpop.f32.mrf.mxu0
        %1576 = vdwg.mxu0
        %v1579 = vunpack.c.l.b16 %v1450
        %v1580 = vunpack.c.l.b16 %v1451
        %v1581 = vpack.c.b16 %v1580, %v1579
        %v1584 = vsel %vm897, %v1447, 0
        %v1587 = vsel %vm897, %v1448, 0
        %1589 = vmatprep.subr.bf16.mxu0 0
        %1590 = vmatpush1.bf16.msra.mxu0 0
        %1591 = vmatprep.subr.bf16.mxu0 0
        %1592 = vmatpush1.bf16.msra.mxu0 0
        %1593 = vmatprep.subr.bf16.mxu0 0
        %1594 = vmatpush1.bf16.msra.mxu0 0
        %1595 = vmatprep.subr.bf16.mxu0 0
        %1596 = vmatpush1.bf16.msra.mxu0 0
        %1597 = vmatprep.subr.bf16.mxu0 0
        %1598 = vmatpush1.bf16.msra.mxu0 0
        %1599 = vmatprep.subr.bf16.mxu0 0
        %1600 = vmatpush1.bf16.msra.mxu0 0
        %1601 = vmatprep.subr.bf16.mxu0 0
        %1602 = vmatpush1.bf16.msra.mxu0 0
        %1603 = vmatprep.subr.bf16.mxu0 0
        %1604 = vmatpush1.bf16.msra.mxu0 %v1581
        %1605 = vmatprep.subr.bf16.mxu0 0
        %1606 = vmatpush2.bf16.msra.mxu0 0
        %1607 = vmatprep.subr.bf16.mxu0 0
        %1608 = vmatpush2.bf16.msra.mxu0 0
        %1609 = vmatprep.subr.bf16.mxu0 0
        %1610 = vmatpush2.bf16.msra.mxu0 0
        %1611 = vmatprep.subr.bf16.mxu0 0
        %1612 = vmatpush2.bf16.msra.mxu0 0
        %1613 = vmatprep.subr.bf16.mxu0 0
        %1614 = vmatpush2.bf16.msra.mxu0 0
        %1615 = vmatprep.subr.bf16.mxu0 0
        %1616 = vmatpush2.bf16.msra.mxu0 0
        %1617 = vmatprep.subr.bf16.mxu0 0
        %1618 = vmatpush2.bf16.msra.mxu0 0
        %1619 = vmatprep.subr.bf16.mxu0 0
        %1620 = vmatpush2.bf16.msra.mxu0 0
        %1621 = vmatprep.mubr.bf16.mxu0 0
        %1622 = vmatmul.mubr.bf16.gmra.mxu0 %v1584
        %v1623 = vpop.f32.mrf.mxu0
        %v1624 = vadd.f32 %v1507, %v1623
        %v1625 = vpop.f32.mrf.mxu0
        %v1626 = vpop.f32.mrf.mxu0
        %v1627 = vadd.f32 %v1510, %v1626
        %v1628 = vpop.f32.mrf.mxu0
        %1629 = vmatprep.mubr.bf16.mxu0 0
        %1630 = vmatmul.mubr.bf16.gmra.mxu0 %v1587
        %v1631 = vpop.f32.mrf.mxu0
        %v1632 = vadd.f32 %v1515, %v1631
        %v1633 = vpop.f32.mrf.mxu0
        %v1634 = vpop.f32.mrf.mxu0
        %v1635 = vpop.f32.mrf.mxu0
        %1636 = vdwg.mxu0
        %v1639 = vunpack.c.l.b16 %v1453
        %v1640 = vunpack.c.l.b16 %v1454
        %v1641 = vpack.c.b16 %v1640, %v1639
        %1643 = vmatprep.subr.bf16.mxu0 0
        %1644 = vmatpush1.bf16.msra.mxu0 0
        %1645 = vmatprep.subr.bf16.mxu0 0
        %1646 = vmatpush1.bf16.msra.mxu0 0
        %1647 = vmatprep.subr.bf16.mxu0 0
        %1648 = vmatpush1.bf16.msra.mxu0 0
        %1649 = vmatprep.subr.bf16.mxu0 0
        %1650 = vmatpush1.bf16.msra.mxu0 0
        %1651 = vmatprep.subr.bf16.mxu0 0
        %1652 = vmatpush1.bf16.msra.mxu0 0
        %1653 = vmatprep.subr.bf16.mxu0 0
        %1654 = vmatpush1.bf16.msra.mxu0 0
        %1655 = vmatprep.subr.bf16.mxu0 0
        %1656 = vmatpush1.bf16.msra.mxu0 0
        %1657 = vmatprep.subr.bf16.mxu0 0
        %1658 = vmatpush1.bf16.msra.mxu0 %v1641
        %1659 = vmatprep.subr.bf16.mxu0 0
        %1660 = vmatpush2.bf16.msra.mxu0 0
        %1661 = vmatprep.subr.bf16.mxu0 0
        %1662 = vmatpush2.bf16.msra.mxu0 0
        %1663 = vmatprep.subr.bf16.mxu0 0
        %1664 = vmatpush2.bf16.msra.mxu0 0
        %1665 = vmatprep.subr.bf16.mxu0 0
        %1666 = vmatpush2.bf16.msra.mxu0 0
        %1667 = vmatprep.subr.bf16.mxu0 0
        %1668 = vmatpush2.bf16.msra.mxu0 0
        %1669 = vmatprep.subr.bf16.mxu0 0
        %1670 = vmatpush2.bf16.msra.mxu0 0
        %1671 = vmatprep.subr.bf16.mxu0 0
        %1672 = vmatpush2.bf16.msra.mxu0 0
        %1673 = vmatprep.subr.bf16.mxu0 0
        %1674 = vmatpush2.bf16.msra.mxu0 0
        %1675 = vmatprep.mubr.bf16.mxu0 0
        %1676 = vmatmul.mubr.bf16.gmra.mxu0 %v1584
        %v1677 = vpop.f32.mrf.mxu0
        %v1678 = vadd.f32 %v1564, %v1677
        %v1679 = vpop.f32.mrf.mxu0
        %v1680 = vpop.f32.mrf.mxu0
        %v1681 = vadd.f32 %v1567, %v1680
        %v1682 = vpop.f32.mrf.mxu0
        %1683 = vmatprep.mubr.bf16.mxu0 0
        %1684 = vmatmul.mubr.bf16.gmra.mxu0 %v1587
        %v1685 = vpop.f32.mrf.mxu0
        %v1686 = vadd.f32 %v1572, %v1685
        %v1687 = vpop.f32.mrf.mxu0
        %v1688 = vpop.f32.mrf.mxu0
        %v1689 = vpop.f32.mrf.mxu0
        %1690 = vdwg.mxu0
        %v1691 = vrot.slane %v1437, 2
        %v1692 = vrot.slane %v1438, 2
        %v1693 = vrot.slane %v1439, 2
        %vm1694 = vcmp.lt.s32.totalorder %v875, 6
        %v1695 = vsel %vm1694, %v1692, %v1693
        %v1696 = vsel %vm1694, %v1691, %v1692
        %v1697 = vsel %vm1694, %v1693, %v1691
        %v1698 = vpack.c.bf16 %v1695, %v1696
        %v1699 = vpack.c.bf16 %v1697, %v1697
        %s1700 = scalar_lea.vmem %s5, 40
        %v1701 = vld [vmem:[%s1700] sm:$0xf]
        %v1702 = vld [vmem:[%s1700 + $0x4] sm:$0xf]
        %v1705 = vunpack.c.l.b16 %v1701
        %v1706 = vunpack.c.l.b16 %v1702
        %v1707 = vpack.c.b16 %v1706, %v1705
        %v1710 = vsel %vm897, %v1698, 0
        %v1713 = vsel %vm897, %v1699, 0
        %1715 = vmatprep.subr.bf16.mxu0 0
        %1716 = vmatpush1.bf16.msra.mxu0 0
        %1717 = vmatprep.subr.bf16.mxu0 0
        %1718 = vmatpush1.bf16.msra.mxu0 0
        %1719 = vmatprep.subr.bf16.mxu0 0
        %1720 = vmatpush1.bf16.msra.mxu0 0
        %1721 = vmatprep.subr.bf16.mxu0 0
        %1722 = vmatpush1.bf16.msra.mxu0 0
        %1723 = vmatprep.subr.bf16.mxu0 0
        %1724 = vmatpush1.bf16.msra.mxu0 0
        %1725 = vmatprep.subr.bf16.mxu0 0
        %1726 = vmatpush1.bf16.msra.mxu0 0
        %1727 = vmatprep.subr.bf16.mxu0 0
        %1728 = vmatpush1.bf16.msra.mxu0 0
        %1729 = vmatprep.subr.bf16.mxu0 0
        %1730 = vmatpush1.bf16.msra.mxu0 %v1707
        %1731 = vmatprep.subr.bf16.mxu0 0
        %1732 = vmatpush2.bf16.msra.mxu0 0
        %1733 = vmatprep.subr.bf16.mxu0 0
        %1734 = vmatpush2.bf16.msra.mxu0 0
        %1735 = vmatprep.subr.bf16.mxu0 0
        %1736 = vmatpush2.bf16.msra.mxu0 0
        %1737 = vmatprep.subr.bf16.mxu0 0
        %1738 = vmatpush2.bf16.msra.mxu0 0
        %1739 = vmatprep.subr.bf16.mxu0 0
        %1740 = vmatpush2.bf16.msra.mxu0 0
        %1741 = vmatprep.subr.bf16.mxu0 0
        %1742 = vmatpush2.bf16.msra.mxu0 0
        %1743 = vmatprep.subr.bf16.mxu0 0
        %1744 = vmatpush2.bf16.msra.mxu0 0
        %1745 = vmatprep.subr.bf16.mxu0 0
        %1746 = vmatpush2.bf16.msra.mxu0 0
        %1747 = vmatprep.mubr.bf16.mxu0 0
        %1748 = vmatmul.mubr.bf16.gmra.mxu0 %v1710
        %v1749 = vpop.f32.mrf.mxu0
        %v1750 = vadd.f32 0.0, %v1749
        %v1751 = vpop.f32.mrf.mxu0
        %v1752 = vpop.f32.mrf.mxu0
        %v1753 = vadd.f32 0.0, %v1752
        %v1754 = vpop.f32.mrf.mxu0
        %1755 = vmatprep.mubr.bf16.mxu0 0
        %1756 = vmatmul.mubr.bf16.gmra.mxu0 %v1713
        %v1757 = vpop.f32.mrf.mxu0
        %v1758 = vadd.f32 0.0, %v1757
        %v1759 = vpop.f32.mrf.mxu0
        %v1760 = vpop.f32.mrf.mxu0
        %v1761 = vpop.f32.mrf.mxu0
        %1762 = vdwg.mxu0
        %s1763 = scalar_lea.vmem %s6, 40
        %v1764 = vld [vmem:[%s1763] sm:$0xf]
        %v1765 = vld [vmem:[%s1763 + $0x4] sm:$0xf]
        %v1768 = vunpack.c.l.b16 %v1764
        %v1769 = vunpack.c.l.b16 %v1765
        %v1770 = vpack.c.b16 %v1769, %v1768
        %1772 = vmatprep.subr.bf16.mxu0 0
        %1773 = vmatpush1.bf16.msra.mxu0 0
        %1774 = vmatprep.subr.bf16.mxu0 0
        %1775 = vmatpush1.bf16.msra.mxu0 0
        %1776 = vmatprep.subr.bf16.mxu0 0
        %1777 = vmatpush1.bf16.msra.mxu0 0
        %1778 = vmatprep.subr.bf16.mxu0 0
        %1779 = vmatpush1.bf16.msra.mxu0 0
        %1780 = vmatprep.subr.bf16.mxu0 0
        %1781 = vmatpush1.bf16.msra.mxu0 0
        %1782 = vmatprep.subr.bf16.mxu0 0
        %1783 = vmatpush1.bf16.msra.mxu0 0
        %1784 = vmatprep.subr.bf16.mxu0 0
        %1785 = vmatpush1.bf16.msra.mxu0 0
        %1786 = vmatprep.subr.bf16.mxu0 0
        %1787 = vmatpush1.bf16.msra.mxu0 %v1770
        %1788 = vmatprep.subr.bf16.mxu0 0
        %1789 = vmatpush2.bf16.msra.mxu0 0
        %1790 = vmatprep.subr.bf16.mxu0 0
        %1791 = vmatpush2.bf16.msra.mxu0 0
        %1792 = vmatprep.subr.bf16.mxu0 0
        %1793 = vmatpush2.bf16.msra.mxu0 0
        %1794 = vmatprep.subr.bf16.mxu0 0
        %1795 = vmatpush2.bf16.msra.mxu0 0
        %1796 = vmatprep.subr.bf16.mxu0 0
        %1797 = vmatpush2.bf16.msra.mxu0 0
        %1798 = vmatprep.subr.bf16.mxu0 0
        %1799 = vmatpush2.bf16.msra.mxu0 0
        %1800 = vmatprep.subr.bf16.mxu0 0
        %1801 = vmatpush2.bf16.msra.mxu0 0
        %1802 = vmatprep.subr.bf16.mxu0 0
        %1803 = vmatpush2.bf16.msra.mxu0 0
        %1804 = vmatprep.mubr.bf16.mxu0 0
        %1805 = vmatmul.mubr.bf16.gmra.mxu0 %v1710
        %v1806 = vpop.f32.mrf.mxu0
        %v1807 = vadd.f32 0.0, %v1806
        %v1808 = vpop.f32.mrf.mxu0
        %v1809 = vpop.f32.mrf.mxu0
        %v1810 = vadd.f32 0.0, %v1809
        %v1811 = vpop.f32.mrf.mxu0
        %1812 = vmatprep.mubr.bf16.mxu0 0
        %1813 = vmatmul.mubr.bf16.gmra.mxu0 %v1713
        %v1814 = vpop.f32.mrf.mxu0
        %v1815 = vadd.f32 0.0, %v1814
        %v1816 = vpop.f32.mrf.mxu0
        %v1817 = vpop.f32.mrf.mxu0
        %v1818 = vpop.f32.mrf.mxu0
        %1819 = vdwg.mxu0
        %v1820 = vadd.f32 %v1624, %v1750
        %v1821 = vadd.f32 %v1627, %v1753
        %v1822 = vadd.f32 %v1632, %v1758
        %v1823 = vadd.f32 %v1678, %v1807
        %v1824 = vadd.f32 %v1681, %v1810
        %v1825 = vadd.f32 %v1686, %v1815
        %s1826 = scalar_lea.vmem [#allocation8], 1
        %v1827 = vld [vmem:[%s1826] sm:$0x1]
        %v1829 = vlaneseq
        %v1830 = vshrl.u32 %v1829, 7
        %v1831 = vsub.s32 0, %v1830
        %v1832 = vrot.slane %v1827, %v1831
        %v1834 = vadd.f32 %v1820, %v1832
        %v1835 = vadd.f32 %v1821, %v1832
        %v1836 = vadd.f32 %v1822, %v1832
        %v1837 = vtanh.pop %v1834
        %v1838 = vtanh.pop %v1835
        %v1839 = vtanh.pop %v1836
        %s1840 = scalar_lea.vmem [#allocation10], 1
        %v1841 = vld [vmem:[%s1840] sm:$0x1]
        %v1843 = vlaneseq
        %v1844 = vshrl.u32 %v1843, 7
        %v1845 = vsub.s32 0, %v1844
        %v1846 = vrot.slane %v1841, %v1845
        %v1848 = vadd.f32 %v1823, %v1846
        %v1849 = vadd.f32 %v1824, %v1846
        %v1850 = vadd.f32 %v1825, %v1846
        %v1851 = vxor.u32 %v1848, 2147483648
        %v1852 = vxor.u32 %v1849, 2147483648
        %v1853 = vxor.u32 %v1850, 2147483648
        %v1854 = vmul.f32 %v1851, 1.442695
        %v1855 = vpow.pop %v1854
        %v1856 = vmul.f32 %v1852, 1.442695
        %v1857 = vpow.pop %v1856
        %v1858 = vmul.f32 %v1853, 1.442695
        %v1859 = vpow.pop %v1858
        %v1860 = vadd.f32 %v1855, 1.0
        %v1861 = vadd.f32 %v1857, 1.0
        %v1862 = vadd.f32 %v1859, 1.0
        %v1863 = vrcp.pop %v1860
        %v1864 = vmul.f32 1.0, %v1863
        %v1865 = vrcp.pop %v1861
        %v1866 = vmul.f32 1.0, %v1865
        %v1867 = vrcp.pop %v1862
        %v1868 = vmul.f32 1.0, %v1867
        %v1869 = vmul.f32 %v1837, %v1864
        %v1870 = vmul.f32 %v1838, %v1866
        %v1871 = vmul.f32 %v1839, %v1868
        %v1872 = vpack.c.bf16 %v1870, %v1869
        %v1873 = vpack.c.bf16 %v1871, %v1871
        %s1874 = scalar_lea.vmem [#allocation14], 8
        %v1875 = vld [vmem:[%s1874] sm:$0xf]
        %v1876 = vld [vmem:[%s1874 + $0x4] sm:$0xf]
        %s1877 = scalar_lea.vmem [#allocation16], 1
        %v1878 = vld [vmem:[%s1877] sm:$0x1]
        %v1880 = vlaneseq
        %v1881 = vshrl.u32 %v1880, 7
        %v1882 = vsub.s32 0, %v1881
        %v1883 = vrot.slane %v1878, %v1882
        %v1887 = vunpack.c.l.b16 %v1875
        %v1888 = vunpack.c.l.b16 %v1876
        %v1889 = vpack.c.b16 %v1888, %v1887
        %v1892 = vsel %vm897, %v1872, 0
        %v1895 = vsel %vm897, %v1873, 0
        %1897 = vmatprep.subr.bf16.mxu0 0
        %1898 = vmatpush1.bf16.msra.mxu0 0
        %1899 = vmatprep.subr.bf16.mxu0 0
        %1900 = vmatpush1.bf16.msra.mxu0 0
        %1901 = vmatprep.subr.bf16.mxu0 0
        %1902 = vmatpush1.bf16.msra.mxu0 0
        %1903 = vmatprep.subr.bf16.mxu0 0
        %1904 = vmatpush1.bf16.msra.mxu0 0
        %1905 = vmatprep.subr.bf16.mxu0 0
        %1906 = vmatpush1.bf16.msra.mxu0 0
        %1907 = vmatprep.subr.bf16.mxu0 0
        %1908 = vmatpush1.bf16.msra.mxu0 0
        %1909 = vmatprep.subr.bf16.mxu0 0
        %1910 = vmatpush1.bf16.msra.mxu0 0
        %1911 = vmatprep.subr.bf16.mxu0 0
        %1912 = vmatpush1.bf16.msra.mxu0 %v1889
        %1913 = vmatprep.subr.bf16.mxu0 0
        %1914 = vmatpush2.bf16.msra.mxu0 0
        %1915 = vmatprep.subr.bf16.mxu0 0
        %1916 = vmatpush2.bf16.msra.mxu0 0
        %1917 = vmatprep.subr.bf16.mxu0 0
        %1918 = vmatpush2.bf16.msra.mxu0 0
        %1919 = vmatprep.subr.bf16.mxu0 0
        %1920 = vmatpush2.bf16.msra.mxu0 0
        %1921 = vmatprep.subr.bf16.mxu0 0
        %1922 = vmatpush2.bf16.msra.mxu0 0
        %1923 = vmatprep.subr.bf16.mxu0 0
        %1924 = vmatpush2.bf16.msra.mxu0 0
        %1925 = vmatprep.subr.bf16.mxu0 0
        %1926 = vmatpush2.bf16.msra.mxu0 0
        %1927 = vmatprep.subr.bf16.mxu0 0
        %1928 = vmatpush2.bf16.msra.mxu0 0
        %1929 = vmatprep.mubr.bf16.mxu0 0
        %1930 = vmatmul.mubr.bf16.gmra.mxu0 %v1892
        %v1931 = vpop.f32.mrf.mxu0
        %v1932 = vpop.f32.mrf.mxu0
        %v1933 = vpop.f32.mrf.mxu0
        %v1934 = vadd.f32 %v1883, %v1933
        %v1935 = vpop.f32.mrf.mxu0
        %1936 = vmatprep.mubr.bf16.mxu0 0
        %1937 = vmatmul.mubr.bf16.gmra.mxu0 %v1895
        %v1938 = vpop.f32.mrf.mxu0
        %v1939 = vpop.f32.mrf.mxu0
        %v1940 = vpop.f32.mrf.mxu0
        %v1941 = vpop.f32.mrf.mxu0
        %1942 = vdwg.mxu0
        %v1943 = vadd.f32 %v1362, %v1934
        %s1944 = scalar_lea.vmem [#allocation11], 8
        %v1945 = vld [vmem:[%s1944] sm:$0xf]
        %v1946 = vld [vmem:[%s1944 + $0x4] sm:$0xf]
        %s1947 = scalar_lea.vmem [#allocation13], 1
        %v1948 = vld [vmem:[%s1947] sm:$0x1]
        %v1950 = vlaneseq
        %v1951 = vshrl.u32 %v1950, 7
        %v1952 = vsub.s32 0, %v1951
        %v1953 = vrot.slane %v1948, %v1952
        %v1957 = vunpack.c.l.b16 %v1945
        %v1958 = vunpack.c.l.b16 %v1946
        %v1959 = vpack.c.b16 %v1958, %v1957
        %1961 = vmatprep.subr.bf16.mxu0 0
        %1962 = vmatpush1.bf16.msra.mxu0 0
        %1963 = vmatprep.subr.bf16.mxu0 0
        %1964 = vmatpush1.bf16.msra.mxu0 0
        %1965 = vmatprep.subr.bf16.mxu0 0
        %1966 = vmatpush1.bf16.msra.mxu0 0
        %1967 = vmatprep.subr.bf16.mxu0 0
        %1968 = vmatpush1.bf16.msra.mxu0 0
        %1969 = vmatprep.subr.bf16.mxu0 0
        %1970 = vmatpush1.bf16.msra.mxu0 0
        %1971 = vmatprep.subr.bf16.mxu0 0
        %1972 = vmatpush1.bf16.msra.mxu0 0
        %1973 = vmatprep.subr.bf16.mxu0 0
        %1974 = vmatpush1.bf16.msra.mxu0 0
        %1975 = vmatprep.subr.bf16.mxu0 0
        %1976 = vmatpush1.bf16.msra.mxu0 %v1959
        %1977 = vmatprep.subr.bf16.mxu0 0
        %1978 = vmatpush2.bf16.msra.mxu0 0
        %1979 = vmatprep.subr.bf16.mxu0 0
        %1980 = vmatpush2.bf16.msra.mxu0 0
        %1981 = vmatprep.subr.bf16.mxu0 0
        %1982 = vmatpush2.bf16.msra.mxu0 0
        %1983 = vmatprep.subr.bf16.mxu0 0
        %1984 = vmatpush2.bf16.msra.mxu0 0
        %1985 = vmatprep.subr.bf16.mxu0 0
        %1986 = vmatpush2.bf16.msra.mxu0 0
        %1987 = vmatprep.subr.bf16.mxu0 0
        %1988 = vmatpush2.bf16.msra.mxu0 0
        %1989 = vmatprep.subr.bf16.mxu0 0
        %1990 = vmatpush2.bf16.msra.mxu0 0
        %1991 = vmatprep.subr.bf16.mxu0 0
        %1992 = vmatpush2.bf16.msra.mxu0 0
        %1993 = vmatprep.mubr.bf16.mxu0 0
        %1994 = vmatmul.mubr.bf16.gmra.mxu0 %v1892
        %v1995 = vpop.f32.mrf.mxu0
        %v1996 = vadd.f32 %v1953, %v1995
        %v1997 = vpop.f32.mrf.mxu0
        %v1998 = vpop.f32.mrf.mxu0
        %v1999 = vadd.f32 %v1953, %v1998
        %v2000 = vpop.f32.mrf.mxu0
        %2001 = vmatprep.mubr.bf16.mxu0 0
        %2002 = vmatmul.mubr.bf16.gmra.mxu0 %v1895
        %v2003 = vpop.f32.mrf.mxu0
        %v2004 = vadd.f32 %v1953, %v2003
        %v2005 = vpop.f32.mrf.mxu0
        %v2006 = vpop.f32.mrf.mxu0
        %v2007 = vpop.f32.mrf.mxu0
        %2008 = vdwg.mxu0
        %v2009 = vadd.f32 %v1437, %v1996
        %v2010 = vadd.f32 %v1438, %v1999
        %v2011 = vadd.f32 %v1439, %v2004
        %v2012 = vmul.f32 %v2009, %v789
        %v2013 = vmul.f32 %v2010, %v794
        %v2014 = vmul.f32 %v2011, %v799
        %v2015 = vrot.slane %v2012, 4
        %v2016 = vrot.slane %v2013, 4
        %v2017 = vrot.slane %v2014, 4
        %vm2018 = vcmp.lt.s32.totalorder %v875, 4
        %v2019 = vsel %vm2018, %v2016, %v2017
        %v2020 = vsel %vm2018, %v2015, %v2016
        %v2021 = vsel %vm2018, %v2017, %v2015
        %v2022 = vpack.c.bf16 %v2020, %v2021
        %v2023 = vpack.c.bf16 %v2019, %v2019
        %s2024 = scalar_lea.vmem %s5, 48
        %v2025 = vld [vmem:[%s2024] sm:$0xf]
        %v2026 = vld [vmem:[%s2024 + $0x4] sm:$0xf]
        %s2027 = scalar_lea.vmem %s6, 48
        %v2028 = vld [vmem:[%s2027] sm:$0xf]
        %v2029 = vld [vmem:[%s2027 + $0x4] sm:$0xf]
        %v2030 = vpack.c.bf16 %v2013, %v2012
        %v2031 = vpack.c.bf16 %v2014, %v2014
        %s2032 = scalar_lea.vmem %s5, 56
        %v2033 = vld [vmem:[%s2032] sm:$0xf]
        %v2034 = vld [vmem:[%s2032 + $0x4] sm:$0xf]
        %v2037 = vunpack.c.l.b16 %v2033
        %v2038 = vunpack.c.l.b16 %v2034
        %v2039 = vpack.c.b16 %v2038, %v2037
        %v2042 = vsel %vm897, %v2030, 0
        %v2045 = vsel %vm897, %v2031, 0
        %2047 = vmatprep.subr.bf16.mxu0 0
        %2048 = vmatpush1.bf16.msra.mxu0 0
        %2049 = vmatprep.subr.bf16.mxu0 0
        %2050 = vmatpush1.bf16.msra.mxu0 0
        %2051 = vmatprep.subr.bf16.mxu0 0
        %2052 = vmatpush1.bf16.msra.mxu0 0
        %2053 = vmatprep.subr.bf16.mxu0 0
        %2054 = vmatpush1.bf16.msra.mxu0 0
        %2055 = vmatprep.subr.bf16.mxu0 0
        %2056 = vmatpush1.bf16.msra.mxu0 0
        %2057 = vmatprep.subr.bf16.mxu0 0
        %2058 = vmatpush1.bf16.msra.mxu0 0
        %2059 = vmatprep.subr.bf16.mxu0 0
        %2060 = vmatpush1.bf16.msra.mxu0 0
        %2061 = vmatprep.subr.bf16.mxu0 0
        %2062 = vmatpush1.bf16.msra.mxu0 %v2039
        %2063 = vmatprep.subr.bf16.mxu0 0
        %2064 = vmatpush2.bf16.msra.mxu0 0
        %2065 = vmatprep.subr.bf16.mxu0 0
        %2066 = vmatpush2.bf16.msra.mxu0 0
        %2067 = vmatprep.subr.bf16.mxu0 0
        %2068 = vmatpush2.bf16.msra.mxu0 0
        %2069 = vmatprep.subr.bf16.mxu0 0
        %2070 = vmatpush2.bf16.msra.mxu0 0
        %2071 = vmatprep.subr.bf16.mxu0 0
        %2072 = vmatpush2.bf16.msra.mxu0 0
        %2073 = vmatprep.subr.bf16.mxu0 0
        %2074 = vmatpush2.bf16.msra.mxu0 0
        %2075 = vmatprep.subr.bf16.mxu0 0
        %2076 = vmatpush2.bf16.msra.mxu0 0
        %2077 = vmatprep.subr.bf16.mxu0 0
        %2078 = vmatpush2.bf16.msra.mxu0 0
        %2079 = vmatprep.mubr.bf16.mxu0 0
        %2080 = vmatmul.mubr.bf16.gmra.mxu0 %v2042
        %v2081 = vpop.f32.mrf.mxu0
        %v2082 = vadd.f32 0.0, %v2081
        %v2083 = vpop.f32.mrf.mxu0
        %v2084 = vpop.f32.mrf.mxu0
        %v2085 = vadd.f32 0.0, %v2084
        %v2086 = vpop.f32.mrf.mxu0
        %2087 = vmatprep.mubr.bf16.mxu0 0
        %2088 = vmatmul.mubr.bf16.gmra.mxu0 %v2045
        %v2089 = vpop.f32.mrf.mxu0
        %v2090 = vadd.f32 0.0, %v2089
        %v2091 = vpop.f32.mrf.mxu0
        %v2092 = vpop.f32.mrf.mxu0
        %v2093 = vpop.f32.mrf.mxu0
        %2094 = vdwg.mxu0
        %s2095 = scalar_lea.vmem %s6, 56
        %v2096 = vld [vmem:[%s2095] sm:$0xf]
        %v2097 = vld [vmem:[%s2095 + $0x4] sm:$0xf]
        %v2100 = vunpack.c.l.b16 %v2096
        %v2101 = vunpack.c.l.b16 %v2097
        %v2102 = vpack.c.b16 %v2101, %v2100
        %2104 = vmatprep.subr.bf16.mxu0 0
        %2105 = vmatpush1.bf16.msra.mxu0 0
        %2106 = vmatprep.subr.bf16.mxu0 0
        %2107 = vmatpush1.bf16.msra.mxu0 0
        %2108 = vmatprep.subr.bf16.mxu0 0
        %2109 = vmatpush1.bf16.msra.mxu0 0
        %2110 = vmatprep.subr.bf16.mxu0 0
        %2111 = vmatpush1.bf16.msra.mxu0 0
        %2112 = vmatprep.subr.bf16.mxu0 0
        %2113 = vmatpush1.bf16.msra.mxu0 0
        %2114 = vmatprep.subr.bf16.mxu0 0
        %2115 = vmatpush1.bf16.msra.mxu0 0
        %2116 = vmatprep.subr.bf16.mxu0 0
        %2117 = vmatpush1.bf16.msra.mxu0 0
        %2118 = vmatprep.subr.bf16.mxu0 0
        %2119 = vmatpush1.bf16.msra.mxu0 %v2102
        %2120 = vmatprep.subr.bf16.mxu0 0
        %2121 = vmatpush2.bf16.msra.mxu0 0
        %2122 = vmatprep.subr.bf16.mxu0 0
        %2123 = vmatpush2.bf16.msra.mxu0 0
        %2124 = vmatprep.subr.bf16.mxu0 0
        %2125 = vmatpush2.bf16.msra.mxu0 0
        %2126 = vmatprep.subr.bf16.mxu0 0
        %2127 = vmatpush2.bf16.msra.mxu0 0
        %2128 = vmatprep.subr.bf16.mxu0 0
        %2129 = vmatpush2.bf16.msra.mxu0 0
        %2130 = vmatprep.subr.bf16.mxu0 0
        %2131 = vmatpush2.bf16.msra.mxu0 0
        %2132 = vmatprep.subr.bf16.mxu0 0
        %2133 = vmatpush2.bf16.msra.mxu0 0
        %2134 = vmatprep.subr.bf16.mxu0 0
        %2135 = vmatpush2.bf16.msra.mxu0 0
        %2136 = vmatprep.mubr.bf16.mxu0 0
        %2137 = vmatmul.mubr.bf16.gmra.mxu0 %v2042
        %v2138 = vpop.f32.mrf.mxu0
        %v2139 = vadd.f32 0.0, %v2138
        %v2140 = vpop.f32.mrf.mxu0
        %v2141 = vpop.f32.mrf.mxu0
        %v2142 = vadd.f32 0.0, %v2141
        %v2143 = vpop.f32.mrf.mxu0
        %2144 = vmatprep.mubr.bf16.mxu0 0
        %2145 = vmatmul.mubr.bf16.gmra.mxu0 %v2045
        %v2146 = vpop.f32.mrf.mxu0
        %v2147 = vadd.f32 0.0, %v2146
        %v2148 = vpop.f32.mrf.mxu0
        %v2149 = vpop.f32.mrf.mxu0
        %v2150 = vpop.f32.mrf.mxu0
        %2151 = vdwg.mxu0
        %v2154 = vunpack.c.l.b16 %v2025
        %v2155 = vunpack.c.l.b16 %v2026
        %v2156 = vpack.c.b16 %v2155, %v2154
        %v2159 = vsel %vm897, %v2022, 0
        %v2162 = vsel %vm897, %v2023, 0
        %2164 = vmatprep.subr.bf16.mxu0 0
        %2165 = vmatpush1.bf16.msra.mxu0 0
        %2166 = vmatprep.subr.bf16.mxu0 0
        %2167 = vmatpush1.bf16.msra.mxu0 0
        %2168 = vmatprep.subr.bf16.mxu0 0
        %2169 = vmatpush1.bf16.msra.mxu0 0
        %2170 = vmatprep.subr.bf16.mxu0 0
        %2171 = vmatpush1.bf16.msra.mxu0 0
        %2172 = vmatprep.subr.bf16.mxu0 0
        %2173 = vmatpush1.bf16.msra.mxu0 0
        %2174 = vmatprep.subr.bf16.mxu0 0
        %2175 = vmatpush1.bf16.msra.mxu0 0
        %2176 = vmatprep.subr.bf16.mxu0 0
        %2177 = vmatpush1.bf16.msra.mxu0 0
        %2178 = vmatprep.subr.bf16.mxu0 0
        %2179 = vmatpush1.bf16.msra.mxu0 %v2156
        %2180 = vmatprep.subr.bf16.mxu0 0
        %2181 = vmatpush2.bf16.msra.mxu0 0
        %2182 = vmatprep.subr.bf16.mxu0 0
        %2183 = vmatpush2.bf16.msra.mxu0 0
        %2184 = vmatprep.subr.bf16.mxu0 0
        %2185 = vmatpush2.bf16.msra.mxu0 0
        %2186 = vmatprep.subr.bf16.mxu0 0
        %2187 = vmatpush2.bf16.msra.mxu0 0
        %2188 = vmatprep.subr.bf16.mxu0 0
        %2189 = vmatpush2.bf16.msra.mxu0 0
        %2190 = vmatprep.subr.bf16.mxu0 0
        %2191 = vmatpush2.bf16.msra.mxu0 0
        %2192 = vmatprep.subr.bf16.mxu0 0
        %2193 = vmatpush2.bf16.msra.mxu0 0
        %2194 = vmatprep.subr.bf16.mxu0 0
        %2195 = vmatpush2.bf16.msra.mxu0 0
        %2196 = vmatprep.mubr.bf16.mxu0 0
        %2197 = vmatmul.mubr.bf16.gmra.mxu0 %v2159
        %v2198 = vpop.f32.mrf.mxu0
        %v2199 = vadd.f32 %v2082, %v2198
        %v2200 = vpop.f32.mrf.mxu0
        %v2201 = vpop.f32.mrf.mxu0
        %v2202 = vadd.f32 %v2085, %v2201
        %v2203 = vpop.f32.mrf.mxu0
        %2204 = vmatprep.mubr.bf16.mxu0 0
        %2205 = vmatmul.mubr.bf16.gmra.mxu0 %v2162
        %v2206 = vpop.f32.mrf.mxu0
        %v2207 = vadd.f32 %v2090, %v2206
        %v2208 = vpop.f32.mrf.mxu0
        %v2209 = vpop.f32.mrf.mxu0
        %v2210 = vpop.f32.mrf.mxu0
        %2211 = vdwg.mxu0
        %v2214 = vunpack.c.l.b16 %v2028
        %v2215 = vunpack.c.l.b16 %v2029
        %v2216 = vpack.c.b16 %v2215, %v2214
        %2218 = vmatprep.subr.bf16.mxu0 0
        %2219 = vmatpush1.bf16.msra.mxu0 0
        %2220 = vmatprep.subr.bf16.mxu0 0
        %2221 = vmatpush1.bf16.msra.mxu0 0
        %2222 = vmatprep.subr.bf16.mxu0 0
        %2223 = vmatpush1.bf16.msra.mxu0 0
        %2224 = vmatprep.subr.bf16.mxu0 0
        %2225 = vmatpush1.bf16.msra.mxu0 0
        %2226 = vmatprep.subr.bf16.mxu0 0
        %2227 = vmatpush1.bf16.msra.mxu0 0
        %2228 = vmatprep.subr.bf16.mxu0 0
        %2229 = vmatpush1.bf16.msra.mxu0 0
        %2230 = vmatprep.subr.bf16.mxu0 0
        %2231 = vmatpush1.bf16.msra.mxu0 0
        %2232 = vmatprep.subr.bf16.mxu0 0
        %2233 = vmatpush1.bf16.msra.mxu0 %v2216
        %2234 = vmatprep.subr.bf16.mxu0 0
        %2235 = vmatpush2.bf16.msra.mxu0 0
        %2236 = vmatprep.subr.bf16.mxu0 0
        %2237 = vmatpush2.bf16.msra.mxu0 0
        %2238 = vmatprep.subr.bf16.mxu0 0
        %2239 = vmatpush2.bf16.msra.mxu0 0
        %2240 = vmatprep.subr.bf16.mxu0 0
        %2241 = vmatpush2.bf16.msra.mxu0 0
        %2242 = vmatprep.subr.bf16.mxu0 0
        %2243 = vmatpush2.bf16.msra.mxu0 0
        %2244 = vmatprep.subr.bf16.mxu0 0
        %2245 = vmatpush2.bf16.msra.mxu0 0
        %2246 = vmatprep.subr.bf16.mxu0 0
        %2247 = vmatpush2.bf16.msra.mxu0 0
        %2248 = vmatprep.subr.bf16.mxu0 0
        %2249 = vmatpush2.bf16.msra.mxu0 0
        %2250 = vmatprep.mubr.bf16.mxu0 0
        %2251 = vmatmul.mubr.bf16.gmra.mxu0 %v2159
        %v2252 = vpop.f32.mrf.mxu0
        %v2253 = vadd.f32 %v2139, %v2252
        %v2254 = vpop.f32.mrf.mxu0
        %v2255 = vpop.f32.mrf.mxu0
        %v2256 = vadd.f32 %v2142, %v2255
        %v2257 = vpop.f32.mrf.mxu0
        %2258 = vmatprep.mubr.bf16.mxu0 0
        %2259 = vmatmul.mubr.bf16.gmra.mxu0 %v2162
        %v2260 = vpop.f32.mrf.mxu0
        %v2261 = vadd.f32 %v2147, %v2260
        %v2262 = vpop.f32.mrf.mxu0
        %v2263 = vpop.f32.mrf.mxu0
        %v2264 = vpop.f32.mrf.mxu0
        %2265 = vdwg.mxu0
        %v2266 = vpack.c.bf16 %v2019, %v2020
        %v2267 = vpack.c.bf16 %v2021, %v2021
        %s2268 = scalar_lea.vmem %s5, 64
        %v2269 = vld [vmem:[%s2268] sm:$0xf]
        %v2270 = vld [vmem:[%s2268 + $0x4] sm:$0xf]
        %v2273 = vunpack.c.l.b16 %v2269
        %v2274 = vunpack.c.l.b16 %v2270
        %v2275 = vpack.c.b16 %v2274, %v2273
        %v2278 = vsel %vm897, %v2266, 0
        %v2281 = vsel %vm897, %v2267, 0
        %2283 = vmatprep.subr.bf16.mxu0 0
        %2284 = vmatpush1.bf16.msra.mxu0 0
        %2285 = vmatprep.subr.bf16.mxu0 0
        %2286 = vmatpush1.bf16.msra.mxu0 0
        %2287 = vmatprep.subr.bf16.mxu0 0
        %2288 = vmatpush1.bf16.msra.mxu0 0
        %2289 = vmatprep.subr.bf16.mxu0 0
        %2290 = vmatpush1.bf16.msra.mxu0 0
        %2291 = vmatprep.subr.bf16.mxu0 0
        %2292 = vmatpush1.bf16.msra.mxu0 0
        %2293 = vmatprep.subr.bf16.mxu0 0
        %2294 = vmatpush1.bf16.msra.mxu0 0
        %2295 = vmatprep.subr.bf16.mxu0 0
        %2296 = vmatpush1.bf16.msra.mxu0 0
        %2297 = vmatprep.subr.bf16.mxu0 0
        %2298 = vmatpush1.bf16.msra.mxu0 %v2275
        %2299 = vmatprep.subr.bf16.mxu0 0
        %2300 = vmatpush2.bf16.msra.mxu0 0
        %2301 = vmatprep.subr.bf16.mxu0 0
        %2302 = vmatpush2.bf16.msra.mxu0 0
        %2303 = vmatprep.subr.bf16.mxu0 0
        %2304 = vmatpush2.bf16.msra.mxu0 0
        %2305 = vmatprep.subr.bf16.mxu0 0
        %2306 = vmatpush2.bf16.msra.mxu0 0
        %2307 = vmatprep.subr.bf16.mxu0 0
        %2308 = vmatpush2.bf16.msra.mxu0 0
        %2309 = vmatprep.subr.bf16.mxu0 0
        %2310 = vmatpush2.bf16.msra.mxu0 0
        %2311 = vmatprep.subr.bf16.mxu0 0
        %2312 = vmatpush2.bf16.msra.mxu0 0
        %2313 = vmatprep.subr.bf16.mxu0 0
        %2314 = vmatpush2.bf16.msra.mxu0 0
        %2315 = vmatprep.mubr.bf16.mxu0 0
        %2316 = vmatmul.mubr.bf16.gmra.mxu0 %v2278
        %v2317 = vpop.f32.mrf.mxu0
        %v2318 = vadd.f32 0.0, %v2317
        %v2319 = vpop.f32.mrf.mxu0
        %v2320 = vpop.f32.mrf.mxu0
        %v2321 = vadd.f32 0.0, %v2320
        %v2322 = vpop.f32.mrf.mxu0
        %2323 = vmatprep.mubr.bf16.mxu0 0
        %2324 = vmatmul.mubr.bf16.gmra.mxu0 %v2281
        %v2325 = vpop.f32.mrf.mxu0
        %v2326 = vadd.f32 0.0, %v2325
        %v2327 = vpop.f32.mrf.mxu0
        %v2328 = vpop.f32.mrf.mxu0
        %v2329 = vpop.f32.mrf.mxu0
        %2330 = vdwg.mxu0
        %s2331 = scalar_lea.vmem %s6, 64
        %v2332 = vld [vmem:[%s2331] sm:$0xf]
        %v2333 = vld [vmem:[%s2331 + $0x4] sm:$0xf]
        %v2336 = vunpack.c.l.b16 %v2332
        %v2337 = vunpack.c.l.b16 %v2333
        %v2338 = vpack.c.b16 %v2337, %v2336
        %2340 = vmatprep.subr.bf16.mxu0 0
        %2341 = vmatpush1.bf16.msra.mxu0 0
        %2342 = vmatprep.subr.bf16.mxu0 0
        %2343 = vmatpush1.bf16.msra.mxu0 0
        %2344 = vmatprep.subr.bf16.mxu0 0
        %2345 = vmatpush1.bf16.msra.mxu0 0
        %2346 = vmatprep.subr.bf16.mxu0 0
        %2347 = vmatpush1.bf16.msra.mxu0 0
        %2348 = vmatprep.subr.bf16.mxu0 0
        %2349 = vmatpush1.bf16.msra.mxu0 0
        %2350 = vmatprep.subr.bf16.mxu0 0
        %2351 = vmatpush1.bf16.msra.mxu0 0
        %2352 = vmatprep.subr.bf16.mxu0 0
        %2353 = vmatpush1.bf16.msra.mxu0 0
        %2354 = vmatprep.subr.bf16.mxu0 0
        %2355 = vmatpush1.bf16.msra.mxu0 %v2338
        %2356 = vmatprep.subr.bf16.mxu0 0
        %2357 = vmatpush2.bf16.msra.mxu0 0
        %2358 = vmatprep.subr.bf16.mxu0 0
        %2359 = vmatpush2.bf16.msra.mxu0 0
        %2360 = vmatprep.subr.bf16.mxu0 0
        %2361 = vmatpush2.bf16.msra.mxu0 0
        %2362 = vmatprep.subr.bf16.mxu0 0
        %2363 = vmatpush2.bf16.msra.mxu0 0
        %2364 = vmatprep.subr.bf16.mxu0 0
        %2365 = vmatpush2.bf16.msra.mxu0 0
        %2366 = vmatprep.subr.bf16.mxu0 0
        %2367 = vmatpush2.bf16.msra.mxu0 0
        %2368 = vmatprep.subr.bf16.mxu0 0
        %2369 = vmatpush2.bf16.msra.mxu0 0
        %2370 = vmatprep.subr.bf16.mxu0 0
        %2371 = vmatpush2.bf16.msra.mxu0 0
        %2372 = vmatprep.mubr.bf16.mxu0 0
        %2373 = vmatmul.mubr.bf16.gmra.mxu0 %v2278
        %v2374 = vpop.f32.mrf.mxu0
        %v2375 = vadd.f32 0.0, %v2374
        %v2376 = vpop.f32.mrf.mxu0
        %v2377 = vpop.f32.mrf.mxu0
        %v2378 = vadd.f32 0.0, %v2377
        %v2379 = vpop.f32.mrf.mxu0
        %2380 = vmatprep.mubr.bf16.mxu0 0
        %2381 = vmatmul.mubr.bf16.gmra.mxu0 %v2281
        %v2382 = vpop.f32.mrf.mxu0
        %v2383 = vadd.f32 0.0, %v2382
        %v2384 = vpop.f32.mrf.mxu0
        %v2385 = vpop.f32.mrf.mxu0
        %v2386 = vpop.f32.mrf.mxu0
        %2387 = vdwg.mxu0
        %v2388 = vadd.f32 %v2199, %v2318
        %v2389 = vadd.f32 %v2202, %v2321
        %v2390 = vadd.f32 %v2207, %v2326
        %v2391 = vadd.f32 %v2253, %v2375
        %v2392 = vadd.f32 %v2256, %v2378
        %v2393 = vadd.f32 %v2261, %v2383
        %s2394 = scalar_lea.vmem [#allocation8], 2
        %v2395 = vld [vmem:[%s2394] sm:$0x1]
        %v2397 = vlaneseq
        %v2398 = vshrl.u32 %v2397, 7
        %v2399 = vsub.s32 0, %v2398
        %v2400 = vrot.slane %v2395, %v2399
        %v2402 = vadd.f32 %v2388, %v2400
        %v2403 = vadd.f32 %v2389, %v2400
        %v2404 = vadd.f32 %v2390, %v2400
        %v2405 = vtanh.pop %v2402
        %v2406 = vtanh.pop %v2403
        %v2407 = vtanh.pop %v2404
        %s2408 = scalar_lea.vmem [#allocation10], 2
        %v2409 = vld [vmem:[%s2408] sm:$0x1]
        %v2411 = vlaneseq
        %v2412 = vshrl.u32 %v2411, 7
        %v2413 = vsub.s32 0, %v2412
        %v2414 = vrot.slane %v2409, %v2413
        %v2416 = vadd.f32 %v2391, %v2414
        %v2417 = vadd.f32 %v2392, %v2414
        %v2418 = vadd.f32 %v2393, %v2414
        %v2419 = vxor.u32 %v2416, 2147483648
        %v2420 = vxor.u32 %v2417, 2147483648
        %v2421 = vxor.u32 %v2418, 2147483648
        %v2422 = vmul.f32 %v2419, 1.442695
        %v2423 = vpow.pop %v2422
        %v2424 = vmul.f32 %v2420, 1.442695
        %v2425 = vpow.pop %v2424
        %v2426 = vmul.f32 %v2421, 1.442695
        %v2427 = vpow.pop %v2426
        %v2428 = vadd.f32 %v2423, 1.0
        %v2429 = vadd.f32 %v2425, 1.0
        %v2430 = vadd.f32 %v2427, 1.0
        %v2431 = vrcp.pop %v2428
        %v2432 = vmul.f32 1.0, %v2431
        %v2433 = vrcp.pop %v2429
        %v2434 = vmul.f32 1.0, %v2433
        %v2435 = vrcp.pop %v2430
        %v2436 = vmul.f32 1.0, %v2435
        %v2437 = vmul.f32 %v2405, %v2432
        %v2438 = vmul.f32 %v2406, %v2434
        %v2439 = vmul.f32 %v2407, %v2436
        %v2440 = vpack.c.bf16 %v2438, %v2437
        %v2441 = vpack.c.bf16 %v2439, %v2439
        %s2442 = scalar_lea.vmem [#allocation14], 16
        %v2443 = vld [vmem:[%s2442] sm:$0xf]
        %v2444 = vld [vmem:[%s2442 + $0x4] sm:$0xf]
        %s2445 = scalar_lea.vmem [#allocation16], 2
        %v2446 = vld [vmem:[%s2445] sm:$0x1]
        %v2448 = vlaneseq
        %v2449 = vshrl.u32 %v2448, 7
        %v2450 = vsub.s32 0, %v2449
        %v2451 = vrot.slane %v2446, %v2450
        %v2455 = vunpack.c.l.b16 %v2443
        %v2456 = vunpack.c.l.b16 %v2444
        %v2457 = vpack.c.b16 %v2456, %v2455
        %v2460 = vsel %vm897, %v2440, 0
        %v2463 = vsel %vm897, %v2441, 0
        %2465 = vmatprep.subr.bf16.mxu0 0
        %2466 = vmatpush1.bf16.msra.mxu0 0
        %2467 = vmatprep.subr.bf16.mxu0 0
        %2468 = vmatpush1.bf16.msra.mxu0 0
        %2469 = vmatprep.subr.bf16.mxu0 0
        %2470 = vmatpush1.bf16.msra.mxu0 0
        %2471 = vmatprep.subr.bf16.mxu0 0
        %2472 = vmatpush1.bf16.msra.mxu0 0
        %2473 = vmatprep.subr.bf16.mxu0 0
        %2474 = vmatpush1.bf16.msra.mxu0 0
        %2475 = vmatprep.subr.bf16.mxu0 0
        %2476 = vmatpush1.bf16.msra.mxu0 0
        %2477 = vmatprep.subr.bf16.mxu0 0
        %2478 = vmatpush1.bf16.msra.mxu0 0
        %2479 = vmatprep.subr.bf16.mxu0 0
        %2480 = vmatpush1.bf16.msra.mxu0 %v2457
        %2481 = vmatprep.subr.bf16.mxu0 0
        %2482 = vmatpush2.bf16.msra.mxu0 0
        %2483 = vmatprep.subr.bf16.mxu0 0
        %2484 = vmatpush2.bf16.msra.mxu0 0
        %2485 = vmatprep.subr.bf16.mxu0 0
        %2486 = vmatpush2.bf16.msra.mxu0 0
        %2487 = vmatprep.subr.bf16.mxu0 0
        %2488 = vmatpush2.bf16.msra.mxu0 0
        %2489 = vmatprep.subr.bf16.mxu0 0
        %2490 = vmatpush2.bf16.msra.mxu0 0
        %2491 = vmatprep.subr.bf16.mxu0 0
        %2492 = vmatpush2.bf16.msra.mxu0 0
        %2493 = vmatprep.subr.bf16.mxu0 0
        %2494 = vmatpush2.bf16.msra.mxu0 0
        %2495 = vmatprep.subr.bf16.mxu0 0
        %2496 = vmatpush2.bf16.msra.mxu0 0
        %2497 = vmatprep.mubr.bf16.mxu0 0
        %2498 = vmatmul.mubr.bf16.gmra.mxu0 %v2460
        %v2499 = vpop.f32.mrf.mxu0
        %v2500 = vpop.f32.mrf.mxu0
        %v2501 = vpop.f32.mrf.mxu0
        %v2502 = vadd.f32 %v2451, %v2501
        %v2503 = vpop.f32.mrf.mxu0
        %2504 = vmatprep.mubr.bf16.mxu0 0
        %2505 = vmatmul.mubr.bf16.gmra.mxu0 %v2463
        %v2506 = vpop.f32.mrf.mxu0
        %v2507 = vpop.f32.mrf.mxu0
        %v2508 = vpop.f32.mrf.mxu0
        %v2509 = vpop.f32.mrf.mxu0
        %2510 = vdwg.mxu0
        %v2511 = vadd.f32 %v1943, %v2502
        %v2512 = vmul.f32 %v2511, %v794
        %v2513 = vpack.c.bf16 %v2512, %v2512
        %v2514 = vld [vmem:[%s13] sm:$0xf]
        %v2515 = vld [vmem:[%s13 + $0x4] sm:$0xf]
        %v2516 = vld [vmem:[%s14] sm:$0x1]
        %v2518 = vlaneseq
        %v2519 = vshrl.u32 %v2518, 7
        %v2520 = vsub.s32 0, %v2519
        %v2521 = vrot.slane %v2516, %v2520
        %v2525 = vunpack.c.l.b16 %v2514
        %v2526 = vunpack.c.l.b16 %v2515
        %v2527 = vpack.c.b16 %v2526, %v2525
        %v2530 = vsel %vm897, %v2513, 0
        %2532 = vmatprep.subr.bf16.mxu0 0
        %2533 = vmatpush1.bf16.msra.mxu0 0
        %2534 = vmatprep.subr.bf16.mxu0 0
        %2535 = vmatpush1.bf16.msra.mxu0 0
        %2536 = vmatprep.subr.bf16.mxu0 0
        %2537 = vmatpush1.bf16.msra.mxu0 0
        %2538 = vmatprep.subr.bf16.mxu0 0
        %2539 = vmatpush1.bf16.msra.mxu0 0
        %2540 = vmatprep.subr.bf16.mxu0 0
        %2541 = vmatpush1.bf16.msra.mxu0 0
        %2542 = vmatprep.subr.bf16.mxu0 0
        %2543 = vmatpush1.bf16.msra.mxu0 0
        %2544 = vmatprep.subr.bf16.mxu0 0
        %2545 = vmatpush1.bf16.msra.mxu0 0
        %2546 = vmatprep.subr.bf16.mxu0 0
        %2547 = vmatpush1.bf16.msra.mxu0 %v2527
        %2548 = vmatprep.subr.bf16.mxu0 0
        %2549 = vmatpush2.bf16.msra.mxu0 0
        %2550 = vmatprep.subr.bf16.mxu0 0
        %2551 = vmatpush2.bf16.msra.mxu0 0
        %2552 = vmatprep.subr.bf16.mxu0 0
        %2553 = vmatpush2.bf16.msra.mxu0 0
        %2554 = vmatprep.subr.bf16.mxu0 0
        %2555 = vmatpush2.bf16.msra.mxu0 0
        %2556 = vmatprep.subr.bf16.mxu0 0
        %2557 = vmatpush2.bf16.msra.mxu0 0
        %2558 = vmatprep.subr.bf16.mxu0 0
        %2559 = vmatpush2.bf16.msra.mxu0 0
        %2560 = vmatprep.subr.bf16.mxu0 0
        %2561 = vmatpush2.bf16.msra.mxu0 0
        %2562 = vmatprep.subr.bf16.mxu0 0
        %2563 = vmatpush2.bf16.msra.mxu0 0
        %2564 = vmatprep.mubr.bf16.mxu0 0
        %2565 = vmatmul.mubr.bf16.gmra.mxu0 %v2530
        %v2566 = vpop.f32.mrf.mxu0
        %v2567 = vadd.f32 %v2521, %v2566
        %v2568 = vpop.f32.mrf.mxu0
        %v2569 = vpop.f32.mrf.mxu0
        %v2570 = vpop.f32.mrf.mxu0
        %2571 = vdwg.mxu0
        %v2572 = vmul.f32 %v2567, %v794
        %v2573 = vld [vmem:[%s15] sm:$0xf]
        %v2574 = vld [vmem:[%s15 + $0x4] sm:$0xf]
        %v2575 = vld [vmem:[%s16] sm:$0x1]
        %v2577 = vlaneseq
        %v2578 = vshrl.u32 %v2577, 7
        %v2579 = vsub.s32 0, %v2578
        %v2580 = vrot.slane %v2575, %v2579
        %v2584 = vunpack.c.l.b16 %v2573
        %v2585 = vunpack.c.l.b16 %v2574
        %v2586 = vpack.c.b16 %v2585, %v2584
        %2588 = vmatprep.subr.bf16.mxu0 0
        %2589 = vmatpush1.bf16.msra.mxu0 0
        %2590 = vmatprep.subr.bf16.mxu0 0
        %2591 = vmatpush1.bf16.msra.mxu0 0
        %2592 = vmatprep.subr.bf16.mxu0 0
        %2593 = vmatpush1.bf16.msra.mxu0 0
        %2594 = vmatprep.subr.bf16.mxu0 0
        %2595 = vmatpush1.bf16.msra.mxu0 0
        %2596 = vmatprep.subr.bf16.mxu0 0
        %2597 = vmatpush1.bf16.msra.mxu0 0
        %2598 = vmatprep.subr.bf16.mxu0 0
        %2599 = vmatpush1.bf16.msra.mxu0 0
        %2600 = vmatprep.subr.bf16.mxu0 0
        %2601 = vmatpush1.bf16.msra.mxu0 0
        %2602 = vmatprep.subr.bf16.mxu0 0
        %2603 = vmatpush1.bf16.msra.mxu0 %v2586
        %2604 = vmatprep.subr.bf16.mxu0 0
        %2605 = vmatpush2.bf16.msra.mxu0 0
        %2606 = vmatprep.subr.bf16.mxu0 0
        %2607 = vmatpush2.bf16.msra.mxu0 0
        %2608 = vmatprep.subr.bf16.mxu0 0
        %2609 = vmatpush2.bf16.msra.mxu0 0
        %2610 = vmatprep.subr.bf16.mxu0 0
        %2611 = vmatpush2.bf16.msra.mxu0 0
        %2612 = vmatprep.subr.bf16.mxu0 0
        %2613 = vmatpush2.bf16.msra.mxu0 0
        %2614 = vmatprep.subr.bf16.mxu0 0
        %2615 = vmatpush2.bf16.msra.mxu0 0
        %2616 = vmatprep.subr.bf16.mxu0 0
        %2617 = vmatpush2.bf16.msra.mxu0 0
        %2618 = vmatprep.subr.bf16.mxu0 0
        %2619 = vmatpush2.bf16.msra.mxu0 0
        %2620 = vmatprep.mubr.bf16.mxu0 0
        %2621 = vmatmul.mubr.bf16.gmra.mxu0 %v2530
        %v2622 = vpop.f32.mrf.mxu0
        %v2623 = vadd.f32 %v2580, %v2622
        %v2624 = vpop.f32.mrf.mxu0
        %v2625 = vpop.f32.mrf.mxu0
        %v2626 = vpop.f32.mrf.mxu0
        %2627 = vdwg.mxu0
        %v2628 = vmul.f32 %v2623, %v794
        %v2629 = vld [vmem:[%s664] sm:$0xff]
        %v2630 = vmul.f32 %v2628, 1.442695
        %v2631 = vpow.pop %v2630
        %v2632 = vmul.f32 %v2629, %v2631
        %v2633 = vmul.f32 %v2632, %v794
        %v2634 = vadd.f32 %v2572, %v2633
        %2635 = vst [vmem:[%s756] sm:$0xff] %v2634
        %2636 = vadd.xlane.f32.xlu0 %v2628
        %v2637 = vpop.xlane.xlu0 %2636
        %v2638 = vrot.slane %v2637, 4
        %v2639 = vadd.f32 %v2637, %v2638
        %v2640 = vrot.slane %v2639, 2
        %v2641 = vadd.f32 %v2639, %v2640
        %v2642 = vrot.slane %v2641, 1
        %v2643 = vadd.f32 %v2641, %v2642
        %s2644 = vtos %v2643
        %v2645 = vstv %s2644
        %v2646 = vadd.f32 %v2645, 0.0
        %2647 = vst [vmem:[%s763] sm:$0xff] %v2646
        %s2648 = sand.u32 %s439, 1
        %s2649 = scalar_lea.sflag [#allocation4], %s2648
        %s2650 = sand.u32 %s439, 1
        %s2651 = smul.addr %s2650, 8
        %s2652 = scalar_lea.vmem [#allocation17], %s2651
        %s2653 = sand.u32 %s467, 1
        %s2654 = scalar_lea.sflag [#allocation19], %s2653
        %s2655 = sand.u32 %s467, 1
        %s2656 = smul.addr %s2655, 8
        %s2657 = scalar_lea.vmem [#allocation18], %s2656
        // Predicated region
        $region125: #{tpu_custom_call.1} parent=87 // pred_check
          %p2658 = pneg %p449
        $region126: #{tpu_custom_call.1} parent=87 // pred_check_branch
          %2660 = sbr.rel (%p2658) target = $region128
        $region127: #{tpu_custom_call.1} parent=87 // pred_region
          %s2662 = ssub.s32 128, 128
          %2663 = vsyncadd %s2649, %s2662
          %s2664 = smul.addr %s47, 2
          %s2665 = sadd.s32 %s48, %s2664
          %s2666 = smul.addr %s2665, 128
          %s2667 = scalar_lea.hbm %s17, %s2666
          %s2669 = sshll.u32 %s2652, 4
          %s2670 = int_to_ptr.vmem [resolvable:$true] %s2669
          %2672 = dma.vmem_to_hbm [thread:$0]  %s2670, 128, %s2667, %s2649
        $region128: #{tpu_custom_call.1} parent=87 // pred_fallthru
          _
        // Predicated region
        $region129: #{tpu_custom_call.1} parent=87 // pred_check
          %p2673 = pneg %p477
        $region130: #{tpu_custom_call.1} parent=87 // pred_check_branch
          %2675 = sbr.rel (%p2673) target = $region132
        $region131: #{tpu_custom_call.1} parent=87 // pred_region
          %s2677 = ssub.s32 128, 128
          %2678 = vsyncadd %s2654, %s2677
          %s2679 = smul.addr %s47, 2
          %s2680 = sadd.s32 %s48, %s2679
          %s2681 = smul.addr %s2680, 128
          %s2682 = scalar_lea.hbm %s18, %s2681
          %s2684 = sshll.u32 %s2657, 4
          %s2685 = int_to_ptr.vmem [resolvable:$true] %s2684
          %2687 = dma.vmem_to_hbm [thread:$0]  %s2685, 128, %s2682, %s2654
        $region132: #{tpu_custom_call.1} parent=87 // pred_fallthru
          _
      $region88: #{tpu_custom_call.1} parent=5 // pred_fallthru
        _
      %p2688 = scmp.le.s32.totalorder 2, %s38
      // Predicated region
      $region133: #{tpu_custom_call.1} parent=5 // pred_check
        %p2689 = pneg %p2688
      $region134: #{tpu_custom_call.1} parent=5 // pred_check_branch
        %2691 = sbr.rel (%p2689) target = $region136
      $region135: #{tpu_custom_call.1} parent=5 // pred_region
        %s2692 = ssub.s32 %s38, 2
        // Predicated region
        $region137: #{tpu_custom_call.1} parent=135 // pred_check
          %p2693 = pneg %p455
        $region138: #{tpu_custom_call.1} parent=135 // pred_check_branch
          %2695 = sbr.rel (%p2693) target = $region140
        $region139: #{tpu_custom_call.1} parent=135 // pred_region
          %s2696 = sand.u32 %s440, 1
          %s2697 = scalar_lea.sflag [#allocation4], %s2696
          %s2698 = sand.u32 %s440, 1
          %s2699 = smul.addr %s2698, 8
          %s2700 = scalar_lea.vmem [#allocation17], %s2699
          %2701 = dma.done %s2697, 128
        $region140: #{tpu_custom_call.1} parent=135 // pred_fallthru
          _
        // Predicated region
        $region141: #{tpu_custom_call.1} parent=135 // pred_check
          %p2702 = pneg %p483
        $region142: #{tpu_custom_call.1} parent=135 // pred_check_branch
          %2704 = sbr.rel (%p2702) target = $region144
        $region143: #{tpu_custom_call.1} parent=135 // pred_region
          %s2705 = sand.u32 %s468, 1
          %s2706 = scalar_lea.sflag [#allocation19], %s2705
          %s2707 = sand.u32 %s468, 1
          %s2708 = smul.addr %s2707, 8
          %s2709 = scalar_lea.vmem [#allocation18], %s2708
          %2710 = dma.done %s2706, 128
        $region144: #{tpu_custom_call.1} parent=135 // pred_fallthru
          _
      $region136: #{tpu_custom_call.1} parent=5 // pred_fallthru
        _
    $region6: #{tpu_custom_call.1} parent=1 // loop_footer
      %s42 = sadd.s32 1, %s38
    $region7: #{tpu_custom_call.1} parent=1 // loop_footer_branch
      %37 = sbr.rel target = $region3
    $region8: #{tpu_custom_call.1} parent=1 // loop_exit
      _
    %2711 = vsyncpa [#allocation3], 1
    %s2712 = scalar_lea.sflag [#allocation3], 1
    %2713 = vsyncpa %s2712, 1
    %2714 = vsyncpa [#allocation6], 1
    %2715 = vsyncpa [#allocation9], 1
    %2716 = vsyncpa [#allocation12], 1
    %2717 = vsyncpa [#allocation15], 1
    %2718 = vsyncpa [#allocation4], 1
    %s2719 = scalar_lea.sflag [#allocation4], 1
    %2720 = vsyncpa %s2719, 1
    %2721 = vsyncpa [#allocation19], 1
    %s2722 = scalar_lea.sflag [#allocation19], 1
    %2723 = vsyncpa %s2722, 1

// kernel: tpu_custom_call.1
$region0: #{tpu_custom_call.1}
  #allocation0 [shape = 'u32[]', space=smem, size = 0x4, offset = 0x4, fixed_abs, tag = 'smem constant byte address 0x4 - core index']
  #allocation1 [shape = 'u32[144,128]{1,0:T(1,128)}', space=vmem, size = 0x12000, scoped, tag = 'internal scratch']
  %s0 = inlined_call_operand.vmem [shape: f32[2,32,2], index: 0, kind: input, shape index: {}]
  %s1 = inlined_call_operand.vmem [shape: f32[2,32,1], index: 1, kind: input, shape index: {}]
  %s2 = inlined_call_operand.hbm [shape: f32[2,16,128], index: 2, kind: input, shape index: {}]
  %s3 = inlined_call_operand.hbm [shape: bf16[2,16], index: 3, kind: input, shape index: {}]
  %s4 = inlined_call_operand.hbm [shape: f32[1,16], index: 4, kind: input, shape index: {}]
  %s5 = inlined_call_operand.vmem [shape: bf16[3,3,16,16], index: 5, kind: input, shape index: {}]
  %s6 = inlined_call_operand.vmem [shape: bf16[3,3,16,16], index: 6, kind: input, shape index: {}]
  %s7 = inlined_call_operand.hbm [shape: f32[3,1,16], index: 7, kind: input, shape index: {}]
  %s8 = inlined_call_operand.hbm [shape: f32[3,1,16], index: 8, kind: input, shape index: {}]
  %s9 = inlined_call_operand.hbm [shape: bf16[3,16,16], index: 9, kind: input, shape index: {}]
  %s10 = inlined_call_operand.hbm [shape: f32[3,1,16], index: 10, kind: input, shape index: {}]
  %s11 = inlined_call_operand.hbm [shape: bf16[3,16,16], index: 11, kind: input, shape index: {}]
  %s12 = inlined_call_operand.hbm [shape: f32[3,1,16], index: 12, kind: input, shape index: {}]
  %s13 = inlined_call_operand.vmem [shape: bf16[16,128], index: 13, kind: input, shape index: {}]
  %s14 = inlined_call_operand.vmem [shape: f32[1,128], index: 14, kind: input, shape index: {}]
  %s15 = inlined_call_operand.vmem [shape: bf16[16,128], index: 15, kind: input, shape index: {}]
  %s16 = inlined_call_operand.vmem [shape: f32[1,128], index: 16, kind: input, shape index: {}]
  %s17 = inlined_call_operand.hbm [shape: f32[2,16,128], index: 17, kind: output, shape index: {0}]
  %s18 = inlined_call_operand.hbm [shape: f32[2,2,8,128], index: 18, kind: output, shape index: {1}]
  %19 = xla_tuple %s17, %s18
  %s20 = sld [smem:[#allocation0]]
  $region145: #{tpu_custom_call.1} parent=0
    _
  %s22 = ssub.s32 1, %s20
  %s23 = scalar_select 0, %s22, %s20
  $region1: #{tpu_custom_call.1} parent=0
    #allocation2 [shape = 'u8[8192]{0}', space=vmem, size = 0x2000, scoped, tag = 'input window, operand 2']
    #allocation3 [shape = 's32[2]{0}', space=sflag, size = 0x8, scoped, tag = 'scoped memory for tpu_custom_call.1']
    #allocation4 [shape = 's32[2]{0}', space=sflag, size = 0x8, scoped, tag = 'scoped memory for tpu_custom_call.1']
    #allocation5 [shape = 'u8[512]{0}', space=vmem, size = 0x400, scoped, tag = 'input window, operand 3, single buffered']
    #allocation6 [shape = 's32[1]{0}', space=sflag, size = 0x4, scoped, tag = 'scoped memory for tpu_custom_call.1']
    #allocation7 [shape = 'u8[512]{0}', space=vmem, size = 0x400, scoped, tag = 'input window, operand 4, single buffered']
    #allocation8 [shape = 'u8[1536]{0}', space=vmem, size = 0x800, scoped, tag = 'input window, operand 7, single buffered']
    #allocation9 [shape = 's32[1]{0}', space=sflag, size = 0x4, scoped, tag = 'scoped memory for tpu_custom_call.1']
    #allocation10 [shape = 'u8[1536]{0}', space=vmem, size = 0x800, scoped, tag = 'input window, operand 8, single buffered']
    #allocation11 [shape = 'u8[12288]{0}', space=vmem, size = 0x3000, scoped, tag = 'input window, operand 9, single buffered']
    #allocation12 [shape = 's32[1]{0}', space=sflag, size = 0x4, scoped, tag = 'scoped memory for tpu_custom_call.1']
    #allocation13 [shape = 'u8[1536]{0}', space=vmem, size = 0x800, scoped, tag = 'input window, operand 10, single buffered']
    #allocation14 [shape = 'u8[12288]{0}', space=vmem, size = 0x3000, scoped, tag = 'input window, operand 11, single buffered']
    #allocation15 [shape = 's32[1]{0}', space=sflag, size = 0x4, scoped, tag = 'scoped memory for tpu_custom_call.1']
    #allocation16 [shape = 'u8[1536]{0}', space=vmem, size = 0x800, scoped, tag = 'input window, operand 12, single buffered']
    #allocation17 [shape = 'u8[8192]{0}', space=vmem, size = 0x2000, scoped, tag = 'output window, operand 0']
    #allocation18 [shape = 'u8[8192]{0}', space=vmem, size = 0x2000, scoped, tag = 'output window, operand 1']
    #allocation19 [shape = 's32[2]{0}', space=sflag, size = 0x8, scoped, tag = 'scoped memory for tpu_custom_call.1']
    %24 = vsyncpa [#allocation3], 0
    %s25 = scalar_lea.sflag [#allocation3], 1
    %26 = vsyncpa %s25, 0
    %27 = vsyncpa [#allocation6], 0
    %28 = vsyncpa [#allocation9], 0
    %29 = vsyncpa [#allocation12], 0
    %30 = vsyncpa [#allocation15], 0
    %31 = vsyncpa [#allocation4], 0
    %s32 = scalar_lea.sflag [#allocation4], 1
    %33 = vsyncpa %s32, 0
    %34 = vsyncpa [#allocation19], 0
    %s35 = scalar_lea.sflag [#allocation19], 1
    %36 = vsyncpa %s35, 0
    loop: start=0, step=1, limit=6
    $region2: #{tpu_custom_call.1} parent=1 // loop_pre_header
      _
    $region3: #{tpu_custom_call.1} parent=1 // loop_header
      %s38 = sphi 0, %s42
      %p39 = scmp.ge.s32.totalorder %s38, 6
      %s45 = sphi 0, %s57
      %s46 = sphi 0, %s53
      %s47 = sphi 0, %s45
      %s48 = sphi 0, %s46
      %s49 = sphi 0, %s47
      %s50 = sphi 0, %s48
      %s60 = sphi 0, %s62
      %s63 = sphi 0, %s60
      %s64 = sphi 0, %s63
      %s80 = sphi 0, %s64
      %s86 = sphi 0, %s88
      %s89 = sphi 0, %s86
      %s90 = sphi 0, %s89
      %s106 = sphi 0, %s90
      %s114 = sphi 0, %s116
      %s117 = sphi 0, %s114
      %s118 = sphi 0, %s117
      %s134 = sphi 0, %s118
      %s138 = sphi 0, %s138
      %s140 = sphi 0, %s138
      %s141 = sphi 0, %s140
      %s155 = sphi 0, %s141
      %s159 = sphi 0, %s159
      %s161 = sphi 0, %s159
      %s162 = sphi 0, %s161
      %s176 = sphi 0, %s162
      %s180 = sphi 0, %s180
      %s182 = sphi 0, %s180
      %s183 = sphi 0, %s182
      %s197 = sphi 0, %s183
      %s201 = sphi 0, %s201
      %s203 = sphi 0, %s201
      %s204 = sphi 0, %s203
      %s218 = sphi 0, %s204
      %s222 = sphi 0, %s222
      %s224 = sphi 0, %s222
      %s225 = sphi 0, %s224
      %s239 = sphi 0, %s225
      %s243 = sphi 0, %s243
      %s245 = sphi 0, %s243
      %s246 = sphi 0, %s245
      %s260 = sphi 0, %s246
      %s264 = sphi 0, %s264
      %s266 = sphi 0, %s264
      %s267 = sphi 0, %s266
      %s281 = sphi 0, %s267
      %s285 = sphi 0, %s285
      %s287 = sphi 0, %s285
      %s288 = sphi 0, %s287
      %s302 = sphi 0, %s288
      %s306 = sphi 0, %s306
      %s308 = sphi 0, %s306
      %s309 = sphi 0, %s308
      %s323 = sphi 0, %s309
      %s327 = sphi 0, %s327
      %s329 = sphi 0, %s327
      %s330 = sphi 0, %s329
      %s344 = sphi 0, %s330
      %s348 = sphi 0, %s348
      %s350 = sphi 0, %s348
      %s351 = sphi 0, %s350
      %s365 = sphi 0, %s351
      %s369 = sphi 0, %s369
      %s371 = sphi 0, %s369
      %s372 = sphi 0, %s371
      %s386 = sphi 0, %s372
      %s390 = sphi 0, %s390
      %s392 = sphi 0, %s390
      %s393 = sphi 0, %s392
      %s407 = sphi 0, %s393
      %s411 = sphi 0, %s411
      %s413 = sphi 0, %s411
      %s414 = sphi 0, %s413
      %s428 = sphi 0, %s414
      %s436 = sphi 0, %s438
      %s439 = sphi 0, %s436
      %s440 = sphi 0, %s439
      %s456 = sphi 0, %s440
      %s464 = sphi 0, %s466
      %s467 = sphi 0, %s464
      %s468 = sphi 0, %s467
      %s484 = sphi 0, %s468
    $region4: #{tpu_custom_call.1} parent=1 // loop_header_branch
      %41 = sbr.rel (%p39) target = $region8
    $region5: #{tpu_custom_call.1} parent=1 // loop_body
      %s43 = ssub.s32 %s38, 1
      %s44 = ssub.s32 %s38, 2
      %s51 = sadd.s32 1, %s46
      %p52 = scmp.ge.s32.totalorder %s51, 2
      %s53 = scalar_select %p52, 0, %s51
      %s54 = sadd.s32 1, %s45
      %s55 = scalar_select %p52, %s54, %s45
      %p56 = scmp.ge.s32.totalorder %s55, 2
      %s57 = scalar_select %p56, 0, %s55
      %s58 = ssub.s32 %s45, %s57
      %p59 = scmp.eq.s32.totalorder %s58, 0
      %s61 = sadd.s32 %s60, 1
      %s62 = scalar_select %p59, %s60, %s61
      %p65 = pneg %p59
      %p66 = scmp.eq.s32.totalorder %s38, 3
      %p67 = por %p65, %p66
      %p68 = scmp.ne.s32.totalorder %s60, %s63
      %p69 = scmp.eq.s32.totalorder %s38, 0
      %p70 = por %p68, %p69
      %p71 = scmp.ne.s32.totalorder %s60, %s63
      %p72 = scmp.eq.s32.totalorder %s43, 3
      %p73 = por %p71, %p72
      %p74 = scmp.ne.s32.totalorder %s63, %s64
      %p75 = scmp.eq.s32.totalorder %s43, 0
      %p76 = por %p74, %p75
      %p77 = scmp.ne.s32.totalorder %s63, %s64
      %p78 = scmp.eq.s32.totalorder %s44, 3
      %p79 = por %p77, %p78
      %p81 = scmp.ne.s32.totalorder %s64, %s80
      %p82 = scmp.eq.s32.totalorder %s44, 0
      %p83 = por %p81, %p82
      %s84 = ssub.s32 %s45, %s57
      %p85 = scmp.eq.s32.totalorder %s84, 0
      %s87 = sadd.s32 %s86, 1
      %s88 = scalar_select %p85, %s86, %s87
      %p91 = pneg %p85
      %p92 = scmp.eq.s32.totalorder %s38, 3
      %p93 = por %p91, %p92
      %p94 = scmp.ne.s32.totalorder %s86, %s89
      %p95 = scmp.eq.s32.totalorder %s38, 0
      %p96 = por %p94, %p95
      %p97 = scmp.ne.s32.totalorder %s86, %s89
      %p98 = scmp.eq.s32.totalorder %s43, 3
      %p99 = por %p97, %p98
      %p100 = scmp.ne.s32.totalorder %s89, %s90
      %p101 = scmp.eq.s32.totalorder %s43, 0
      %p102 = por %p100, %p101
      %p103 = scmp.ne.s32.totalorder %s89, %s90
      %p104 = scmp.eq.s32.totalorder %s44, 3
      %p105 = por %p103, %p104
      %p107 = scmp.ne.s32.totalorder %s90, %s106
      %p108 = scmp.eq.s32.totalorder %s44, 0
      %p109 = por %p107, %p108
      %s110 = ssub.s32 %s45, %s57
      %s111 = ssub.s32 %s46, %s53
      %s112 = sor.u32 %s110, %s111
      %p113 = scmp.eq.s32.totalorder %s112, 0
      %s115 = sadd.s32 %s114, 1
      %s116 = scalar_select %p113, %s114, %s115
      %p119 = pneg %p113
      %p120 = scmp.eq.s32.totalorder %s38, 3
      %p121 = por %p119, %p120
      %p122 = scmp.ne.s32.totalorder %s114, %s117
      %p123 = scmp.eq.s32.totalorder %s38, 0
      %p124 = por %p122, %p123
      %p125 = scmp.ne.s32.totalorder %s114, %s117
      %p126 = scmp.eq.s32.totalorder %s43, 3
      %p127 = por %p125, %p126
      %p128 = scmp.ne.s32.totalorder %s117, %s118
      %p129 = scmp.eq.s32.totalorder %s43, 0
      %p130 = por %p128, %p129
      %p131 = scmp.ne.s32.totalorder %s117, %s118
      %p132 = scmp.eq.s32.totalorder %s44, 3
      %p133 = por %p131, %p132
      %p135 = scmp.ne.s32.totalorder %s118, %s134
      %p136 = scmp.eq.s32.totalorder %s44, 0
      %p137 = por %p135, %p136
      %s139 = sadd.s32 %s138, 1
      %p142 = scmp.eq.s32.totalorder %s38, 3
      %p143 = scmp.ne.s32.totalorder %s138, %s140
      %p144 = scmp.eq.s32.totalorder %s38, 0
      %p145 = por %p143, %p144
      %p146 = scmp.ne.s32.totalorder %s138, %s140
      %p147 = scmp.eq.s32.totalorder %s43, 3
      %p148 = por %p146, %p147
      %p149 = scmp.ne.s32.totalorder %s140, %s141
      %p150 = scmp.eq.s32.totalorder %s43, 0
      %p151 = por %p149, %p150
      %p152 = scmp.ne.s32.totalorder %s140, %s141
      %p153 = scmp.eq.s32.totalorder %s44, 3
      %p154 = por %p152, %p153
      %p156 = scmp.ne.s32.totalorder %s141, %s155
      %p157 = scmp.eq.s32.totalorder %s44, 0
      %p158 = por %p156, %p157
      %s160 = sadd.s32 %s159, 1
      %p163 = scmp.eq.s32.totalorder %s38, 3
      %p164 = scmp.ne.s32.totalorder %s159, %s161
      %p165 = scmp.eq.s32.totalorder %s38, 0
      %p166 = por %p164, %p165
      %p167 = scmp.ne.s32.totalorder %s159, %s161
      %p168 = scmp.eq.s32.totalorder %s43, 3
      %p169 = por %p167, %p168
      %p170 = scmp.ne.s32.totalorder %s161, %s162
      %p171 = scmp.eq.s32.totalorder %s43, 0
      %p172 = por %p170, %p171
      %p173 = scmp.ne.s32.totalorder %s161, %s162
      %p174 = scmp.eq.s32.totalorder %s44, 3
      %p175 = por %p173, %p174
      %p177 = scmp.ne.s32.totalorder %s162, %s176
      %p178 = scmp.eq.s32.totalorder %s44, 0
      %p179 = por %p177, %p178
      %s181 = sadd.s32 %s180, 1
      %p184 = scmp.eq.s32.totalorder %s38, 3
      %p185 = scmp.ne.s32.totalorder %s180, %s182
      %p186 = scmp.eq.s32.totalorder %s38, 0
      %p187 = por %p185, %p186
      %p188 = scmp.ne.s32.totalorder %s180, %s182
      %p189 = scmp.eq.s32.totalorder %s43, 3
      %p190 = por %p188, %p189
      %p191 = scmp.ne.s32.totalorder %s182, %s183
      %p192 = scmp.eq.s32.totalorder %s43, 0
      %p193 = por %p191, %p192
      %p194 = scmp.ne.s32.totalorder %s182, %s183
      %p195 = scmp.eq.s32.totalorder %s44, 3
      %p196 = por %p194, %p195
      %p198 = scmp.ne.s32.totalorder %s183, %s197
      %p199 = scmp.eq.s32.totalorder %s44, 0
      %p200 = por %p198, %p199
      %s202 = sadd.s32 %s201, 1
      %p205 = scmp.eq.s32.totalorder %s38, 3
      %p206 = scmp.ne.s32.totalorder %s201, %s203
      %p207 = scmp.eq.s32.totalorder %s38, 0
      %p208 = por %p206, %p207
      %p209 = scmp.ne.s32.totalorder %s201, %s203
      %p210 = scmp.eq.s32.totalorder %s43, 3
      %p211 = por %p209, %p210
      %p212 = scmp.ne.s32.totalorder %s203, %s204
      %p213 = scmp.eq.s32.totalorder %s43, 0
      %p214 = por %p212, %p213
      %p215 = scmp.ne.s32.totalorder %s203, %s204
      %p216 = scmp.eq.s32.totalorder %s44, 3
      %p217 = por %p215, %p216
      %p219 = scmp.ne.s32.totalorder %s204, %s218
      %p220 = scmp.eq.s32.totalorder %s44, 0
      %p221 = por %p219, %p220
      %s223 = sadd.s32 %s222, 1
      %p226 = scmp.eq.s32.totalorder %s38, 3
      %p227 = scmp.ne.s32.totalorder %s222, %s224
      %p228 = scmp.eq.s32.totalorder %s38, 0
      %p229 = por %p227, %p228
      %p230 = scmp.ne.s32.totalorder %s222, %s224
      %p231 = scmp.eq.s32.totalorder %s43, 3
      %p232 = por %p230, %p231
      %p233 = scmp.ne.s32.totalorder %s224, %s225
      %p234 = scmp.eq.s32.totalorder %s43, 0
      %p235 = por %p233, %p234
      %p236 = scmp.ne.s32.totalorder %s224, %s225
      %p237 = scmp.eq.s32.totalorder %s44, 3
      %p238 = por %p236, %p237
      %p240 = scmp.ne.s32.totalorder %s225, %s239
      %p241 = scmp.eq.s32.totalorder %s44, 0
      %p242 = por %p240, %p241
      %s244 = sadd.s32 %s243, 1
      %p247 = scmp.eq.s32.totalorder %s38, 3
      %p248 = scmp.ne.s32.totalorder %s243, %s245
      %p249 = scmp.eq.s32.totalorder %s38, 0
      %p250 = por %p248, %p249
      %p251 = scmp.ne.s32.totalorder %s243, %s245
      %p252 = scmp.eq.s32.totalorder %s43, 3
      %p253 = por %p251, %p252
      %p254 = scmp.ne.s32.totalorder %s245, %s246
      %p255 = scmp.eq.s32.totalorder %s43, 0
      %p256 = por %p254, %p255
      %p257 = scmp.ne.s32.totalorder %s245, %s246
      %p258 = scmp.eq.s32.totalorder %s44, 3
      %p259 = por %p257, %p258
      %p261 = scmp.ne.s32.totalorder %s246, %s260
      %p262 = scmp.eq.s32.totalorder %s44, 0
      %p263 = por %p261, %p262
      %s265 = sadd.s32 %s264, 1
      %p268 = scmp.eq.s32.totalorder %s38, 3
      %p269 = scmp.ne.s32.totalorder %s264, %s266
      %p270 = scmp.eq.s32.totalorder %s38, 0
      %p271 = por %p269, %p270
      %p272 = scmp.ne.s32.totalorder %s264, %s266
      %p273 = scmp.eq.s32.totalorder %s43, 3
      %p274 = por %p272, %p273
      %p275 = scmp.ne.s32.totalorder %s266, %s267
      %p276 = scmp.eq.s32.totalorder %s43, 0
      %p277 = por %p275, %p276
      %p278 = scmp.ne.s32.totalorder %s266, %s267
      %p279 = scmp.eq.s32.totalorder %s44, 3
      %p280 = por %p278, %p279
      %p282 = scmp.ne.s32.totalorder %s267, %s281
      %p283 = scmp.eq.s32.totalorder %s44, 0
      %p284 = por %p282, %p283
      %s286 = sadd.s32 %s285, 1
      %p289 = scmp.eq.s32.totalorder %s38, 3
      %p290 = scmp.ne.s32.totalorder %s285, %s287
      %p291 = scmp.eq.s32.totalorder %s38, 0
      %p292 = por %p290, %p291
      %p293 = scmp.ne.s32.totalorder %s285, %s287
      %p294 = scmp.eq.s32.totalorder %s43, 3
      %p295 = por %p293, %p294
      %p296 = scmp.ne.s32.totalorder %s287, %s288
      %p297 = scmp.eq.s32.totalorder %s43, 0
      %p298 = por %p296, %p297
      %p299 = scmp.ne.s32.totalorder %s287, %s288
      %p300 = scmp.eq.s32.totalorder %s44, 3
      %p301 = por %p299, %p300
      %p303 = scmp.ne.s32.totalorder %s288, %s302
      %p304 = scmp.eq.s32.totalorder %s44, 0
      %p305 = por %p303, %p304
      %s307 = sadd.s32 %s306, 1
      %p310 = scmp.eq.s32.totalorder %s38, 3
      %p311 = scmp.ne.s32.totalorder %s306, %s308
      %p312 = scmp.eq.s32.totalorder %s38, 0
      %p313 = por %p311, %p312
      %p314 = scmp.ne.s32.totalorder %s306, %s308
      %p315 = scmp.eq.s32.totalorder %s43, 3
      %p316 = por %p314, %p315
      %p317 = scmp.ne.s32.totalorder %s308, %s309
      %p318 = scmp.eq.s32.totalorder %s43, 0
      %p319 = por %p317, %p318
      %p320 = scmp.ne.s32.totalorder %s308, %s309
      %p321 = scmp.eq.s32.totalorder %s44, 3
      %p322 = por %p320, %p321
      %p324 = scmp.ne.s32.totalorder %s309, %s323
      %p325 = scmp.eq.s32.totalorder %s44, 0
      %p326 = por %p324, %p325
      %s328 = sadd.s32 %s327, 1
      %p331 = scmp.eq.s32.totalorder %s38, 3
      %p332 = scmp.ne.s32.totalorder %s327, %s329
      %p333 = scmp.eq.s32.totalorder %s38, 0
      %p334 = por %p332, %p333
      %p335 = scmp.ne.s32.totalorder %s327, %s329
      %p336 = scmp.eq.s32.totalorder %s43, 3
      %p337 = por %p335, %p336
      %p338 = scmp.ne.s32.totalorder %s329, %s330
      %p339 = scmp.eq.s32.totalorder %s43, 0
      %p340 = por %p338, %p339
      %p341 = scmp.ne.s32.totalorder %s329, %s330
      %p342 = scmp.eq.s32.totalorder %s44, 3
      %p343 = por %p341, %p342
      %p345 = scmp.ne.s32.totalorder %s330, %s344
      %p346 = scmp.eq.s32.totalorder %s44, 0
      %p347 = por %p345, %p346
      %s349 = sadd.s32 %s348, 1
      %p352 = scmp.eq.s32.totalorder %s38, 3
      %p353 = scmp.ne.s32.totalorder %s348, %s350
      %p354 = scmp.eq.s32.totalorder %s38, 0
      %p355 = por %p353, %p354
      %p356 = scmp.ne.s32.totalorder %s348, %s350
      %p357 = scmp.eq.s32.totalorder %s43, 3
      %p358 = por %p356, %p357
      %p359 = scmp.ne.s32.totalorder %s350, %s351
      %p360 = scmp.eq.s32.totalorder %s43, 0
      %p361 = por %p359, %p360
      %p362 = scmp.ne.s32.totalorder %s350, %s351
      %p363 = scmp.eq.s32.totalorder %s44, 3
      %p364 = por %p362, %p363
      %p366 = scmp.ne.s32.totalorder %s351, %s365
      %p367 = scmp.eq.s32.totalorder %s44, 0
      %p368 = por %p366, %p367
      %s370 = sadd.s32 %s369, 1
      %p373 = scmp.eq.s32.totalorder %s38, 3
      %p374 = scmp.ne.s32.totalorder %s369, %s371
      %p375 = scmp.eq.s32.totalorder %s38, 0
      %p376 = por %p374, %p375
      %p377 = scmp.ne.s32.totalorder %s369, %s371
      %p378 = scmp.eq.s32.totalorder %s43, 3
      %p379 = por %p377, %p378
      %p380 = scmp.ne.s32.totalorder %s371, %s372
      %p381 = scmp.eq.s32.totalorder %s43, 0
      %p382 = por %p380, %p381
      %p383 = scmp.ne.s32.totalorder %s371, %s372
      %p384 = scmp.eq.s32.totalorder %s44, 3
      %p385 = por %p383, %p384
      %p387 = scmp.ne.s32.totalorder %s372, %s386
      %p388 = scmp.eq.s32.totalorder %s44, 0
      %p389 = por %p387, %p388
      %s391 = sadd.s32 %s390, 1
      %p394 = scmp.eq.s32.totalorder %s38, 3
      %p395 = scmp.ne.s32.totalorder %s390, %s392
      %p396 = scmp.eq.s32.totalorder %s38, 0
      %p397 = por %p395, %p396
      %p398 = scmp.ne.s32.totalorder %s390, %s392
      %p399 = scmp.eq.s32.totalorder %s43, 3
      %p400 = por %p398, %p399
      %p401 = scmp.ne.s32.totalorder %s392, %s393
      %p402 = scmp.eq.s32.totalorder %s43, 0
      %p403 = por %p401, %p402
      %p404 = scmp.ne.s32.totalorder %s392, %s393
      %p405 = scmp.eq.s32.totalorder %s44, 3
      %p406 = por %p404, %p405
      %p408 = scmp.ne.s32.totalorder %s393, %s407
      %p409 = scmp.eq.s32.totalorder %s44, 0
      %p410 = por %p408, %p409
      %s412 = sadd.s32 %s411, 1
      %p415 = scmp.eq.s32.totalorder %s38, 3
      %p416 = scmp.ne.s32.totalorder %s411, %s413
      %p417 = scmp.eq.s32.totalorder %s38, 0
      %p418 = por %p416, %p417
      %p419 = scmp.ne.s32.totalorder %s411, %s413
      %p420 = scmp.eq.s32.totalorder %s43, 3
      %p421 = por %p419, %p420
      %p422 = scmp.ne.s32.totalorder %s413, %s414
      %p423 = scmp.eq.s32.totalorder %s43, 0
      %p424 = por %p422, %p423
      %p425 = scmp.ne.s32.totalorder %s413, %s414
      %p426 = scmp.eq.s32.totalorder %s44, 3
      %p427 = por %p425, %p426
      %p429 = scmp.ne.s32.totalorder %s414, %s428
      %p430 = scmp.eq.s32.totalorder %s44, 0
      %p431 = por %p429, %p430
      %s432 = ssub.s32 %s45, %s57
      %s433 = ssub.s32 %s46, %s53
      %s434 = sor.u32 %s432, %s433
      %p435 = scmp.eq.s32.totalorder %s434, 0
      %s437 = sadd.s32 %s436, 1
      %s438 = scalar_select %p435, %s436, %s437
      %p441 = pneg %p435
      %p442 = scmp.eq.s32.totalorder %s38, 3
      %p443 = por %p441, %p442
      %p444 = scmp.ne.s32.totalorder %s436, %s439
      %p445 = scmp.eq.s32.totalorder %s38, 0
      %p446 = por %p444, %p445
      %p447 = scmp.ne.s32.totalorder %s436, %s439
      %p448 = scmp.eq.s32.totalorder %s43, 3
      %p449 = por %p447, %p448
      %p450 = scmp.ne.s32.totalorder %s439, %s440
      %p451 = scmp.eq.s32.totalorder %s43, 0
      %p452 = por %p450, %p451
      %p453 = scmp.ne.s32.totalorder %s439, %s440
      %p454 = scmp.eq.s32.totalorder %s44, 3
      %p455 = por %p453, %p454
      %p457 = scmp.ne.s32.totalorder %s440, %s456
      %p458 = scmp.eq.s32.totalorder %s44, 0
      %p459 = por %p457, %p458
      %s460 = ssub.s32 %s45, %s57
      %s461 = ssub.s32 %s46, %s53
      %s462 = sor.u32 %s460, %s461
      %p463 = scmp.eq.s32.totalorder %s462, 0
      %s465 = sadd.s32 %s464, 1
      %s466 = scalar_select %p463, %s464, %s465
      %p469 = pneg %p463
      %p470 = scmp.eq.s32.totalorder %s38, 3
      %p471 = por %p469, %p470
      %p472 = scmp.ne.s32.totalorder %s464, %s467
      %p473 = scmp.eq.s32.totalorder %s38, 0
      %p474 = por %p472, %p473
      %p475 = scmp.ne.s32.totalorder %s464, %s467
      %p476 = scmp.eq.s32.totalorder %s43, 3
      %p477 = por %p475, %p476
      %p478 = scmp.ne.s32.totalorder %s467, %s468
      %p479 = scmp.eq.s32.totalorder %s43, 0
      %p480 = por %p478, %p479
      %p481 = scmp.ne.s32.totalorder %s467, %s468
      %p482 = scmp.eq.s32.totalorder %s44, 3
      %p483 = por %p481, %p482
      %p485 = scmp.ne.s32.totalorder %s468, %s484
      %p486 = scmp.eq.s32.totalorder %s44, 0
      %p487 = por %p485, %p486
      %p488 = scmp.le.s32.totalorder 1, %s38
      %p489 = scmp.lt.s32.totalorder %s38, 5
      %p490 = pnand %p488, %p489
      %p491 = pneg %p490
      // Predicated region
      $region9: #{tpu_custom_call.1} parent=5 // pred_check
        _
      $region10: #{tpu_custom_call.1} parent=5 // pred_check_branch
        %493 = sbr.rel (%p490) target = $region12
      $region11: #{tpu_custom_call.1} parent=5 // pred_region
        %s494 = ssub.s32 %s38, 1
        // Predicated region
        $region13: #{tpu_custom_call.1} parent=11 // pred_check
          %p495 = pneg %p151
        $region14: #{tpu_custom_call.1} parent=11 // pred_check_branch
          %497 = sbr.rel (%p495) target = $region16
        $region15: #{tpu_custom_call.1} parent=11 // pred_region
          %s499 = ssub.s32 16, 16
          %500 = vsyncadd [#allocation6], %s499
          %s502 = sshll.u32 [#allocation5], 4
          %s503 = int_to_ptr.vmem [resolvable:$true] %s502
          %505 = dma.hbm_to_vmem [thread:$0]  %s3, 16, %s503, [#allocation6]
        $region16: #{tpu_custom_call.1} parent=11 // pred_fallthru
          _
        // Predicated region
        $region17: #{tpu_custom_call.1} parent=11 // pred_check
          %p506 = pneg %p172
        $region18: #{tpu_custom_call.1} parent=11 // pred_check_branch
          %508 = sbr.rel (%p506) target = $region20
        $region19: #{tpu_custom_call.1} parent=11 // pred_region
          %s510 = ssub.s32 16, 16
          %511 = vsyncadd [#allocation6], %s510
          %s513 = sshll.u32 [#allocation7], 4
          %s514 = int_to_ptr.vmem [resolvable:$true] %s513
          %516 = dma.hbm_to_vmem [thread:$0]  %s4, 16, %s514, [#allocation6]
        $region20: #{tpu_custom_call.1} parent=11 // pred_fallthru
          _
        // Predicated region
        $region21: #{tpu_custom_call.1} parent=11 // pred_check
          %p517 = pneg %p193
        $region22: #{tpu_custom_call.1} parent=11 // pred_check_branch
          %519 = sbr.rel (%p517) target = $region24
        $region23: #{tpu_custom_call.1} parent=11 // pred_region
          _
        $region24: #{tpu_custom_call.1} parent=11 // pred_fallthru
          _
        // Predicated region
        $region25: #{tpu_custom_call.1} parent=11 // pred_check
          %p520 = pneg %p214
        $region26: #{tpu_custom_call.1} parent=11 // pred_check_branch
          %522 = sbr.rel (%p520) target = $region28
        $region27: #{tpu_custom_call.1} parent=11 // pred_region
          _
        $region28: #{tpu_custom_call.1} parent=11 // pred_fallthru
          _
        // Predicated region
        $region29: #{tpu_custom_call.1} parent=11 // pred_check
          %p523 = pneg %p235
        $region30: #{tpu_custom_call.1} parent=11 // pred_check_branch
          %525 = sbr.rel (%p523) target = $region32
        $region31: #{tpu_custom_call.1} parent=11 // pred_region
          %s527 = ssub.s32 48, 48
          %528 = vsyncadd [#allocation9], %s527
          %s529 = sshll.u32 [#allocation8], 4
          %s530 = int_to_ptr.vmem [resolvable:$true] %s529
          %535 = dma.hbm_to_vmem [thread:$0]  %s7, 48, %s530, [#allocation9], 16, 16, 1
        $region32: #{tpu_custom_call.1} parent=11 // pred_fallthru
          _
        // Predicated region
        $region33: #{tpu_custom_call.1} parent=11 // pred_check
          %p536 = pneg %p256
        $region34: #{tpu_custom_call.1} parent=11 // pred_check_branch
          %538 = sbr.rel (%p536) target = $region36
        $region35: #{tpu_custom_call.1} parent=11 // pred_region
          %s540 = ssub.s32 48, 48
          %541 = vsyncadd [#allocation9], %s540
          %s542 = sshll.u32 [#allocation10], 4
          %s543 = int_to_ptr.vmem [resolvable:$true] %s542
          %548 = dma.hbm_to_vmem [thread:$0]  %s8, 48, %s543, [#allocation9], 16, 16, 1
        $region36: #{tpu_custom_call.1} parent=11 // pred_fallthru
          _
        // Predicated region
        $region37: #{tpu_custom_call.1} parent=11 // pred_check
          %p549 = pneg %p277
        $region38: #{tpu_custom_call.1} parent=11 // pred_check_branch
          %551 = sbr.rel (%p549) target = $region40
        $region39: #{tpu_custom_call.1} parent=11 // pred_region
          %s553 = ssub.s32 384, 384
          %554 = vsyncadd [#allocation12], %s553
          %s555 = sshll.u32 [#allocation11], 4
          %s556 = int_to_ptr.vmem [resolvable:$true] %s555
          %561 = dma.hbm_to_vmem [thread:$0]  %s9, 384, %s556, [#allocation12], 64, 64, 4
        $region40: #{tpu_custom_call.1} parent=11 // pred_fallthru
          _
        // Predicated region
        $region41: #{tpu_custom_call.1} parent=11 // pred_check
          %p562 = pneg %p298
        $region42: #{tpu_custom_call.1} parent=11 // pred_check_branch
          %564 = sbr.rel (%p562) target = $region44
        $region43: #{tpu_custom_call.1} parent=11 // pred_region
          %s566 = ssub.s32 48, 48
          %567 = vsyncadd [#allocation12], %s566
          %s568 = sshll.u32 [#allocation13], 4
          %s569 = int_to_ptr.vmem [resolvable:$true] %s568
          %574 = dma.hbm_to_vmem [thread:$0]  %s10, 48, %s569, [#allocation12], 16, 16, 1
        $region44: #{tpu_custom_call.1} parent=11 // pred_fallthru
          _
        // Predicated region
        $region45: #{tpu_custom_call.1} parent=11 // pred_check
          %p575 = pneg %p319
        $region46: #{tpu_custom_call.1} parent=11 // pred_check_branch
          %577 = sbr.rel (%p575) target = $region48
        $region47: #{tpu_custom_call.1} parent=11 // pred_region
          %s579 = ssub.s32 384, 384
          %580 = vsyncadd [#allocation15], %s579
          %s581 = sshll.u32 [#allocation14], 4
          %s582 = int_to_ptr.vmem [resolvable:$true] %s581
          %587 = dma.hbm_to_vmem [thread:$0]  %s11, 384, %s582, [#allocation15], 64, 64, 4
        $region48: #{tpu_custom_call.1} parent=11 // pred_fallthru
          _
        // Predicated region
        $region49: #{tpu_custom_call.1} parent=11 // pred_check
          %p588 = pneg %p340
        $region50: #{tpu_custom_call.1} parent=11 // pred_check_branch
          %590 = sbr.rel (%p588) target = $region52
        $region51: #{tpu_custom_call.1} parent=11 // pred_region
          %s592 = ssub.s32 48, 48
          %593 = vsyncadd [#allocation15], %s592
          %s594 = sshll.u32 [#allocation16], 4
          %s595 = int_to_ptr.vmem [resolvable:$true] %s594
          %600 = dma.hbm_to_vmem [thread:$0]  %s12, 48, %s595, [#allocation15], 16, 16, 1
        $region52: #{tpu_custom_call.1} parent=11 // pred_fallthru
          _
        // Predicated region
        $region53: #{tpu_custom_call.1} parent=11 // pred_check
          %p601 = pneg %p361
        $region54: #{tpu_custom_call.1} parent=11 // pred_check_branch
          %603 = sbr.rel (%p601) target = $region56
        $region55: #{tpu_custom_call.1} parent=11 // pred_region
          _
        $region56: #{tpu_custom_call.1} parent=11 // pred_fallthru
          _
        // Predicated region
        $region57: #{tpu_custom_call.1} parent=11 // pred_check
          %p604 = pneg %p382
        $region58: #{tpu_custom_call.1} parent=11 // pred_check_branch
          %606 = sbr.rel (%p604) target = $region60
        $region59: #{tpu_custom_call.1} parent=11 // pred_region
          _
        $region60: #{tpu_custom_call.1} parent=11 // pred_fallthru
          _
        // Predicated region
        $region61: #{tpu_custom_call.1} parent=11 // pred_check
          %p607 = pneg %p403
        $region62: #{tpu_custom_call.1} parent=11 // pred_check_branch
          %609 = sbr.rel (%p607) target = $region64
        $region63: #{tpu_custom_call.1} parent=11 // pred_region
          _
        $region64: #{tpu_custom_call.1} parent=11 // pred_fallthru
          _
        // Predicated region
        $region65: #{tpu_custom_call.1} parent=11 // pred_check
          %p610 = pneg %p424
        $region66: #{tpu_custom_call.1} parent=11 // pred_check_branch
          %612 = sbr.rel (%p610) target = $region68
        $region67: #{tpu_custom_call.1} parent=11 // pred_region
          _
        $region68: #{tpu_custom_call.1} parent=11 // pred_fallthru
          _
      $region12: #{tpu_custom_call.1} parent=5 // pred_fallthru
        _
      %p613 = scmp.lt.s32.totalorder %s38, 4
      // Predicated region
      $region69: #{tpu_custom_call.1} parent=5 // pred_check
        %p614 = pneg %p613
      $region70: #{tpu_custom_call.1} parent=5 // pred_check_branch
        %616 = sbr.rel (%p614) target = $region72
      $region71: #{tpu_custom_call.1} parent=5 // pred_region
        // Predicated region
        $region73: #{tpu_custom_call.1} parent=71 // pred_check
          %p617 = pneg %p70
        $region74: #{tpu_custom_call.1} parent=71 // pred_check_branch
          %619 = sbr.rel (%p617) target = $region76
        $region75: #{tpu_custom_call.1} parent=71 // pred_region
          %p620 = scmp.lt.s32.totalorder %s45, 1
          %s621 = scalar_select %p620, %s45, 1
          %s622 = smul.addr %s621, 4
          %s623 = smul.addr %s622, 8
          %s624 = scalar_lea.vmem %s0, %s623
        $region76: #{tpu_custom_call.1} parent=71 // pred_fallthru
          _
        // Predicated region
        $region77: #{tpu_custom_call.1} parent=71 // pred_check
          %p625 = pneg %p96
        $region78: #{tpu_custom_call.1} parent=71 // pred_check_branch
          %627 = sbr.rel (%p625) target = $region80
        $region79: #{tpu_custom_call.1} parent=71 // pred_region
          %p628 = scmp.lt.s32.totalorder %s45, 1
          %s629 = scalar_select %p628, %s45, 1
          %s630 = smul.addr %s629, 4
          %s631 = smul.addr %s630, 8
          %s632 = scalar_lea.vmem %s1, %s631
        $region80: #{tpu_custom_call.1} parent=71 // pred_fallthru
          _
        // Predicated region
        $region81: #{tpu_custom_call.1} parent=71 // pred_check
          %p633 = pneg %p124
        $region82: #{tpu_custom_call.1} parent=71 // pred_check_branch
          %635 = sbr.rel (%p633) target = $region84
        $region83: #{tpu_custom_call.1} parent=71 // pred_region
          %s636 = sand.u32 %s114, 1
          %s637 = scalar_lea.sflag [#allocation3], %s636
          %s638 = sand.u32 %s114, 1
          %s639 = smul.addr %s638, 8
          %s640 = scalar_lea.vmem [#allocation2], %s639
          %s642 = ssub.s32 128, 128
          %643 = vsyncadd %s637, %s642
          %s644 = smul.addr %s45, 2
          %s645 = sadd.s32 %s46, %s644
          %s646 = smul.addr %s645, 128
          %s647 = scalar_lea.hbm %s2, %s646
          %s649 = sshll.u32 %s640, 4
          %s650 = int_to_ptr.vmem [resolvable:$true] %s649
          %652 = dma.hbm_to_vmem [thread:$0]  %s647, 128, %s650, %s637
        $region84: #{tpu_custom_call.1} parent=71 // pred_fallthru
          _
      $region72: #{tpu_custom_call.1} parent=5 // pred_fallthru
        _
      %p653 = scmp.le.s32.totalorder 1, %s38
      %p654 = scmp.lt.s32.totalorder %s38, 5
      %p655 = pnand %p653, %p654
      %p656 = pneg %p655
      // Predicated region
      $region85: #{tpu_custom_call.1} parent=5 // pred_check
        _
      $region86: #{tpu_custom_call.1} parent=5 // pred_check_branch
        %658 = sbr.rel (%p655) target = $region88
      $region87: #{tpu_custom_call.1} parent=5 // pred_region
        %s659 = ssub.s32 %s38, 1
        %s660 = sand.u32 %s117, 1
        %s661 = scalar_lea.sflag [#allocation3], %s660
        %s662 = sand.u32 %s117, 1
        %s663 = smul.addr %s662, 8
        %s664 = scalar_lea.vmem [#allocation2], %s663
        // Predicated region
        $region89: #{tpu_custom_call.1} parent=87 // pred_check
          %p665 = pneg %p130
        $region90: #{tpu_custom_call.1} parent=87 // pred_check_branch
          %667 = sbr.rel (%p665) target = $region92
        $region91: #{tpu_custom_call.1} parent=87 // pred_region
          %668 = dma.done %s661, 128
        $region92: #{tpu_custom_call.1} parent=87 // pred_fallthru
          _
        // Predicated region
        $region93: #{tpu_custom_call.1} parent=87 // pred_check
          %p669 = pneg %p151
        $region94: #{tpu_custom_call.1} parent=87 // pred_check_branch
          %671 = sbr.rel (%p669) target = $region96
        $region95: #{tpu_custom_call.1} parent=87 // pred_region
          %672 = dma.done [#allocation6], 16
        $region96: #{tpu_custom_call.1} parent=87 // pred_fallthru
          _
        // Predicated region
        $region97: #{tpu_custom_call.1} parent=87 // pred_check
          %p673 = pneg %p172
        $region98: #{tpu_custom_call.1} parent=87 // pred_check_branch
          %675 = sbr.rel (%p673) target = $region100
        $region99: #{tpu_custom_call.1} parent=87 // pred_region
          %676 = dma.done [#allocation6], 16
        $region100: #{tpu_custom_call.1} parent=87 // pred_fallthru
          _
        // Predicated region
        $region101: #{tpu_custom_call.1} parent=87 // pred_check
          %p677 = pneg %p235
        $region102: #{tpu_custom_call.1} parent=87 // pred_check_branch
          %679 = sbr.rel (%p677) target = $region104
        $region103: #{tpu_custom_call.1} parent=87 // pred_region
          %680 = dma.done [#allocation9], 48
        $region104: #{tpu_custom_call.1} parent=87 // pred_fallthru
          _
        // Predicated region
        $region105: #{tpu_custom_call.1} parent=87 // pred_check
          %p681 = pneg %p256
        $region106: #{tpu_custom_call.1} parent=87 // pred_check_branch
          %683 = sbr.rel (%p681) target = $region108
        $region107: #{tpu_custom_call.1} parent=87 // pred_region
          %684 = dma.done [#allocation9], 48
        $region108: #{tpu_custom_call.1} parent=87 // pred_fallthru
          _
        // Predicated region
        $region109: #{tpu_custom_call.1} parent=87 // pred_check
          %p685 = pneg %p277
        $region110: #{tpu_custom_call.1} parent=87 // pred_check_branch
          %687 = sbr.rel (%p685) target = $region112
        $region111: #{tpu_custom_call.1} parent=87 // pred_region
          %688 = dma.done [#allocation12], 384
        $region112: #{tpu_custom_call.1} parent=87 // pred_fallthru
          _
        // Predicated region
        $region113: #{tpu_custom_call.1} parent=87 // pred_check
          %p689 = pneg %p298
        $region114: #{tpu_custom_call.1} parent=87 // pred_check_branch
          %691 = sbr.rel (%p689) target = $region116
        $region115: #{tpu_custom_call.1} parent=87 // pred_region
          %692 = dma.done [#allocation12], 48
        $region116: #{tpu_custom_call.1} parent=87 // pred_fallthru
          _
        // Predicated region
        $region117: #{tpu_custom_call.1} parent=87 // pred_check
          %p693 = pneg %p319
        $region118: #{tpu_custom_call.1} parent=87 // pred_check_branch
          %695 = sbr.rel (%p693) target = $region120
        $region119: #{tpu_custom_call.1} parent=87 // pred_region
          %696 = dma.done [#allocation15], 384
        $region120: #{tpu_custom_call.1} parent=87 // pred_fallthru
          _
        // Predicated region
        $region121: #{tpu_custom_call.1} parent=87 // pred_check
          %p697 = pneg %p340
        $region122: #{tpu_custom_call.1} parent=87 // pred_check_branch
          %699 = sbr.rel (%p697) target = $region124
        $region123: #{tpu_custom_call.1} parent=87 // pred_region
          %700 = dma.done [#allocation15], 48
        $region124: #{tpu_custom_call.1} parent=87 // pred_fallthru
          _
        %p701 = scmp.lt.s32.totalorder %s47, 1
        %s702 = scalar_select %p701, %s47, 1
        %s703 = smul.addr %s702, 4
        %s704 = smul.addr %s703, 8
        %s705 = scalar_lea.vmem %s0, %s704
        %p706 = pneg %p76
        %p707 = pneg %p73
        %p708 = scmp.lt.s32.totalorder %s47, 1
        %s709 = scalar_select %p708, %s47, 1
        %s710 = smul.addr %s709, 4
        %s711 = smul.addr %s710, 8
        %s712 = scalar_lea.vmem %s1, %s711
        %p713 = pneg %p102
        %p714 = pneg %p99
        %s715 = sand.u32 %s117, 1
        %s716 = scalar_lea.sflag [#allocation3], %s715
        %s717 = sand.u32 %s117, 1
        %s718 = smul.addr %s717, 8
        %s719 = scalar_lea.vmem [#allocation2], %s718
        %p720 = pneg %p130
        %p721 = pneg %p127
        %p722 = pneg %p151
        %p723 = pneg %p148
        %p724 = pneg %p172
        %p725 = pneg %p169
        %p726 = pneg %p193
        %p727 = pneg %p190
        %p728 = pneg %p214
        %p729 = pneg %p211
        %p730 = pneg %p235
        %p731 = pneg %p232
        %p732 = pneg %p256
        %p733 = pneg %p253
        %p734 = pneg %p277
        %p735 = pneg %p274
        %p736 = pneg %p298
        %p737 = pneg %p295
        %p738 = pneg %p319
        %p739 = pneg %p316
        %p740 = pneg %p340
        %p741 = pneg %p337
        %p742 = pneg %p361
        %p743 = pneg %p358
        %p744 = pneg %p382
        %p745 = pneg %p379
        %p746 = pneg %p403
        %p747 = pneg %p400
        %p748 = pneg %p424
        %p749 = pneg %p421
        %p750 = pneg %p452
        %p751 = pneg %p449
        %s752 = sand.u32 %s439, 1
        %s753 = scalar_lea.sflag [#allocation4], %s752
        %s754 = sand.u32 %s439, 1
        %s755 = smul.addr %s754, 8
        %s756 = scalar_lea.vmem [#allocation17], %s755
        %p757 = pneg %p480
        %p758 = pneg %p477
        %s759 = sand.u32 %s467, 1
        %s760 = scalar_lea.sflag [#allocation19], %s759
        %s761 = sand.u32 %s467, 1
        %s762 = smul.addr %s761, 8
        %s763 = scalar_lea.vmem [#allocation18], %s762
        %p764 = scmp.lt.s32.totalorder %s47, 1
        %s765 = scalar_select %p764, %s47, 1
        %s766 = smul.addr %s765, 4
        %s767 = smul.addr %s766, 8
        %s768 = scalar_lea.vmem %s0, %s767
        %p769 = scmp.lt.s32.totalorder %s47, 1
        %s770 = scalar_select %p769, %s47, 1
        %s771 = smul.addr %s770, 4
        %s772 = smul.addr %s771, 8
        %s773 = scalar_lea.vmem %s1, %s772
        %s775 = smul.u32 %s48, 8
        %s776 = scalar_lea.vmem %s768, %s775
        %v777 = vld [vmem:[%s776] sm:$0xff]
        %v778 = vld [vmem:[%s776 + $0x8] sm:$0xff]
        %v779 = vld [vmem:[%s776 + $0x10] sm:$0xff]
        %v780 = vpack.c.bf16 %v778, %v777
        %v781 = vpack.c.bf16 %v779, %v779
        %s782 = scalar_lea.vmem %s773, %s775
        %v783 = vld [vmem:[%s782] sm:$0xff]
        %v784 = vld [vmem:[%s782 + $0x8] sm:$0xff]
        %v785 = vld [vmem:[%s782 + $0x10] sm:$0xff]
        %787 = vset.pattern.permute.xlu0 0
        %788 = vperm.xlu0 %787, %v783
        %v789 = vpop.permute.xlu0 %788
        %792 = vset.pattern.permute.xlu0 0
        %793 = vperm.xlu0 %792, %v784
        %v794 = vpop.permute.xlu0 %793
        %797 = vset.pattern.permute.xlu0 0
        %798 = vperm.xlu0 %797, %v785
        %v799 = vpop.permute.xlu0 %798
        %v801 = vld [vmem:[#allocation5] sm:$0x1]
        %v802 = vld [vmem:[#allocation7] sm:$0x1]
        %v804 = vlaneseq
        %v805 = vshrl.u32 %v804, 7
        %v806 = vsub.s32 0, %v805
        %v807 = vrot.slane %v802, %v806
        %vm809 = vcmask 15360
        %v811 = vsel %vm809, %v780, 0
        %v814 = vsel %vm809, %v781, 0
        %vm816 = vcmask 1040384
        %v818 = vsel %vm816, %v801, 0
        %820 = vmatprep.subr.bf16.mxu0 0
        %821 = vmatpush1.bf16.msra.mxu0 0
        %822 = vmatprep.subr.bf16.mxu0 0
        %823 = vmatpush1.bf16.msra.mxu0 0
        %824 = vmatprep.subr.bf16.mxu0 0
        %825 = vmatpush1.bf16.msra.mxu0 0
        %826 = vmatprep.subr.bf16.mxu0 0
        %827 = vmatpush1.bf16.msra.mxu0 0
        %828 = vmatprep.subr.bf16.mxu0 0
        %829 = vmatpush1.bf16.msra.mxu0 0
        %830 = vmatprep.subr.bf16.mxu0 0
        %831 = vmatpush1.bf16.msra.mxu0 0
        %832 = vmatprep.subr.bf16.mxu0 0
        %833 = vmatpush1.bf16.msra.mxu0 0
        %834 = vmatprep.subr.bf16.mxu0 0
        %835 = vmatpush1.bf16.msra.mxu0 %v818
        %836 = vmatprep.subr.bf16.mxu0 0
        %837 = vmatpush2.bf16.msra.mxu0 0
        %838 = vmatprep.subr.bf16.mxu0 0
        %839 = vmatpush2.bf16.msra.mxu0 0
        %840 = vmatprep.subr.bf16.mxu0 0
        %841 = vmatpush2.bf16.msra.mxu0 0
        %842 = vmatprep.subr.bf16.mxu0 0
        %843 = vmatpush2.bf16.msra.mxu0 0
        %844 = vmatprep.subr.bf16.mxu0 0
        %845 = vmatpush2.bf16.msra.mxu0 0
        %846 = vmatprep.subr.bf16.mxu0 0
        %847 = vmatpush2.bf16.msra.mxu0 0
        %848 = vmatprep.subr.bf16.mxu0 0
        %849 = vmatpush2.bf16.msra.mxu0 0
        %850 = vmatprep.subr.bf16.mxu0 0
        %851 = vmatpush2.bf16.msra.mxu0 0
        %852 = vmatprep.mubr.bf16.mxu0 0
        %853 = vmatmul.mubr.bf16.gmra.mxu0 %v811
        %v854 = vpop.f32.mrf.mxu0
        %v855 = vadd.f32 %v807, %v854
        %v856 = vpop.f32.mrf.mxu0
        %v857 = vpop.f32.mrf.mxu0
        %v858 = vadd.f32 %v807, %v857
        %v859 = vpop.f32.mrf.mxu0
        %860 = vmatprep.mubr.bf16.mxu0 0
        %861 = vmatmul.mubr.bf16.gmra.mxu0 %v814
        %v862 = vpop.f32.mrf.mxu0
        %v863 = vadd.f32 %v807, %v862
        %v864 = vpop.f32.mrf.mxu0
        %v865 = vpop.f32.mrf.mxu0
        %v866 = vpop.f32.mrf.mxu0
        %867 = vdwg.mxu0
        %v868 = vmul.f32 %v855, %v789
        %v869 = vmul.f32 %v858, %v794
        %v870 = vmul.f32 %v863, %v799
        %v871 = vrot.slane %v868, 7
        %v872 = vrot.slane %v869, 7
        %v873 = vrot.slane %v870, 7
        %v874 = vlaneseq
        %v875 = vshrl.u32 %v874, 7
        %vm876 = vcmp.lt.s32.totalorder %v875, 1
        %v877 = vsel %vm876, %v872, %v873
        %v878 = vsel %vm876, %v871, %v872
        %v879 = vsel %vm876, %v873, %v871
        %v880 = vpack.c.bf16 %v878, %v879
        %v881 = vpack.c.bf16 %v877, %v877
        %v882 = vld [vmem:[%s5] sm:$0xf]
        %v883 = vld [vmem:[%s5 + $0x4] sm:$0xf]
        %v884 = vld [vmem:[%s6] sm:$0xf]
        %v885 = vld [vmem:[%s6 + $0x4] sm:$0xf]
        %v886 = vpack.c.bf16 %v869, %v868
        %v887 = vpack.c.bf16 %v870, %v870
        %s888 = scalar_lea.vmem %s5, 8
        %v889 = vld [vmem:[%s888] sm:$0xf]
        %v890 = vld [vmem:[%s888 + $0x4] sm:$0xf]
        %v893 = vunpack.c.l.b16 %v889
        %v894 = vunpack.c.l.b16 %v890
        %v895 = vpack.c.b16 %v894, %v893
        %vm897 = vcmask 130048
        %v899 = vsel %vm897, %v886, 0
        %v902 = vsel %vm897, %v887, 0
        %904 = vmatprep.subr.bf16.mxu0 0
        %905 = vmatpush1.bf16.msra.mxu0 0
        %906 = vmatprep.subr.bf16.mxu0 0
        %907 = vmatpush1.bf16.msra.mxu0 0
        %908 = vmatprep.subr.bf16.mxu0 0
        %909 = vmatpush1.bf16.msra.mxu0 0
        %910 = vmatprep.subr.bf16.mxu0 0
        %911 = vmatpush1.bf16.msra.mxu0 0
        %912 = vmatprep.subr.bf16.mxu0 0
        %913 = vmatpush1.bf16.msra.mxu0 0
        %914 = vmatprep.subr.bf16.mxu0 0
        %915 = vmatpush1.bf16.msra.mxu0 0
        %916 = vmatprep.subr.bf16.mxu0 0
        %917 = vmatpush1.bf16.msra.mxu0 0
        %918 = vmatprep.subr.bf16.mxu0 0
        %919 = vmatpush1.bf16.msra.mxu0 %v895
        %920 = vmatprep.subr.bf16.mxu0 0
        %921 = vmatpush2.bf16.msra.mxu0 0
        %922 = vmatprep.subr.bf16.mxu0 0
        %923 = vmatpush2.bf16.msra.mxu0 0
        %924 = vmatprep.subr.bf16.mxu0 0
        %925 = vmatpush2.bf16.msra.mxu0 0
        %926 = vmatprep.subr.bf16.mxu0 0
        %927 = vmatpush2.bf16.msra.mxu0 0
        %928 = vmatprep.subr.bf16.mxu0 0
        %929 = vmatpush2.bf16.msra.mxu0 0
        %930 = vmatprep.subr.bf16.mxu0 0
        %931 = vmatpush2.bf16.msra.mxu0 0
        %932 = vmatprep.subr.bf16.mxu0 0
        %933 = vmatpush2.bf16.msra.mxu0 0
        %934 = vmatprep.subr.bf16.mxu0 0
        %935 = vmatpush2.bf16.msra.mxu0 0
        %936 = vmatprep.mubr.bf16.mxu0 0
        %937 = vmatmul.mubr.bf16.gmra.mxu0 %v899
        %v938 = vpop.f32.mrf.mxu0
        %v939 = vadd.f32 0.0, %v938
        %v940 = vpop.f32.mrf.mxu0
        %v941 = vpop.f32.mrf.mxu0
        %v942 = vadd.f32 0.0, %v941
        %v943 = vpop.f32.mrf.mxu0
        %944 = vmatprep.mubr.bf16.mxu0 0
        %945 = vmatmul.mubr.bf16.gmra.mxu0 %v902
        %v946 = vpop.f32.mrf.mxu0
        %v947 = vadd.f32 0.0, %v946
        %v948 = vpop.f32.mrf.mxu0
        %v949 = vpop.f32.mrf.mxu0
        %v950 = vpop.f32.mrf.mxu0
        %951 = vdwg.mxu0
        %s952 = scalar_lea.vmem %s6, 8
        %v953 = vld [vmem:[%s952] sm:$0xf]
        %v954 = vld [vmem:[%s952 + $0x4] sm:$0xf]
        %v957 = vunpack.c.l.b16 %v953
        %v958 = vunpack.c.l.b16 %v954
        %v959 = vpack.c.b16 %v958, %v957
        %961 = vmatprep.subr.bf16.mxu0 0
        %962 = vmatpush1.bf16.msra.mxu0 0
        %963 = vmatprep.subr.bf16.mxu0 0
        %964 = vmatpush1.bf16.msra.mxu0 0
        %965 = vmatprep.subr.bf16.mxu0 0
        %966 = vmatpush1.bf16.msra.mxu0 0
        %967 = vmatprep.subr.bf16.mxu0 0
        %968 = vmatpush1.bf16.msra.mxu0 0
        %969 = vmatprep.subr.bf16.mxu0 0
        %970 = vmatpush1.bf16.msra.mxu0 0
        %971 = vmatprep.subr.bf16.mxu0 0
        %972 = vmatpush1.bf16.msra.mxu0 0
        %973 = vmatprep.subr.bf16.mxu0 0
        %974 = vmatpush1.bf16.msra.mxu0 0
        %975 = vmatprep.subr.bf16.mxu0 0
        %976 = vmatpush1.bf16.msra.mxu0 %v959
        %977 = vmatprep.subr.bf16.mxu0 0
        %978 = vmatpush2.bf16.msra.mxu0 0
        %979 = vmatprep.subr.bf16.mxu0 0
        %980 = vmatpush2.bf16.msra.mxu0 0
        %981 = vmatprep.subr.bf16.mxu0 0
        %982 = vmatpush2.bf16.msra.mxu0 0
        %983 = vmatprep.subr.bf16.mxu0 0
        %984 = vmatpush2.bf16.msra.mxu0 0
        %985 = vmatprep.subr.bf16.mxu0 0
        %986 = vmatpush2.bf16.msra.mxu0 0
        %987 = vmatprep.subr.bf16.mxu0 0
        %988 = vmatpush2.bf16.msra.mxu0 0
        %989 = vmatprep.subr.bf16.mxu0 0
        %990 = vmatpush2.bf16.msra.mxu0 0
        %991 = vmatprep.subr.bf16.mxu0 0
        %992 = vmatpush2.bf16.msra.mxu0 0
        %993 = vmatprep.mubr.bf16.mxu0 0
        %994 = vmatmul.mubr.bf16.gmra.mxu0 %v899
        %v995 = vpop.f32.mrf.mxu0
        %v996 = vadd.f32 0.0, %v995
        %v997 = vpop.f32.mrf.mxu0
        %v998 = vpop.f32.mrf.mxu0
        %v999 = vadd.f32 0.0, %v998
        %v1000 = vpop.f32.mrf.mxu0
        %1001 = vmatprep.mubr.bf16.mxu0 0
        %1002 = vmatmul.mubr.bf16.gmra.mxu0 %v902
        %v1003 = vpop.f32.mrf.mxu0
        %v1004 = vadd.f32 0.0, %v1003
        %v1005 = vpop.f32.mrf.mxu0
        %v1006 = vpop.f32.mrf.mxu0
        %v1007 = vpop.f32.mrf.mxu0
        %1008 = vdwg.mxu0
        %v1011 = vunpack.c.l.b16 %v882
        %v1012 = vunpack.c.l.b16 %v883
        %v1013 = vpack.c.b16 %v1012, %v1011
        %v1016 = vsel %vm897, %v880, 0
        %v1019 = vsel %vm897, %v881, 0
        %1021 = vmatprep.subr.bf16.mxu0 0
        %1022 = vmatpush1.bf16.msra.mxu0 0
        %1023 = vmatprep.subr.bf16.mxu0 0
        %1024 = vmatpush1.bf16.msra.mxu0 0
        %1025 = vmatprep.subr.bf16.mxu0 0
        %1026 = vmatpush1.bf16.msra.mxu0 0
        %1027 = vmatprep.subr.bf16.mxu0 0
        %1028 = vmatpush1.bf16.msra.mxu0 0
        %1029 = vmatprep.subr.bf16.mxu0 0
        %1030 = vmatpush1.bf16.msra.mxu0 0
        %1031 = vmatprep.subr.bf16.mxu0 0
        %1032 = vmatpush1.bf16.msra.mxu0 0
        %1033 = vmatprep.subr.bf16.mxu0 0
        %1034 = vmatpush1.bf16.msra.mxu0 0
        %1035 = vmatprep.subr.bf16.mxu0 0
        %1036 = vmatpush1.bf16.msra.mxu0 %v1013
        %1037 = vmatprep.subr.bf16.mxu0 0
        %1038 = vmatpush2.bf16.msra.mxu0 0
        %1039 = vmatprep.subr.bf16.mxu0 0
        %1040 = vmatpush2.bf16.msra.mxu0 0
        %1041 = vmatprep.subr.bf16.mxu0 0
        %1042 = vmatpush2.bf16.msra.mxu0 0
        %1043 = vmatprep.subr.bf16.mxu0 0
        %1044 = vmatpush2.bf16.msra.mxu0 0
        %1045 = vmatprep.subr.bf16.mxu0 0
        %1046 = vmatpush2.bf16.msra.mxu0 0
        %1047 = vmatprep.subr.bf16.mxu0 0
        %1048 = vmatpush2.bf16.msra.mxu0 0
        %1049 = vmatprep.subr.bf16.mxu0 0
        %1050 = vmatpush2.bf16.msra.mxu0 0
        %1051 = vmatprep.subr.bf16.mxu0 0
        %1052 = vmatpush2.bf16.msra.mxu0 0
        %1053 = vmatprep.mubr.bf16.mxu0 0
        %1054 = vmatmul.mubr.bf16.gmra.mxu0 %v1016
        %v1055 = vpop.f32.mrf.mxu0
        %v1056 = vadd.f32 %v939, %v1055
        %v1057 = vpop.f32.mrf.mxu0
        %v1058 = vpop.f32.mrf.mxu0
        %v1059 = vadd.f32 %v942, %v1058
        %v1060 = vpop.f32.mrf.mxu0
        %1061 = vmatprep.mubr.bf16.mxu0 0
        %1062 = vmatmul.mubr.bf16.gmra.mxu0 %v1019
        %v1063 = vpop.f32.mrf.mxu0
        %v1064 = vadd.f32 %v947, %v1063
        %v1065 = vpop.f32.mrf.mxu0
        %v1066 = vpop.f32.mrf.mxu0
        %v1067 = vpop.f32.mrf.mxu0
        %1068 = vdwg.mxu0
        %v1071 = vunpack.c.l.b16 %v884
        %v1072 = vunpack.c.l.b16 %v885
        %v1073 = vpack.c.b16 %v1072, %v1071
        %1075 = vmatprep.subr.bf16.mxu0 0
        %1076 = vmatpush1.bf16.msra.mxu0 0
        %1077 = vmatprep.subr.bf16.mxu0 0
        %1078 = vmatpush1.bf16.msra.mxu0 0
        %1079 = vmatprep.subr.bf16.mxu0 0
        %1080 = vmatpush1.bf16.msra.mxu0 0
        %1081 = vmatprep.subr.bf16.mxu0 0
        %1082 = vmatpush1.bf16.msra.mxu0 0
        %1083 = vmatprep.subr.bf16.mxu0 0
        %1084 = vmatpush1.bf16.msra.mxu0 0
        %1085 = vmatprep.subr.bf16.mxu0 0
        %1086 = vmatpush1.bf16.msra.mxu0 0
        %1087 = vmatprep.subr.bf16.mxu0 0
        %1088 = vmatpush1.bf16.msra.mxu0 0
        %1089 = vmatprep.subr.bf16.mxu0 0
        %1090 = vmatpush1.bf16.msra.mxu0 %v1073
        %1091 = vmatprep.subr.bf16.mxu0 0
        %1092 = vmatpush2.bf16.msra.mxu0 0
        %1093 = vmatprep.subr.bf16.mxu0 0
        %1094 = vmatpush2.bf16.msra.mxu0 0
        %1095 = vmatprep.subr.bf16.mxu0 0
        %1096 = vmatpush2.bf16.msra.mxu0 0
        %1097 = vmatprep.subr.bf16.mxu0 0
        %1098 = vmatpush2.bf16.msra.mxu0 0
        %1099 = vmatprep.subr.bf16.mxu0 0
        %1100 = vmatpush2.bf16.msra.mxu0 0
        %1101 = vmatprep.subr.bf16.mxu0 0
        %1102 = vmatpush2.bf16.msra.mxu0 0
        %1103 = vmatprep.subr.bf16.mxu0 0
        %1104 = vmatpush2.bf16.msra.mxu0 0
        %1105 = vmatprep.subr.bf16.mxu0 0
        %1106 = vmatpush2.bf16.msra.mxu0 0
        %1107 = vmatprep.mubr.bf16.mxu0 0
        %1108 = vmatmul.mubr.bf16.gmra.mxu0 %v1016
        %v1109 = vpop.f32.mrf.mxu0
        %v1110 = vadd.f32 %v996, %v1109
        %v1111 = vpop.f32.mrf.mxu0
        %v1112 = vpop.f32.mrf.mxu0
        %v1113 = vadd.f32 %v999, %v1112
        %v1114 = vpop.f32.mrf.mxu0
        %1115 = vmatprep.mubr.bf16.mxu0 0
        %1116 = vmatmul.mubr.bf16.gmra.mxu0 %v1019
        %v1117 = vpop.f32.mrf.mxu0
        %v1118 = vadd.f32 %v1004, %v1117
        %v1119 = vpop.f32.mrf.mxu0
        %v1120 = vpop.f32.mrf.mxu0
        %v1121 = vpop.f32.mrf.mxu0
        %1122 = vdwg.mxu0
        %v1123 = vrot.slane %v868, 1
        %v1124 = vrot.slane %v869, 1
        %v1125 = vrot.slane %v870, 1
        %vm1126 = vcmp.lt.s32.totalorder %v875, 7
        %v1127 = vsel %vm1126, %v1124, %v1125
        %v1128 = vsel %vm1126, %v1123, %v1124
        %v1129 = vsel %vm1126, %v1125, %v1123
        %v1130 = vpack.c.bf16 %v1127, %v1128
        %v1131 = vpack.c.bf16 %v1129, %v1129
        %s1132 = scalar_lea.vmem %s5, 16
        %v1133 = vld [vmem:[%s1132] sm:$0xf]
        %v1134 = vld [vmem:[%s1132 + $0x4] sm:$0xf]
        %v1137 = vunpack.c.l.b16 %v1133
        %v1138 = vunpack.c.l.b16 %v1134
        %v1139 = vpack.c.b16 %v1138, %v1137
        %v1142 = vsel %vm897, %v1130, 0
        %v1145 = vsel %vm897, %v1131, 0
        %1147 = vmatprep.subr.bf16.mxu0 0
        %1148 = vmatpush1.bf16.msra.mxu0 0
        %1149 = vmatprep.subr.bf16.mxu0 0
        %1150 = vmatpush1.bf16.msra.mxu0 0
        %1151 = vmatprep.subr.bf16.mxu0 0
        %1152 = vmatpush1.bf16.msra.mxu0 0
        %1153 = vmatprep.subr.bf16.mxu0 0
        %1154 = vmatpush1.bf16.msra.mxu0 0
        %1155 = vmatprep.subr.bf16.mxu0 0
        %1156 = vmatpush1.bf16.msra.mxu0 0
        %1157 = vmatprep.subr.bf16.mxu0 0
        %1158 = vmatpush1.bf16.msra.mxu0 0
        %1159 = vmatprep.subr.bf16.mxu0 0
        %1160 = vmatpush1.bf16.msra.mxu0 0
        %1161 = vmatprep.subr.bf16.mxu0 0
        %1162 = vmatpush1.bf16.msra.mxu0 %v1139
        %1163 = vmatprep.subr.bf16.mxu0 0
        %1164 = vmatpush2.bf16.msra.mxu0 0
        %1165 = vmatprep.subr.bf16.mxu0 0
        %1166 = vmatpush2.bf16.msra.mxu0 0
        %1167 = vmatprep.subr.bf16.mxu0 0
        %1168 = vmatpush2.bf16.msra.mxu0 0
        %1169 = vmatprep.subr.bf16.mxu0 0
        %1170 = vmatpush2.bf16.msra.mxu0 0
        %1171 = vmatprep.subr.bf16.mxu0 0
        %1172 = vmatpush2.bf16.msra.mxu0 0
        %1173 = vmatprep.subr.bf16.mxu0 0
        %1174 = vmatpush2.bf16.msra.mxu0 0
        %1175 = vmatprep.subr.bf16.mxu0 0
        %1176 = vmatpush2.bf16.msra.mxu0 0
        %1177 = vmatprep.subr.bf16.mxu0 0
        %1178 = vmatpush2.bf16.msra.mxu0 0
        %1179 = vmatprep.mubr.bf16.mxu0 0
        %1180 = vmatmul.mubr.bf16.gmra.mxu0 %v1142
        %v1181 = vpop.f32.mrf.mxu0
        %v1182 = vadd.f32 0.0, %v1181
        %v1183 = vpop.f32.mrf.mxu0
        %v1184 = vpop.f32.mrf.mxu0
        %v1185 = vadd.f32 0.0, %v1184
        %v1186 = vpop.f32.mrf.mxu0
        %1187 = vmatprep.mubr.bf16.mxu0 0
        %1188 = vmatmul.mubr.bf16.gmra.mxu0 %v1145
        %v1189 = vpop.f32.mrf.mxu0
        %v1190 = vadd.f32 0.0, %v1189
        %v1191 = vpop.f32.mrf.mxu0
        %v1192 = vpop.f32.mrf.mxu0
        %v1193 = vpop.f32.mrf.mxu0
        %1194 = vdwg.mxu0
        %s1195 = scalar_lea.vmem %s6, 16
        %v1196 = vld [vmem:[%s1195] sm:$0xf]
        %v1197 = vld [vmem:[%s1195 + $0x4] sm:$0xf]
        %v1200 = vunpack.c.l.b16 %v1196
        %v1201 = vunpack.c.l.b16 %v1197
        %v1202 = vpack.c.b16 %v1201, %v1200
        %1204 = vmatprep.subr.bf16.mxu0 0
        %1205 = vmatpush1.bf16.msra.mxu0 0
        %1206 = vmatprep.subr.bf16.mxu0 0
        %1207 = vmatpush1.bf16.msra.mxu0 0
        %1208 = vmatprep.subr.bf16.mxu0 0
        %1209 = vmatpush1.bf16.msra.mxu0 0
        %1210 = vmatprep.subr.bf16.mxu0 0
        %1211 = vmatpush1.bf16.msra.mxu0 0
        %1212 = vmatprep.subr.bf16.mxu0 0
        %1213 = vmatpush1.bf16.msra.mxu0 0
        %1214 = vmatprep.subr.bf16.mxu0 0
        %1215 = vmatpush1.bf16.msra.mxu0 0
        %1216 = vmatprep.subr.bf16.mxu0 0
        %1217 = vmatpush1.bf16.msra.mxu0 0
        %1218 = vmatprep.subr.bf16.mxu0 0
        %1219 = vmatpush1.bf16.msra.mxu0 %v1202
        %1220 = vmatprep.subr.bf16.mxu0 0
        %1221 = vmatpush2.bf16.msra.mxu0 0
        %1222 = vmatprep.subr.bf16.mxu0 0
        %1223 = vmatpush2.bf16.msra.mxu0 0
        %1224 = vmatprep.subr.bf16.mxu0 0
        %1225 = vmatpush2.bf16.msra.mxu0 0
        %1226 = vmatprep.subr.bf16.mxu0 0
        %1227 = vmatpush2.bf16.msra.mxu0 0
        %1228 = vmatprep.subr.bf16.mxu0 0
        %1229 = vmatpush2.bf16.msra.mxu0 0
        %1230 = vmatprep.subr.bf16.mxu0 0
        %1231 = vmatpush2.bf16.msra.mxu0 0
        %1232 = vmatprep.subr.bf16.mxu0 0
        %1233 = vmatpush2.bf16.msra.mxu0 0
        %1234 = vmatprep.subr.bf16.mxu0 0
        %1235 = vmatpush2.bf16.msra.mxu0 0
        %1236 = vmatprep.mubr.bf16.mxu0 0
        %1237 = vmatmul.mubr.bf16.gmra.mxu0 %v1142
        %v1238 = vpop.f32.mrf.mxu0
        %v1239 = vadd.f32 0.0, %v1238
        %v1240 = vpop.f32.mrf.mxu0
        %v1241 = vpop.f32.mrf.mxu0
        %v1242 = vadd.f32 0.0, %v1241
        %v1243 = vpop.f32.mrf.mxu0
        %1244 = vmatprep.mubr.bf16.mxu0 0
        %1245 = vmatmul.mubr.bf16.gmra.mxu0 %v1145
        %v1246 = vpop.f32.mrf.mxu0
        %v1247 = vadd.f32 0.0, %v1246
        %v1248 = vpop.f32.mrf.mxu0
        %v1249 = vpop.f32.mrf.mxu0
        %v1250 = vpop.f32.mrf.mxu0
        %1251 = vdwg.mxu0
        %v1252 = vadd.f32 %v1056, %v1182
        %v1253 = vadd.f32 %v1059, %v1185
        %v1254 = vadd.f32 %v1064, %v1190
        %v1255 = vadd.f32 %v1110, %v1239
        %v1256 = vadd.f32 %v1113, %v1242
        %v1257 = vadd.f32 %v1118, %v1247
        %v1258 = vld [vmem:[#allocation8] sm:$0x1]
        %v1260 = vlaneseq
        %v1261 = vshrl.u32 %v1260, 7
        %v1262 = vsub.s32 0, %v1261
        %v1263 = vrot.slane %v1258, %v1262
        %v1265 = vadd.f32 %v1252, %v1263
        %v1266 = vadd.f32 %v1253, %v1263
        %v1267 = vadd.f32 %v1254, %v1263
        %v1268 = vtanh.pop %v1265
        %v1269 = vtanh.pop %v1266
        %v1270 = vtanh.pop %v1267
        %v1271 = vld [vmem:[#allocation10] sm:$0x1]
        %v1273 = vlaneseq
        %v1274 = vshrl.u32 %v1273, 7
        %v1275 = vsub.s32 0, %v1274
        %v1276 = vrot.slane %v1271, %v1275
        %v1278 = vadd.f32 %v1255, %v1276
        %v1279 = vadd.f32 %v1256, %v1276
        %v1280 = vadd.f32 %v1257, %v1276
        %v1281 = vxor.u32 %v1278, 2147483648
        %v1282 = vxor.u32 %v1279, 2147483648
        %v1283 = vxor.u32 %v1280, 2147483648
        %v1284 = vmul.f32 %v1281, 1.442695
        %v1285 = vpow.pop %v1284
        %v1286 = vmul.f32 %v1282, 1.442695
        %v1287 = vpow.pop %v1286
        %v1288 = vmul.f32 %v1283, 1.442695
        %v1289 = vpow.pop %v1288
        %v1290 = vadd.f32 %v1285, 1.0
        %v1291 = vadd.f32 %v1287, 1.0
        %v1292 = vadd.f32 %v1289, 1.0
        %v1293 = vrcp.pop %v1290
        %v1294 = vmul.f32 1.0, %v1293
        %v1295 = vrcp.pop %v1291
        %v1296 = vmul.f32 1.0, %v1295
        %v1297 = vrcp.pop %v1292
        %v1298 = vmul.f32 1.0, %v1297
        %v1299 = vmul.f32 %v1268, %v1294
        %v1300 = vmul.f32 %v1269, %v1296
        %v1301 = vmul.f32 %v1270, %v1298
        %v1302 = vpack.c.bf16 %v1300, %v1299
        %v1303 = vpack.c.bf16 %v1301, %v1301
        %v1304 = vld [vmem:[#allocation14] sm:$0xf]
        %v1305 = vld [vmem:[#allocation14 + $0x4] sm:$0xf]
        %v1306 = vld [vmem:[#allocation16] sm:$0x1]
        %v1308 = vlaneseq
        %v1309 = vshrl.u32 %v1308, 7
        %v1310 = vsub.s32 0, %v1309
        %v1311 = vrot.slane %v1306, %v1310
        %v1315 = vunpack.c.l.b16 %v1304
        %v1316 = vunpack.c.l.b16 %v1305
        %v1317 = vpack.c.b16 %v1316, %v1315
        %v1320 = vsel %vm897, %v1302, 0
        %v1323 = vsel %vm897, %v1303, 0
        %1325 = vmatprep.subr.bf16.mxu0 0
        %1326 = vmatpush1.bf16.msra.mxu0 0
        %1327 = vmatprep.subr.bf16.mxu0 0
        %1328 = vmatpush1.bf16.msra.mxu0 0
        %1329 = vmatprep.subr.bf16.mxu0 0
        %1330 = vmatpush1.bf16.msra.mxu0 0
        %1331 = vmatprep.subr.bf16.mxu0 0
        %1332 = vmatpush1.bf16.msra.mxu0 0
        %1333 = vmatprep.subr.bf16.mxu0 0
        %1334 = vmatpush1.bf16.msra.mxu0 0
        %1335 = vmatprep.subr.bf16.mxu0 0
        %1336 = vmatpush1.bf16.msra.mxu0 0
        %1337 = vmatprep.subr.bf16.mxu0 0
        %1338 = vmatpush1.bf16.msra.mxu0 0
        %1339 = vmatprep.subr.bf16.mxu0 0
        %1340 = vmatpush1.bf16.msra.mxu0 %v1317
        %1341 = vmatprep.subr.bf16.mxu0 0
        %1342 = vmatpush2.bf16.msra.mxu0 0
        %1343 = vmatprep.subr.bf16.mxu0 0
        %1344 = vmatpush2.bf16.msra.mxu0 0
        %1345 = vmatprep.subr.bf16.mxu0 0
        %1346 = vmatpush2.bf16.msra.mxu0 0
        %1347 = vmatprep.subr.bf16.mxu0 0
        %1348 = vmatpush2.bf16.msra.mxu0 0
        %1349 = vmatprep.subr.bf16.mxu0 0
        %1350 = vmatpush2.bf16.msra.mxu0 0
        %1351 = vmatprep.subr.bf16.mxu0 0
        %1352 = vmatpush2.bf16.msra.mxu0 0
        %1353 = vmatprep.subr.bf16.mxu0 0
        %1354 = vmatpush2.bf16.msra.mxu0 0
        %1355 = vmatprep.subr.bf16.mxu0 0
        %1356 = vmatpush2.bf16.msra.mxu0 0
        %1357 = vmatprep.mubr.bf16.mxu0 0
        %1358 = vmatmul.mubr.bf16.gmra.mxu0 %v1320
        %v1359 = vpop.f32.mrf.mxu0
        %v1360 = vpop.f32.mrf.mxu0
        %v1361 = vpop.f32.mrf.mxu0
        %v1362 = vadd.f32 %v1311, %v1361
        %v1363 = vpop.f32.mrf.mxu0
        %1364 = vmatprep.mubr.bf16.mxu0 0
        %1365 = vmatmul.mubr.bf16.gmra.mxu0 %v1323
        %v1366 = vpop.f32.mrf.mxu0
        %v1367 = vpop.f32.mrf.mxu0
        %v1368 = vpop.f32.mrf.mxu0
        %v1369 = vpop.f32.mrf.mxu0
        %1370 = vdwg.mxu0
        %v1371 = vld [vmem:[#allocation11] sm:$0xf]
        %v1372 = vld [vmem:[#allocation11 + $0x4] sm:$0xf]
        %v1373 = vld [vmem:[#allocation13] sm:$0x1]
        %v1375 = vlaneseq
        %v1376 = vshrl.u32 %v1375, 7
        %v1377 = vsub.s32 0, %v1376
        %v1378 = vrot.slane %v1373, %v1377
        %v1382 = vunpack.c.l.b16 %v1371
        %v1383 = vunpack.c.l.b16 %v1372
        %v1384 = vpack.c.b16 %v1383, %v1382
        %1386 = vmatprep.subr.bf16.mxu0 0
        %1387 = vmatpush1.bf16.msra.mxu0 0
        %1388 = vmatprep.subr.bf16.mxu0 0
        %1389 = vmatpush1.bf16.msra.mxu0 0
        %1390 = vmatprep.subr.bf16.mxu0 0
        %1391 = vmatpush1.bf16.msra.mxu0 0
        %1392 = vmatprep.subr.bf16.mxu0 0
        %1393 = vmatpush1.bf16.msra.mxu0 0
        %1394 = vmatprep.subr.bf16.mxu0 0
        %1395 = vmatpush1.bf16.msra.mxu0 0
        %1396 = vmatprep.subr.bf16.mxu0 0
        %1397 = vmatpush1.bf16.msra.mxu0 0
        %1398 = vmatprep.subr.bf16.mxu0 0
        %1399 = vmatpush1.bf16.msra.mxu0 0
        %1400 = vmatprep.subr.bf16.mxu0 0
        %1401 = vmatpush1.bf16.msra.mxu0 %v1384
        %1402 = vmatprep.subr.bf16.mxu0 0
        %1403 = vmatpush2.bf16.msra.mxu0 0
        %1404 = vmatprep.subr.bf16.mxu0 0
        %1405 = vmatpush2.bf16.msra.mxu0 0
        %1406 = vmatprep.subr.bf16.mxu0 0
        %1407 = vmatpush2.bf16.msra.mxu0 0
        %1408 = vmatprep.subr.bf16.mxu0 0
        %1409 = vmatpush2.bf16.msra.mxu0 0
        %1410 = vmatprep.subr.bf16.mxu0 0
        %1411 = vmatpush2.bf16.msra.mxu0 0
        %1412 = vmatprep.subr.bf16.mxu0 0
        %1413 = vmatpush2.bf16.msra.mxu0 0
        %1414 = vmatprep.subr.bf16.mxu0 0
        %1415 = vmatpush2.bf16.msra.mxu0 0
        %1416 = vmatprep.subr.bf16.mxu0 0
        %1417 = vmatpush2.bf16.msra.mxu0 0
        %1418 = vmatprep.mubr.bf16.mxu0 0
        %1419 = vmatmul.mubr.bf16.gmra.mxu0 %v1320
        %v1420 = vpop.f32.mrf.mxu0
        %v1421 = vadd.f32 %v1378, %v1420
        %v1422 = vpop.f32.mrf.mxu0
        %v1423 = vpop.f32.mrf.mxu0
        %v1424 = vadd.f32 %v1378, %v1423
        %v1425 = vpop.f32.mrf.mxu0
        %1426 = vmatprep.mubr.bf16.mxu0 0
        %1427 = vmatmul.mubr.bf16.gmra.mxu0 %v1323
        %v1428 = vpop.f32.mrf.mxu0
        %v1429 = vadd.f32 %v1378, %v1428
        %v1430 = vpop.f32.mrf.mxu0
        %v1431 = vpop.f32.mrf.mxu0
        %v1432 = vpop.f32.mrf.mxu0
        %1433 = vdwg.mxu0
        %v1434 = vadd.f32 %v868, %v1421
        %v1435 = vadd.f32 %v869, %v1424
        %v1436 = vadd.f32 %v870, %v1429
        %v1437 = vmul.f32 %v1434, %v789
        %v1438 = vmul.f32 %v1435, %v794
        %v1439 = vmul.f32 %v1436, %v799
        %v1440 = vrot.slane %v1437, 6
        %v1441 = vrot.slane %v1438, 6
        %v1442 = vrot.slane %v1439, 6
        %vm1443 = vcmp.lt.s32.totalorder %v875, 2
        %v1444 = vsel %vm1443, %v1441, %v1442
        %v1445 = vsel %vm1443, %v1440, %v1441
        %v1446 = vsel %vm1443, %v1442, %v1440
        %v1447 = vpack.c.bf16 %v1445, %v1446
        %v1448 = vpack.c.bf16 %v1444, %v1444
        %s1449 = scalar_lea.vmem %s5, 24
        %v1450 = vld [vmem:[%s1449] sm:$0xf]
        %v1451 = vld [vmem:[%s1449 + $0x4] sm:$0xf]
        %s1452 = scalar_lea.vmem %s6, 24
        %v1453 = vld [vmem:[%s1452] sm:$0xf]
        %v1454 = vld [vmem:[%s1452 + $0x4] sm:$0xf]
        %v1455 = vpack.c.bf16 %v1438, %v1437
        %v1456 = vpack.c.bf16 %v1439, %v1439
        %s1457 = scalar_lea.vmem %s5, 32
        %v1458 = vld [vmem:[%s1457] sm:$0xf]
        %v1459 = vld [vmem:[%s1457 + $0x4] sm:$0xf]
        %v1462 = vunpack.c.l.b16 %v1458
        %v1463 = vunpack.c.l.b16 %v1459
        %v1464 = vpack.c.b16 %v1463, %v1462
        %v1467 = vsel %vm897, %v1455, 0
        %v1470 = vsel %vm897, %v1456, 0
        %1472 = vmatprep.subr.bf16.mxu0 0
        %1473 = vmatpush1.bf16.msra.mxu0 0
        %1474 = vmatprep.subr.bf16.mxu0 0
        %1475 = vmatpush1.bf16.msra.mxu0 0
        %1476 = vmatprep.subr.bf16.mxu0 0
        %1477 = vmatpush1.bf16.msra.mxu0 0
        %1478 = vmatprep.subr.bf16.mxu0 0
        %1479 = vmatpush1.bf16.msra.mxu0 0
        %1480 = vmatprep.subr.bf16.mxu0 0
        %1481 = vmatpush1.bf16.msra.mxu0 0
        %1482 = vmatprep.subr.bf16.mxu0 0
        %1483 = vmatpush1.bf16.msra.mxu0 0
        %1484 = vmatprep.subr.bf16.mxu0 0
        %1485 = vmatpush1.bf16.msra.mxu0 0
        %1486 = vmatprep.subr.bf16.mxu0 0
        %1487 = vmatpush1.bf16.msra.mxu0 %v1464
        %1488 = vmatprep.subr.bf16.mxu0 0
        %1489 = vmatpush2.bf16.msra.mxu0 0
        %1490 = vmatprep.subr.bf16.mxu0 0
        %1491 = vmatpush2.bf16.msra.mxu0 0
        %1492 = vmatprep.subr.bf16.mxu0 0
        %1493 = vmatpush2.bf16.msra.mxu0 0
        %1494 = vmatprep.subr.bf16.mxu0 0
        %1495 = vmatpush2.bf16.msra.mxu0 0
        %1496 = vmatprep.subr.bf16.mxu0 0
        %1497 = vmatpush2.bf16.msra.mxu0 0
        %1498 = vmatprep.subr.bf16.mxu0 0
        %1499 = vmatpush2.bf16.msra.mxu0 0
        %1500 = vmatprep.subr.bf16.mxu0 0
        %1501 = vmatpush2.bf16.msra.mxu0 0
        %1502 = vmatprep.subr.bf16.mxu0 0
        %1503 = vmatpush2.bf16.msra.mxu0 0
        %1504 = vmatprep.mubr.bf16.mxu0 0
        %1505 = vmatmul.mubr.bf16.gmra.mxu0 %v1467
        %v1506 = vpop.f32.mrf.mxu0
        %v1507 = vadd.f32 0.0, %v1506
        %v1508 = vpop.f32.mrf.mxu0
        %v1509 = vpop.f32.mrf.mxu0
        %v1510 = vadd.f32 0.0, %v1509
        %v1511 = vpop.f32.mrf.mxu0
        %1512 = vmatprep.mubr.bf16.mxu0 0
        %1513 = vmatmul.mubr.bf16.gmra.mxu0 %v1470
        %v1514 = vpop.f32.mrf.mxu0
        %v1515 = vadd.f32 0.0, %v1514
        %v1516 = vpop.f32.mrf.mxu0
        %v1517 = vpop.f32.mrf.mxu0
        %v1518 = vpop.f32.mrf.mxu0
        %1519 = vdwg.mxu0
        %s1520 = scalar_lea.vmem %s6, 32
        %v1521 = vld [vmem:[%s1520] sm:$0xf]
        %v1522 = vld [vmem:[%s1520 + $0x4] sm:$0xf]
        %v1525 = vunpack.c.l.b16 %v1521
        %v1526 = vunpack.c.l.b16 %v1522
        %v1527 = vpack.c.b16 %v1526, %v1525
        %1529 = vmatprep.subr.bf16.mxu0 0
        %1530 = vmatpush1.bf16.msra.mxu0 0
        %1531 = vmatprep.subr.bf16.mxu0 0
        %1532 = vmatpush1.bf16.msra.mxu0 0
        %1533 = vmatprep.subr.bf16.mxu0 0
        %1534 = vmatpush1.bf16.msra.mxu0 0
        %1535 = vmatprep.subr.bf16.mxu0 0
        %1536 = vmatpush1.bf16.msra.mxu0 0
        %1537 = vmatprep.subr.bf16.mxu0 0
        %1538 = vmatpush1.bf16.msra.mxu0 0
        %1539 = vmatprep.subr.bf16.mxu0 0
        %1540 = vmatpush1.bf16.msra.mxu0 0
        %1541 = vmatprep.subr.bf16.mxu0 0
        %1542 = vmatpush1.bf16.msra.mxu0 0
        %1543 = vmatprep.subr.bf16.mxu0 0
        %1544 = vmatpush1.bf16.msra.mxu0 %v1527
        %1545 = vmatprep.subr.bf16.mxu0 0
        %1546 = vmatpush2.bf16.msra.mxu0 0
        %1547 = vmatprep.subr.bf16.mxu0 0
        %1548 = vmatpush2.bf16.msra.mxu0 0
        %1549 = vmatprep.subr.bf16.mxu0 0
        %1550 = vmatpush2.bf16.msra.mxu0 0
        %1551 = vmatprep.subr.bf16.mxu0 0
        %1552 = vmatpush2.bf16.msra.mxu0 0
        %1553 = vmatprep.subr.bf16.mxu0 0
        %1554 = vmatpush2.bf16.msra.mxu0 0
        %1555 = vmatprep.subr.bf16.mxu0 0
        %1556 = vmatpush2.bf16.msra.mxu0 0
        %1557 = vmatprep.subr.bf16.mxu0 0
        %1558 = vmatpush2.bf16.msra.mxu0 0
        %1559 = vmatprep.subr.bf16.mxu0 0
        %1560 = vmatpush2.bf16.msra.mxu0 0
        %1561 = vmatprep.mubr.bf16.mxu0 0
        %1562 = vmatmul.mubr.bf16.gmra.mxu0 %v1467
        %v1563 = vpop.f32.mrf.mxu0
        %v1564 = vadd.f32 0.0, %v1563
        %v1565 = vpop.f32.mrf.mxu0
        %v1566 = vpop.f32.mrf.mxu0
        %v1567 = vadd.f32 0.0, %v1566
        %v1568 = vpop.f32.mrf.mxu0
        %1569 = vmatprep.mubr.bf16.mxu0 0
        %1570 = vmatmul.mubr.bf16.gmra.mxu0 %v1470
        %v1571 = vpop.f32.mrf.mxu0
        %v1572 = vadd.f32 0.0, %v1571
        %v1573 = vpop.f32.mrf.mxu0
        %v1574 = vpop.f32.mrf.mxu0
        %v1575 = vpop.f32.mrf.mxu0
        %1576 = vdwg.mxu0
        %v1579 = vunpack.c.l.b16 %v1450
        %v1580 = vunpack.c.l.b16 %v1451
        %v1581 = vpack.c.b16 %v1580, %v1579
        %v1584 = vsel %vm897, %v1447, 0
        %v1587 = vsel %vm897, %v1448, 0
        %1589 = vmatprep.subr.bf16.mxu0 0
        %1590 = vmatpush1.bf16.msra.mxu0 0
        %1591 = vmatprep.subr.bf16.mxu0 0
        %1592 = vmatpush1.bf16.msra.mxu0 0
        %1593 = vmatprep.subr.bf16.mxu0 0
        %1594 = vmatpush1.bf16.msra.mxu0 0
        %1595 = vmatprep.subr.bf16.mxu0 0
        %1596 = vmatpush1.bf16.msra.mxu0 0
        %1597 = vmatprep.subr.bf16.mxu0 0
        %1598 = vmatpush1.bf16.msra.mxu0 0
        %1599 = vmatprep.subr.bf16.mxu0 0
        %1600 = vmatpush1.bf16.msra.mxu0 0
        %1601 = vmatprep.subr.bf16.mxu0 0
        %1602 = vmatpush1.bf16.msra.mxu0 0
        %1603 = vmatprep.subr.bf16.mxu0 0
        %1604 = vmatpush1.bf16.msra.mxu0 %v1581
        %1605 = vmatprep.subr.bf16.mxu0 0
        %1606 = vmatpush2.bf16.msra.mxu0 0
        %1607 = vmatprep.subr.bf16.mxu0 0
        %1608 = vmatpush2.bf16.msra.mxu0 0
        %1609 = vmatprep.subr.bf16.mxu0 0
        %1610 = vmatpush2.bf16.msra.mxu0 0
        %1611 = vmatprep.subr.bf16.mxu0 0
        %1612 = vmatpush2.bf16.msra.mxu0 0
        %1613 = vmatprep.subr.bf16.mxu0 0
        %1614 = vmatpush2.bf16.msra.mxu0 0
        %1615 = vmatprep.subr.bf16.mxu0 0
        %1616 = vmatpush2.bf16.msra.mxu0 0
        %1617 = vmatprep.subr.bf16.mxu0 0
        %1618 = vmatpush2.bf16.msra.mxu0 0
        %1619 = vmatprep.subr.bf16.mxu0 0
        %1620 = vmatpush2.bf16.msra.mxu0 0
        %1621 = vmatprep.mubr.bf16.mxu0 0
        %1622 = vmatmul.mubr.bf16.gmra.mxu0 %v1584
        %v1623 = vpop.f32.mrf.mxu0
        %v1624 = vadd.f32 %v1507, %v1623
        %v1625 = vpop.f32.mrf.mxu0
        %v1626 = vpop.f32.mrf.mxu0
        %v1627 = vadd.f32 %v1510, %v1626
        %v1628 = vpop.f32.mrf.mxu0
        %1629 = vmatprep.mubr.bf16.mxu0 0
        %1630 = vmatmul.mubr.bf16.gmra.mxu0 %v1587
        %v1631 = vpop.f32.mrf.mxu0
        %v1632 = vadd.f32 %v1515, %v1631
        %v1633 = vpop.f32.mrf.mxu0
        %v1634 = vpop.f32.mrf.mxu0
        %v1635 = vpop.f32.mrf.mxu0
        %1636 = vdwg.mxu0
        %v1639 = vunpack.c.l.b16 %v1453
        %v1640 = vunpack.c.l.b16 %v1454
        %v1641 = vpack.c.b16 %v1640, %v1639
        %1643 = vmatprep.subr.bf16.mxu0 0
        %1644 = vmatpush1.bf16.msra.mxu0 0
        %1645 = vmatprep.subr.bf16.mxu0 0
        %1646 = vmatpush1.bf16.msra.mxu0 0
        %1647 = vmatprep.subr.bf16.mxu0 0
        %1648 = vmatpush1.bf16.msra.mxu0 0
        %1649 = vmatprep.subr.bf16.mxu0 0
        %1650 = vmatpush1.bf16.msra.mxu0 0
        %1651 = vmatprep.subr.bf16.mxu0 0
        %1652 = vmatpush1.bf16.msra.mxu0 0
        %1653 = vmatprep.subr.bf16.mxu0 0
        %1654 = vmatpush1.bf16.msra.mxu0 0
        %1655 = vmatprep.subr.bf16.mxu0 0
        %1656 = vmatpush1.bf16.msra.mxu0 0
        %1657 = vmatprep.subr.bf16.mxu0 0
        %1658 = vmatpush1.bf16.msra.mxu0 %v1641
        %1659 = vmatprep.subr.bf16.mxu0 0
        %1660 = vmatpush2.bf16.msra.mxu0 0
        %1661 = vmatprep.subr.bf16.mxu0 0
        %1662 = vmatpush2.bf16.msra.mxu0 0
        %1663 = vmatprep.subr.bf16.mxu0 0
        %1664 = vmatpush2.bf16.msra.mxu0 0
        %1665 = vmatprep.subr.bf16.mxu0 0
        %1666 = vmatpush2.bf16.msra.mxu0 0
        %1667 = vmatprep.subr.bf16.mxu0 0
        %1668 = vmatpush2.bf16.msra.mxu0 0
        %1669 = vmatprep.subr.bf16.mxu0 0
        %1670 = vmatpush2.bf16.msra.mxu0 0
        %1671 = vmatprep.subr.bf16.mxu0 0
        %1672 = vmatpush2.bf16.msra.mxu0 0
        %1673 = vmatprep.subr.bf16.mxu0 0
        %1674 = vmatpush2.bf16.msra.mxu0 0
        %1675 = vmatprep.mubr.bf16.mxu0 0
        %1676 = vmatmul.mubr.bf16.gmra.mxu0 %v1584
        %v1677 = vpop.f32.mrf.mxu0
        %v1678 = vadd.f32 %v1564, %v1677
        %v1679 = vpop.f32.mrf.mxu0
        %v1680 = vpop.f32.mrf.mxu0
        %v1681 = vadd.f32 %v1567, %v1680
        %v1682 = vpop.f32.mrf.mxu0
        %1683 = vmatprep.mubr.bf16.mxu0 0
        %1684 = vmatmul.mubr.bf16.gmra.mxu0 %v1587
        %v1685 = vpop.f32.mrf.mxu0
        %v1686 = vadd.f32 %v1572, %v1685
        %v1687 = vpop.f32.mrf.mxu0
        %v1688 = vpop.f32.mrf.mxu0
        %v1689 = vpop.f32.mrf.mxu0
        %1690 = vdwg.mxu0
        %v1691 = vrot.slane %v1437, 2
        %v1692 = vrot.slane %v1438, 2
        %v1693 = vrot.slane %v1439, 2
        %vm1694 = vcmp.lt.s32.totalorder %v875, 6
        %v1695 = vsel %vm1694, %v1692, %v1693
        %v1696 = vsel %vm1694, %v1691, %v1692
        %v1697 = vsel %vm1694, %v1693, %v1691
        %v1698 = vpack.c.bf16 %v1695, %v1696
        %v1699 = vpack.c.bf16 %v1697, %v1697
        %s1700 = scalar_lea.vmem %s5, 40
        %v1701 = vld [vmem:[%s1700] sm:$0xf]
        %v1702 = vld [vmem:[%s1700 + $0x4] sm:$0xf]
        %v1705 = vunpack.c.l.b16 %v1701
        %v1706 = vunpack.c.l.b16 %v1702
        %v1707 = vpack.c.b16 %v1706, %v1705
        %v1710 = vsel %vm897, %v1698, 0
        %v1713 = vsel %vm897, %v1699, 0
        %1715 = vmatprep.subr.bf16.mxu0 0
        %1716 = vmatpush1.bf16.msra.mxu0 0
        %1717 = vmatprep.subr.bf16.mxu0 0
        %1718 = vmatpush1.bf16.msra.mxu0 0
        %1719 = vmatprep.subr.bf16.mxu0 0
        %1720 = vmatpush1.bf16.msra.mxu0 0
        %1721 = vmatprep.subr.bf16.mxu0 0
        %1722 = vmatpush1.bf16.msra.mxu0 0
        %1723 = vmatprep.subr.bf16.mxu0 0
        %1724 = vmatpush1.bf16.msra.mxu0 0
        %1725 = vmatprep.subr.bf16.mxu0 0
        %1726 = vmatpush1.bf16.msra.mxu0 0
        %1727 = vmatprep.subr.bf16.mxu0 0
        %1728 = vmatpush1.bf16.msra.mxu0 0
        %1729 = vmatprep.subr.bf16.mxu0 0
        %1730 = vmatpush1.bf16.msra.mxu0 %v1707
        %1731 = vmatprep.subr.bf16.mxu0 0
        %1732 = vmatpush2.bf16.msra.mxu0 0
        %1733 = vmatprep.subr.bf16.mxu0 0
        %1734 = vmatpush2.bf16.msra.mxu0 0
        %1735 = vmatprep.subr.bf16.mxu0 0
        %1736 = vmatpush2.bf16.msra.mxu0 0
        %1737 = vmatprep.subr.bf16.mxu0 0
        %1738 = vmatpush2.bf16.msra.mxu0 0
        %1739 = vmatprep.subr.bf16.mxu0 0
        %1740 = vmatpush2.bf16.msra.mxu0 0
        %1741 = vmatprep.subr.bf16.mxu0 0
        %1742 = vmatpush2.bf16.msra.mxu0 0
        %1743 = vmatprep.subr.bf16.mxu0 0
        %1744 = vmatpush2.bf16.msra.mxu0 0
        %1745 = vmatprep.subr.bf16.mxu0 0
        %1746 = vmatpush2.bf16.msra.mxu0 0
        %1747 = vmatprep.mubr.bf16.mxu0 0
        %1748 = vmatmul.mubr.bf16.gmra.mxu0 %v1710
        %v1749 = vpop.f32.mrf.mxu0
        %v1750 = vadd.f32 0.0, %v1749
        %v1751 = vpop.f32.mrf.mxu0
        %v1752 = vpop.f32.mrf.mxu0
        %v1753 = vadd.f32 0.0, %v1752
        %v1754 = vpop.f32.mrf.mxu0
        %1755 = vmatprep.mubr.bf16.mxu0 0
        %1756 = vmatmul.mubr.bf16.gmra.mxu0 %v1713
        %v1757 = vpop.f32.mrf.mxu0
        %v1758 = vadd.f32 0.0, %v1757
        %v1759 = vpop.f32.mrf.mxu0
        %v1760 = vpop.f32.mrf.mxu0
        %v1761 = vpop.f32.mrf.mxu0
        %1762 = vdwg.mxu0
        %s1763 = scalar_lea.vmem %s6, 40
        %v1764 = vld [vmem:[%s1763] sm:$0xf]
        %v1765 = vld [vmem:[%s1763 + $0x4] sm:$0xf]
        %v1768 = vunpack.c.l.b16 %v1764
        %v1769 = vunpack.c.l.b16 %v1765
        %v1770 = vpack.c.b16 %v1769, %v1768
        %1772 = vmatprep.subr.bf16.mxu0 0
        %1773 = vmatpush1.bf16.msra.mxu0 0
        %1774 = vmatprep.subr.bf16.mxu0 0
        %1775 = vmatpush1.bf16.msra.mxu0 0
        %1776 = vmatprep.subr.bf16.mxu0 0
        %1777 = vmatpush1.bf16.msra.mxu0 0
        %1778 = vmatprep.subr.bf16.mxu0 0
        %1779 = vmatpush1.bf16.msra.mxu0 0
        %1780 = vmatprep.subr.bf16.mxu0 0
        %1781 = vmatpush1.bf16.msra.mxu0 0
        %1782 = vmatprep.subr.bf16.mxu0 0
        %1783 = vmatpush1.bf16.msra.mxu0 0
        %1784 = vmatprep.subr.bf16.mxu0 0
        %1785 = vmatpush1.bf16.msra.mxu0 0
        %1786 = vmatprep.subr.bf16.mxu0 0
        %1787 = vmatpush1.bf16.msra.mxu0 %v1770
        %1788 = vmatprep.subr.bf16.mxu0 0
        %1789 = vmatpush2.bf16.msra.mxu0 0
        %1790 = vmatprep.subr.bf16.mxu0 0
        %1791 = vmatpush2.bf16.msra.mxu0 0
        %1792 = vmatprep.subr.bf16.mxu0 0
        %1793 = vmatpush2.bf16.msra.mxu0 0
        %1794 = vmatprep.subr.bf16.mxu0 0
        %1795 = vmatpush2.bf16.msra.mxu0 0
        %1796 = vmatprep.subr.bf16.mxu0 0
        %1797 = vmatpush2.bf16.msra.mxu0 0
        %1798 = vmatprep.subr.bf16.mxu0 0
        %1799 = vmatpush2.bf16.msra.mxu0 0
        %1800 = vmatprep.subr.bf16.mxu0 0
        %1801 = vmatpush2.bf16.msra.mxu0 0
        %1802 = vmatprep.subr.bf16.mxu0 0
        %1803 = vmatpush2.bf16.msra.mxu0 0
        %1804 = vmatprep.mubr.bf16.mxu0 0
        %1805 = vmatmul.mubr.bf16.gmra.mxu0 %v1710
        %v1806 = vpop.f32.mrf.mxu0
        %v1807 = vadd.f32 0.0, %v1806
        %v1808 = vpop.f32.mrf.mxu0
        %v1809 = vpop.f32.mrf.mxu0
        %v1810 = vadd.f32 0.0, %v1809
        %v1811 = vpop.f32.mrf.mxu0
        %1812 = vmatprep.mubr.bf16.mxu0 0
        %1813 = vmatmul.mubr.bf16.gmra.mxu0 %v1713
        %v1814 = vpop.f32.mrf.mxu0
        %v1815 = vadd.f32 0.0, %v1814
        %v1816 = vpop.f32.mrf.mxu0
        %v1817 = vpop.f32.mrf.mxu0
        %v1818 = vpop.f32.mrf.mxu0
        %1819 = vdwg.mxu0
        %v1820 = vadd.f32 %v1624, %v1750
        %v1821 = vadd.f32 %v1627, %v1753
        %v1822 = vadd.f32 %v1632, %v1758
        %v1823 = vadd.f32 %v1678, %v1807
        %v1824 = vadd.f32 %v1681, %v1810
        %v1825 = vadd.f32 %v1686, %v1815
        %s1826 = scalar_lea.vmem [#allocation8], 1
        %v1827 = vld [vmem:[%s1826] sm:$0x1]
        %v1829 = vlaneseq
        %v1830 = vshrl.u32 %v1829, 7
        %v1831 = vsub.s32 0, %v1830
        %v1832 = vrot.slane %v1827, %v1831
        %v1834 = vadd.f32 %v1820, %v1832
        %v1835 = vadd.f32 %v1821, %v1832
        %v1836 = vadd.f32 %v1822, %v1832
        %v1837 = vtanh.pop %v1834
        %v1838 = vtanh.pop %v1835
        %v1839 = vtanh.pop %v1836
        %s1840 = scalar_lea.vmem [#allocation10], 1
        %v1841 = vld [vmem:[%s1840] sm:$0x1]
        %v1843 = vlaneseq
        %v1844 = vshrl.u32 %v1843, 7
        %v1845 = vsub.s32 0, %v1844
        %v1846 = vrot.slane %v1841, %v1845
        %v1848 = vadd.f32 %v1823, %v1846
        %v1849 = vadd.f32 %v1824, %v1846
        %v1850 = vadd.f32 %v1825, %v1846
        %v1851 = vxor.u32 %v1848, 2147483648
        %v1852 = vxor.u32 %v1849, 2147483648
        %v1853 = vxor.u32 %v1850, 2147483648
        %v1854 = vmul.f32 %v1851, 1.442695
        %v1855 = vpow.pop %v1854
        %v1856 = vmul.f32 %v1852, 1.442695
        %v1857 = vpow.pop %v1856
        %v1858 = vmul.f32 %v1853, 1.442695
        %v1859 = vpow.pop %v1858
        %v1860 = vadd.f32 %v1855, 1.0
        %v1861 = vadd.f32 %v1857, 1.0
        %v1862 = vadd.f32 %v1859, 1.0
        %v1863 = vrcp.pop %v1860
        %v1864 = vmul.f32 1.0, %v1863
        %v1865 = vrcp.pop %v1861
        %v1866 = vmul.f32 1.0, %v1865
        %v1867 = vrcp.pop %v1862
        %v1868 = vmul.f32 1.0, %v1867
        %v1869 = vmul.f32 %v1837, %v1864
        %v1870 = vmul.f32 %v1838, %v1866
        %v1871 = vmul.f32 %v1839, %v1868
        %v1872 = vpack.c.bf16 %v1870, %v1869
        %v1873 = vpack.c.bf16 %v1871, %v1871
        %s1874 = scalar_lea.vmem [#allocation14], 8
        %v1875 = vld [vmem:[%s1874] sm:$0xf]
        %v1876 = vld [vmem:[%s1874 + $0x4] sm:$0xf]
        %s1877 = scalar_lea.vmem [#allocation16], 1
        %v1878 = vld [vmem:[%s1877] sm:$0x1]
        %v1880 = vlaneseq
        %v1881 = vshrl.u32 %v1880, 7
        %v1882 = vsub.s32 0, %v1881
        %v1883 = vrot.slane %v1878, %v1882
        %v1887 = vunpack.c.l.b16 %v1875
        %v1888 = vunpack.c.l.b16 %v1876
        %v1889 = vpack.c.b16 %v1888, %v1887
        %v1892 = vsel %vm897, %v1872, 0
        %v1895 = vsel %vm897, %v1873, 0
        %1897 = vmatprep.subr.bf16.mxu0 0
        %1898 = vmatpush1.bf16.msra.mxu0 0
        %1899 = vmatprep.subr.bf16.mxu0 0
        %1900 = vmatpush1.bf16.msra.mxu0 0
        %1901 = vmatprep.subr.bf16.mxu0 0
        %1902 = vmatpush1.bf16.msra.mxu0 0
        %1903 = vmatprep.subr.bf16.mxu0 0
        %1904 = vmatpush1.bf16.msra.mxu0 0
        %1905 = vmatprep.subr.bf16.mxu0 0
        %1906 = vmatpush1.bf16.msra.mxu0 0
        %1907 = vmatprep.subr.bf16.mxu0 0
        %1908 = vmatpush1.bf16.msra.mxu0 0
        %1909 = vmatprep.subr.bf16.mxu0 0
        %1910 = vmatpush1.bf16.msra.mxu0 0
        %1911 = vmatprep.subr.bf16.mxu0 0
        %1912 = vmatpush1.bf16.msra.mxu0 %v1889
        %1913 = vmatprep.subr.bf16.mxu0 0
        %1914 = vmatpush2.bf16.msra.mxu0 0
        %1915 = vmatprep.subr.bf16.mxu0 0
        %1916 = vmatpush2.bf16.msra.mxu0 0
        %1917 = vmatprep.subr.bf16.mxu0 0
        %1918 = vmatpush2.bf16.msra.mxu0 0
        %1919 = vmatprep.subr.bf16.mxu0 0
        %1920 = vmatpush2.bf16.msra.mxu0 0
        %1921 = vmatprep.subr.bf16.mxu0 0
        %1922 = vmatpush2.bf16.msra.mxu0 0
        %1923 = vmatprep.subr.bf16.mxu0 0
        %1924 = vmatpush2.bf16.msra.mxu0 0
        %1925 = vmatprep.subr.bf16.mxu0 0
        %1926 = vmatpush2.bf16.msra.mxu0 0
        %1927 = vmatprep.subr.bf16.mxu0 0
        %1928 = vmatpush2.bf16.msra.mxu0 0
        %1929 = vmatprep.mubr.bf16.mxu0 0
        %1930 = vmatmul.mubr.bf16.gmra.mxu0 %v1892
        %v1931 = vpop.f32.mrf.mxu0
        %v1932 = vpop.f32.mrf.mxu0
        %v1933 = vpop.f32.mrf.mxu0
        %v1934 = vadd.f32 %v1883, %v1933
        %v1935 = vpop.f32.mrf.mxu0
        %1936 = vmatprep.mubr.bf16.mxu0 0
        %1937 = vmatmul.mubr.bf16.gmra.mxu0 %v1895
        %v1938 = vpop.f32.mrf.mxu0
        %v1939 = vpop.f32.mrf.mxu0
        %v1940 = vpop.f32.mrf.mxu0
        %v1941 = vpop.f32.mrf.mxu0
        %1942 = vdwg.mxu0
        %v1943 = vadd.f32 %v1362, %v1934
        %s1944 = scalar_lea.vmem [#allocation11], 8
        %v1945 = vld [vmem:[%s1944] sm:$0xf]
        %v1946 = vld [vmem:[%s1944 + $0x4] sm:$0xf]
        %s1947 = scalar_lea.vmem [#allocation13], 1
        %v1948 = vld [vmem:[%s1947] sm:$0x1]
        %v1950 = vlaneseq
        %v1951 = vshrl.u32 %v1950, 7
        %v1952 = vsub.s32 0, %v1951
        %v1953 = vrot.slane %v1948, %v1952
        %v1957 = vunpack.c.l.b16 %v1945
        %v1958 = vunpack.c.l.b16 %v1946
        %v1959 = vpack.c.b16 %v1958, %v1957
        %1961 = vmatprep.subr.bf16.mxu0 0
        %1962 = vmatpush1.bf16.msra.mxu0 0
        %1963 = vmatprep.subr.bf16.mxu0 0
        %1964 = vmatpush1.bf16.msra.mxu0 0
        %1965 = vmatprep.subr.bf16.mxu0 0
        %1966 = vmatpush1.bf16.msra.mxu0 0
        %1967 = vmatprep.subr.bf16.mxu0 0
        %1968 = vmatpush1.bf16.msra.mxu0 0
        %1969 = vmatprep.subr.bf16.mxu0 0
        %1970 = vmatpush1.bf16.msra.mxu0 0
        %1971 = vmatprep.subr.bf16.mxu0 0
        %1972 = vmatpush1.bf16.msra.mxu0 0
        %1973 = vmatprep.subr.bf16.mxu0 0
        %1974 = vmatpush1.bf16.msra.mxu0 0
        %1975 = vmatprep.subr.bf16.mxu0 0
        %1976 = vmatpush1.bf16.msra.mxu0 %v1959
        %1977 = vmatprep.subr.bf16.mxu0 0
        %1978 = vmatpush2.bf16.msra.mxu0 0
        %1979 = vmatprep.subr.bf16.mxu0 0
        %1980 = vmatpush2.bf16.msra.mxu0 0
        %1981 = vmatprep.subr.bf16.mxu0 0
        %1982 = vmatpush2.bf16.msra.mxu0 0
        %1983 = vmatprep.subr.bf16.mxu0 0
        %1984 = vmatpush2.bf16.msra.mxu0 0
        %1985 = vmatprep.subr.bf16.mxu0 0
        %1986 = vmatpush2.bf16.msra.mxu0 0
        %1987 = vmatprep.subr.bf16.mxu0 0
        %1988 = vmatpush2.bf16.msra.mxu0 0
        %1989 = vmatprep.subr.bf16.mxu0 0
        %1990 = vmatpush2.bf16.msra.mxu0 0
        %1991 = vmatprep.subr.bf16.mxu0 0
        %1992 = vmatpush2.bf16.msra.mxu0 0
        %1993 = vmatprep.mubr.bf16.mxu0 0
        %1994 = vmatmul.mubr.bf16.gmra.mxu0 %v1892
        %v1995 = vpop.f32.mrf.mxu0
        %v1996 = vadd.f32 %v1953, %v1995
        %v1997 = vpop.f32.mrf.mxu0
        %v1998 = vpop.f32.mrf.mxu0
        %v1999 = vadd.f32 %v1953, %v1998
        %v2000 = vpop.f32.mrf.mxu0
        %2001 = vmatprep.mubr.bf16.mxu0 0
        %2002 = vmatmul.mubr.bf16.gmra.mxu0 %v1895
        %v2003 = vpop.f32.mrf.mxu0
        %v2004 = vadd.f32 %v1953, %v2003
        %v2005 = vpop.f32.mrf.mxu0
        %v2006 = vpop.f32.mrf.mxu0
        %v2007 = vpop.f32.mrf.mxu0
        %2008 = vdwg.mxu0
        %v2009 = vadd.f32 %v1437, %v1996
        %v2010 = vadd.f32 %v1438, %v1999
        %v2011 = vadd.f32 %v1439, %v2004
        %v2012 = vmul.f32 %v2009, %v789
        %v2013 = vmul.f32 %v2010, %v794
        %v2014 = vmul.f32 %v2011, %v799
        %v2015 = vrot.slane %v2012, 4
        %v2016 = vrot.slane %v2013, 4
        %v2017 = vrot.slane %v2014, 4
        %vm2018 = vcmp.lt.s32.totalorder %v875, 4
        %v2019 = vsel %vm2018, %v2016, %v2017
        %v2020 = vsel %vm2018, %v2015, %v2016
        %v2021 = vsel %vm2018, %v2017, %v2015
        %v2022 = vpack.c.bf16 %v2020, %v2021
        %v2023 = vpack.c.bf16 %v2019, %v2019
        %s2024 = scalar_lea.vmem %s5, 48
        %v2025 = vld [vmem:[%s2024] sm:$0xf]
        %v2026 = vld [vmem:[%s2024 + $0x4] sm:$0xf]
        %s2027 = scalar_lea.vmem %s6, 48
        %v2028 = vld [vmem:[%s2027] sm:$0xf]
        %v2029 = vld [vmem:[%s2027 + $0x4] sm:$0xf]
        %v2030 = vpack.c.bf16 %v2013, %v2012
        %v2031 = vpack.c.bf16 %v2014, %v2014
        %s2032 = scalar_lea.vmem %s5, 56
        %v2033 = vld [vmem:[%s2032] sm:$0xf]
        %v2034 = vld [vmem:[%s2032 + $0x4] sm:$0xf]
        %v2037 = vunpack.c.l.b16 %v2033
        %v2038 = vunpack.c.l.b16 %v2034
        %v2039 = vpack.c.b16 %v2038, %v2037
        %v2042 = vsel %vm897, %v2030, 0
        %v2045 = vsel %vm897, %v2031, 0
        %2047 = vmatprep.subr.bf16.mxu0 0
        %2048 = vmatpush1.bf16.msra.mxu0 0
        %2049 = vmatprep.subr.bf16.mxu0 0
        %2050 = vmatpush1.bf16.msra.mxu0 0
        %2051 = vmatprep.subr.bf16.mxu0 0
        %2052 = vmatpush1.bf16.msra.mxu0 0
        %2053 = vmatprep.subr.bf16.mxu0 0
        %2054 = vmatpush1.bf16.msra.mxu0 0
        %2055 = vmatprep.subr.bf16.mxu0 0
        %2056 = vmatpush1.bf16.msra.mxu0 0
        %2057 = vmatprep.subr.bf16.mxu0 0
        %2058 = vmatpush1.bf16.msra.mxu0 0
        %2059 = vmatprep.subr.bf16.mxu0 0
        %2060 = vmatpush1.bf16.msra.mxu0 0
        %2061 = vmatprep.subr.bf16.mxu0 0
        %2062 = vmatpush1.bf16.msra.mxu0 %v2039
        %2063 = vmatprep.subr.bf16.mxu0 0
        %2064 = vmatpush2.bf16.msra.mxu0 0
        %2065 = vmatprep.subr.bf16.mxu0 0
        %2066 = vmatpush2.bf16.msra.mxu0 0
        %2067 = vmatprep.subr.bf16.mxu0 0
        %2068 = vmatpush2.bf16.msra.mxu0 0
        %2069 = vmatprep.subr.bf16.mxu0 0
        %2070 = vmatpush2.bf16.msra.mxu0 0
        %2071 = vmatprep.subr.bf16.mxu0 0
        %2072 = vmatpush2.bf16.msra.mxu0 0
        %2073 = vmatprep.subr.bf16.mxu0 0
        %2074 = vmatpush2.bf16.msra.mxu0 0
        %2075 = vmatprep.subr.bf16.mxu0 0
        %2076 = vmatpush2.bf16.msra.mxu0 0
        %2077 = vmatprep.subr.bf16.mxu0 0
        %2078 = vmatpush2.bf16.msra.mxu0 0
        %2079 = vmatprep.mubr.bf16.mxu0 0
        %2080 = vmatmul.mubr.bf16.gmra.mxu0 %v2042
        %v2081 = vpop.f32.mrf.mxu0
        %v2082 = vadd.f32 0.0, %v2081
        %v2083 = vpop.f32.mrf.mxu0
        %v2084 = vpop.f32.mrf.mxu0
        %v2085 = vadd.f32 0.0, %v2084
        %v2086 = vpop.f32.mrf.mxu0
        %2087 = vmatprep.mubr.bf16.mxu0 0
        %2088 = vmatmul.mubr.bf16.gmra.mxu0 %v2045
        %v2089 = vpop.f32.mrf.mxu0
        %v2090 = vadd.f32 0.0, %v2089
        %v2091 = vpop.f32.mrf.mxu0
        %v2092 = vpop.f32.mrf.mxu0
        %v2093 = vpop.f32.mrf.mxu0
        %2094 = vdwg.mxu0
        %s2095 = scalar_lea.vmem %s6, 56
        %v2096 = vld [vmem:[%s2095] sm:$0xf]
        %v2097 = vld [vmem:[%s2095 + $0x4] sm:$0xf]
        %v2100 = vunpack.c.l.b16 %v2096
        %v2101 = vunpack.c.l.b16 %v2097
        %v2102 = vpack.c.b16 %v2101, %v2100
        %2104 = vmatprep.subr.bf16.mxu0 0
        %2105 = vmatpush1.bf16.msra.mxu0 0
        %2106 = vmatprep.subr.bf16.mxu0 0
        %2107 = vmatpush1.bf16.msra.mxu0 0
        %2108 = vmatprep.subr.bf16.mxu0 0
        %2109 = vmatpush1.bf16.msra.mxu0 0
        %2110 = vmatprep.subr.bf16.mxu0 0
        %2111 = vmatpush1.bf16.msra.mxu0 0
        %2112 = vmatprep.subr.bf16.mxu0 0
        %2113 = vmatpush1.bf16.msra.mxu0 0
        %2114 = vmatprep.subr.bf16.mxu0 0
        %2115 = vmatpush1.bf16.msra.mxu0 0
        %2116 = vmatprep.subr.bf16.mxu0 0
        %2117 = vmatpush1.bf16.msra.mxu0 0
        %2118 = vmatprep.subr.bf16.mxu0 0
        %2119 = vmatpush1.bf16.msra.mxu0 %v2102
        %2120 = vmatprep.subr.bf16.mxu0 0
        %2121 = vmatpush2.bf16.msra.mxu0 0
        %2122 = vmatprep.subr.bf16.mxu0 0
        %2123 = vmatpush2.bf16.msra.mxu0 0
        %2124 = vmatprep.subr.bf16.mxu0 0
        %2125 = vmatpush2.bf16.msra.mxu0 0
        %2126 = vmatprep.subr.bf16.mxu0 0
        %2127 = vmatpush2.bf16.msra.mxu0 0
        %2128 = vmatprep.subr.bf16.mxu0 0
        %2129 = vmatpush2.bf16.msra.mxu0 0
        %2130 = vmatprep.subr.bf16.mxu0 0
        %2131 = vmatpush2.bf16.msra.mxu0 0
        %2132 = vmatprep.subr.bf16.mxu0 0
        %2133 = vmatpush2.bf16.msra.mxu0 0
        %2134 = vmatprep.subr.bf16.mxu0 0
        %2135 = vmatpush2.bf16.msra.mxu0 0
        %2136 = vmatprep.mubr.bf16.mxu0 0
        %2137 = vmatmul.mubr.bf16.gmra.mxu0 %v2042
        %v2138 = vpop.f32.mrf.mxu0
        %v2139 = vadd.f32 0.0, %v2138
        %v2140 = vpop.f32.mrf.mxu0
        %v2141 = vpop.f32.mrf.mxu0
        %v2142 = vadd.f32 0.0, %v2141
        %v2143 = vpop.f32.mrf.mxu0
        %2144 = vmatprep.mubr.bf16.mxu0 0
        %2145 = vmatmul.mubr.bf16.gmra.mxu0 %v2045
        %v2146 = vpop.f32.mrf.mxu0
        %v2147 = vadd.f32 0.0, %v2146
        %v2148 = vpop.f32.mrf.mxu0
        %v2149 = vpop.f32.mrf.mxu0
        %v2150 = vpop.f32.mrf.mxu0
        %2151 = vdwg.mxu0
        %v2154 = vunpack.c.l.b16 %v2025
        %v2155 = vunpack.c.l.b16 %v2026
        %v2156 = vpack.c.b16 %v2155, %v2154
        %v2159 = vsel %vm897, %v2022, 0
        %v2162 = vsel %vm897, %v2023, 0
        %2164 = vmatprep.subr.bf16.mxu0 0
        %2165 = vmatpush1.bf16.msra.mxu0 0
        %2166 = vmatprep.subr.bf16.mxu0 0
        %2167 = vmatpush1.bf16.msra.mxu0 0
        %2168 = vmatprep.subr.bf16.mxu0 0
        %2169 = vmatpush1.bf16.msra.mxu0 0
        %2170 = vmatprep.subr.bf16.mxu0 0
        %2171 = vmatpush1.bf16.msra.mxu0 0
        %2172 = vmatprep.subr.bf16.mxu0 0
        %2173 = vmatpush1.bf16.msra.mxu0 0
        %2174 = vmatprep.subr.bf16.mxu0 0
        %2175 = vmatpush1.bf16.msra.mxu0 0
        %2176 = vmatprep.subr.bf16.mxu0 0
        %2177 = vmatpush1.bf16.msra.mxu0 0
        %2178 = vmatprep.subr.bf16.mxu0 0
        %2179 = vmatpush1.bf16.msra.mxu0 %v2156
        %2180 = vmatprep.subr.bf16.mxu0 0
        %2181 = vmatpush2.bf16.msra.mxu0 0
        %2182 = vmatprep.subr.bf16.mxu0 0
        %2183 = vmatpush2.bf16.msra.mxu0 0
        %2184 = vmatprep.subr.bf16.mxu0 0
        %2185 = vmatpush2.bf16.msra.mxu0 0
        %2186 = vmatprep.subr.bf16.mxu0 0
        %2187 = vmatpush2.bf16.msra.mxu0 0
        %2188 = vmatprep.subr.bf16.mxu0 0
        %2189 = vmatpush2.bf16.msra.mxu0 0
        %2190 = vmatprep.subr.bf16.mxu0 0
        %2191 = vmatpush2.bf16.msra.mxu0 0
        %2192 = vmatprep.subr.bf16.mxu0 0
        %2193 = vmatpush2.bf16.msra.mxu0 0
        %2194 = vmatprep.subr.bf16.mxu0 0
        %2195 = vmatpush2.bf16.msra.mxu0 0
        %2196 = vmatprep.mubr.bf16.mxu0 0
        %2197 = vmatmul.mubr.bf16.gmra.mxu0 %v2159
        %v2198 = vpop.f32.mrf.mxu0
        %v2199 = vadd.f32 %v2082, %v2198
        %v2200 = vpop.f32.mrf.mxu0
        %v2201 = vpop.f32.mrf.mxu0
        %v2202 = vadd.f32 %v2085, %v2201
        %v2203 = vpop.f32.mrf.mxu0
        %2204 = vmatprep.mubr.bf16.mxu0 0
        %2205 = vmatmul.mubr.bf16.gmra.mxu0 %v2162
        %v2206 = vpop.f32.mrf.mxu0
        %v2207 = vadd.f32 %v2090, %v2206
        %v2208 = vpop.f32.mrf.mxu0
        %v2209 = vpop.f32.mrf.mxu0
        %v2210 = vpop.f32.mrf.mxu0
        %2211 = vdwg.mxu0
        %v2214 = vunpack.c.l.b16 %v2028
        %v2215 = vunpack.c.l.b16 %v2029
        %v2216 = vpack.c.b16 %v2215, %v2214
        %2218 = vmatprep.subr.bf16.mxu0 0
        %2219 = vmatpush1.bf16.msra.mxu0 0
        %2220 = vmatprep.subr.bf16.mxu0 0
        %2221 = vmatpush1.bf16.msra.mxu0 0
        %2222 = vmatprep.subr.bf16.mxu0 0
        %2223 = vmatpush1.bf16.msra.mxu0 0
        %2224 = vmatprep.subr.bf16.mxu0 0
        %2225 = vmatpush1.bf16.msra.mxu0 0
        %2226 = vmatprep.subr.bf16.mxu0 0
        %2227 = vmatpush1.bf16.msra.mxu0 0
        %2228 = vmatprep.subr.bf16.mxu0 0
        %2229 = vmatpush1.bf16.msra.mxu0 0
        %2230 = vmatprep.subr.bf16.mxu0 0
        %2231 = vmatpush1.bf16.msra.mxu0 0
        %2232 = vmatprep.subr.bf16.mxu0 0
        %2233 = vmatpush1.bf16.msra.mxu0 %v2216
        %2234 = vmatprep.subr.bf16.mxu0 0
        %2235 = vmatpush2.bf16.msra.mxu0 0
        %2236 = vmatprep.subr.bf16.mxu0 0
        %2237 = vmatpush2.bf16.msra.mxu0 0
        %2238 = vmatprep.subr.bf16.mxu0 0
        %2239 = vmatpush2.bf16.msra.mxu0 0
        %2240 = vmatprep.subr.bf16.mxu0 0
        %2241 = vmatpush2.bf16.msra.mxu0 0
        %2242 = vmatprep.subr.bf16.mxu0 0
        %2243 = vmatpush2.bf16.msra.mxu0 0
        %2244 = vmatprep.subr.bf16.mxu0 0
        %2245 = vmatpush2.bf16.msra.mxu0 0
        %2246 = vmatprep.subr.bf16.mxu0 0
        %2247 = vmatpush2.bf16.msra.mxu0 0
        %2248 = vmatprep.subr.bf16.mxu0 0
        %2249 = vmatpush2.bf16.msra.mxu0 0
        %2250 = vmatprep.mubr.bf16.mxu0 0
        %2251 = vmatmul.mubr.bf16.gmra.mxu0 %v2159
        %v2252 = vpop.f32.mrf.mxu0
        %v2253 = vadd.f32 %v2139, %v2252
        %v2254 = vpop.f32.mrf.mxu0
        %v2255 = vpop.f32.mrf.mxu0
        %v2256 = vadd.f32 %v2142, %v2255
        %v2257 = vpop.f32.mrf.mxu0
        %2258 = vmatprep.mubr.bf16.mxu0 0
        %2259 = vmatmul.mubr.bf16.gmra.mxu0 %v2162
        %v2260 = vpop.f32.mrf.mxu0
        %v2261 = vadd.f32 %v2147, %v2260
        %v2262 = vpop.f32.mrf.mxu0
        %v2263 = vpop.f32.mrf.mxu0
        %v2264 = vpop.f32.mrf.mxu0
        %2265 = vdwg.mxu0
        %v2266 = vpack.c.bf16 %v2019, %v2020
        %v2267 = vpack.c.bf16 %v2021, %v2021
        %s2268 = scalar_lea.vmem %s5, 64
        %v2269 = vld [vmem:[%s2268] sm:$0xf]
        %v2270 = vld [vmem:[%s2268 + $0x4] sm:$0xf]
        %v2273 = vunpack.c.l.b16 %v2269
        %v2274 = vunpack.c.l.b16 %v2270
        %v2275 = vpack.c.b16 %v2274, %v2273
        %v2278 = vsel %vm897, %v2266, 0
        %v2281 = vsel %vm897, %v2267, 0
        %2283 = vmatprep.subr.bf16.mxu0 0
        %2284 = vmatpush1.bf16.msra.mxu0 0
        %2285 = vmatprep.subr.bf16.mxu0 0
        %2286 = vmatpush1.bf16.msra.mxu0 0
        %2287 = vmatprep.subr.bf16.mxu0 0
        %2288 = vmatpush1.bf16.msra.mxu0 0
        %2289 = vmatprep.subr.bf16.mxu0 0
        %2290 = vmatpush1.bf16.msra.mxu0 0
        %2291 = vmatprep.subr.bf16.mxu0 0
        %2292 = vmatpush1.bf16.msra.mxu0 0
        %2293 = vmatprep.subr.bf16.mxu0 0
        %2294 = vmatpush1.bf16.msra.mxu0 0
        %2295 = vmatprep.subr.bf16.mxu0 0
        %2296 = vmatpush1.bf16.msra.mxu0 0
        %2297 = vmatprep.subr.bf16.mxu0 0
        %2298 = vmatpush1.bf16.msra.mxu0 %v2275
        %2299 = vmatprep.subr.bf16.mxu0 0
        %2300 = vmatpush2.bf16.msra.mxu0 0
        %2301 = vmatprep.subr.bf16.mxu0 0
        %2302 = vmatpush2.bf16.msra.mxu0 0
        %2303 = vmatprep.subr.bf16.mxu0 0
        %2304 = vmatpush2.bf16.msra.mxu0 0
        %2305 = vmatprep.subr.bf16.mxu0 0
        %2306 = vmatpush2.bf16.msra.mxu0 0
        %2307 = vmatprep.subr.bf16.mxu0 0
        %2308 = vmatpush2.bf16.msra.mxu0 0
        %2309 = vmatprep.subr.bf16.mxu0 0
        %2310 = vmatpush2.bf16.msra.mxu0 0
        %2311 = vmatprep.subr.bf16.mxu0 0
        %2312 = vmatpush2.bf16.msra.mxu0 0
        %2313 = vmatprep.subr.bf16.mxu0 0
        %2314 = vmatpush2.bf16.msra.mxu0 0
        %2315 = vmatprep.mubr.bf16.mxu0 0
        %2316 = vmatmul.mubr.bf16.gmra.mxu0 %v2278
        %v2317 = vpop.f32.mrf.mxu0
        %v2318 = vadd.f32 0.0, %v2317
        %v2319 = vpop.f32.mrf.mxu0
        %v2320 = vpop.f32.mrf.mxu0
        %v2321 = vadd.f32 0.0, %v2320
        %v2322 = vpop.f32.mrf.mxu0
        %2323 = vmatprep.mubr.bf16.mxu0 0
        %2324 = vmatmul.mubr.bf16.gmra.mxu0 %v2281
        %v2325 = vpop.f32.mrf.mxu0
        %v2326 = vadd.f32 0.0, %v2325
        %v2327 = vpop.f32.mrf.mxu0
        %v2328 = vpop.f32.mrf.mxu0
        %v2329 = vpop.f32.mrf.mxu0
        %2330 = vdwg.mxu0
        %s2331 = scalar_lea.vmem %s6, 64
        %v2332 = vld [vmem:[%s2331] sm:$0xf]
        %v2333 = vld [vmem:[%s2331 + $0x4] sm:$0xf]
        %v2336 = vunpack.c.l.b16 %v2332
        %v2337 = vunpack.c.l.b16 %v2333
        %v2338 = vpack.c.b16 %v2337, %v2336
        %2340 = vmatprep.subr.bf16.mxu0 0
        %2341 = vmatpush1.bf16.msra.mxu0 0
        %2342 = vmatprep.subr.bf16.mxu0 0
        %2343 = vmatpush1.bf16.msra.mxu0 0
        %2344 = vmatprep.subr.bf16.mxu0 0
        %2345 = vmatpush1.bf16.msra.mxu0 0
        %2346 = vmatprep.subr.bf16.mxu0 0
        %2347 = vmatpush1.bf16.msra.mxu0 0
        %2348 = vmatprep.subr.bf16.mxu0 0
        %2349 = vmatpush1.bf16.msra.mxu0 0
        %2350 = vmatprep.subr.bf16.mxu0 0
        %2351 = vmatpush1.bf16.msra.mxu0 0
        %2352 = vmatprep.subr.bf16.mxu0 0
        %2353 = vmatpush1.bf16.msra.mxu0 0
        %2354 = vmatprep.subr.bf16.mxu0 0
        %2355 = vmatpush1.bf16.msra.mxu0 %v2338
        %2356 = vmatprep.subr.bf16.mxu0 0
        %2357 = vmatpush2.bf16.msra.mxu0 0
        %2358 = vmatprep.subr.bf16.mxu0 0
        %2359 = vmatpush2.bf16.msra.mxu0 0
        %2360 = vmatprep.subr.bf16.mxu0 0
        %2361 = vmatpush2.bf16.msra.mxu0 0
        %2362 = vmatprep.subr.bf16.mxu0 0
        %2363 = vmatpush2.bf16.msra.mxu0 0
        %2364 = vmatprep.subr.bf16.mxu0 0
        %2365 = vmatpush2.bf16.msra.mxu0 0
        %2366 = vmatprep.subr.bf16.mxu0 0
        %2367 = vmatpush2.bf16.msra.mxu0 0
        %2368 = vmatprep.subr.bf16.mxu0 0
        %2369 = vmatpush2.bf16.msra.mxu0 0
        %2370 = vmatprep.subr.bf16.mxu0 0
        %2371 = vmatpush2.bf16.msra.mxu0 0
        %2372 = vmatprep.mubr.bf16.mxu0 0
        %2373 = vmatmul.mubr.bf16.gmra.mxu0 %v2278
        %v2374 = vpop.f32.mrf.mxu0
        %v2375 = vadd.f32 0.0, %v2374
        %v2376 = vpop.f32.mrf.mxu0
        %v2377 = vpop.f32.mrf.mxu0
        %v2378 = vadd.f32 0.0, %v2377
        %v2379 = vpop.f32.mrf.mxu0
        %2380 = vmatprep.mubr.bf16.mxu0 0
        %2381 = vmatmul.mubr.bf16.gmra.mxu0 %v2281
        %v2382 = vpop.f32.mrf.mxu0
        %v2383 = vadd.f32 0.0, %v2382
        %v2384 = vpop.f32.mrf.mxu0
        %v2385 = vpop.f32.mrf.mxu0
        %v2386 = vpop.f32.mrf.mxu0
        %2387 = vdwg.mxu0
        %v2388 = vadd.f32 %v2199, %v2318
        %v2389 = vadd.f32 %v2202, %v2321
        %v2390 = vadd.f32 %v2207, %v2326
        %v2391 = vadd.f32 %v2253, %v2375
        %v2392 = vadd.f32 %v2256, %v2378
        %v2393 = vadd.f32 %v2261, %v2383
        %s2394 = scalar_lea.vmem [#allocation8], 2
        %v2395 = vld [vmem:[%s2394] sm:$0x1]
        %v2397 = vlaneseq
        %v2398 = vshrl.u32 %v2397, 7
        %v2399 = vsub.s32 0, %v2398
        %v2400 = vrot.slane %v2395, %v2399
        %v2402 = vadd.f32 %v2388, %v2400
        %v2403 = vadd.f32 %v2389, %v2400
        %v2404 = vadd.f32 %v2390, %v2400
        %v2405 = vtanh.pop %v2402
        %v2406 = vtanh.pop %v2403
        %v2407 = vtanh.pop %v2404
        %s2408 = scalar_lea.vmem [#allocation10], 2
        %v2409 = vld [vmem:[%s2408] sm:$0x1]
        %v2411 = vlaneseq
        %v2412 = vshrl.u32 %v2411, 7
        %v2413 = vsub.s32 0, %v2412
        %v2414 = vrot.slane %v2409, %v2413
        %v2416 = vadd.f32 %v2391, %v2414
        %v2417 = vadd.f32 %v2392, %v2414
        %v2418 = vadd.f32 %v2393, %v2414
        %v2419 = vxor.u32 %v2416, 2147483648
        %v2420 = vxor.u32 %v2417, 2147483648
        %v2421 = vxor.u32 %v2418, 2147483648
        %v2422 = vmul.f32 %v2419, 1.442695
        %v2423 = vpow.pop %v2422
        %v2424 = vmul.f32 %v2420, 1.442695
        %v2425 = vpow.pop %v2424
        %v2426 = vmul.f32 %v2421, 1.442695
        %v2427 = vpow.pop %v2426
        %v2428 = vadd.f32 %v2423, 1.0
        %v2429 = vadd.f32 %v2425, 1.0
        %v2430 = vadd.f32 %v2427, 1.0
        %v2431 = vrcp.pop %v2428
        %v2432 = vmul.f32 1.0, %v2431
        %v2433 = vrcp.pop %v2429
        %v2434 = vmul.f32 1.0, %v2433
        %v2435 = vrcp.pop %v2430
        %v2436 = vmul.f32 1.0, %v2435
        %v2437 = vmul.f32 %v2405, %v2432
        %v2438 = vmul.f32 %v2406, %v2434
        %v2439 = vmul.f32 %v2407, %v2436
        %v2440 = vpack.c.bf16 %v2438, %v2437
        %v2441 = vpack.c.bf16 %v2439, %v2439
        %s2442 = scalar_lea.vmem [#allocation14], 16
        %v2443 = vld [vmem:[%s2442] sm:$0xf]
        %v2444 = vld [vmem:[%s2442 + $0x4] sm:$0xf]
        %s2445 = scalar_lea.vmem [#allocation16], 2
        %v2446 = vld [vmem:[%s2445] sm:$0x1]
        %v2448 = vlaneseq
        %v2449 = vshrl.u32 %v2448, 7
        %v2450 = vsub.s32 0, %v2449
        %v2451 = vrot.slane %v2446, %v2450
        %v2455 = vunpack.c.l.b16 %v2443
        %v2456 = vunpack.c.l.b16 %v2444
        %v2457 = vpack.c.b16 %v2456, %v2455
        %v2460 = vsel %vm897, %v2440, 0
        %v2463 = vsel %vm897, %v2441, 0
        %2465 = vmatprep.subr.bf16.mxu0 0
        %2466 = vmatpush1.bf16.msra.mxu0 0
        %2467 = vmatprep.subr.bf16.mxu0 0
        %2468 = vmatpush1.bf16.msra.mxu0 0
        %2469 = vmatprep.subr.bf16.mxu0 0
        %2470 = vmatpush1.bf16.msra.mxu0 0
        %2471 = vmatprep.subr.bf16.mxu0 0
        %2472 = vmatpush1.bf16.msra.mxu0 0
        %2473 = vmatprep.subr.bf16.mxu0 0
        %2474 = vmatpush1.bf16.msra.mxu0 0
        %2475 = vmatprep.subr.bf16.mxu0 0
        %2476 = vmatpush1.bf16.msra.mxu0 0
        %2477 = vmatprep.subr.bf16.mxu0 0
        %2478 = vmatpush1.bf16.msra.mxu0 0
        %2479 = vmatprep.subr.bf16.mxu0 0
        %2480 = vmatpush1.bf16.msra.mxu0 %v2457
        %2481 = vmatprep.subr.bf16.mxu0 0
        %2482 = vmatpush2.bf16.msra.mxu0 0
        %2483 = vmatprep.subr.bf16.mxu0 0
        %2484 = vmatpush2.bf16.msra.mxu0 0
        %2485 = vmatprep.subr.bf16.mxu0 0
        %2486 = vmatpush2.bf16.msra.mxu0 0
        %2487 = vmatprep.subr.bf16.mxu0 0
        %2488 = vmatpush2.bf16.msra.mxu0 0
        %2489 = vmatprep.subr.bf16.mxu0 0
        %2490 = vmatpush2.bf16.msra.mxu0 0
        %2491 = vmatprep.subr.bf16.mxu0 0
        %2492 = vmatpush2.bf16.msra.mxu0 0
        %2493 = vmatprep.subr.bf16.mxu0 0
        %2494 = vmatpush2.bf16.msra.mxu0 0
        %2495 = vmatprep.subr.bf16.mxu0 0
        %2496 = vmatpush2.bf16.msra.mxu0 0
        %2497 = vmatprep.mubr.bf16.mxu0 0
        %2498 = vmatmul.mubr.bf16.gmra.mxu0 %v2460
        %v2499 = vpop.f32.mrf.mxu0
        %v2500 = vpop.f32.mrf.mxu0
        %v2501 = vpop.f32.mrf.mxu0
        %v2502 = vadd.f32 %v2451, %v2501
        %v2503 = vpop.f32.mrf.mxu0
        %2504 = vmatprep.mubr.bf16.mxu0 0
        %2505 = vmatmul.mubr.bf16.gmra.mxu0 %v2463
        %v2506 = vpop.f32.mrf.mxu0
        %v2507 = vpop.f32.mrf.mxu0
        %v2508 = vpop.f32.mrf.mxu0
        %v2509 = vpop.f32.mrf.mxu0
        %2510 = vdwg.mxu0
        %v2511 = vadd.f32 %v1943, %v2502
        %v2512 = vmul.f32 %v2511, %v794
        %v2513 = vpack.c.bf16 %v2512, %v2512
        %v2514 = vld [vmem:[%s13] sm:$0xf]
        %v2515 = vld [vmem:[%s13 + $0x4] sm:$0xf]
        %v2516 = vld [vmem:[%s14] sm:$0x1]
        %v2518 = vlaneseq
        %v2519 = vshrl.u32 %v2518, 7
        %v2520 = vsub.s32 0, %v2519
        %v2521 = vrot.slane %v2516, %v2520
        %v2525 = vunpack.c.l.b16 %v2514
        %v2526 = vunpack.c.l.b16 %v2515
        %v2527 = vpack.c.b16 %v2526, %v2525
        %v2530 = vsel %vm897, %v2513, 0
        %2532 = vmatprep.subr.bf16.mxu0 0
        %2533 = vmatpush1.bf16.msra.mxu0 0
        %2534 = vmatprep.subr.bf16.mxu0 0
        %2535 = vmatpush1.bf16.msra.mxu0 0
        %2536 = vmatprep.subr.bf16.mxu0 0
        %2537 = vmatpush1.bf16.msra.mxu0 0
        %2538 = vmatprep.subr.bf16.mxu0 0
        %2539 = vmatpush1.bf16.msra.mxu0 0
        %2540 = vmatprep.subr.bf16.mxu0 0
        %2541 = vmatpush1.bf16.msra.mxu0 0
        %2542 = vmatprep.subr.bf16.mxu0 0
        %2543 = vmatpush1.bf16.msra.mxu0 0
        %2544 = vmatprep.subr.bf16.mxu0 0
        %2545 = vmatpush1.bf16.msra.mxu0 0
        %2546 = vmatprep.subr.bf16.mxu0 0
        %2547 = vmatpush1.bf16.msra.mxu0 %v2527
        %2548 = vmatprep.subr.bf16.mxu0 0
        %2549 = vmatpush2.bf16.msra.mxu0 0
        %2550 = vmatprep.subr.bf16.mxu0 0
        %2551 = vmatpush2.bf16.msra.mxu0 0
        %2552 = vmatprep.subr.bf16.mxu0 0
        %2553 = vmatpush2.bf16.msra.mxu0 0
        %2554 = vmatprep.subr.bf16.mxu0 0
        %2555 = vmatpush2.bf16.msra.mxu0 0
        %2556 = vmatprep.subr.bf16.mxu0 0
        %2557 = vmatpush2.bf16.msra.mxu0 0
        %2558 = vmatprep.subr.bf16.mxu0 0
        %2559 = vmatpush2.bf16.msra.mxu0 0
        %2560 = vmatprep.subr.bf16.mxu0 0
        %2561 = vmatpush2.bf16.msra.mxu0 0
        %2562 = vmatprep.subr.bf16.mxu0 0
        %2563 = vmatpush2.bf16.msra.mxu0 0
        %2564 = vmatprep.mubr.bf16.mxu0 0
        %2565 = vmatmul.mubr.bf16.gmra.mxu0 %v2530
        %v2566 = vpop.f32.mrf.mxu0
        %v2567 = vadd.f32 %v2521, %v2566
        %v2568 = vpop.f32.mrf.mxu0
        %v2569 = vpop.f32.mrf.mxu0
        %v2570 = vpop.f32.mrf.mxu0
        %2571 = vdwg.mxu0
        %v2572 = vmul.f32 %v2567, %v794
        %v2573 = vld [vmem:[%s15] sm:$0xf]
        %v2574 = vld [vmem:[%s15 + $0x4] sm:$0xf]
        %v2575 = vld [vmem:[%s16] sm:$0x1]
        %v2577 = vlaneseq
        %v2578 = vshrl.u32 %v2577, 7
        %v2579 = vsub.s32 0, %v2578
        %v2580 = vrot.slane %v2575, %v2579
        %v2584 = vunpack.c.l.b16 %v2573
        %v2585 = vunpack.c.l.b16 %v2574
        %v2586 = vpack.c.b16 %v2585, %v2584
        %2588 = vmatprep.subr.bf16.mxu0 0
        %2589 = vmatpush1.bf16.msra.mxu0 0
        %2590 = vmatprep.subr.bf16.mxu0 0
        %2591 = vmatpush1.bf16.msra.mxu0 0
        %2592 = vmatprep.subr.bf16.mxu0 0
        %2593 = vmatpush1.bf16.msra.mxu0 0
        %2594 = vmatprep.subr.bf16.mxu0 0
        %2595 = vmatpush1.bf16.msra.mxu0 0
        %2596 = vmatprep.subr.bf16.mxu0 0
        %2597 = vmatpush1.bf16.msra.mxu0 0
        %2598 = vmatprep.subr.bf16.mxu0 0
        %2599 = vmatpush1.bf16.msra.mxu0 0
        %2600 = vmatprep.subr.bf16.mxu0 0
        %2601 = vmatpush1.bf16.msra.mxu0 0
        %2602 = vmatprep.subr.bf16.mxu0 0
        %2603 = vmatpush1.bf16.msra.mxu0 %v2586
        %2604 = vmatprep.subr.bf16.mxu0 0
        %2605 = vmatpush2.bf16.msra.mxu0 0
        %2606 = vmatprep.subr.bf16.mxu0 0
        %2607 = vmatpush2.bf16.msra.mxu0 0
        %2608 = vmatprep.subr.bf16.mxu0 0
        %2609 = vmatpush2.bf16.msra.mxu0 0
        %2610 = vmatprep.subr.bf16.mxu0 0
        %2611 = vmatpush2.bf16.msra.mxu0 0
        %2612 = vmatprep.subr.bf16.mxu0 0
        %2613 = vmatpush2.bf16.msra.mxu0 0
        %2614 = vmatprep.subr.bf16.mxu0 0
        %2615 = vmatpush2.bf16.msra.mxu0 0
        %2616 = vmatprep.subr.bf16.mxu0 0
        %2617 = vmatpush2.bf16.msra.mxu0 0
        %2618 = vmatprep.subr.bf16.mxu0 0
        %2619 = vmatpush2.bf16.msra.mxu0 0
        %2620 = vmatprep.mubr.bf16.mxu0 0
        %2621 = vmatmul.mubr.bf16.gmra.mxu0 %v2530
        %v2622 = vpop.f32.mrf.mxu0
        %v2623 = vadd.f32 %v2580, %v2622
        %v2624 = vpop.f32.mrf.mxu0
        %v2625 = vpop.f32.mrf.mxu0
        %v2626 = vpop.f32.mrf.mxu0
        %2627 = vdwg.mxu0
        %v2628 = vmul.f32 %v2623, %v794
        %v2629 = vld [vmem:[%s664] sm:$0xff]
        %v2630 = vmul.f32 %v2628, 1.442695
        %v2631 = vpow.pop %v2630
        %v2632 = vmul.f32 %v2629, %v2631
        %v2633 = vmul.f32 %v2632, %v794
        %v2634 = vadd.f32 %v2572, %v2633
        %2635 = vst [vmem:[%s756] sm:$0xff] %v2634
        %2636 = vadd.xlane.f32.xlu0 %v2628
        %v2637 = vpop.xlane.xlu0 %2636
        %v2638 = vrot.slane %v2637, 4
        %v2639 = vadd.f32 %v2637, %v2638
        %v2640 = vrot.slane %v2639, 2
        %v2641 = vadd.f32 %v2639, %v2640
        %v2642 = vrot.slane %v2641, 1
        %v2643 = vadd.f32 %v2641, %v2642
        %s2644 = vtos %v2643
        %v2645 = vstv %s2644
        %v2646 = vadd.f32 %v2645, 0.0
        %2647 = vst [vmem:[%s763] sm:$0xff] %v2646
        %s2648 = sand.u32 %s439, 1
        %s2649 = scalar_lea.sflag [#allocation4], %s2648
        %s2650 = sand.u32 %s439, 1
        %s2651 = smul.addr %s2650, 8
        %s2652 = scalar_lea.vmem [#allocation17], %s2651
        %s2653 = sand.u32 %s467, 1
        %s2654 = scalar_lea.sflag [#allocation19], %s2653
        %s2655 = sand.u32 %s467, 1
        %s2656 = smul.addr %s2655, 8
        %s2657 = scalar_lea.vmem [#allocation18], %s2656
        // Predicated region
        $region125: #{tpu_custom_call.1} parent=87 // pred_check
          %p2658 = pneg %p449
        $region126: #{tpu_custom_call.1} parent=87 // pred_check_branch
          %2660 = sbr.rel (%p2658) target = $region128
        $region127: #{tpu_custom_call.1} parent=87 // pred_region
          %s2662 = ssub.s32 128, 128
          %2663 = vsyncadd %s2649, %s2662
          %s2664 = smul.addr %s47, 2
          %s2665 = sadd.s32 %s48, %s2664
          %s2666 = smul.addr %s2665, 128
          %s2667 = scalar_lea.hbm %s17, %s2666
          %s2669 = sshll.u32 %s2652, 4
          %s2670 = int_to_ptr.vmem [resolvable:$true] %s2669
          %2672 = dma.vmem_to_hbm [thread:$0]  %s2670, 128, %s2667, %s2649
        $region128: #{tpu_custom_call.1} parent=87 // pred_fallthru
          _
        // Predicated region
        $region129: #{tpu_custom_call.1} parent=87 // pred_check
          %p2673 = pneg %p477
        $region130: #{tpu_custom_call.1} parent=87 // pred_check_branch
          %2675 = sbr.rel (%p2673) target = $region132
        $region131: #{tpu_custom_call.1} parent=87 // pred_region
          %s2677 = ssub.s32 128, 128
          %2678 = vsyncadd %s2654, %s2677
          %s2679 = smul.addr %s47, 2
          %s2680 = sadd.s32 %s48, %s2679
          %s2681 = smul.addr %s2680, 128
          %s2682 = scalar_lea.hbm %s18, %s2681
          %s2684 = sshll.u32 %s2657, 4
          %s2685 = int_to_ptr.vmem [resolvable:$true] %s2684
          %2687 = dma.vmem_to_hbm [thread:$0]  %s2685, 128, %s2682, %s2654
        $region132: #{tpu_custom_call.1} parent=87 // pred_fallthru
          _
      $region88: #{tpu_custom_call.1} parent=5 // pred_fallthru
        _
      %p2688 = scmp.le.s32.totalorder 2, %s38
      // Predicated region
      $region133: #{tpu_custom_call.1} parent=5 // pred_check
        %p2689 = pneg %p2688
      $region134: #{tpu_custom_call.1} parent=5 // pred_check_branch
        %2691 = sbr.rel (%p2689) target = $region136
      $region135: #{tpu_custom_call.1} parent=5 // pred_region
        %s2692 = ssub.s32 %s38, 2
        // Predicated region
        $region137: #{tpu_custom_call.1} parent=135 // pred_check
          %p2693 = pneg %p455
        $region138: #{tpu_custom_call.1} parent=135 // pred_check_branch
          %2695 = sbr.rel (%p2693) target = $region140
        $region139: #{tpu_custom_call.1} parent=135 // pred_region
          %s2696 = sand.u32 %s440, 1
          %s2697 = scalar_lea.sflag [#allocation4], %s2696
          %s2698 = sand.u32 %s440, 1
          %s2699 = smul.addr %s2698, 8
          %s2700 = scalar_lea.vmem [#allocation17], %s2699
          %2701 = dma.done %s2697, 128
        $region140: #{tpu_custom_call.1} parent=135 // pred_fallthru
          _
        // Predicated region
        $region141: #{tpu_custom_call.1} parent=135 // pred_check
          %p2702 = pneg %p483
        $region142: #{tpu_custom_call.1} parent=135 // pred_check_branch
          %2704 = sbr.rel (%p2702) target = $region144
        $region143: #{tpu_custom_call.1} parent=135 // pred_region
          %s2705 = sand.u32 %s468, 1
          %s2706 = scalar_lea.sflag [#allocation19], %s2705
          %s2707 = sand.u32 %s468, 1
          %s2708 = smul.addr %s2707, 8
          %s2709 = scalar_lea.vmem [#allocation18], %s2708
          %2710 = dma.done %s2706, 128
        $region144: #{tpu_custom_call.1} parent=135 // pred_fallthru
          _
      $region136: #{tpu_custom_call.1} parent=5 // pred_fallthru
        _
    $region6: #{tpu_custom_call.1} parent=1 // loop_footer
      %s42 = sadd.s32 1, %s38
    $region7: #{tpu_custom_call.1} parent=1 // loop_footer_branch
      %37 = sbr.rel target = $region3
    $region8: #{tpu_custom_call.1} parent=1 // loop_exit
      _
    %2711 = vsyncpa [#allocation3], 1
    %s2712 = scalar_lea.sflag [#allocation3], 1
    %2713 = vsyncpa %s2712, 1
    %2714 = vsyncpa [#allocation6], 1
    %2715 = vsyncpa [#allocation9], 1
    %2716 = vsyncpa [#allocation12], 1
    %2717 = vsyncpa [#allocation15], 1
    %2718 = vsyncpa [#allocation4], 1
    %s2719 = scalar_lea.sflag [#allocation4], 1
    %2720 = vsyncpa %s2719, 1
    %2721 = vsyncpa [#allocation19], 1
    %s2722 = scalar_lea.sflag [#allocation19], 1
    %2723 = vsyncpa %s2722, 1

</llo_original>
